<compile_context>
chip_gen: v6e
topology: v6e:2x2x1
jax: 0.10.0
libtpu: 0.0.40
codegen_flags: <defaults>
</compile_context>

<pallas_src>
import functools

import numpy as np

import jax
import jax.numpy as jnp
from jax import lax
from jax.experimental import pallas as pl
from jax.experimental.pallas import tpu as pltpu


def _tap_mask(p, col, dh, dw, H, W):
    """Validity mask (HW, 1) bool for the (dh, dw) shifted read; None == all valid."""
    conds = []
    if dh == -1:
        conds.append(p >= W)                 # needs row h-1 >= 0
    elif dh == 1:
        conds.append(p < (H - 1) * W)        # needs row h+1 <  H
    if dw == -1:
        conds.append(col >= 1)               # needs col w-1 >= 0
    elif dw == 1:
        conds.append(col < W - 1)            # needs col w+1 <  W
    if not conds:
        return None
    m = conds[0]
    for c in conds[1:]:
        m = jnp.logical_and(m, c)
    return m


def _conv3x3_from_scratch(src_ref, w_ref, bias, p, col, *, H, W, M):
    """3x3 'same' conv as 9 shifted (HW, Cin) x (Cin, Cout) MXU matmuls.

    src_ref: VMEM scratch (HW + 2*M, Cin). Valid data lives in rows [M, M+HW)
    as the row-major (h*W + w) flattened feature map. A read shifted by
    d = dh*W + dw stays inside the scratch (M >= W+1); out-of-image taps are
    masked to zero before hitting the MXU, so the margin rows never need init.
    """
    HW = H * W
    cout = w_ref.shape[-1]
    # Fold the bias into the accumulator init (single broadcast, hoisted).
    acc = jnp.broadcast_to(bias, (HW, cout)).astype(jnp.float32)
    for dh in (-1, 0, 1):
        for dw in (-1, 0, 1):
            k = (dh + 1) * 3 + (dw + 1)                      # tap index kh*3 + kw
            shifted = src_ref[pl.ds(M + dh * W + dw, HW), :]  # (HW, Cin)
            mask = _tap_mask(p, col, dh, dw, H, W)
            if mask is not None:
                shifted = jnp.where(mask, shifted, 0.0)
            acc = acc + jnp.dot(shifted, w_ref[k],
                                preferred_element_type=jnp.float32)
    return acc


def _fused_double_conv_kernel(col_ref, x_ref, w1_ref, b1_ref, w2_ref, b2_ref,
                              o_ref, xs_ref, ys_ref, *, H, W, M):
    """One batch element per grid step: conv1 -> ReLU -> conv2, y1 kept in VMEM."""
    HW = H * W
    p = lax.broadcasted_iota(jnp.int32, (HW, 1), 0)   # flat position h*W + w
    col = col_ref[...]                                # (HW, 1) int32: w = p mod W

    # Stage the input image (HW, Cin) into the margin scratch, then conv1+ReLU.
    xs_ref[pl.ds(M, HW), :] = x_ref[0]
    y1 = _conv3x3_from_scratch(xs_ref, w1_ref, b1_ref[...], p, col, H=H, W=W, M=M)
    y1 = jnp.maximum(y1, 0.0)

    # y1 stays on-chip: write it into the second margin scratch and run conv2
    # directly on the VMEM-resident activation (no HBM round trip, no patches).
    ys_ref[pl.ds(M, HW), :] = y1
    y2 = _conv3x3_from_scratch(ys_ref, w2_ref, b2_ref[...], p, col, H=H, W=W, M=M)
    o_ref[0] = y2.astype(o_ref.dtype)


def fused_double_conv(xf, w1, b1, w2, b2, *, H, W):
    """xf: (N, H*W, Cin) row-major flattened NHWC. Returns (N, H*W, Cout2)."""
    N, HW, cin = xf.shape
    c1 = w1.shape[-1]
    c2 = w2.shape[-1]
    # Halo margin (rows) so every shifted read is a plain static slice.
    M = max(8, ((W + 1 + 7) // 8) * 8)

    w1f = w1.reshape(9, cin, c1)      # tap-major (kh*3+kw, Cin, Cout) weights
    w2f = w2.reshape(9, c1, c2)
    b1m = b1.reshape(1, c1)
    b2m = b2.reshape(1, c2)
    # Column index per flattened position, baked as a tiny int32 constant.
    col_idx = jnp.asarray((np.arange(HW) % W).reshape(HW, 1), dtype=jnp.int32)

    kernel = functools.partial(_fused_double_conv_kernel, H=H, W=W, M=M)

    return pl.pallas_call(
        kernel,
        out_shape=jax.ShapeDtypeStruct((N, HW, c2), xf.dtype),
        grid_spec=pltpu.PrefetchScalarGridSpec(
            num_scalar_prefetch=0,
            grid=(N,),
            in_specs=[
                pl.BlockSpec((HW, 1), lambda n: (0, 0)),          # col index
                pl.BlockSpec((1, HW, cin), lambda n: (n, 0, 0)),  # input image
                pl.BlockSpec((9, cin, c1), lambda n: (0, 0, 0)),  # conv1 weights
                pl.BlockSpec((1, c1), lambda n: (0, 0)),          # conv1 bias
                pl.BlockSpec((9, c1, c2), lambda n: (0, 0, 0)),   # conv2 weights
                pl.BlockSpec((1, c2), lambda n: (0, 0)),          # conv2 bias
            ],
            out_specs=pl.BlockSpec((1, HW, c2), lambda n: (n, 0, 0)),
            scratch_shapes=[
                pltpu.VMEM((HW + 2 * M, cin), jnp.float32),  # staged input
                pltpu.VMEM((HW + 2 * M, c1), jnp.float32),   # y1 (never hits HBM)
            ],
        ),
        compiler_params=pltpu.CompilerParams(
            dimension_semantics=("parallel",)),
    )(col_idx, xf, w1f, b1m, w2f, b2m)


def model_forward(v1, params):
    """v1: (N, 3, 3, H, W) float32 (dim=2 has size 3, as in the PyTorch module)."""
    w1, b1, w2, b2 = params

    # split_tensors = torch.split(v1, [1, 1, 1], dim=2)
    splits = tuple(v1[:, :, i:i + 1, :, :] for i in range(3))

    # split_tensors[0].squeeze(dim=2) -> (N, 3, H, W); convert NCHW -> (N, HW, C)
    x_nchw = v1[:, :, 0, :, :]
    N, C, H, W = x_nchw.shape
    xf = jnp.transpose(x_nchw, (0, 2, 3, 1)).reshape(N, H * W, C)

    # Fused conv1 + ReLU + conv2 in one Pallas kernel.
    y2 = fused_double_conv(xf, w1, b1, w2, b2, H=H, W=W)      # (N, HW, 64)
    y2 = y2.reshape(N, H, W, w2.shape[-1])

    # torch.cat(y, dim=2) with y: (N, 64, H, W) iterates over batch ->
    # result[c, h, n*W + w] = y[n, c, h, w]
    Cout = y2.shape[-1]
    concatenated = jnp.transpose(y2, (3, 1, 0, 2)).reshape(Cout, H, N * W)

    return concatenated, splits


def init_params(key):
    """Deterministic init matching PyTorch Conv2d default (uniform +-1/sqrt(fan_in)).

    Weights stored directly in HWIO layout (3, 3, Cin, Cout)."""
    k1, k2, k3, k4 = jax.random.split(key, 4)
    bound1 = 1.0 / jnp.sqrt(3.0 * 9.0)
    bound2 = 1.0 / jnp.sqrt(32.0 * 9.0)
    w1 = jax.random.uniform(k1, (3, 3, 3, 32), jnp.float32, -bound1, bound1)
    b1 = jax.random.uniform(k2, (32,), jnp.float32, -bound1, bound1)
    w2 = jax.random.uniform(k3, (3, 3, 32, 64), jnp.float32, -bound2, bound2)
    b2 = jax.random.uniform(k4, (64,), jnp.float32, -bound2, bound2)
    return (w1, b1, w2, b2)


def _reference_forward(v1, params):
    """Pure-JAX reference (lax convs) for correctness checking."""
    w1, b1, w2, b2 = params
    x = jnp.transpose(v1[:, :, 0, :, :], (0, 2, 3, 1))  # NHWC
    dn = ("NHWC", "HWIO", "NHWC")
    y1 = lax.conv_general_dilated(x, w1, (1, 1), "SAME", dimension_numbers=dn) + b1
    y1 = jnp.maximum(y1, 0.0)
    y2 = lax.conv_general_dilated(y1, w2, (1, 1), "SAME", dimension_numbers=dn) + b2
    N, H, W, C = y2.shape
    return jnp.transpose(y2, (3, 1, 0, 2)).reshape(C, H, N * W)


if __name__ == "__main__":
    key = jax.random.PRNGKey(0)
    k_in, k_p = jax.random.split(key)

    N, H, W = 2, 16, 16
    v1 = jax.random.normal(k_in, (N, 3, 3, H, W), jnp.float32)
    params = init_params(k_p)

    concatenated, splits = jax.jit(model_forward)(v1, params)
    jax.block_until_ready(concatenated)
    for s in splits:
        jax.block_until_ready(s)

    # sanity checks
    assert concatenated.shape == (64, H, N * W), concatenated.shape
    assert all(s.shape == (N, 3, 1, H, W) for s in splits)
    ref = _reference_forward(v1, params)
    assert jnp.allclose(concatenated, ref, atol=1e-4, rtol=1e-4), (
        float(jnp.max(jnp.abs(concatenated - ref))))
    for i, s in enumerate(splits):
        assert jnp.array_equal(s, v1[:, :, i:i + 1, :, :])

    print("KERNEL_OK")
</pallas_src>

<mosaic_0001>
module attributes {stable_mosaic.version = 11 : i64} {
  func.func @_fused_double_conv_kernel(%arg0: i32, %arg1: memref<256x1xi32, #tpu.memory_space<vmem>>, %arg2: memref<1x256x3xf32, #tpu.memory_space<vmem>>, %arg3: memref<9x3x32xf32, #tpu.memory_space<vmem>>, %arg4: memref<1x32xf32, #tpu.memory_space<vmem>>, %arg5: memref<9x32x64xf32, #tpu.memory_space<vmem>>, %arg6: memref<1x64xf32, #tpu.memory_space<vmem>>, %arg7: memref<1x256x64xf32, #tpu.memory_space<vmem>>, %arg8: memref<304x3xf32, #tpu.memory_space<vmem>>, %arg9: memref<304x32xf32, #tpu.memory_space<vmem>>) attributes {dimension_semantics = [#tpu.dimension_semantics<parallel>], iteration_bounds = array<i64: 2>, scalar_prefetch = 0 : i64, scratch_operands = 2 : i64, tpu.core_type = #tpu.core_type<tc>, window_params = [{pipeline_mode = #tpu.pipeline_mode<synchronous>, transform_indices = @transform_0, window_bounds = array<i64: 256, 1>}, {transform_indices = @transform_1, window_bounds = array<i64: 1, 256, 3>}, {pipeline_mode = #tpu.pipeline_mode<synchronous>, transform_indices = @transform_2, window_bounds = array<i64: 9, 3, 32>}, {pipeline_mode = #tpu.pipeline_mode<synchronous>, transform_indices = @transform_3, window_bounds = array<i64: 1, 32>}, {pipeline_mode = #tpu.pipeline_mode<synchronous>, transform_indices = @transform_4, window_bounds = array<i64: 9, 32, 64>}, {pipeline_mode = #tpu.pipeline_mode<synchronous>, transform_indices = @transform_5, window_bounds = array<i64: 1, 64>}, {transform_indices = @transform_6, window_bounds = array<i64: 1, 256, 64>}]} {
    %0 = tpu.iota {dimensions = array<i32: 0>} : vector<256x1xi32>
    %c0 = arith.constant 0 : index
    %c0_0 = arith.constant 0 : index
    %1 = vector.load %arg1[%c0, %c0_0] : memref<256x1xi32, #tpu.memory_space<vmem>>, vector<256x1xi32>
    %c0_1 = arith.constant 0 : index
    %c0_2 = arith.constant 0 : index
    %c0_3 = arith.constant 0 : index
    %2 = vector.load %arg2[%c0_1, %c0_2, %c0_3] : memref<1x256x3xf32, #tpu.memory_space<vmem>>, vector<1x256x3xf32>
    %3 = vector.shape_cast %2 : vector<1x256x3xf32> to vector<256x3xf32>
    %c24 = arith.constant 24 : index
    %c0_4 = arith.constant 0 : index
    %4 = vector.load %arg8[%c24, %c0_4] : memref<304x3xf32, #tpu.memory_space<vmem>>, vector<256x3xf32>
    tpu.vector_store %arg8[%c24, %c0_4], %3 {strides = array<i32>} : memref<304x3xf32, #tpu.memory_space<vmem>>, vector<256x3xf32>,
    %c0_5 = arith.constant 0 : index
    %c0_6 = arith.constant 0 : index
    %5 = vector.load %arg4[%c0_5, %c0_6] : memref<1x32xf32, #tpu.memory_space<vmem>>, vector<1x32xf32>
    %6 = vector.shape_cast %5 : vector<1x32xf32> to vector<1x32xf32>
    %7 = vector.broadcast %6 : vector<1x32xf32> to vector<256x32xf32>
    %c7 = arith.constant 7 : index
    %c0_7 = arith.constant 0 : index
    %8 = vector.load %arg8[%c7, %c0_7] : memref<304x3xf32, #tpu.memory_space<vmem>>, vector<256x3xf32>
    %c16_i32 = arith.constant 16 : i32
    %9 = vector.broadcast %c16_i32 : i32 to vector<256x1xi32>
    %10 = arith.cmpi sge, %0, %9 : vector<256x1xi32>
    %c1_i32 = arith.constant 1 : i32
    %11 = vector.broadcast %c1_i32 : i32 to vector<256x1xi32>
    %12 = arith.cmpi sge, %1, %11 : vector<256x1xi32>
    %13 = arith.andi %10, %12 : vector<256x1xi1>
    %cst = arith.constant 0.000000e+00 : f32
    %14 = vector.shape_cast %13 : vector<256x1xi1> to vector<256x1xi1>
    %15 = vector.broadcast %14 : vector<256x1xi1> to vector<256x3xi1>
    %16 = vector.broadcast %cst : f32 to vector<256x3xf32>
    %17 = arith.select %15, %8, %16 : vector<256x3xi1>, vector<256x3xf32>
    %c0_8 = arith.constant 0 : index
    %c0_9 = arith.constant 0 : index
    %c0_10 = arith.constant 0 : index
    %18 = vector.load %arg3[%c0_8, %c0_9, %c0_10] : memref<9x3x32xf32, #tpu.memory_space<vmem>>, vector<1x3x32xf32>
    %19 = vector.shape_cast %18 : vector<1x3x32xf32> to vector<3x32xf32>
    %cst_11 = arith.constant dense<0.000000e+00> : vector<256x32xf32>
    %20 = tpu.matmul %17, %19, %cst_11 {dimension_numbers = #tpu.dot_dimension_numbers<[1], [0], [0], [1], [0, 0, 1, 1], [], []>} : vector<256x3xf32>, vector<3x32xf32>, vector<256x32xf32> -> vector<256x32xf32>
    %21 = arith.addf %7, %20 : vector<256x32xf32>
    %c8 = arith.constant 8 : index
    %c0_12 = arith.constant 0 : index
    %22 = vector.load %arg8[%c8, %c0_12] : memref<304x3xf32, #tpu.memory_space<vmem>>, vector<256x3xf32>
    %c16_i32_13 = arith.constant 16 : i32
    %23 = vector.broadcast %c16_i32_13 : i32 to vector<256x1xi32>
    %24 = arith.cmpi sge, %0, %23 : vector<256x1xi32>
    %cst_14 = arith.constant 0.000000e+00 : f32
    %25 = vector.shape_cast %24 : vector<256x1xi1> to vector<256x1xi1>
    %26 = vector.broadcast %25 : vector<256x1xi1> to vector<256x3xi1>
    %27 = vector.broadcast %cst_14 : f32 to vector<256x3xf32>
    %28 = arith.select %26, %22, %27 : vector<256x3xi1>, vector<256x3xf32>
    %c1 = arith.constant 1 : index
    %c0_15 = arith.constant 0 : index
    %c0_16 = arith.constant 0 : index
    %29 = vector.load %arg3[%c1, %c0_15, %c0_16] : memref<9x3x32xf32, #tpu.memory_space<vmem>>, vector<1x3x32xf32>
    %30 = vector.shape_cast %29 : vector<1x3x32xf32> to vector<3x32xf32>
    %cst_17 = arith.constant dense<0.000000e+00> : vector<256x32xf32>
    %31 = tpu.matmul %28, %30, %cst_17 {dimension_numbers = #tpu.dot_dimension_numbers<[1], [0], [0], [1], [0, 0, 1, 1], [], []>} : vector<256x3xf32>, vector<3x32xf32>, vector<256x32xf32> -> vector<256x32xf32>
    %32 = arith.addf %21, %31 : vector<256x32xf32>
    %c9 = arith.constant 9 : index
    %c0_18 = arith.constant 0 : index
    %33 = vector.load %arg8[%c9, %c0_18] : memref<304x3xf32, #tpu.memory_space<vmem>>, vector<256x3xf32>
    %c16_i32_19 = arith.constant 16 : i32
    %34 = vector.broadcast %c16_i32_19 : i32 to vector<256x1xi32>
    %35 = arith.cmpi sge, %0, %34 : vector<256x1xi32>
    %c15_i32 = arith.constant 15 : i32
    %36 = vector.broadcast %c15_i32 : i32 to vector<256x1xi32>
    %37 = arith.cmpi slt, %1, %36 : vector<256x1xi32>
    %38 = arith.andi %35, %37 : vector<256x1xi1>
    %cst_20 = arith.constant 0.000000e+00 : f32
    %39 = vector.shape_cast %38 : vector<256x1xi1> to vector<256x1xi1>
    %40 = vector.broadcast %39 : vector<256x1xi1> to vector<256x3xi1>
    %41 = vector.broadcast %cst_20 : f32 to vector<256x3xf32>
    %42 = arith.select %40, %33, %41 : vector<256x3xi1>, vector<256x3xf32>
    %c2 = arith.constant 2 : index
    %c0_21 = arith.constant 0 : index
    %c0_22 = arith.constant 0 : index
    %43 = vector.load %arg3[%c2, %c0_21, %c0_22] : memref<9x3x32xf32, #tpu.memory_space<vmem>>, vector<1x3x32xf32>
    %44 = vector.shape_cast %43 : vector<1x3x32xf32> to vector<3x32xf32>
    %cst_23 = arith.constant dense<0.000000e+00> : vector<256x32xf32>
    %45 = tpu.matmul %42, %44, %cst_23 {dimension_numbers = #tpu.dot_dimension_numbers<[1], [0], [0], [1], [0, 0, 1, 1], [], []>} : vector<256x3xf32>, vector<3x32xf32>, vector<256x32xf32> -> vector<256x32xf32>
    %46 = arith.addf %32, %45 : vector<256x32xf32>
    %c23 = arith.constant 23 : index
    %c0_24 = arith.constant 0 : index
    %47 = vector.load %arg8[%c23, %c0_24] : memref<304x3xf32, #tpu.memory_space<vmem>>, vector<256x3xf32>
    %c1_i32_25 = arith.constant 1 : i32
    %48 = vector.broadcast %c1_i32_25 : i32 to vector<256x1xi32>
    %49 = arith.cmpi sge, %1, %48 : vector<256x1xi32>
    %cst_26 = arith.constant 0.000000e+00 : f32
    %50 = vector.shape_cast %49 : vector<256x1xi1> to vector<256x1xi1>
    %51 = vector.broadcast %50 : vector<256x1xi1> to vector<256x3xi1>
    %52 = vector.broadcast %cst_26 : f32 to vector<256x3xf32>
    %53 = arith.select %51, %47, %52 : vector<256x3xi1>, vector<256x3xf32>
    %c3 = arith.constant 3 : index
    %c0_27 = arith.constant 0 : index
    %c0_28 = arith.constant 0 : index
    %54 = vector.load %arg3[%c3, %c0_27, %c0_28] : memref<9x3x32xf32, #tpu.memory_space<vmem>>, vector<1x3x32xf32>
    %55 = vector.shape_cast %54 : vector<1x3x32xf32> to vector<3x32xf32>
    %cst_29 = arith.constant dense<0.000000e+00> : vector<256x32xf32>
    %56 = tpu.matmul %53, %55, %cst_29 {dimension_numbers = #tpu.dot_dimension_numbers<[1], [0], [0], [1], [0, 0, 1, 1], [], []>} : vector<256x3xf32>, vector<3x32xf32>, vector<256x32xf32> -> vector<256x32xf32>
    %57 = arith.addf %46, %56 : vector<256x32xf32>
    %c24_30 = arith.constant 24 : index
    %c0_31 = arith.constant 0 : index
    %58 = vector.load %arg8[%c24_30, %c0_31] : memref<304x3xf32, #tpu.memory_space<vmem>>, vector<256x3xf32>
    %c4 = arith.constant 4 : index
    %c0_32 = arith.constant 0 : index
    %c0_33 = arith.constant 0 : index
    %59 = vector.load %arg3[%c4, %c0_32, %c0_33] : memref<9x3x32xf32, #tpu.memory_space<vmem>>, vector<1x3x32xf32>
    %60 = vector.shape_cast %59 : vector<1x3x32xf32> to vector<3x32xf32>
    %cst_34 = arith.constant dense<0.000000e+00> : vector<256x32xf32>
    %61 = tpu.matmul %58, %60, %cst_34 {dimension_numbers = #tpu.dot_dimension_numbers<[1], [0], [0], [1], [0, 0, 1, 1], [], []>} : vector<256x3xf32>, vector<3x32xf32>, vector<256x32xf32> -> vector<256x32xf32>
    %62 = arith.addf %57, %61 : vector<256x32xf32>
    %c25 = arith.constant 25 : index
    %c0_35 = arith.constant 0 : index
    %63 = vector.load %arg8[%c25, %c0_35] : memref<304x3xf32, #tpu.memory_space<vmem>>, vector<256x3xf32>
    %c15_i32_36 = arith.constant 15 : i32
    %64 = vector.broadcast %c15_i32_36 : i32 to vector<256x1xi32>
    %65 = arith.cmpi slt, %1, %64 : vector<256x1xi32>
    %cst_37 = arith.constant 0.000000e+00 : f32
    %66 = vector.shape_cast %65 : vector<256x1xi1> to vector<256x1xi1>
    %67 = vector.broadcast %66 : vector<256x1xi1> to vector<256x3xi1>
    %68 = vector.broadcast %cst_37 : f32 to vector<256x3xf32>
    %69 = arith.select %67, %63, %68 : vector<256x3xi1>, vector<256x3xf32>
    %c5 = arith.constant 5 : index
    %c0_38 = arith.constant 0 : index
    %c0_39 = arith.constant 0 : index
    %70 = vector.load %arg3[%c5, %c0_38, %c0_39] : memref<9x3x32xf32, #tpu.memory_space<vmem>>, vector<1x3x32xf32>
    %71 = vector.shape_cast %70 : vector<1x3x32xf32> to vector<3x32xf32>
    %cst_40 = arith.constant dense<0.000000e+00> : vector<256x32xf32>
    %72 = tpu.matmul %69, %71, %cst_40 {dimension_numbers = #tpu.dot_dimension_numbers<[1], [0], [0], [1], [0, 0, 1, 1], [], []>} : vector<256x3xf32>, vector<3x32xf32>, vector<256x32xf32> -> vector<256x32xf32>
    %73 = arith.addf %62, %72 : vector<256x32xf32>
    %c39 = arith.constant 39 : index
    %c0_41 = arith.constant 0 : index
    %74 = vector.load %arg8[%c39, %c0_41] : memref<304x3xf32, #tpu.memory_space<vmem>>, vector<256x3xf32>
    %c240_i32 = arith.constant 240 : i32
    %75 = vector.broadcast %c240_i32 : i32 to vector<256x1xi32>
    %76 = arith.cmpi slt, %0, %75 : vector<256x1xi32>
    %c1_i32_42 = arith.constant 1 : i32
    %77 = vector.broadcast %c1_i32_42 : i32 to vector<256x1xi32>
    %78 = arith.cmpi sge, %1, %77 : vector<256x1xi32>
    %79 = arith.andi %76, %78 : vector<256x1xi1>
    %cst_43 = arith.constant 0.000000e+00 : f32
    %80 = vector.shape_cast %79 : vector<256x1xi1> to vector<256x1xi1>
    %81 = vector.broadcast %80 : vector<256x1xi1> to vector<256x3xi1>
    %82 = vector.broadcast %cst_43 : f32 to vector<256x3xf32>
    %83 = arith.select %81, %74, %82 : vector<256x3xi1>, vector<256x3xf32>
    %c6 = arith.constant 6 : index
    %c0_44 = arith.constant 0 : index
    %c0_45 = arith.constant 0 : index
    %84 = vector.load %arg3[%c6, %c0_44, %c0_45] : memref<9x3x32xf32, #tpu.memory_space<vmem>>, vector<1x3x32xf32>
    %85 = vector.shape_cast %84 : vector<1x3x32xf32> to vector<3x32xf32>
    %cst_46 = arith.constant dense<0.000000e+00> : vector<256x32xf32>
    %86 = tpu.matmul %83, %85, %cst_46 {dimension_numbers = #tpu.dot_dimension_numbers<[1], [0], [0], [1], [0, 0, 1, 1], [], []>} : vector<256x3xf32>, vector<3x32xf32>, vector<256x32xf32> -> vector<256x32xf32>
    %87 = arith.addf %73, %86 : vector<256x32xf32>
    %c40 = arith.constant 40 : index
    %c0_47 = arith.constant 0 : index
    %88 = vector.load %arg8[%c40, %c0_47] : memref<304x3xf32, #tpu.memory_space<vmem>>, vector<256x3xf32>
    %c240_i32_48 = arith.constant 240 : i32
    %89 = vector.broadcast %c240_i32_48 : i32 to vector<256x1xi32>
    %90 = arith.cmpi slt, %0, %89 : vector<256x1xi32>
    %cst_49 = arith.constant 0.000000e+00 : f32
    %91 = vector.shape_cast %90 : vector<256x1xi1> to vector<256x1xi1>
    %92 = vector.broadcast %91 : vector<256x1xi1> to vector<256x3xi1>
    %93 = vector.broadcast %cst_49 : f32 to vector<256x3xf32>
    %94 = arith.select %92, %88, %93 : vector<256x3xi1>, vector<256x3xf32>
    %c7_50 = arith.constant 7 : index
    %c0_51 = arith.constant 0 : index
    %c0_52 = arith.constant 0 : index
    %95 = vector.load %arg3[%c7_50, %c0_51, %c0_52] : memref<9x3x32xf32, #tpu.memory_space<vmem>>, vector<1x3x32xf32>
    %96 = vector.shape_cast %95 : vector<1x3x32xf32> to vector<3x32xf32>
    %cst_53 = arith.constant dense<0.000000e+00> : vector<256x32xf32>
    %97 = tpu.matmul %94, %96, %cst_53 {dimension_numbers = #tpu.dot_dimension_numbers<[1], [0], [0], [1], [0, 0, 1, 1], [], []>} : vector<256x3xf32>, vector<3x32xf32>, vector<256x32xf32> -> vector<256x32xf32>
    %98 = arith.addf %87, %97 : vector<256x32xf32>
    %c41 = arith.constant 41 : index
    %c0_54 = arith.constant 0 : index
    %99 = vector.load %arg8[%c41, %c0_54] : memref<304x3xf32, #tpu.memory_space<vmem>>, vector<256x3xf32>
    %c240_i32_55 = arith.constant 240 : i32
    %100 = vector.broadcast %c240_i32_55 : i32 to vector<256x1xi32>
    %101 = arith.cmpi slt, %0, %100 : vector<256x1xi32>
    %c15_i32_56 = arith.constant 15 : i32
    %102 = vector.broadcast %c15_i32_56 : i32 to vector<256x1xi32>
    %103 = arith.cmpi slt, %1, %102 : vector<256x1xi32>
    %104 = arith.andi %101, %103 : vector<256x1xi1>
    %cst_57 = arith.constant 0.000000e+00 : f32
    %105 = vector.shape_cast %104 : vector<256x1xi1> to vector<256x1xi1>
    %106 = vector.broadcast %105 : vector<256x1xi1> to vector<256x3xi1>
    %107 = vector.broadcast %cst_57 : f32 to vector<256x3xf32>
    %108 = arith.select %106, %99, %107 : vector<256x3xi1>, vector<256x3xf32>
    %c8_58 = arith.constant 8 : index
    %c0_59 = arith.constant 0 : index
    %c0_60 = arith.constant 0 : index
    %109 = vector.load %arg3[%c8_58, %c0_59, %c0_60] : memref<9x3x32xf32, #tpu.memory_space<vmem>>, vector<1x3x32xf32>
    %110 = vector.shape_cast %109 : vector<1x3x32xf32> to vector<3x32xf32>
    %cst_61 = arith.constant dense<0.000000e+00> : vector<256x32xf32>
    %111 = tpu.matmul %108, %110, %cst_61 {dimension_numbers = #tpu.dot_dimension_numbers<[1], [0], [0], [1], [0, 0, 1, 1], [], []>} : vector<256x3xf32>, vector<3x32xf32>, vector<256x32xf32> -> vector<256x32xf32>
    %112 = arith.addf %98, %111 : vector<256x32xf32>
    %cst_62 = arith.constant 0.000000e+00 : f32
    %113 = vector.broadcast %cst_62 : f32 to vector<256x32xf32>
    %114 = arith.maximumf %112, %113 : vector<256x32xf32>
    %c24_63 = arith.constant 24 : index
    %c0_64 = arith.constant 0 : index
    %115 = vector.load %arg9[%c24_63, %c0_64] : memref<304x32xf32, #tpu.memory_space<vmem>>, vector<256x32xf32>
    tpu.vector_store %arg9[%c24_63, %c0_64], %114 {strides = array<i32>} : memref<304x32xf32, #tpu.memory_space<vmem>>, vector<256x32xf32>,
    %c0_65 = arith.constant 0 : index
    %c0_66 = arith.constant 0 : index
    %116 = vector.load %arg6[%c0_65, %c0_66] : memref<1x64xf32, #tpu.memory_space<vmem>>, vector<1x64xf32>
    %117 = vector.shape_cast %116 : vector<1x64xf32> to vector<1x64xf32>
    %118 = vector.broadcast %117 : vector<1x64xf32> to vector<256x64xf32>
    %c7_67 = arith.constant 7 : index
    %c0_68 = arith.constant 0 : index
    %119 = vector.load %arg9[%c7_67, %c0_68] : memref<304x32xf32, #tpu.memory_space<vmem>>, vector<256x32xf32>
    %c16_i32_69 = arith.constant 16 : i32
    %120 = vector.broadcast %c16_i32_69 : i32 to vector<256x1xi32>
    %121 = arith.cmpi sge, %0, %120 : vector<256x1xi32>
    %c1_i32_70 = arith.constant 1 : i32
    %122 = vector.broadcast %c1_i32_70 : i32 to vector<256x1xi32>
    %123 = arith.cmpi sge, %1, %122 : vector<256x1xi32>
    %124 = arith.andi %121, %123 : vector<256x1xi1>
    %cst_71 = arith.constant 0.000000e+00 : f32
    %125 = vector.shape_cast %124 : vector<256x1xi1> to vector<256x1xi1>
    %126 = vector.broadcast %125 : vector<256x1xi1> to vector<256x32xi1>
    %127 = vector.broadcast %cst_71 : f32 to vector<256x32xf32>
    %128 = arith.select %126, %119, %127 : vector<256x32xi1>, vector<256x32xf32>
    %c0_72 = arith.constant 0 : index
    %c0_73 = arith.constant 0 : index
    %c0_74 = arith.constant 0 : index
    %129 = vector.load %arg5[%c0_72, %c0_73, %c0_74] : memref<9x32x64xf32, #tpu.memory_space<vmem>>, vector<1x32x64xf32>
    %130 = vector.shape_cast %129 : vector<1x32x64xf32> to vector<32x64xf32>
    %cst_75 = arith.constant dense<0.000000e+00> : vector<256x64xf32>
    %131 = tpu.matmul %128, %130, %cst_75 {dimension_numbers = #tpu.dot_dimension_numbers<[1], [0], [0], [1], [0, 0, 1, 1], [], []>} : vector<256x32xf32>, vector<32x64xf32>, vector<256x64xf32> -> vector<256x64xf32>
    %132 = arith.addf %118, %131 : vector<256x64xf32>
    %c8_76 = arith.constant 8 : index
    %c0_77 = arith.constant 0 : index
    %133 = vector.load %arg9[%c8_76, %c0_77] : memref<304x32xf32, #tpu.memory_space<vmem>>, vector<256x32xf32>
    %c16_i32_78 = arith.constant 16 : i32
    %134 = vector.broadcast %c16_i32_78 : i32 to vector<256x1xi32>
    %135 = arith.cmpi sge, %0, %134 : vector<256x1xi32>
    %cst_79 = arith.constant 0.000000e+00 : f32
    %136 = vector.shape_cast %135 : vector<256x1xi1> to vector<256x1xi1>
    %137 = vector.broadcast %136 : vector<256x1xi1> to vector<256x32xi1>
    %138 = vector.broadcast %cst_79 : f32 to vector<256x32xf32>
    %139 = arith.select %137, %133, %138 : vector<256x32xi1>, vector<256x32xf32>
    %c1_80 = arith.constant 1 : index
    %c0_81 = arith.constant 0 : index
    %c0_82 = arith.constant 0 : index
    %140 = vector.load %arg5[%c1_80, %c0_81, %c0_82] : memref<9x32x64xf32, #tpu.memory_space<vmem>>, vector<1x32x64xf32>
    %141 = vector.shape_cast %140 : vector<1x32x64xf32> to vector<32x64xf32>
    %cst_83 = arith.constant dense<0.000000e+00> : vector<256x64xf32>
    %142 = tpu.matmul %139, %141, %cst_83 {dimension_numbers = #tpu.dot_dimension_numbers<[1], [0], [0], [1], [0, 0, 1, 1], [], []>} : vector<256x32xf32>, vector<32x64xf32>, vector<256x64xf32> -> vector<256x64xf32>
    %143 = arith.addf %132, %142 : vector<256x64xf32>
    %c9_84 = arith.constant 9 : index
    %c0_85 = arith.constant 0 : index
    %144 = vector.load %arg9[%c9_84, %c0_85] : memref<304x32xf32, #tpu.memory_space<vmem>>, vector<256x32xf32>
    %c16_i32_86 = arith.constant 16 : i32
    %145 = vector.broadcast %c16_i32_86 : i32 to vector<256x1xi32>
    %146 = arith.cmpi sge, %0, %145 : vector<256x1xi32>
    %c15_i32_87 = arith.constant 15 : i32
    %147 = vector.broadcast %c15_i32_87 : i32 to vector<256x1xi32>
    %148 = arith.cmpi slt, %1, %147 : vector<256x1xi32>
    %149 = arith.andi %146, %148 : vector<256x1xi1>
    %cst_88 = arith.constant 0.000000e+00 : f32
    %150 = vector.shape_cast %149 : vector<256x1xi1> to vector<256x1xi1>
    %151 = vector.broadcast %150 : vector<256x1xi1> to vector<256x32xi1>
    %152 = vector.broadcast %cst_88 : f32 to vector<256x32xf32>
    %153 = arith.select %151, %144, %152 : vector<256x32xi1>, vector<256x32xf32>
    %c2_89 = arith.constant 2 : index
    %c0_90 = arith.constant 0 : index
    %c0_91 = arith.constant 0 : index
    %154 = vector.load %arg5[%c2_89, %c0_90, %c0_91] : memref<9x32x64xf32, #tpu.memory_space<vmem>>, vector<1x32x64xf32>
    %155 = vector.shape_cast %154 : vector<1x32x64xf32> to vector<32x64xf32>
    %cst_92 = arith.constant dense<0.000000e+00> : vector<256x64xf32>
    %156 = tpu.matmul %153, %155, %cst_92 {dimension_numbers = #tpu.dot_dimension_numbers<[1], [0], [0], [1], [0, 0, 1, 1], [], []>} : vector<256x32xf32>, vector<32x64xf32>, vector<256x64xf32> -> vector<256x64xf32>
    %157 = arith.addf %143, %156 : vector<256x64xf32>
    %c23_93 = arith.constant 23 : index
    %c0_94 = arith.constant 0 : index
    %158 = vector.load %arg9[%c23_93, %c0_94] : memref<304x32xf32, #tpu.memory_space<vmem>>, vector<256x32xf32>
    %c1_i32_95 = arith.constant 1 : i32
    %159 = vector.broadcast %c1_i32_95 : i32 to vector<256x1xi32>
    %160 = arith.cmpi sge, %1, %159 : vector<256x1xi32>
    %cst_96 = arith.constant 0.000000e+00 : f32
    %161 = vector.shape_cast %160 : vector<256x1xi1> to vector<256x1xi1>
    %162 = vector.broadcast %161 : vector<256x1xi1> to vector<256x32xi1>
    %163 = vector.broadcast %cst_96 : f32 to vector<256x32xf32>
    %164 = arith.select %162, %158, %163 : vector<256x32xi1>, vector<256x32xf32>
    %c3_97 = arith.constant 3 : index
    %c0_98 = arith.constant 0 : index
    %c0_99 = arith.constant 0 : index
    %165 = vector.load %arg5[%c3_97, %c0_98, %c0_99] : memref<9x32x64xf32, #tpu.memory_space<vmem>>, vector<1x32x64xf32>
    %166 = vector.shape_cast %165 : vector<1x32x64xf32> to vector<32x64xf32>
    %cst_100 = arith.constant dense<0.000000e+00> : vector<256x64xf32>
    %167 = tpu.matmul %164, %166, %cst_100 {dimension_numbers = #tpu.dot_dimension_numbers<[1], [0], [0], [1], [0, 0, 1, 1], [], []>} : vector<256x32xf32>, vector<32x64xf32>, vector<256x64xf32> -> vector<256x64xf32>
    %168 = arith.addf %157, %167 : vector<256x64xf32>
    %c24_101 = arith.constant 24 : index
    %c0_102 = arith.constant 0 : index
    %169 = vector.load %arg9[%c24_101, %c0_102] : memref<304x32xf32, #tpu.memory_space<vmem>>, vector<256x32xf32>
    %c4_103 = arith.constant 4 : index
    %c0_104 = arith.constant 0 : index
    %c0_105 = arith.constant 0 : index
    %170 = vector.load %arg5[%c4_103, %c0_104, %c0_105] : memref<9x32x64xf32, #tpu.memory_space<vmem>>, vector<1x32x64xf32>
    %171 = vector.shape_cast %170 : vector<1x32x64xf32> to vector<32x64xf32>
    %cst_106 = arith.constant dense<0.000000e+00> : vector<256x64xf32>
    %172 = tpu.matmul %169, %171, %cst_106 {dimension_numbers = #tpu.dot_dimension_numbers<[1], [0], [0], [1], [0, 0, 1, 1], [], []>} : vector<256x32xf32>, vector<32x64xf32>, vector<256x64xf32> -> vector<256x64xf32>
    %173 = arith.addf %168, %172 : vector<256x64xf32>
    %c25_107 = arith.constant 25 : index
    %c0_108 = arith.constant 0 : index
    %174 = vector.load %arg9[%c25_107, %c0_108] : memref<304x32xf32, #tpu.memory_space<vmem>>, vector<256x32xf32>
    %c15_i32_109 = arith.constant 15 : i32
    %175 = vector.broadcast %c15_i32_109 : i32 to vector<256x1xi32>
    %176 = arith.cmpi slt, %1, %175 : vector<256x1xi32>
    %cst_110 = arith.constant 0.000000e+00 : f32
    %177 = vector.shape_cast %176 : vector<256x1xi1> to vector<256x1xi1>
    %178 = vector.broadcast %177 : vector<256x1xi1> to vector<256x32xi1>
    %179 = vector.broadcast %cst_110 : f32 to vector<256x32xf32>
    %180 = arith.select %178, %174, %179 : vector<256x32xi1>, vector<256x32xf32>
    %c5_111 = arith.constant 5 : index
    %c0_112 = arith.constant 0 : index
    %c0_113 = arith.constant 0 : index
    %181 = vector.load %arg5[%c5_111, %c0_112, %c0_113] : memref<9x32x64xf32, #tpu.memory_space<vmem>>, vector<1x32x64xf32>
    %182 = vector.shape_cast %181 : vector<1x32x64xf32> to vector<32x64xf32>
    %cst_114 = arith.constant dense<0.000000e+00> : vector<256x64xf32>
    %183 = tpu.matmul %180, %182, %cst_114 {dimension_numbers = #tpu.dot_dimension_numbers<[1], [0], [0], [1], [0, 0, 1, 1], [], []>} : vector<256x32xf32>, vector<32x64xf32>, vector<256x64xf32> -> vector<256x64xf32>
    %184 = arith.addf %173, %183 : vector<256x64xf32>
    %c39_115 = arith.constant 39 : index
    %c0_116 = arith.constant 0 : index
    %185 = vector.load %arg9[%c39_115, %c0_116] : memref<304x32xf32, #tpu.memory_space<vmem>>, vector<256x32xf32>
    %c240_i32_117 = arith.constant 240 : i32
    %186 = vector.broadcast %c240_i32_117 : i32 to vector<256x1xi32>
    %187 = arith.cmpi slt, %0, %186 : vector<256x1xi32>
    %c1_i32_118 = arith.constant 1 : i32
    %188 = vector.broadcast %c1_i32_118 : i32 to vector<256x1xi32>
    %189 = arith.cmpi sge, %1, %188 : vector<256x1xi32>
    %190 = arith.andi %187, %189 : vector<256x1xi1>
    %cst_119 = arith.constant 0.000000e+00 : f32
    %191 = vector.shape_cast %190 : vector<256x1xi1> to vector<256x1xi1>
    %192 = vector.broadcast %191 : vector<256x1xi1> to vector<256x32xi1>
    %193 = vector.broadcast %cst_119 : f32 to vector<256x32xf32>
    %194 = arith.select %192, %185, %193 : vector<256x32xi1>, vector<256x32xf32>
    %c6_120 = arith.constant 6 : index
    %c0_121 = arith.constant 0 : index
    %c0_122 = arith.constant 0 : index
    %195 = vector.load %arg5[%c6_120, %c0_121, %c0_122] : memref<9x32x64xf32, #tpu.memory_space<vmem>>, vector<1x32x64xf32>
    %196 = vector.shape_cast %195 : vector<1x32x64xf32> to vector<32x64xf32>
    %cst_123 = arith.constant dense<0.000000e+00> : vector<256x64xf32>
    %197 = tpu.matmul %194, %196, %cst_123 {dimension_numbers = #tpu.dot_dimension_numbers<[1], [0], [0], [1], [0, 0, 1, 1], [], []>} : vector<256x32xf32>, vector<32x64xf32>, vector<256x64xf32> -> vector<256x64xf32>
    %198 = arith.addf %184, %197 : vector<256x64xf32>
    %c40_124 = arith.constant 40 : index
    %c0_125 = arith.constant 0 : index
    %199 = vector.load %arg9[%c40_124, %c0_125] : memref<304x32xf32, #tpu.memory_space<vmem>>, vector<256x32xf32>
    %c240_i32_126 = arith.constant 240 : i32
    %200 = vector.broadcast %c240_i32_126 : i32 to vector<256x1xi32>
    %201 = arith.cmpi slt, %0, %200 : vector<256x1xi32>
    %cst_127 = arith.constant 0.000000e+00 : f32
    %202 = vector.shape_cast %201 : vector<256x1xi1> to vector<256x1xi1>
    %203 = vector.broadcast %202 : vector<256x1xi1> to vector<256x32xi1>
    %204 = vector.broadcast %cst_127 : f32 to vector<256x32xf32>
    %205 = arith.select %203, %199, %204 : vector<256x32xi1>, vector<256x32xf32>
    %c7_128 = arith.constant 7 : index
    %c0_129 = arith.constant 0 : index
    %c0_130 = arith.constant 0 : index
    %206 = vector.load %arg5[%c7_128, %c0_129, %c0_130] : memref<9x32x64xf32, #tpu.memory_space<vmem>>, vector<1x32x64xf32>
    %207 = vector.shape_cast %206 : vector<1x32x64xf32> to vector<32x64xf32>
    %cst_131 = arith.constant dense<0.000000e+00> : vector<256x64xf32>
    %208 = tpu.matmul %205, %207, %cst_131 {dimension_numbers = #tpu.dot_dimension_numbers<[1], [0], [0], [1], [0, 0, 1, 1], [], []>} : vector<256x32xf32>, vector<32x64xf32>, vector<256x64xf32> -> vector<256x64xf32>
    %209 = arith.addf %198, %208 : vector<256x64xf32>
    %c41_132 = arith.constant 41 : index
    %c0_133 = arith.constant 0 : index
    %210 = vector.load %arg9[%c41_132, %c0_133] : memref<304x32xf32, #tpu.memory_space<vmem>>, vector<256x32xf32>
    %c240_i32_134 = arith.constant 240 : i32
    %211 = vector.broadcast %c240_i32_134 : i32 to vector<256x1xi32>
    %212 = arith.cmpi slt, %0, %211 : vector<256x1xi32>
    %c15_i32_135 = arith.constant 15 : i32
    %213 = vector.broadcast %c15_i32_135 : i32 to vector<256x1xi32>
    %214 = arith.cmpi slt, %1, %213 : vector<256x1xi32>
    %215 = arith.andi %212, %214 : vector<256x1xi1>
    %cst_136 = arith.constant 0.000000e+00 : f32
    %216 = vector.shape_cast %215 : vector<256x1xi1> to vector<256x1xi1>
    %217 = vector.broadcast %216 : vector<256x1xi1> to vector<256x32xi1>
    %218 = vector.broadcast %cst_136 : f32 to vector<256x32xf32>
    %219 = arith.select %217, %210, %218 : vector<256x32xi1>, vector<256x32xf32>
    %c8_137 = arith.constant 8 : index
    %c0_138 = arith.constant 0 : index
    %c0_139 = arith.constant 0 : index
    %220 = vector.load %arg5[%c8_137, %c0_138, %c0_139] : memref<9x32x64xf32, #tpu.memory_space<vmem>>, vector<1x32x64xf32>
    %221 = vector.shape_cast %220 : vector<1x32x64xf32> to vector<32x64xf32>
    %cst_140 = arith.constant dense<0.000000e+00> : vector<256x64xf32>
    %222 = tpu.matmul %219, %221, %cst_140 {dimension_numbers = #tpu.dot_dimension_numbers<[1], [0], [0], [1], [0, 0, 1, 1], [], []>} : vector<256x32xf32>, vector<32x64xf32>, vector<256x64xf32> -> vector<256x64xf32>
    %223 = arith.addf %209, %222 : vector<256x64xf32>
    %c0_141 = arith.constant 0 : index
    %c0_142 = arith.constant 0 : index
    %c0_143 = arith.constant 0 : index
    %224 = vector.load %arg7[%c0_141, %c0_142, %c0_143] : memref<1x256x64xf32, #tpu.memory_space<vmem>>, vector<1x256x64xf32>
    %225 = vector.shape_cast %224 : vector<1x256x64xf32> to vector<256x64xf32>
    %226 = vector.shape_cast %223 : vector<256x64xf32> to vector<1x256x64xf32>
    tpu.vector_store %arg7[%c0_141, %c0_142, %c0_143], %226 {strides = array<i32>} : memref<1x256x64xf32, #tpu.memory_space<vmem>>, vector<1x256x64xf32>,
    return
  }
  func.func @transform_0(%arg0: i32) -> (i32, i32) {
    %c0_i32 = arith.constant 0 : i32
    %c0_i32_0 = arith.constant 0 : i32
    %c0_i32_1 = arith.constant 0 : i32
    return %c0_i32, %c0_i32_0 : i32, i32
  }
  func.func @transform_1(%arg0: i32) -> (i32, i32, i32) {
    %c0_i32 = arith.constant 0 : i32
    %c0_i32_0 = arith.constant 0 : i32
    %c0_i32_1 = arith.constant 0 : i32
    return %arg0, %c0_i32, %c0_i32_0 : i32, i32, i32
  }
  func.func @transform_2(%arg0: i32) -> (i32, i32, i32) {
    %c0_i32 = arith.constant 0 : i32
    %c0_i32_0 = arith.constant 0 : i32
    %c0_i32_1 = arith.constant 0 : i32
    %c0_i32_2 = arith.constant 0 : i32
    return %c0_i32, %c0_i32_0, %c0_i32_1 : i32, i32, i32
  }
  func.func @transform_3(%arg0: i32) -> (i32, i32) {
    %c0_i32 = arith.constant 0 : i32
    %c0_i32_0 = arith.constant 0 : i32
    %c0_i32_1 = arith.constant 0 : i32
    return %c0_i32, %c0_i32_0 : i32, i32
  }
  func.func @transform_4(%arg0: i32) -> (i32, i32, i32) {
    %c0_i32 = arith.constant 0 : i32
    %c0_i32_0 = arith.constant 0 : i32
    %c0_i32_1 = arith.constant 0 : i32
    %c0_i32_2 = arith.constant 0 : i32
    return %c0_i32, %c0_i32_0, %c0_i32_1 : i32, i32, i32
  }
  func.func @transform_5(%arg0: i32) -> (i32, i32) {
    %c0_i32 = arith.constant 0 : i32
    %c0_i32_0 = arith.constant 0 : i32
    %c0_i32_1 = arith.constant 0 : i32
    return %c0_i32, %c0_i32_0 : i32, i32
  }
  func.func @transform_6(%arg0: i32) -> (i32, i32, i32) {
    %c0_i32 = arith.constant 0 : i32
    %c0_i32_0 = arith.constant 0 : i32
    %c0_i32_1 = arith.constant 0 : i32
    return %arg0, %c0_i32, %c0_i32_0 : i32, i32, i32
  }
}

</mosaic_0001>

<llo_original>
// kernel: model_forward.1
$region0: #{model_forward.1}
  #allocation0 [shape = 'u32[]', space=smem, size = 0x4, offset = 0x4, fixed_abs, tag = 'smem constant byte address 0x4 - core index']
  #allocation1 [shape = 'u32[144,128]{1,0:T(1,128)}', space=vmem, size = 0x12000, scoped, tag = 'internal scratch']
  #allocation2 [shape = 'f32[304,3]{1,0:T(8,128)}', space=vmem, size = 0x26000, scoped, tag = 'scratch operand']
  #allocation3 [shape = 'f32[304,32]{1,0:T(8,128)}', space=vmem, size = 0x26000, scoped, tag = 'scratch operand']
  %s0 = inlined_call_operand.vmem [shape: s32[256,1], index: 0, kind: input, shape index: {}]
  %s1 = inlined_call_operand.vmem [shape: f32[2,256,3], index: 1, kind: input, shape index: {}]
  %s2 = inlined_call_operand.vmem [shape: f32[9,3,32], index: 2, kind: input, shape index: {}]
  %s3 = inlined_call_operand.vmem [shape: f32[1,32], index: 3, kind: input, shape index: {}]
  %s4 = inlined_call_operand.vmem [shape: f32[9,32,64], index: 4, kind: input, shape index: {}]
  %s5 = inlined_call_operand.vmem [shape: f32[1,64], index: 5, kind: input, shape index: {}]
  %s6 = inlined_call_operand.vmem [shape: f32[2,256,64], index: 6, kind: output, shape index: {}]
  %s7 = sld [smem:[#allocation0]]
  $region57: #{model_forward.1} parent=0
    _
  %s9 = ssub.s32 1, %s7
  %s10 = scalar_select 0, %s9, %s7
  loop: start=0, step=1, limit=4
  $region2: #{model_forward.1} parent=0 // loop_pre_header
    _
  $region3: #{model_forward.1} parent=0 // loop_header
    %s12 = sphi 0, %s16
    %p13 = scmp.ge.s32.totalorder %s12, 4
    %s20 = sphi 0, %s20
    %s22 = sphi 0, %s20
    %s23 = sphi 0, %s22
    %s37 = sphi 0, %s23
    %s43 = sphi 0, %s45
    %s46 = sphi 0, %s43
    %s47 = sphi 0, %s46
    %s63 = sphi 0, %s47
    %s67 = sphi 0, %s67
    %s69 = sphi 0, %s67
    %s70 = sphi 0, %s69
    %s84 = sphi 0, %s70
    %s88 = sphi 0, %s88
    %s90 = sphi 0, %s88
    %s91 = sphi 0, %s90
    %s105 = sphi 0, %s91
    %s109 = sphi 0, %s109
    %s111 = sphi 0, %s109
    %s112 = sphi 0, %s111
    %s126 = sphi 0, %s112
    %s130 = sphi 0, %s130
    %s132 = sphi 0, %s130
    %s133 = sphi 0, %s132
    %s147 = sphi 0, %s133
    %s153 = sphi 0, %s155
    %s156 = sphi 0, %s153
    %s157 = sphi 0, %s156
    %s173 = sphi 0, %s157
  $region4: #{model_forward.1} parent=0 // loop_header_branch
    %15 = sbr.rel (%p13) target = $region8
  $region5: #{model_forward.1} parent=0 // loop_body
    %s17 = ssub.s32 %s12, 1
    %s18 = ssub.s32 %s12, 2
    %s19 = sadd.s32 %s12, 1
    %s21 = sadd.s32 %s20, 1
    %p24 = scmp.eq.s32.totalorder %s12, 1
    %p25 = scmp.ne.s32.totalorder %s20, %s22
    %p26 = scmp.eq.s32.totalorder %s12, 0
    %p27 = por %p25, %p26
    %p28 = scmp.ne.s32.totalorder %s20, %s22
    %p29 = scmp.eq.s32.totalorder %s17, 1
    %p30 = por %p28, %p29
    %p31 = scmp.ne.s32.totalorder %s22, %s23
    %p32 = scmp.eq.s32.totalorder %s17, 0
    %p33 = por %p31, %p32
    %p34 = scmp.ne.s32.totalorder %s22, %s23
    %p35 = scmp.eq.s32.totalorder %s18, 1
    %p36 = por %p34, %p35
    %p38 = scmp.ne.s32.totalorder %s23, %s37
    %p39 = scmp.eq.s32.totalorder %s18, 0
    %p40 = por %p38, %p39
    %s41 = ssub.s32 %s12, %s19
    %p42 = scmp.eq.s32.totalorder %s41, 0
    %s44 = sadd.s32 %s43, 1
    %s45 = scalar_select %p42, %s43, %s44
    %p48 = pneg %p42
    %p49 = scmp.eq.s32.totalorder %s12, 1
    %p50 = por %p48, %p49
    %p51 = scmp.ne.s32.totalorder %s43, %s46
    %p52 = scmp.eq.s32.totalorder %s12, 0
    %p53 = por %p51, %p52
    %p54 = scmp.ne.s32.totalorder %s43, %s46
    %p55 = scmp.eq.s32.totalorder %s17, 1
    %p56 = por %p54, %p55
    %p57 = scmp.ne.s32.totalorder %s46, %s47
    %p58 = scmp.eq.s32.totalorder %s17, 0
    %p59 = por %p57, %p58
    %p60 = scmp.ne.s32.totalorder %s46, %s47
    %p61 = scmp.eq.s32.totalorder %s18, 1
    %p62 = por %p60, %p61
    %p64 = scmp.ne.s32.totalorder %s47, %s63
    %p65 = scmp.eq.s32.totalorder %s18, 0
    %p66 = por %p64, %p65
    %s68 = sadd.s32 %s67, 1
    %p71 = scmp.eq.s32.totalorder %s12, 1
    %p72 = scmp.ne.s32.totalorder %s67, %s69
    %p73 = scmp.eq.s32.totalorder %s12, 0
    %p74 = por %p72, %p73
    %p75 = scmp.ne.s32.totalorder %s67, %s69
    %p76 = scmp.eq.s32.totalorder %s17, 1
    %p77 = por %p75, %p76
    %p78 = scmp.ne.s32.totalorder %s69, %s70
    %p79 = scmp.eq.s32.totalorder %s17, 0
    %p80 = por %p78, %p79
    %p81 = scmp.ne.s32.totalorder %s69, %s70
    %p82 = scmp.eq.s32.totalorder %s18, 1
    %p83 = por %p81, %p82
    %p85 = scmp.ne.s32.totalorder %s70, %s84
    %p86 = scmp.eq.s32.totalorder %s18, 0
    %p87 = por %p85, %p86
    %s89 = sadd.s32 %s88, 1
    %p92 = scmp.eq.s32.totalorder %s12, 1
    %p93 = scmp.ne.s32.totalorder %s88, %s90
    %p94 = scmp.eq.s32.totalorder %s12, 0
    %p95 = por %p93, %p94
    %p96 = scmp.ne.s32.totalorder %s88, %s90
    %p97 = scmp.eq.s32.totalorder %s17, 1
    %p98 = por %p96, %p97
    %p99 = scmp.ne.s32.totalorder %s90, %s91
    %p100 = scmp.eq.s32.totalorder %s17, 0
    %p101 = por %p99, %p100
    %p102 = scmp.ne.s32.totalorder %s90, %s91
    %p103 = scmp.eq.s32.totalorder %s18, 1
    %p104 = por %p102, %p103
    %p106 = scmp.ne.s32.totalorder %s91, %s105
    %p107 = scmp.eq.s32.totalorder %s18, 0
    %p108 = por %p106, %p107
    %s110 = sadd.s32 %s109, 1
    %p113 = scmp.eq.s32.totalorder %s12, 1
    %p114 = scmp.ne.s32.totalorder %s109, %s111
    %p115 = scmp.eq.s32.totalorder %s12, 0
    %p116 = por %p114, %p115
    %p117 = scmp.ne.s32.totalorder %s109, %s111
    %p118 = scmp.eq.s32.totalorder %s17, 1
    %p119 = por %p117, %p118
    %p120 = scmp.ne.s32.totalorder %s111, %s112
    %p121 = scmp.eq.s32.totalorder %s17, 0
    %p122 = por %p120, %p121
    %p123 = scmp.ne.s32.totalorder %s111, %s112
    %p124 = scmp.eq.s32.totalorder %s18, 1
    %p125 = por %p123, %p124
    %p127 = scmp.ne.s32.totalorder %s112, %s126
    %p128 = scmp.eq.s32.totalorder %s18, 0
    %p129 = por %p127, %p128
    %s131 = sadd.s32 %s130, 1
    %p134 = scmp.eq.s32.totalorder %s12, 1
    %p135 = scmp.ne.s32.totalorder %s130, %s132
    %p136 = scmp.eq.s32.totalorder %s12, 0
    %p137 = por %p135, %p136
    %p138 = scmp.ne.s32.totalorder %s130, %s132
    %p139 = scmp.eq.s32.totalorder %s17, 1
    %p140 = por %p138, %p139
    %p141 = scmp.ne.s32.totalorder %s132, %s133
    %p142 = scmp.eq.s32.totalorder %s17, 0
    %p143 = por %p141, %p142
    %p144 = scmp.ne.s32.totalorder %s132, %s133
    %p145 = scmp.eq.s32.totalorder %s18, 1
    %p146 = por %p144, %p145
    %p148 = scmp.ne.s32.totalorder %s133, %s147
    %p149 = scmp.eq.s32.totalorder %s18, 0
    %p150 = por %p148, %p149
    %s151 = ssub.s32 %s12, %s19
    %p152 = scmp.eq.s32.totalorder %s151, 0
    %s154 = sadd.s32 %s153, 1
    %s155 = scalar_select %p152, %s153, %s154
    %p158 = pneg %p152
    %p159 = scmp.eq.s32.totalorder %s12, 1
    %p160 = por %p158, %p159
    %p161 = scmp.ne.s32.totalorder %s153, %s156
    %p162 = scmp.eq.s32.totalorder %s12, 0
    %p163 = por %p161, %p162
    %p164 = scmp.ne.s32.totalorder %s153, %s156
    %p165 = scmp.eq.s32.totalorder %s17, 1
    %p166 = por %p164, %p165
    %p167 = scmp.ne.s32.totalorder %s156, %s157
    %p168 = scmp.eq.s32.totalorder %s17, 0
    %p169 = por %p167, %p168
    %p170 = scmp.ne.s32.totalorder %s156, %s157
    %p171 = scmp.eq.s32.totalorder %s18, 1
    %p172 = por %p170, %p171
    %p174 = scmp.ne.s32.totalorder %s157, %s173
    %p175 = scmp.eq.s32.totalorder %s18, 0
    %p176 = por %p174, %p175
    %p177 = scmp.le.s32.totalorder 1, %s12
    %p178 = scmp.lt.s32.totalorder %s12, 3
    %p179 = pnand %p177, %p178
    %p180 = pneg %p179
    // Predicated region
    $region9: #{model_forward.1} parent=5 // pred_check
      _
    $region10: #{model_forward.1} parent=5 // pred_check_branch
      %182 = sbr.rel (%p179) target = $region12
    $region11: #{model_forward.1} parent=5 // pred_region
      %s183 = ssub.s32 %s12, 1
      // Predicated region
      $region13: #{model_forward.1} parent=11 // pred_check
        %p184 = pneg %p33
      $region14: #{model_forward.1} parent=11 // pred_check_branch
        %186 = sbr.rel (%p184) target = $region16
      $region15: #{model_forward.1} parent=11 // pred_region
        _
      $region16: #{model_forward.1} parent=11 // pred_fallthru
        _
      // Predicated region
      $region17: #{model_forward.1} parent=11 // pred_check
        %p187 = pneg %p80
      $region18: #{model_forward.1} parent=11 // pred_check_branch
        %189 = sbr.rel (%p187) target = $region20
      $region19: #{model_forward.1} parent=11 // pred_region
        _
      $region20: #{model_forward.1} parent=11 // pred_fallthru
        _
      // Predicated region
      $region21: #{model_forward.1} parent=11 // pred_check
        %p190 = pneg %p101
      $region22: #{model_forward.1} parent=11 // pred_check_branch
        %192 = sbr.rel (%p190) target = $region24
      $region23: #{model_forward.1} parent=11 // pred_region
        _
      $region24: #{model_forward.1} parent=11 // pred_fallthru
        _
      // Predicated region
      $region25: #{model_forward.1} parent=11 // pred_check
        %p193 = pneg %p122
      $region26: #{model_forward.1} parent=11 // pred_check_branch
        %195 = sbr.rel (%p193) target = $region28
      $region27: #{model_forward.1} parent=11 // pred_region
        _
      $region28: #{model_forward.1} parent=11 // pred_fallthru
        _
      // Predicated region
      $region29: #{model_forward.1} parent=11 // pred_check
        %p196 = pneg %p143
      $region30: #{model_forward.1} parent=11 // pred_check_branch
        %198 = sbr.rel (%p196) target = $region32
      $region31: #{model_forward.1} parent=11 // pred_region
        _
      $region32: #{model_forward.1} parent=11 // pred_fallthru
        _
    $region12: #{model_forward.1} parent=5 // pred_fallthru
      _
    %p199 = scmp.lt.s32.totalorder %s12, 2
    // Predicated region
    $region33: #{model_forward.1} parent=5 // pred_check
      %p200 = pneg %p199
    $region34: #{model_forward.1} parent=5 // pred_check_branch
      %202 = sbr.rel (%p200) target = $region36
    $region35: #{model_forward.1} parent=5 // pred_region
      // Predicated region
      $region37: #{model_forward.1} parent=35 // pred_check
        %p203 = pneg %p53
      $region38: #{model_forward.1} parent=35 // pred_check_branch
        %205 = sbr.rel (%p203) target = $region40
      $region39: #{model_forward.1} parent=35 // pred_region
        %p206 = scmp.lt.s32.totalorder %s12, 1
        %s207 = scalar_select %p206, %s12, 1
        %s208 = smul.addr %s207, 32
        %s209 = smul.addr %s208, 8
        %s210 = scalar_lea.vmem %s1, %s209
      $region40: #{model_forward.1} parent=35 // pred_fallthru
        _
    $region36: #{model_forward.1} parent=5 // pred_fallthru
      _
    %p211 = scmp.le.s32.totalorder 1, %s12
    %p212 = scmp.lt.s32.totalorder %s12, 3
    %p213 = pnand %p211, %p212
    %p214 = pneg %p213
    // Predicated region
    $region41: #{model_forward.1} parent=5 // pred_check
      _
    $region42: #{model_forward.1} parent=5 // pred_check_branch
      %216 = sbr.rel (%p213) target = $region44
    $region43: #{model_forward.1} parent=5 // pred_region
      %s217 = ssub.s32 %s12, 1
      %p218 = pneg %p33
      %p219 = pneg %p30
      %p220 = scmp.lt.s32.totalorder %s17, 1
      %s221 = scalar_select %p220, %s17, 1
      %s222 = smul.addr %s221, 32
      %s223 = smul.addr %s222, 8
      %s224 = scalar_lea.vmem %s1, %s223
      %p225 = pneg %p59
      %p226 = pneg %p56
      %p227 = pneg %p80
      %p228 = pneg %p77
      %p229 = pneg %p101
      %p230 = pneg %p98
      %p231 = pneg %p122
      %p232 = pneg %p119
      %p233 = pneg %p143
      %p234 = pneg %p140
      %p235 = pneg %p169
      %p236 = pneg %p166
      %p237 = scmp.lt.s32.totalorder %s17, 1
      %s238 = scalar_select %p237, %s17, 1
      %s239 = smul.addr %s238, 32
      %s240 = smul.addr %s239, 8
      %s241 = scalar_lea.vmem %s6, %s240
      %p242 = scmp.lt.s32.totalorder %s17, 1
      %s243 = scalar_select %p242, %s17, 1
      %s244 = smul.addr %s243, 32
      %s245 = smul.addr %s244, 8
      %s246 = scalar_lea.vmem %s1, %s245
      %p247 = scmp.lt.s32.totalorder %s17, 1
      %s248 = scalar_select %p247, %s17, 1
      %s249 = smul.addr %s248, 32
      %s250 = smul.addr %s249, 8
      %s251 = scalar_lea.vmem %s6, %s250
      %v252 = vlaneseq
      %v253 = vshrl.u32 %v252, 7
      %v254 = vadd.s32 %v253, 8
      %v255 = vadd.s32 %v253, 16
      %v256 = vadd.s32 %v253, 24
      %v257 = vadd.s32 %v253, 32
      %v258 = vadd.s32 %v253, 40
      %v259 = vadd.s32 %v253, 48
      %v260 = vadd.s32 %v253, 56
      %v261 = vadd.s32 %v253, 64
      %v262 = vadd.s32 %v253, 72
      %v263 = vadd.s32 %v253, 80
      %v264 = vadd.s32 %v253, 88
      %v265 = vadd.s32 %v253, 96
      %v266 = vadd.s32 %v253, 104
      %v267 = vadd.s32 %v253, 112
      %v268 = vadd.s32 %v253, 120
      %v269 = vadd.s32 %v253, 128
      %v270 = vadd.s32 %v253, 136
      %v271 = vadd.s32 %v253, 144
      %v272 = vadd.s32 %v253, 152
      %v273 = vadd.s32 %v253, 160
      %v274 = vadd.s32 %v253, 168
      %v275 = vadd.s32 %v253, 176
      %v276 = vadd.s32 %v253, 184
      %v277 = vadd.s32 %v253, 192
      %v278 = vadd.s32 %v253, 200
      %v279 = vadd.s32 %v253, 208
      %v280 = vadd.s32 %v253, 216
      %v281 = vadd.s32 %v253, 224
      %v282 = vadd.s32 %v253, 232
      %v283 = vadd.s32 %v253, 240
      %v284 = vadd.s32 %v253, 248
      %v285 = vld [vmem:[%s0] sm:$0xff]
      %v286 = vld [vmem:[%s0 + $0x8] sm:$0xff]
      %v287 = vld [vmem:[%s0 + $0x10] sm:$0xff]
      %v288 = vld [vmem:[%s0 + $0x18] sm:$0xff]
      %v289 = vld [vmem:[%s0 + $0x20] sm:$0xff]
      %v290 = vld [vmem:[%s0 + $0x28] sm:$0xff]
      %v291 = vld [vmem:[%s0 + $0x30] sm:$0xff]
      %v292 = vld [vmem:[%s0 + $0x38] sm:$0xff]
      %v293 = vld [vmem:[%s0 + $0x40] sm:$0xff]
      %v294 = vld [vmem:[%s0 + $0x48] sm:$0xff]
      %v295 = vld [vmem:[%s0 + $0x50] sm:$0xff]
      %v296 = vld [vmem:[%s0 + $0x58] sm:$0xff]
      %v297 = vld [vmem:[%s0 + $0x60] sm:$0xff]
      %v298 = vld [vmem:[%s0 + $0x68] sm:$0xff]
      %v299 = vld [vmem:[%s0 + $0x70] sm:$0xff]
      %v300 = vld [vmem:[%s0 + $0x78] sm:$0xff]
      %v301 = vld [vmem:[%s0 + $0x80] sm:$0xff]
      %v302 = vld [vmem:[%s0 + $0x88] sm:$0xff]
      %v303 = vld [vmem:[%s0 + $0x90] sm:$0xff]
      %v304 = vld [vmem:[%s0 + $0x98] sm:$0xff]
      %v305 = vld [vmem:[%s0 + $0xa0] sm:$0xff]
      %v306 = vld [vmem:[%s0 + $0xa8] sm:$0xff]
      %v307 = vld [vmem:[%s0 + $0xb0] sm:$0xff]
      %v308 = vld [vmem:[%s0 + $0xb8] sm:$0xff]
      %v309 = vld [vmem:[%s0 + $0xc0] sm:$0xff]
      %v310 = vld [vmem:[%s0 + $0xc8] sm:$0xff]
      %v311 = vld [vmem:[%s0 + $0xd0] sm:$0xff]
      %v312 = vld [vmem:[%s0 + $0xd8] sm:$0xff]
      %v313 = vld [vmem:[%s0 + $0xe0] sm:$0xff]
      %v314 = vld [vmem:[%s0 + $0xe8] sm:$0xff]
      %v315 = vld [vmem:[%s0 + $0xf0] sm:$0xff]
      %v316 = vld [vmem:[%s0 + $0xf8] sm:$0xff]
      %v317 = vld [vmem:[%s246] sm:$0xff]
      %v318 = vld [vmem:[%s246 + $0x8] sm:$0xff]
      %v319 = vld [vmem:[%s246 + $0x10] sm:$0xff]
      %v320 = vld [vmem:[%s246 + $0x18] sm:$0xff]
      %v321 = vld [vmem:[%s246 + $0x20] sm:$0xff]
      %v322 = vld [vmem:[%s246 + $0x28] sm:$0xff]
      %v323 = vld [vmem:[%s246 + $0x30] sm:$0xff]
      %v324 = vld [vmem:[%s246 + $0x38] sm:$0xff]
      %v325 = vld [vmem:[%s246 + $0x40] sm:$0xff]
      %v326 = vld [vmem:[%s246 + $0x48] sm:$0xff]
      %v327 = vld [vmem:[%s246 + $0x50] sm:$0xff]
      %v328 = vld [vmem:[%s246 + $0x58] sm:$0xff]
      %v329 = vld [vmem:[%s246 + $0x60] sm:$0xff]
      %v330 = vld [vmem:[%s246 + $0x68] sm:$0xff]
      %v331 = vld [vmem:[%s246 + $0x70] sm:$0xff]
      %v332 = vld [vmem:[%s246 + $0x78] sm:$0xff]
      %v333 = vld [vmem:[%s246 + $0x80] sm:$0xff]
      %v334 = vld [vmem:[%s246 + $0x88] sm:$0xff]
      %v335 = vld [vmem:[%s246 + $0x90] sm:$0xff]
      %v336 = vld [vmem:[%s246 + $0x98] sm:$0xff]
      %v337 = vld [vmem:[%s246 + $0xa0] sm:$0xff]
      %v338 = vld [vmem:[%s246 + $0xa8] sm:$0xff]
      %v339 = vld [vmem:[%s246 + $0xb0] sm:$0xff]
      %v340 = vld [vmem:[%s246 + $0xb8] sm:$0xff]
      %v341 = vld [vmem:[%s246 + $0xc0] sm:$0xff]
      %v342 = vld [vmem:[%s246 + $0xc8] sm:$0xff]
      %v343 = vld [vmem:[%s246 + $0xd0] sm:$0xff]
      %v344 = vld [vmem:[%s246 + $0xd8] sm:$0xff]
      %v345 = vld [vmem:[%s246 + $0xe0] sm:$0xff]
      %v346 = vld [vmem:[%s246 + $0xe8] sm:$0xff]
      %v347 = vld [vmem:[%s246 + $0xf0] sm:$0xff]
      %v348 = vld [vmem:[%s246 + $0xf8] sm:$0xff]
      %vm349 = vcmask 23552
      %350 = vst.msk [vmem:[#allocation2 + $0x18] sm:$0xff] %vm349, %v317
      %351 = vst.msk [vmem:[#allocation2 + $0x20] sm:$0xff] %vm349, %v318
      %352 = vst.msk [vmem:[#allocation2 + $0x28] sm:$0xff] %vm349, %v319
      %353 = vst.msk [vmem:[#allocation2 + $0x30] sm:$0xff] %vm349, %v320
      %354 = vst.msk [vmem:[#allocation2 + $0x38] sm:$0xff] %vm349, %v321
      %355 = vst.msk [vmem:[#allocation2 + $0x40] sm:$0xff] %vm349, %v322
      %356 = vst.msk [vmem:[#allocation2 + $0x48] sm:$0xff] %vm349, %v323
      %357 = vst.msk [vmem:[#allocation2 + $0x50] sm:$0xff] %vm349, %v324
      %358 = vst.msk [vmem:[#allocation2 + $0x58] sm:$0xff] %vm349, %v325
      %359 = vst.msk [vmem:[#allocation2 + $0x60] sm:$0xff] %vm349, %v326
      %360 = vst.msk [vmem:[#allocation2 + $0x68] sm:$0xff] %vm349, %v327
      %361 = vst.msk [vmem:[#allocation2 + $0x70] sm:$0xff] %vm349, %v328
      %362 = vst.msk [vmem:[#allocation2 + $0x78] sm:$0xff] %vm349, %v329
      %363 = vst.msk [vmem:[#allocation2 + $0x80] sm:$0xff] %vm349, %v330
      %364 = vst.msk [vmem:[#allocation2 + $0x88] sm:$0xff] %vm349, %v331
      %365 = vst.msk [vmem:[#allocation2 + $0x90] sm:$0xff] %vm349, %v332
      %366 = vst.msk [vmem:[#allocation2 + $0x98] sm:$0xff] %vm349, %v333
      %367 = vst.msk [vmem:[#allocation2 + $0xa0] sm:$0xff] %vm349, %v334
      %368 = vst.msk [vmem:[#allocation2 + $0xa8] sm:$0xff] %vm349, %v335
      %369 = vst.msk [vmem:[#allocation2 + $0xb0] sm:$0xff] %vm349, %v336
      %370 = vst.msk [vmem:[#allocation2 + $0xb8] sm:$0xff] %vm349, %v337
      %371 = vst.msk [vmem:[#allocation2 + $0xc0] sm:$0xff] %vm349, %v338
      %372 = vst.msk [vmem:[#allocation2 + $0xc8] sm:$0xff] %vm349, %v339
      %373 = vst.msk [vmem:[#allocation2 + $0xd0] sm:$0xff] %vm349, %v340
      %374 = vst.msk [vmem:[#allocation2 + $0xd8] sm:$0xff] %vm349, %v341
      %375 = vst.msk [vmem:[#allocation2 + $0xe0] sm:$0xff] %vm349, %v342
      %376 = vst.msk [vmem:[#allocation2 + $0xe8] sm:$0xff] %vm349, %v343
      %377 = vst.msk [vmem:[#allocation2 + $0xf0] sm:$0xff] %vm349, %v344
      %378 = vst.msk [vmem:[#allocation2 + $0xf8] sm:$0xff] %vm349, %v345
      %379 = vst.msk [vmem:[#allocation2 + $0x100] sm:$0xff] %vm349, %v346
      %380 = vst.msk [vmem:[#allocation2 + $0x108] sm:$0xff] %vm349, %v347
      %381 = vst.msk [vmem:[#allocation2 + $0x110] sm:$0xff] %vm349, %v348
      %v382 = vld [vmem:[%s3] sm:$0x1]
      %v384 = vlaneseq
      %v385 = vshrl.u32 %v384, 7
      %v386 = vsub.s32 0, %v385
      %v387 = vrot.slane %v382, %v386
      %v389 = vld [vmem:[#allocation2 + $0x7] sm:$0xff]
      %v390 = vld [vmem:[#allocation2 + $0xf] sm:$0xff]
      %v391 = vld [vmem:[#allocation2 + $0x17] sm:$0xff]
      %v392 = vld [vmem:[#allocation2 + $0x1f] sm:$0xff]
      %v393 = vld [vmem:[#allocation2 + $0x27] sm:$0xff]
      %v394 = vld [vmem:[#allocation2 + $0x2f] sm:$0xff]
      %v395 = vld [vmem:[#allocation2 + $0x37] sm:$0xff]
      %v396 = vld [vmem:[#allocation2 + $0x3f] sm:$0xff]
      %v397 = vld [vmem:[#allocation2 + $0x47] sm:$0xff]
      %v398 = vld [vmem:[#allocation2 + $0x4f] sm:$0xff]
      %v399 = vld [vmem:[#allocation2 + $0x57] sm:$0xff]
      %v400 = vld [vmem:[#allocation2 + $0x5f] sm:$0xff]
      %v401 = vld [vmem:[#allocation2 + $0x67] sm:$0xff]
      %v402 = vld [vmem:[#allocation2 + $0x6f] sm:$0xff]
      %v403 = vld [vmem:[#allocation2 + $0x77] sm:$0xff]
      %v404 = vld [vmem:[#allocation2 + $0x7f] sm:$0xff]
      %v405 = vld [vmem:[#allocation2 + $0x87] sm:$0xff]
      %v406 = vld [vmem:[#allocation2 + $0x8f] sm:$0xff]
      %v407 = vld [vmem:[#allocation2 + $0x97] sm:$0xff]
      %v408 = vld [vmem:[#allocation2 + $0x9f] sm:$0xff]
      %v409 = vld [vmem:[#allocation2 + $0xa7] sm:$0xff]
      %v410 = vld [vmem:[#allocation2 + $0xaf] sm:$0xff]
      %v411 = vld [vmem:[#allocation2 + $0xb7] sm:$0xff]
      %v412 = vld [vmem:[#allocation2 + $0xbf] sm:$0xff]
      %v413 = vld [vmem:[#allocation2 + $0xc7] sm:$0xff]
      %v414 = vld [vmem:[#allocation2 + $0xcf] sm:$0xff]
      %v415 = vld [vmem:[#allocation2 + $0xd7] sm:$0xff]
      %v416 = vld [vmem:[#allocation2 + $0xdf] sm:$0xff]
      %v417 = vld [vmem:[#allocation2 + $0xe7] sm:$0xff]
      %v418 = vld [vmem:[#allocation2 + $0xef] sm:$0xff]
      %v419 = vld [vmem:[#allocation2 + $0xf7] sm:$0xff]
      %v420 = vld [vmem:[#allocation2 + $0xff] sm:$0xff]
      %vm421 = vcmp.ge.s32.totalorder %v253, 16
      %vm422 = vcmp.ge.s32.totalorder %v254, 16
      %vm423 = vcmp.ge.s32.totalorder %v255, 16
      %vm424 = vcmp.ge.s32.totalorder %v256, 16
      %vm425 = vcmp.ge.s32.totalorder %v257, 16
      %vm426 = vcmp.ge.s32.totalorder %v258, 16
      %vm427 = vcmp.ge.s32.totalorder %v259, 16
      %vm428 = vcmp.ge.s32.totalorder %v260, 16
      %vm429 = vcmp.ge.s32.totalorder %v261, 16
      %vm430 = vcmp.ge.s32.totalorder %v262, 16
      %vm431 = vcmp.ge.s32.totalorder %v263, 16
      %vm432 = vcmp.ge.s32.totalorder %v264, 16
      %vm433 = vcmp.ge.s32.totalorder %v265, 16
      %vm434 = vcmp.ge.s32.totalorder %v266, 16
      %vm435 = vcmp.ge.s32.totalorder %v267, 16
      %vm436 = vcmp.ge.s32.totalorder %v268, 16
      %vm437 = vcmp.ge.s32.totalorder %v269, 16
      %vm438 = vcmp.ge.s32.totalorder %v270, 16
      %vm439 = vcmp.ge.s32.totalorder %v271, 16
      %vm440 = vcmp.ge.s32.totalorder %v272, 16
      %vm441 = vcmp.ge.s32.totalorder %v273, 16
      %vm442 = vcmp.ge.s32.totalorder %v274, 16
      %vm443 = vcmp.ge.s32.totalorder %v275, 16
      %vm444 = vcmp.ge.s32.totalorder %v276, 16
      %vm445 = vcmp.ge.s32.totalorder %v277, 16
      %vm446 = vcmp.ge.s32.totalorder %v278, 16
      %vm447 = vcmp.ge.s32.totalorder %v279, 16
      %vm448 = vcmp.ge.s32.totalorder %v280, 16
      %vm449 = vcmp.ge.s32.totalorder %v281, 16
      %vm450 = vcmp.ge.s32.totalorder %v282, 16
      %vm451 = vcmp.ge.s32.totalorder %v283, 16
      %vm452 = vcmp.ge.s32.totalorder %v284, 16
      %vm453 = vcmp.ge.s32.totalorder %v285, 1
      %vm454 = vcmp.ge.s32.totalorder %v286, 1
      %vm455 = vcmp.ge.s32.totalorder %v287, 1
      %vm456 = vcmp.ge.s32.totalorder %v288, 1
      %vm457 = vcmp.ge.s32.totalorder %v289, 1
      %vm458 = vcmp.ge.s32.totalorder %v290, 1
      %vm459 = vcmp.ge.s32.totalorder %v291, 1
      %vm460 = vcmp.ge.s32.totalorder %v292, 1
      %vm461 = vcmp.ge.s32.totalorder %v293, 1
      %vm462 = vcmp.ge.s32.totalorder %v294, 1
      %vm463 = vcmp.ge.s32.totalorder %v295, 1
      %vm464 = vcmp.ge.s32.totalorder %v296, 1
      %vm465 = vcmp.ge.s32.totalorder %v297, 1
      %vm466 = vcmp.ge.s32.totalorder %v298, 1
      %vm467 = vcmp.ge.s32.totalorder %v299, 1
      %vm468 = vcmp.ge.s32.totalorder %v300, 1
      %vm469 = vcmp.ge.s32.totalorder %v301, 1
      %vm470 = vcmp.ge.s32.totalorder %v302, 1
      %vm471 = vcmp.ge.s32.totalorder %v303, 1
      %vm472 = vcmp.ge.s32.totalorder %v304, 1
      %vm473 = vcmp.ge.s32.totalorder %v305, 1
      %vm474 = vcmp.ge.s32.totalorder %v306, 1
      %vm475 = vcmp.ge.s32.totalorder %v307, 1
      %vm476 = vcmp.ge.s32.totalorder %v308, 1
      %vm477 = vcmp.ge.s32.totalorder %v309, 1
      %vm478 = vcmp.ge.s32.totalorder %v310, 1
      %vm479 = vcmp.ge.s32.totalorder %v311, 1
      %vm480 = vcmp.ge.s32.totalorder %v312, 1
      %vm481 = vcmp.ge.s32.totalorder %v313, 1
      %vm482 = vcmp.ge.s32.totalorder %v314, 1
      %vm483 = vcmp.ge.s32.totalorder %v315, 1
      %vm484 = vcmp.ge.s32.totalorder %v316, 1
      %vm485 = vmand %vm421, %vm453
      %vm486 = vmand %vm422, %vm454
      %vm487 = vmand %vm423, %vm455
      %vm488 = vmand %vm424, %vm456
      %vm489 = vmand %vm425, %vm457
      %vm490 = vmand %vm426, %vm458
      %vm491 = vmand %vm427, %vm459
      %vm492 = vmand %vm428, %vm460
      %vm493 = vmand %vm429, %vm461
      %vm494 = vmand %vm430, %vm462
      %vm495 = vmand %vm431, %vm463
      %vm496 = vmand %vm432, %vm464
      %vm497 = vmand %vm433, %vm465
      %vm498 = vmand %vm434, %vm466
      %vm499 = vmand %vm435, %vm467
      %vm500 = vmand %vm436, %vm468
      %vm501 = vmand %vm437, %vm469
      %vm502 = vmand %vm438, %vm470
      %vm503 = vmand %vm439, %vm471
      %vm504 = vmand %vm440, %vm472
      %vm505 = vmand %vm441, %vm473
      %vm506 = vmand %vm442, %vm474
      %vm507 = vmand %vm443, %vm475
      %vm508 = vmand %vm444, %vm476
      %vm509 = vmand %vm445, %vm477
      %vm510 = vmand %vm446, %vm478
      %vm511 = vmand %vm447, %vm479
      %vm512 = vmand %vm448, %vm480
      %vm513 = vmand %vm449, %vm481
      %vm514 = vmand %vm450, %vm482
      %vm515 = vmand %vm451, %vm483
      %vm516 = vmand %vm452, %vm484
      %v517 = vsel %vm485, 1, 0
      %v518 = vsel %vm486, 1, 0
      %v519 = vsel %vm487, 1, 0
      %v520 = vsel %vm488, 1, 0
      %v521 = vsel %vm489, 1, 0
      %v522 = vsel %vm490, 1, 0
      %v523 = vsel %vm491, 1, 0
      %v524 = vsel %vm492, 1, 0
      %v525 = vsel %vm493, 1, 0
      %v526 = vsel %vm494, 1, 0
      %v527 = vsel %vm495, 1, 0
      %v528 = vsel %vm496, 1, 0
      %v529 = vsel %vm497, 1, 0
      %v530 = vsel %vm498, 1, 0
      %v531 = vsel %vm499, 1, 0
      %v532 = vsel %vm500, 1, 0
      %v533 = vsel %vm501, 1, 0
      %v534 = vsel %vm502, 1, 0
      %v535 = vsel %vm503, 1, 0
      %v536 = vsel %vm504, 1, 0
      %v537 = vsel %vm505, 1, 0
      %v538 = vsel %vm506, 1, 0
      %v539 = vsel %vm507, 1, 0
      %v540 = vsel %vm508, 1, 0
      %v541 = vsel %vm509, 1, 0
      %v542 = vsel %vm510, 1, 0
      %v543 = vsel %vm511, 1, 0
      %v544 = vsel %vm512, 1, 0
      %v545 = vsel %vm513, 1, 0
      %v546 = vsel %vm514, 1, 0
      %v547 = vsel %vm515, 1, 0
      %v548 = vsel %vm516, 1, 0
      %549 = vset.pattern.permute.xlu0 0
      %550 = vperm.xlu0 %549, %v517
      %v551 = vpop.permute.xlu0 %550
      %552 = vset.pattern.permute.xlu0 0
      %553 = vperm.xlu0 %552, %v518
      %v554 = vpop.permute.xlu0 %553
      %555 = vset.pattern.permute.xlu0 0
      %556 = vperm.xlu0 %555, %v519
      %v557 = vpop.permute.xlu0 %556
      %558 = vset.pattern.permute.xlu0 0
      %559 = vperm.xlu0 %558, %v520
      %v560 = vpop.permute.xlu0 %559
      %561 = vset.pattern.permute.xlu0 0
      %562 = vperm.xlu0 %561, %v521
      %v563 = vpop.permute.xlu0 %562
      %564 = vset.pattern.permute.xlu0 0
      %565 = vperm.xlu0 %564, %v522
      %v566 = vpop.permute.xlu0 %565
      %567 = vset.pattern.permute.xlu0 0
      %568 = vperm.xlu0 %567, %v523
      %v569 = vpop.permute.xlu0 %568
      %570 = vset.pattern.permute.xlu0 0
      %571 = vperm.xlu0 %570, %v524
      %v572 = vpop.permute.xlu0 %571
      %573 = vset.pattern.permute.xlu0 0
      %574 = vperm.xlu0 %573, %v525
      %v575 = vpop.permute.xlu0 %574
      %576 = vset.pattern.permute.xlu0 0
      %577 = vperm.xlu0 %576, %v526
      %v578 = vpop.permute.xlu0 %577
      %579 = vset.pattern.permute.xlu0 0
      %580 = vperm.xlu0 %579, %v527
      %v581 = vpop.permute.xlu0 %580
      %582 = vset.pattern.permute.xlu0 0
      %583 = vperm.xlu0 %582, %v528
      %v584 = vpop.permute.xlu0 %583
      %585 = vset.pattern.permute.xlu0 0
      %586 = vperm.xlu0 %585, %v529
      %v587 = vpop.permute.xlu0 %586
      %588 = vset.pattern.permute.xlu0 0
      %589 = vperm.xlu0 %588, %v530
      %v590 = vpop.permute.xlu0 %589
      %591 = vset.pattern.permute.xlu0 0
      %592 = vperm.xlu0 %591, %v531
      %v593 = vpop.permute.xlu0 %592
      %594 = vset.pattern.permute.xlu0 0
      %595 = vperm.xlu0 %594, %v532
      %v596 = vpop.permute.xlu0 %595
      %597 = vset.pattern.permute.xlu0 0
      %598 = vperm.xlu0 %597, %v533
      %v599 = vpop.permute.xlu0 %598
      %600 = vset.pattern.permute.xlu0 0
      %601 = vperm.xlu0 %600, %v534
      %v602 = vpop.permute.xlu0 %601
      %603 = vset.pattern.permute.xlu0 0
      %604 = vperm.xlu0 %603, %v535
      %v605 = vpop.permute.xlu0 %604
      %606 = vset.pattern.permute.xlu0 0
      %607 = vperm.xlu0 %606, %v536
      %v608 = vpop.permute.xlu0 %607
      %609 = vset.pattern.permute.xlu0 0
      %610 = vperm.xlu0 %609, %v537
      %v611 = vpop.permute.xlu0 %610
      %612 = vset.pattern.permute.xlu0 0
      %613 = vperm.xlu0 %612, %v538
      %v614 = vpop.permute.xlu0 %613
      %615 = vset.pattern.permute.xlu0 0
      %616 = vperm.xlu0 %615, %v539
      %v617 = vpop.permute.xlu0 %616
      %618 = vset.pattern.permute.xlu0 0
      %619 = vperm.xlu0 %618, %v540
      %v620 = vpop.permute.xlu0 %619
      %621 = vset.pattern.permute.xlu0 0
      %622 = vperm.xlu0 %621, %v541
      %v623 = vpop.permute.xlu0 %622
      %624 = vset.pattern.permute.xlu0 0
      %625 = vperm.xlu0 %624, %v542
      %v626 = vpop.permute.xlu0 %625
      %627 = vset.pattern.permute.xlu0 0
      %628 = vperm.xlu0 %627, %v543
      %v629 = vpop.permute.xlu0 %628
      %630 = vset.pattern.permute.xlu0 0
      %631 = vperm.xlu0 %630, %v544
      %v632 = vpop.permute.xlu0 %631
      %633 = vset.pattern.permute.xlu0 0
      %634 = vperm.xlu0 %633, %v545
      %v635 = vpop.permute.xlu0 %634
      %636 = vset.pattern.permute.xlu0 0
      %637 = vperm.xlu0 %636, %v546
      %v638 = vpop.permute.xlu0 %637
      %639 = vset.pattern.permute.xlu0 0
      %640 = vperm.xlu0 %639, %v547
      %v641 = vpop.permute.xlu0 %640
      %642 = vset.pattern.permute.xlu0 0
      %643 = vperm.xlu0 %642, %v548
      %v644 = vpop.permute.xlu0 %643
      %vm645 = vcmp.eq.s32.totalorder %v551, 1
      %vm646 = vcmp.eq.s32.totalorder %v554, 1
      %vm647 = vcmp.eq.s32.totalorder %v557, 1
      %vm648 = vcmp.eq.s32.totalorder %v560, 1
      %vm649 = vcmp.eq.s32.totalorder %v563, 1
      %vm650 = vcmp.eq.s32.totalorder %v566, 1
      %vm651 = vcmp.eq.s32.totalorder %v569, 1
      %vm652 = vcmp.eq.s32.totalorder %v572, 1
      %vm653 = vcmp.eq.s32.totalorder %v575, 1
      %vm654 = vcmp.eq.s32.totalorder %v578, 1
      %vm655 = vcmp.eq.s32.totalorder %v581, 1
      %vm656 = vcmp.eq.s32.totalorder %v584, 1
      %vm657 = vcmp.eq.s32.totalorder %v587, 1
      %vm658 = vcmp.eq.s32.totalorder %v590, 1
      %vm659 = vcmp.eq.s32.totalorder %v593, 1
      %vm660 = vcmp.eq.s32.totalorder %v596, 1
      %vm661 = vcmp.eq.s32.totalorder %v599, 1
      %vm662 = vcmp.eq.s32.totalorder %v602, 1
      %vm663 = vcmp.eq.s32.totalorder %v605, 1
      %vm664 = vcmp.eq.s32.totalorder %v608, 1
      %vm665 = vcmp.eq.s32.totalorder %v611, 1
      %vm666 = vcmp.eq.s32.totalorder %v614, 1
      %vm667 = vcmp.eq.s32.totalorder %v617, 1
      %vm668 = vcmp.eq.s32.totalorder %v620, 1
      %vm669 = vcmp.eq.s32.totalorder %v623, 1
      %vm670 = vcmp.eq.s32.totalorder %v626, 1
      %vm671 = vcmp.eq.s32.totalorder %v629, 1
      %vm672 = vcmp.eq.s32.totalorder %v632, 1
      %vm673 = vcmp.eq.s32.totalorder %v635, 1
      %vm674 = vcmp.eq.s32.totalorder %v638, 1
      %vm675 = vcmp.eq.s32.totalorder %v641, 1
      %vm676 = vcmp.eq.s32.totalorder %v644, 1
      %v677 = vsel %vm645, %v389, 0.0
      %v678 = vsel %vm646, %v390, 0.0
      %v679 = vsel %vm647, %v391, 0.0
      %v680 = vsel %vm648, %v392, 0.0
      %v681 = vsel %vm649, %v393, 0.0
      %v682 = vsel %vm650, %v394, 0.0
      %v683 = vsel %vm651, %v395, 0.0
      %v684 = vsel %vm652, %v396, 0.0
      %v685 = vsel %vm653, %v397, 0.0
      %v686 = vsel %vm654, %v398, 0.0
      %v687 = vsel %vm655, %v399, 0.0
      %v688 = vsel %vm656, %v400, 0.0
      %v689 = vsel %vm657, %v401, 0.0
      %v690 = vsel %vm658, %v402, 0.0
      %v691 = vsel %vm659, %v403, 0.0
      %v692 = vsel %vm660, %v404, 0.0
      %v693 = vsel %vm661, %v405, 0.0
      %v694 = vsel %vm662, %v406, 0.0
      %v695 = vsel %vm663, %v407, 0.0
      %v696 = vsel %vm664, %v408, 0.0
      %v697 = vsel %vm665, %v409, 0.0
      %v698 = vsel %vm666, %v410, 0.0
      %v699 = vsel %vm667, %v411, 0.0
      %v700 = vsel %vm668, %v412, 0.0
      %v701 = vsel %vm669, %v413, 0.0
      %v702 = vsel %vm670, %v414, 0.0
      %v703 = vsel %vm671, %v415, 0.0
      %v704 = vsel %vm672, %v416, 0.0
      %v705 = vsel %vm673, %v417, 0.0
      %v706 = vsel %vm674, %v418, 0.0
      %v707 = vsel %vm675, %v419, 0.0
      %v708 = vsel %vm676, %v420, 0.0
      %v709 = vld [vmem:[%s2] sm:$0x7]
      %v711 = vsel %vm349, %v677, 0
      %v714 = vsel %vm349, %v678, 0
      %v717 = vsel %vm349, %v679, 0
      %v720 = vsel %vm349, %v680, 0
      %v723 = vsel %vm349, %v681, 0
      %v726 = vsel %vm349, %v682, 0
      %v729 = vsel %vm349, %v683, 0
      %v732 = vsel %vm349, %v684, 0
      %v735 = vsel %vm349, %v685, 0
      %v738 = vsel %vm349, %v686, 0
      %v741 = vsel %vm349, %v687, 0
      %v744 = vsel %vm349, %v688, 0
      %v747 = vsel %vm349, %v689, 0
      %v750 = vsel %vm349, %v690, 0
      %v753 = vsel %vm349, %v691, 0
      %v756 = vsel %vm349, %v692, 0
      %v759 = vsel %vm349, %v693, 0
      %v762 = vsel %vm349, %v694, 0
      %v765 = vsel %vm349, %v695, 0
      %v768 = vsel %vm349, %v696, 0
      %v771 = vsel %vm349, %v697, 0
      %v774 = vsel %vm349, %v698, 0
      %v777 = vsel %vm349, %v699, 0
      %v780 = vsel %vm349, %v700, 0
      %v783 = vsel %vm349, %v701, 0
      %v786 = vsel %vm349, %v702, 0
      %v789 = vsel %vm349, %v703, 0
      %v792 = vsel %vm349, %v704, 0
      %v795 = vsel %vm349, %v705, 0
      %v798 = vsel %vm349, %v706, 0
      %v801 = vsel %vm349, %v707, 0
      %v804 = vsel %vm349, %v708, 0
      %vm806 = vcmask 1042432
      %v808 = vsel %vm806, %v709, 0
      %810 = vmatprep.subr.mxu0 0.0
      %811 = vmatpush1.msra.mxu0 0.0
      %812 = vmatprep.subr.mxu0 0.0
      %813 = vmatpush1.msra.mxu0 0.0
      %814 = vmatprep.subr.mxu0 0.0
      %815 = vmatpush1.msra.mxu0 0.0
      %816 = vmatprep.subr.mxu0 0.0
      %817 = vmatpush1.msra.mxu0 0.0
      %818 = vmatprep.subr.mxu0 0.0
      %819 = vmatpush1.msra.mxu0 0.0
      %820 = vmatprep.subr.mxu0 0.0
      %821 = vmatpush1.msra.mxu0 0.0
      %822 = vmatprep.subr.mxu0 0.0
      %823 = vmatpush1.msra.mxu0 0.0
      %824 = vmatprep.subr.mxu0 0.0
      %825 = vmatpush1.msra.mxu0 0.0
      %826 = vmatprep.subr.mxu0 0.0
      %827 = vmatpush1.msra.mxu0 0.0
      %828 = vmatprep.subr.mxu0 0.0
      %829 = vmatpush1.msra.mxu0 0.0
      %830 = vmatprep.subr.mxu0 0.0
      %831 = vmatpush1.msra.mxu0 0.0
      %832 = vmatprep.subr.mxu0 0.0
      %833 = vmatpush1.msra.mxu0 0.0
      %834 = vmatprep.subr.mxu0 0.0
      %835 = vmatpush1.msra.mxu0 0.0
      %836 = vmatprep.subr.mxu0 0.0
      %837 = vmatpush1.msra.mxu0 0.0
      %838 = vmatprep.subr.mxu0 0.0
      %839 = vmatpush1.msra.mxu0 0.0
      %840 = vmatprep.subr.mxu0 0.0
      %841 = vmatpush1.msra.mxu0 %v808
      %842 = vmatprep.subr.mxu0 0.0
      %843 = vmatpush2.msra.mxu0 0.0
      %844 = vmatprep.subr.mxu0 0.0
      %845 = vmatpush2.msra.mxu0 0.0
      %846 = vmatprep.subr.mxu0 0.0
      %847 = vmatpush2.msra.mxu0 0.0
      %848 = vmatprep.subr.mxu0 0.0
      %849 = vmatpush2.msra.mxu0 0.0
      %850 = vmatprep.subr.mxu0 0.0
      %851 = vmatpush2.msra.mxu0 0.0
      %852 = vmatprep.subr.mxu0 0.0
      %853 = vmatpush2.msra.mxu0 0.0
      %854 = vmatprep.subr.mxu0 0.0
      %855 = vmatpush2.msra.mxu0 0.0
      %856 = vmatprep.subr.mxu0 0.0
      %857 = vmatpush2.msra.mxu0 0.0
      %858 = vmatprep.subr.mxu0 0.0
      %859 = vmatpush2.msra.mxu0 0.0
      %860 = vmatprep.subr.mxu0 0.0
      %861 = vmatpush2.msra.mxu0 0.0
      %862 = vmatprep.subr.mxu0 0.0
      %863 = vmatpush2.msra.mxu0 0.0
      %864 = vmatprep.subr.mxu0 0.0
      %865 = vmatpush2.msra.mxu0 0.0
      %866 = vmatprep.subr.mxu0 0.0
      %867 = vmatpush2.msra.mxu0 0.0
      %868 = vmatprep.subr.mxu0 0.0
      %869 = vmatpush2.msra.mxu0 0.0
      %870 = vmatprep.subr.mxu0 0.0
      %871 = vmatpush2.msra.mxu0 0.0
      %872 = vmatprep.subr.mxu0 0.0
      %873 = vmatpush2.msra.mxu0 0.0
      %874 = vmatprep.mubr.f32.mxu0 0.0
      %875 = vmatmul.mubr.f32.gmra.mxu0 %v711
      %v876 = vpop.f32.mrf.mxu0
      %v877 = vadd.f32 0.0, %v876
      %v878 = vpop.f32.mrf.mxu0
      %879 = vmatprep.mubr.f32.mxu0 0.0
      %880 = vmatmul.mubr.f32.gmra.mxu0 %v714
      %v881 = vpop.f32.mrf.mxu0
      %v882 = vadd.f32 0.0, %v881
      %v883 = vpop.f32.mrf.mxu0
      %884 = vmatprep.mubr.f32.mxu0 0.0
      %885 = vmatmul.mubr.f32.gmra.mxu0 %v717
      %v886 = vpop.f32.mrf.mxu0
      %v887 = vadd.f32 0.0, %v886
      %v888 = vpop.f32.mrf.mxu0
      %889 = vmatprep.mubr.f32.mxu0 0.0
      %890 = vmatmul.mubr.f32.gmra.mxu0 %v720
      %v891 = vpop.f32.mrf.mxu0
      %v892 = vadd.f32 0.0, %v891
      %v893 = vpop.f32.mrf.mxu0
      %894 = vmatprep.mubr.f32.mxu0 0.0
      %895 = vmatmul.mubr.f32.gmra.mxu0 %v723
      %v896 = vpop.f32.mrf.mxu0
      %v897 = vadd.f32 0.0, %v896
      %v898 = vpop.f32.mrf.mxu0
      %899 = vmatprep.mubr.f32.mxu0 0.0
      %900 = vmatmul.mubr.f32.gmra.mxu0 %v726
      %v901 = vpop.f32.mrf.mxu0
      %v902 = vadd.f32 0.0, %v901
      %v903 = vpop.f32.mrf.mxu0
      %904 = vmatprep.mubr.f32.mxu0 0.0
      %905 = vmatmul.mubr.f32.gmra.mxu0 %v729
      %v906 = vpop.f32.mrf.mxu0
      %v907 = vadd.f32 0.0, %v906
      %v908 = vpop.f32.mrf.mxu0
      %909 = vmatprep.mubr.f32.mxu0 0.0
      %910 = vmatmul.mubr.f32.gmra.mxu0 %v732
      %v911 = vpop.f32.mrf.mxu0
      %v912 = vadd.f32 0.0, %v911
      %v913 = vpop.f32.mrf.mxu0
      %914 = vmatprep.mubr.f32.mxu0 0.0
      %915 = vmatmul.mubr.f32.gmra.mxu0 %v735
      %v916 = vpop.f32.mrf.mxu0
      %v917 = vadd.f32 0.0, %v916
      %v918 = vpop.f32.mrf.mxu0
      %919 = vmatprep.mubr.f32.mxu0 0.0
      %920 = vmatmul.mubr.f32.gmra.mxu0 %v738
      %v921 = vpop.f32.mrf.mxu0
      %v922 = vadd.f32 0.0, %v921
      %v923 = vpop.f32.mrf.mxu0
      %924 = vmatprep.mubr.f32.mxu0 0.0
      %925 = vmatmul.mubr.f32.gmra.mxu0 %v741
      %v926 = vpop.f32.mrf.mxu0
      %v927 = vadd.f32 0.0, %v926
      %v928 = vpop.f32.mrf.mxu0
      %929 = vmatprep.mubr.f32.mxu0 0.0
      %930 = vmatmul.mubr.f32.gmra.mxu0 %v744
      %v931 = vpop.f32.mrf.mxu0
      %v932 = vadd.f32 0.0, %v931
      %v933 = vpop.f32.mrf.mxu0
      %934 = vmatprep.mubr.f32.mxu0 0.0
      %935 = vmatmul.mubr.f32.gmra.mxu0 %v747
      %v936 = vpop.f32.mrf.mxu0
      %v937 = vadd.f32 0.0, %v936
      %v938 = vpop.f32.mrf.mxu0
      %939 = vmatprep.mubr.f32.mxu0 0.0
      %940 = vmatmul.mubr.f32.gmra.mxu0 %v750
      %v941 = vpop.f32.mrf.mxu0
      %v942 = vadd.f32 0.0, %v941
      %v943 = vpop.f32.mrf.mxu0
      %944 = vmatprep.mubr.f32.mxu0 0.0
      %945 = vmatmul.mubr.f32.gmra.mxu0 %v753
      %v946 = vpop.f32.mrf.mxu0
      %v947 = vadd.f32 0.0, %v946
      %v948 = vpop.f32.mrf.mxu0
      %949 = vmatprep.mubr.f32.mxu0 0.0
      %950 = vmatmul.mubr.f32.gmra.mxu0 %v756
      %v951 = vpop.f32.mrf.mxu0
      %v952 = vadd.f32 0.0, %v951
      %v953 = vpop.f32.mrf.mxu0
      %954 = vmatprep.mubr.f32.mxu0 0.0
      %955 = vmatmul.mubr.f32.gmra.mxu0 %v759
      %v956 = vpop.f32.mrf.mxu0
      %v957 = vadd.f32 0.0, %v956
      %v958 = vpop.f32.mrf.mxu0
      %959 = vmatprep.mubr.f32.mxu0 0.0
      %960 = vmatmul.mubr.f32.gmra.mxu0 %v762
      %v961 = vpop.f32.mrf.mxu0
      %v962 = vadd.f32 0.0, %v961
      %v963 = vpop.f32.mrf.mxu0
      %964 = vmatprep.mubr.f32.mxu0 0.0
      %965 = vmatmul.mubr.f32.gmra.mxu0 %v765
      %v966 = vpop.f32.mrf.mxu0
      %v967 = vadd.f32 0.0, %v966
      %v968 = vpop.f32.mrf.mxu0
      %969 = vmatprep.mubr.f32.mxu0 0.0
      %970 = vmatmul.mubr.f32.gmra.mxu0 %v768
      %v971 = vpop.f32.mrf.mxu0
      %v972 = vadd.f32 0.0, %v971
      %v973 = vpop.f32.mrf.mxu0
      %974 = vmatprep.mubr.f32.mxu0 0.0
      %975 = vmatmul.mubr.f32.gmra.mxu0 %v771
      %v976 = vpop.f32.mrf.mxu0
      %v977 = vadd.f32 0.0, %v976
      %v978 = vpop.f32.mrf.mxu0
      %979 = vmatprep.mubr.f32.mxu0 0.0
      %980 = vmatmul.mubr.f32.gmra.mxu0 %v774
      %v981 = vpop.f32.mrf.mxu0
      %v982 = vadd.f32 0.0, %v981
      %v983 = vpop.f32.mrf.mxu0
      %984 = vmatprep.mubr.f32.mxu0 0.0
      %985 = vmatmul.mubr.f32.gmra.mxu0 %v777
      %v986 = vpop.f32.mrf.mxu0
      %v987 = vadd.f32 0.0, %v986
      %v988 = vpop.f32.mrf.mxu0
      %989 = vmatprep.mubr.f32.mxu0 0.0
      %990 = vmatmul.mubr.f32.gmra.mxu0 %v780
      %v991 = vpop.f32.mrf.mxu0
      %v992 = vadd.f32 0.0, %v991
      %v993 = vpop.f32.mrf.mxu0
      %994 = vmatprep.mubr.f32.mxu0 0.0
      %995 = vmatmul.mubr.f32.gmra.mxu0 %v783
      %v996 = vpop.f32.mrf.mxu0
      %v997 = vadd.f32 0.0, %v996
      %v998 = vpop.f32.mrf.mxu0
      %999 = vmatprep.mubr.f32.mxu0 0.0
      %1000 = vmatmul.mubr.f32.gmra.mxu0 %v786
      %v1001 = vpop.f32.mrf.mxu0
      %v1002 = vadd.f32 0.0, %v1001
      %v1003 = vpop.f32.mrf.mxu0
      %1004 = vmatprep.mubr.f32.mxu0 0.0
      %1005 = vmatmul.mubr.f32.gmra.mxu0 %v789
      %v1006 = vpop.f32.mrf.mxu0
      %v1007 = vadd.f32 0.0, %v1006
      %v1008 = vpop.f32.mrf.mxu0
      %1009 = vmatprep.mubr.f32.mxu0 0.0
      %1010 = vmatmul.mubr.f32.gmra.mxu0 %v792
      %v1011 = vpop.f32.mrf.mxu0
      %v1012 = vadd.f32 0.0, %v1011
      %v1013 = vpop.f32.mrf.mxu0
      %1014 = vmatprep.mubr.f32.mxu0 0.0
      %1015 = vmatmul.mubr.f32.gmra.mxu0 %v795
      %v1016 = vpop.f32.mrf.mxu0
      %v1017 = vadd.f32 0.0, %v1016
      %v1018 = vpop.f32.mrf.mxu0
      %1019 = vmatprep.mubr.f32.mxu0 0.0
      %1020 = vmatmul.mubr.f32.gmra.mxu0 %v798
      %v1021 = vpop.f32.mrf.mxu0
      %v1022 = vadd.f32 0.0, %v1021
      %v1023 = vpop.f32.mrf.mxu0
      %1024 = vmatprep.mubr.f32.mxu0 0.0
      %1025 = vmatmul.mubr.f32.gmra.mxu0 %v801
      %v1026 = vpop.f32.mrf.mxu0
      %v1027 = vadd.f32 0.0, %v1026
      %v1028 = vpop.f32.mrf.mxu0
      %1029 = vmatprep.mubr.f32.mxu0 0.0
      %1030 = vmatmul.mubr.f32.gmra.mxu0 %v804
      %v1031 = vpop.f32.mrf.mxu0
      %v1032 = vadd.f32 0.0, %v1031
      %v1033 = vpop.f32.mrf.mxu0
      %1034 = vdwg.mxu0
      %v1035 = vadd.f32 %v387, %v877
      %v1036 = vadd.f32 %v387, %v882
      %v1037 = vadd.f32 %v387, %v887
      %v1038 = vadd.f32 %v387, %v892
      %v1039 = vadd.f32 %v387, %v897
      %v1040 = vadd.f32 %v387, %v902
      %v1041 = vadd.f32 %v387, %v907
      %v1042 = vadd.f32 %v387, %v912
      %v1043 = vadd.f32 %v387, %v917
      %v1044 = vadd.f32 %v387, %v922
      %v1045 = vadd.f32 %v387, %v927
      %v1046 = vadd.f32 %v387, %v932
      %v1047 = vadd.f32 %v387, %v937
      %v1048 = vadd.f32 %v387, %v942
      %v1049 = vadd.f32 %v387, %v947
      %v1050 = vadd.f32 %v387, %v952
      %v1051 = vadd.f32 %v387, %v957
      %v1052 = vadd.f32 %v387, %v962
      %v1053 = vadd.f32 %v387, %v967
      %v1054 = vadd.f32 %v387, %v972
      %v1055 = vadd.f32 %v387, %v977
      %v1056 = vadd.f32 %v387, %v982
      %v1057 = vadd.f32 %v387, %v987
      %v1058 = vadd.f32 %v387, %v992
      %v1059 = vadd.f32 %v387, %v997
      %v1060 = vadd.f32 %v387, %v1002
      %v1061 = vadd.f32 %v387, %v1007
      %v1062 = vadd.f32 %v387, %v1012
      %v1063 = vadd.f32 %v387, %v1017
      %v1064 = vadd.f32 %v387, %v1022
      %v1065 = vadd.f32 %v387, %v1027
      %v1066 = vadd.f32 %v387, %v1032
      %v1067 = vld [vmem:[#allocation2 + $0x8] sm:$0xff]
      %v1068 = vld [vmem:[#allocation2 + $0x10] sm:$0xff]
      %v1069 = vld [vmem:[#allocation2 + $0x18] sm:$0xff]
      %v1070 = vld [vmem:[#allocation2 + $0x20] sm:$0xff]
      %v1071 = vld [vmem:[#allocation2 + $0x28] sm:$0xff]
      %v1072 = vld [vmem:[#allocation2 + $0x30] sm:$0xff]
      %v1073 = vld [vmem:[#allocation2 + $0x38] sm:$0xff]
      %v1074 = vld [vmem:[#allocation2 + $0x40] sm:$0xff]
      %v1075 = vld [vmem:[#allocation2 + $0x48] sm:$0xff]
      %v1076 = vld [vmem:[#allocation2 + $0x50] sm:$0xff]
      %v1077 = vld [vmem:[#allocation2 + $0x58] sm:$0xff]
      %v1078 = vld [vmem:[#allocation2 + $0x60] sm:$0xff]
      %v1079 = vld [vmem:[#allocation2 + $0x68] sm:$0xff]
      %v1080 = vld [vmem:[#allocation2 + $0x70] sm:$0xff]
      %v1081 = vld [vmem:[#allocation2 + $0x78] sm:$0xff]
      %v1082 = vld [vmem:[#allocation2 + $0x80] sm:$0xff]
      %v1083 = vld [vmem:[#allocation2 + $0x88] sm:$0xff]
      %v1084 = vld [vmem:[#allocation2 + $0x90] sm:$0xff]
      %v1085 = vld [vmem:[#allocation2 + $0x98] sm:$0xff]
      %v1086 = vld [vmem:[#allocation2 + $0xa0] sm:$0xff]
      %v1087 = vld [vmem:[#allocation2 + $0xa8] sm:$0xff]
      %v1088 = vld [vmem:[#allocation2 + $0xb0] sm:$0xff]
      %v1089 = vld [vmem:[#allocation2 + $0xb8] sm:$0xff]
      %v1090 = vld [vmem:[#allocation2 + $0xc0] sm:$0xff]
      %v1091 = vld [vmem:[#allocation2 + $0xc8] sm:$0xff]
      %v1092 = vld [vmem:[#allocation2 + $0xd0] sm:$0xff]
      %v1093 = vld [vmem:[#allocation2 + $0xd8] sm:$0xff]
      %v1094 = vld [vmem:[#allocation2 + $0xe0] sm:$0xff]
      %v1095 = vld [vmem:[#allocation2 + $0xe8] sm:$0xff]
      %v1096 = vld [vmem:[#allocation2 + $0xf0] sm:$0xff]
      %v1097 = vld [vmem:[#allocation2 + $0xf8] sm:$0xff]
      %v1098 = vld [vmem:[#allocation2 + $0x100] sm:$0xff]
      %v1099 = vsel %vm421, 1, 0
      %v1100 = vsel %vm422, 1, 0
      %v1101 = vsel %vm423, 1, 0
      %v1102 = vsel %vm424, 1, 0
      %v1103 = vsel %vm425, 1, 0
      %v1104 = vsel %vm426, 1, 0
      %v1105 = vsel %vm427, 1, 0
      %v1106 = vsel %vm428, 1, 0
      %v1107 = vsel %vm429, 1, 0
      %v1108 = vsel %vm430, 1, 0
      %v1109 = vsel %vm431, 1, 0
      %v1110 = vsel %vm432, 1, 0
      %v1111 = vsel %vm433, 1, 0
      %v1112 = vsel %vm434, 1, 0
      %v1113 = vsel %vm435, 1, 0
      %v1114 = vsel %vm436, 1, 0
      %v1115 = vsel %vm437, 1, 0
      %v1116 = vsel %vm438, 1, 0
      %v1117 = vsel %vm439, 1, 0
      %v1118 = vsel %vm440, 1, 0
      %v1119 = vsel %vm441, 1, 0
      %v1120 = vsel %vm442, 1, 0
      %v1121 = vsel %vm443, 1, 0
      %v1122 = vsel %vm444, 1, 0
      %v1123 = vsel %vm445, 1, 0
      %v1124 = vsel %vm446, 1, 0
      %v1125 = vsel %vm447, 1, 0
      %v1126 = vsel %vm448, 1, 0
      %v1127 = vsel %vm449, 1, 0
      %v1128 = vsel %vm450, 1, 0
      %v1129 = vsel %vm451, 1, 0
      %v1130 = vsel %vm452, 1, 0
      %vm1131 = vcmp.eq.s32.totalorder %v1099, 1
      %vm1132 = vcmp.eq.s32.totalorder %v1100, 1
      %vm1133 = vcmp.eq.s32.totalorder %v1101, 1
      %vm1134 = vcmp.eq.s32.totalorder %v1102, 1
      %vm1135 = vcmp.eq.s32.totalorder %v1103, 1
      %vm1136 = vcmp.eq.s32.totalorder %v1104, 1
      %vm1137 = vcmp.eq.s32.totalorder %v1105, 1
      %vm1138 = vcmp.eq.s32.totalorder %v1106, 1
      %vm1139 = vcmp.eq.s32.totalorder %v1107, 1
      %vm1140 = vcmp.eq.s32.totalorder %v1108, 1
      %vm1141 = vcmp.eq.s32.totalorder %v1109, 1
      %vm1142 = vcmp.eq.s32.totalorder %v1110, 1
      %vm1143 = vcmp.eq.s32.totalorder %v1111, 1
      %vm1144 = vcmp.eq.s32.totalorder %v1112, 1
      %vm1145 = vcmp.eq.s32.totalorder %v1113, 1
      %vm1146 = vcmp.eq.s32.totalorder %v1114, 1
      %vm1147 = vcmp.eq.s32.totalorder %v1115, 1
      %vm1148 = vcmp.eq.s32.totalorder %v1116, 1
      %vm1149 = vcmp.eq.s32.totalorder %v1117, 1
      %vm1150 = vcmp.eq.s32.totalorder %v1118, 1
      %vm1151 = vcmp.eq.s32.totalorder %v1119, 1
      %vm1152 = vcmp.eq.s32.totalorder %v1120, 1
      %vm1153 = vcmp.eq.s32.totalorder %v1121, 1
      %vm1154 = vcmp.eq.s32.totalorder %v1122, 1
      %vm1155 = vcmp.eq.s32.totalorder %v1123, 1
      %vm1156 = vcmp.eq.s32.totalorder %v1124, 1
      %vm1157 = vcmp.eq.s32.totalorder %v1125, 1
      %vm1158 = vcmp.eq.s32.totalorder %v1126, 1
      %vm1159 = vcmp.eq.s32.totalorder %v1127, 1
      %vm1160 = vcmp.eq.s32.totalorder %v1128, 1
      %vm1161 = vcmp.eq.s32.totalorder %v1129, 1
      %vm1162 = vcmp.eq.s32.totalorder %v1130, 1
      %v1163 = vsel %vm1131, %v1067, 0.0
      %v1164 = vsel %vm1132, %v1068, 0.0
      %v1165 = vsel %vm1133, %v1069, 0.0
      %v1166 = vsel %vm1134, %v1070, 0.0
      %v1167 = vsel %vm1135, %v1071, 0.0
      %v1168 = vsel %vm1136, %v1072, 0.0
      %v1169 = vsel %vm1137, %v1073, 0.0
      %v1170 = vsel %vm1138, %v1074, 0.0
      %v1171 = vsel %vm1139, %v1075, 0.0
      %v1172 = vsel %vm1140, %v1076, 0.0
      %v1173 = vsel %vm1141, %v1077, 0.0
      %v1174 = vsel %vm1142, %v1078, 0.0
      %v1175 = vsel %vm1143, %v1079, 0.0
      %v1176 = vsel %vm1144, %v1080, 0.0
      %v1177 = vsel %vm1145, %v1081, 0.0
      %v1178 = vsel %vm1146, %v1082, 0.0
      %v1179 = vsel %vm1147, %v1083, 0.0
      %v1180 = vsel %vm1148, %v1084, 0.0
      %v1181 = vsel %vm1149, %v1085, 0.0
      %v1182 = vsel %vm1150, %v1086, 0.0
      %v1183 = vsel %vm1151, %v1087, 0.0
      %v1184 = vsel %vm1152, %v1088, 0.0
      %v1185 = vsel %vm1153, %v1089, 0.0
      %v1186 = vsel %vm1154, %v1090, 0.0
      %v1187 = vsel %vm1155, %v1091, 0.0
      %v1188 = vsel %vm1156, %v1092, 0.0
      %v1189 = vsel %vm1157, %v1093, 0.0
      %v1190 = vsel %vm1158, %v1094, 0.0
      %v1191 = vsel %vm1159, %v1095, 0.0
      %v1192 = vsel %vm1160, %v1096, 0.0
      %v1193 = vsel %vm1161, %v1097, 0.0
      %v1194 = vsel %vm1162, %v1098, 0.0
      %s1195 = scalar_lea.vmem %s2, 4
      %v1196 = vld [vmem:[%s1195] sm:$0x7]
      %v1198 = vsel %vm349, %v1163, 0
      %v1201 = vsel %vm349, %v1164, 0
      %v1204 = vsel %vm349, %v1165, 0
      %v1207 = vsel %vm349, %v1166, 0
      %v1210 = vsel %vm349, %v1167, 0
      %v1213 = vsel %vm349, %v1168, 0
      %v1216 = vsel %vm349, %v1169, 0
      %v1219 = vsel %vm349, %v1170, 0
      %v1222 = vsel %vm349, %v1171, 0
      %v1225 = vsel %vm349, %v1172, 0
      %v1228 = vsel %vm349, %v1173, 0
      %v1231 = vsel %vm349, %v1174, 0
      %v1234 = vsel %vm349, %v1175, 0
      %v1237 = vsel %vm349, %v1176, 0
      %v1240 = vsel %vm349, %v1177, 0
      %v1243 = vsel %vm349, %v1178, 0
      %v1246 = vsel %vm349, %v1179, 0
      %v1249 = vsel %vm349, %v1180, 0
      %v1252 = vsel %vm349, %v1181, 0
      %v1255 = vsel %vm349, %v1182, 0
      %v1258 = vsel %vm349, %v1183, 0
      %v1261 = vsel %vm349, %v1184, 0
      %v1264 = vsel %vm349, %v1185, 0
      %v1267 = vsel %vm349, %v1186, 0
      %v1270 = vsel %vm349, %v1187, 0
      %v1273 = vsel %vm349, %v1188, 0
      %v1276 = vsel %vm349, %v1189, 0
      %v1279 = vsel %vm349, %v1190, 0
      %v1282 = vsel %vm349, %v1191, 0
      %v1285 = vsel %vm349, %v1192, 0
      %v1288 = vsel %vm349, %v1193, 0
      %v1291 = vsel %vm349, %v1194, 0
      %v1294 = vsel %vm806, %v1196, 0
      %1296 = vmatprep.subr.mxu0 0.0
      %1297 = vmatpush1.msra.mxu0 0.0
      %1298 = vmatprep.subr.mxu0 0.0
      %1299 = vmatpush1.msra.mxu0 0.0
      %1300 = vmatprep.subr.mxu0 0.0
      %1301 = vmatpush1.msra.mxu0 0.0
      %1302 = vmatprep.subr.mxu0 0.0
      %1303 = vmatpush1.msra.mxu0 0.0
      %1304 = vmatprep.subr.mxu0 0.0
      %1305 = vmatpush1.msra.mxu0 0.0
      %1306 = vmatprep.subr.mxu0 0.0
      %1307 = vmatpush1.msra.mxu0 0.0
      %1308 = vmatprep.subr.mxu0 0.0
      %1309 = vmatpush1.msra.mxu0 0.0
      %1310 = vmatprep.subr.mxu0 0.0
      %1311 = vmatpush1.msra.mxu0 0.0
      %1312 = vmatprep.subr.mxu0 0.0
      %1313 = vmatpush1.msra.mxu0 0.0
      %1314 = vmatprep.subr.mxu0 0.0
      %1315 = vmatpush1.msra.mxu0 0.0
      %1316 = vmatprep.subr.mxu0 0.0
      %1317 = vmatpush1.msra.mxu0 0.0
      %1318 = vmatprep.subr.mxu0 0.0
      %1319 = vmatpush1.msra.mxu0 0.0
      %1320 = vmatprep.subr.mxu0 0.0
      %1321 = vmatpush1.msra.mxu0 0.0
      %1322 = vmatprep.subr.mxu0 0.0
      %1323 = vmatpush1.msra.mxu0 0.0
      %1324 = vmatprep.subr.mxu0 0.0
      %1325 = vmatpush1.msra.mxu0 0.0
      %1326 = vmatprep.subr.mxu0 0.0
      %1327 = vmatpush1.msra.mxu0 %v1294
      %1328 = vmatprep.subr.mxu0 0.0
      %1329 = vmatpush2.msra.mxu0 0.0
      %1330 = vmatprep.subr.mxu0 0.0
      %1331 = vmatpush2.msra.mxu0 0.0
      %1332 = vmatprep.subr.mxu0 0.0
      %1333 = vmatpush2.msra.mxu0 0.0
      %1334 = vmatprep.subr.mxu0 0.0
      %1335 = vmatpush2.msra.mxu0 0.0
      %1336 = vmatprep.subr.mxu0 0.0
      %1337 = vmatpush2.msra.mxu0 0.0
      %1338 = vmatprep.subr.mxu0 0.0
      %1339 = vmatpush2.msra.mxu0 0.0
      %1340 = vmatprep.subr.mxu0 0.0
      %1341 = vmatpush2.msra.mxu0 0.0
      %1342 = vmatprep.subr.mxu0 0.0
      %1343 = vmatpush2.msra.mxu0 0.0
      %1344 = vmatprep.subr.mxu0 0.0
      %1345 = vmatpush2.msra.mxu0 0.0
      %1346 = vmatprep.subr.mxu0 0.0
      %1347 = vmatpush2.msra.mxu0 0.0
      %1348 = vmatprep.subr.mxu0 0.0
      %1349 = vmatpush2.msra.mxu0 0.0
      %1350 = vmatprep.subr.mxu0 0.0
      %1351 = vmatpush2.msra.mxu0 0.0
      %1352 = vmatprep.subr.mxu0 0.0
      %1353 = vmatpush2.msra.mxu0 0.0
      %1354 = vmatprep.subr.mxu0 0.0
      %1355 = vmatpush2.msra.mxu0 0.0
      %1356 = vmatprep.subr.mxu0 0.0
      %1357 = vmatpush2.msra.mxu0 0.0
      %1358 = vmatprep.subr.mxu0 0.0
      %1359 = vmatpush2.msra.mxu0 0.0
      %1360 = vmatprep.mubr.f32.mxu0 0.0
      %1361 = vmatmul.mubr.f32.gmra.mxu0 %v1198
      %v1362 = vpop.f32.mrf.mxu0
      %v1363 = vadd.f32 0.0, %v1362
      %v1364 = vpop.f32.mrf.mxu0
      %1365 = vmatprep.mubr.f32.mxu0 0.0
      %1366 = vmatmul.mubr.f32.gmra.mxu0 %v1201
      %v1367 = vpop.f32.mrf.mxu0
      %v1368 = vadd.f32 0.0, %v1367
      %v1369 = vpop.f32.mrf.mxu0
      %1370 = vmatprep.mubr.f32.mxu0 0.0
      %1371 = vmatmul.mubr.f32.gmra.mxu0 %v1204
      %v1372 = vpop.f32.mrf.mxu0
      %v1373 = vadd.f32 0.0, %v1372
      %v1374 = vpop.f32.mrf.mxu0
      %1375 = vmatprep.mubr.f32.mxu0 0.0
      %1376 = vmatmul.mubr.f32.gmra.mxu0 %v1207
      %v1377 = vpop.f32.mrf.mxu0
      %v1378 = vadd.f32 0.0, %v1377
      %v1379 = vpop.f32.mrf.mxu0
      %1380 = vmatprep.mubr.f32.mxu0 0.0
      %1381 = vmatmul.mubr.f32.gmra.mxu0 %v1210
      %v1382 = vpop.f32.mrf.mxu0
      %v1383 = vadd.f32 0.0, %v1382
      %v1384 = vpop.f32.mrf.mxu0
      %1385 = vmatprep.mubr.f32.mxu0 0.0
      %1386 = vmatmul.mubr.f32.gmra.mxu0 %v1213
      %v1387 = vpop.f32.mrf.mxu0
      %v1388 = vadd.f32 0.0, %v1387
      %v1389 = vpop.f32.mrf.mxu0
      %1390 = vmatprep.mubr.f32.mxu0 0.0
      %1391 = vmatmul.mubr.f32.gmra.mxu0 %v1216
      %v1392 = vpop.f32.mrf.mxu0
      %v1393 = vadd.f32 0.0, %v1392
      %v1394 = vpop.f32.mrf.mxu0
      %1395 = vmatprep.mubr.f32.mxu0 0.0
      %1396 = vmatmul.mubr.f32.gmra.mxu0 %v1219
      %v1397 = vpop.f32.mrf.mxu0
      %v1398 = vadd.f32 0.0, %v1397
      %v1399 = vpop.f32.mrf.mxu0
      %1400 = vmatprep.mubr.f32.mxu0 0.0
      %1401 = vmatmul.mubr.f32.gmra.mxu0 %v1222
      %v1402 = vpop.f32.mrf.mxu0
      %v1403 = vadd.f32 0.0, %v1402
      %v1404 = vpop.f32.mrf.mxu0
      %1405 = vmatprep.mubr.f32.mxu0 0.0
      %1406 = vmatmul.mubr.f32.gmra.mxu0 %v1225
      %v1407 = vpop.f32.mrf.mxu0
      %v1408 = vadd.f32 0.0, %v1407
      %v1409 = vpop.f32.mrf.mxu0
      %1410 = vmatprep.mubr.f32.mxu0 0.0
      %1411 = vmatmul.mubr.f32.gmra.mxu0 %v1228
      %v1412 = vpop.f32.mrf.mxu0
      %v1413 = vadd.f32 0.0, %v1412
      %v1414 = vpop.f32.mrf.mxu0
      %1415 = vmatprep.mubr.f32.mxu0 0.0
      %1416 = vmatmul.mubr.f32.gmra.mxu0 %v1231
      %v1417 = vpop.f32.mrf.mxu0
      %v1418 = vadd.f32 0.0, %v1417
      %v1419 = vpop.f32.mrf.mxu0
      %1420 = vmatprep.mubr.f32.mxu0 0.0
      %1421 = vmatmul.mubr.f32.gmra.mxu0 %v1234
      %v1422 = vpop.f32.mrf.mxu0
      %v1423 = vadd.f32 0.0, %v1422
      %v1424 = vpop.f32.mrf.mxu0
      %1425 = vmatprep.mubr.f32.mxu0 0.0
      %1426 = vmatmul.mubr.f32.gmra.mxu0 %v1237
      %v1427 = vpop.f32.mrf.mxu0
      %v1428 = vadd.f32 0.0, %v1427
      %v1429 = vpop.f32.mrf.mxu0
      %1430 = vmatprep.mubr.f32.mxu0 0.0
      %1431 = vmatmul.mubr.f32.gmra.mxu0 %v1240
      %v1432 = vpop.f32.mrf.mxu0
      %v1433 = vadd.f32 0.0, %v1432
      %v1434 = vpop.f32.mrf.mxu0
      %1435 = vmatprep.mubr.f32.mxu0 0.0
      %1436 = vmatmul.mubr.f32.gmra.mxu0 %v1243
      %v1437 = vpop.f32.mrf.mxu0
      %v1438 = vadd.f32 0.0, %v1437
      %v1439 = vpop.f32.mrf.mxu0
      %1440 = vmatprep.mubr.f32.mxu0 0.0
      %1441 = vmatmul.mubr.f32.gmra.mxu0 %v1246
      %v1442 = vpop.f32.mrf.mxu0
      %v1443 = vadd.f32 0.0, %v1442
      %v1444 = vpop.f32.mrf.mxu0
      %1445 = vmatprep.mubr.f32.mxu0 0.0
      %1446 = vmatmul.mubr.f32.gmra.mxu0 %v1249
      %v1447 = vpop.f32.mrf.mxu0
      %v1448 = vadd.f32 0.0, %v1447
      %v1449 = vpop.f32.mrf.mxu0
      %1450 = vmatprep.mubr.f32.mxu0 0.0
      %1451 = vmatmul.mubr.f32.gmra.mxu0 %v1252
      %v1452 = vpop.f32.mrf.mxu0
      %v1453 = vadd.f32 0.0, %v1452
      %v1454 = vpop.f32.mrf.mxu0
      %1455 = vmatprep.mubr.f32.mxu0 0.0
      %1456 = vmatmul.mubr.f32.gmra.mxu0 %v1255
      %v1457 = vpop.f32.mrf.mxu0
      %v1458 = vadd.f32 0.0, %v1457
      %v1459 = vpop.f32.mrf.mxu0
      %1460 = vmatprep.mubr.f32.mxu0 0.0
      %1461 = vmatmul.mubr.f32.gmra.mxu0 %v1258
      %v1462 = vpop.f32.mrf.mxu0
      %v1463 = vadd.f32 0.0, %v1462
      %v1464 = vpop.f32.mrf.mxu0
      %1465 = vmatprep.mubr.f32.mxu0 0.0
      %1466 = vmatmul.mubr.f32.gmra.mxu0 %v1261
      %v1467 = vpop.f32.mrf.mxu0
      %v1468 = vadd.f32 0.0, %v1467
      %v1469 = vpop.f32.mrf.mxu0
      %1470 = vmatprep.mubr.f32.mxu0 0.0
      %1471 = vmatmul.mubr.f32.gmra.mxu0 %v1264
      %v1472 = vpop.f32.mrf.mxu0
      %v1473 = vadd.f32 0.0, %v1472
      %v1474 = vpop.f32.mrf.mxu0
      %1475 = vmatprep.mubr.f32.mxu0 0.0
      %1476 = vmatmul.mubr.f32.gmra.mxu0 %v1267
      %v1477 = vpop.f32.mrf.mxu0
      %v1478 = vadd.f32 0.0, %v1477
      %v1479 = vpop.f32.mrf.mxu0
      %1480 = vmatprep.mubr.f32.mxu0 0.0
      %1481 = vmatmul.mubr.f32.gmra.mxu0 %v1270
      %v1482 = vpop.f32.mrf.mxu0
      %v1483 = vadd.f32 0.0, %v1482
      %v1484 = vpop.f32.mrf.mxu0
      %1485 = vmatprep.mubr.f32.mxu0 0.0
      %1486 = vmatmul.mubr.f32.gmra.mxu0 %v1273
      %v1487 = vpop.f32.mrf.mxu0
      %v1488 = vadd.f32 0.0, %v1487
      %v1489 = vpop.f32.mrf.mxu0
      %1490 = vmatprep.mubr.f32.mxu0 0.0
      %1491 = vmatmul.mubr.f32.gmra.mxu0 %v1276
      %v1492 = vpop.f32.mrf.mxu0
      %v1493 = vadd.f32 0.0, %v1492
      %v1494 = vpop.f32.mrf.mxu0
      %1495 = vmatprep.mubr.f32.mxu0 0.0
      %1496 = vmatmul.mubr.f32.gmra.mxu0 %v1279
      %v1497 = vpop.f32.mrf.mxu0
      %v1498 = vadd.f32 0.0, %v1497
      %v1499 = vpop.f32.mrf.mxu0
      %1500 = vmatprep.mubr.f32.mxu0 0.0
      %1501 = vmatmul.mubr.f32.gmra.mxu0 %v1282
      %v1502 = vpop.f32.mrf.mxu0
      %v1503 = vadd.f32 0.0, %v1502
      %v1504 = vpop.f32.mrf.mxu0
      %1505 = vmatprep.mubr.f32.mxu0 0.0
      %1506 = vmatmul.mubr.f32.gmra.mxu0 %v1285
      %v1507 = vpop.f32.mrf.mxu0
      %v1508 = vadd.f32 0.0, %v1507
      %v1509 = vpop.f32.mrf.mxu0
      %1510 = vmatprep.mubr.f32.mxu0 0.0
      %1511 = vmatmul.mubr.f32.gmra.mxu0 %v1288
      %v1512 = vpop.f32.mrf.mxu0
      %v1513 = vadd.f32 0.0, %v1512
      %v1514 = vpop.f32.mrf.mxu0
      %1515 = vmatprep.mubr.f32.mxu0 0.0
      %1516 = vmatmul.mubr.f32.gmra.mxu0 %v1291
      %v1517 = vpop.f32.mrf.mxu0
      %v1518 = vadd.f32 0.0, %v1517
      %v1519 = vpop.f32.mrf.mxu0
      %1520 = vdwg.mxu0
      %v1521 = vadd.f32 %v1035, %v1363
      %v1522 = vadd.f32 %v1036, %v1368
      %v1523 = vadd.f32 %v1037, %v1373
      %v1524 = vadd.f32 %v1038, %v1378
      %v1525 = vadd.f32 %v1039, %v1383
      %v1526 = vadd.f32 %v1040, %v1388
      %v1527 = vadd.f32 %v1041, %v1393
      %v1528 = vadd.f32 %v1042, %v1398
      %v1529 = vadd.f32 %v1043, %v1403
      %v1530 = vadd.f32 %v1044, %v1408
      %v1531 = vadd.f32 %v1045, %v1413
      %v1532 = vadd.f32 %v1046, %v1418
      %v1533 = vadd.f32 %v1047, %v1423
      %v1534 = vadd.f32 %v1048, %v1428
      %v1535 = vadd.f32 %v1049, %v1433
      %v1536 = vadd.f32 %v1050, %v1438
      %v1537 = vadd.f32 %v1051, %v1443
      %v1538 = vadd.f32 %v1052, %v1448
      %v1539 = vadd.f32 %v1053, %v1453
      %v1540 = vadd.f32 %v1054, %v1458
      %v1541 = vadd.f32 %v1055, %v1463
      %v1542 = vadd.f32 %v1056, %v1468
      %v1543 = vadd.f32 %v1057, %v1473
      %v1544 = vadd.f32 %v1058, %v1478
      %v1545 = vadd.f32 %v1059, %v1483
      %v1546 = vadd.f32 %v1060, %v1488
      %v1547 = vadd.f32 %v1061, %v1493
      %v1548 = vadd.f32 %v1062, %v1498
      %v1549 = vadd.f32 %v1063, %v1503
      %v1550 = vadd.f32 %v1064, %v1508
      %v1551 = vadd.f32 %v1065, %v1513
      %v1552 = vadd.f32 %v1066, %v1518
      %v1553 = vld [vmem:[#allocation2 + $0x9] sm:$0xff]
      %v1554 = vld [vmem:[#allocation2 + $0x11] sm:$0xff]
      %v1555 = vld [vmem:[#allocation2 + $0x19] sm:$0xff]
      %v1556 = vld [vmem:[#allocation2 + $0x21] sm:$0xff]
      %v1557 = vld [vmem:[#allocation2 + $0x29] sm:$0xff]
      %v1558 = vld [vmem:[#allocation2 + $0x31] sm:$0xff]
      %v1559 = vld [vmem:[#allocation2 + $0x39] sm:$0xff]
      %v1560 = vld [vmem:[#allocation2 + $0x41] sm:$0xff]
      %v1561 = vld [vmem:[#allocation2 + $0x49] sm:$0xff]
      %v1562 = vld [vmem:[#allocation2 + $0x51] sm:$0xff]
      %v1563 = vld [vmem:[#allocation2 + $0x59] sm:$0xff]
      %v1564 = vld [vmem:[#allocation2 + $0x61] sm:$0xff]
      %v1565 = vld [vmem:[#allocation2 + $0x69] sm:$0xff]
      %v1566 = vld [vmem:[#allocation2 + $0x71] sm:$0xff]
      %v1567 = vld [vmem:[#allocation2 + $0x79] sm:$0xff]
      %v1568 = vld [vmem:[#allocation2 + $0x81] sm:$0xff]
      %v1569 = vld [vmem:[#allocation2 + $0x89] sm:$0xff]
      %v1570 = vld [vmem:[#allocation2 + $0x91] sm:$0xff]
      %v1571 = vld [vmem:[#allocation2 + $0x99] sm:$0xff]
      %v1572 = vld [vmem:[#allocation2 + $0xa1] sm:$0xff]
      %v1573 = vld [vmem:[#allocation2 + $0xa9] sm:$0xff]
      %v1574 = vld [vmem:[#allocation2 + $0xb1] sm:$0xff]
      %v1575 = vld [vmem:[#allocation2 + $0xb9] sm:$0xff]
      %v1576 = vld [vmem:[#allocation2 + $0xc1] sm:$0xff]
      %v1577 = vld [vmem:[#allocation2 + $0xc9] sm:$0xff]
      %v1578 = vld [vmem:[#allocation2 + $0xd1] sm:$0xff]
      %v1579 = vld [vmem:[#allocation2 + $0xd9] sm:$0xff]
      %v1580 = vld [vmem:[#allocation2 + $0xe1] sm:$0xff]
      %v1581 = vld [vmem:[#allocation2 + $0xe9] sm:$0xff]
      %v1582 = vld [vmem:[#allocation2 + $0xf1] sm:$0xff]
      %v1583 = vld [vmem:[#allocation2 + $0xf9] sm:$0xff]
      %v1584 = vld [vmem:[#allocation2 + $0x101] sm:$0xff]
      %vm1585 = vcmp.lt.s32.totalorder %v285, 15
      %vm1586 = vcmp.lt.s32.totalorder %v286, 15
      %vm1587 = vcmp.lt.s32.totalorder %v287, 15
      %vm1588 = vcmp.lt.s32.totalorder %v288, 15
      %vm1589 = vcmp.lt.s32.totalorder %v289, 15
      %vm1590 = vcmp.lt.s32.totalorder %v290, 15
      %vm1591 = vcmp.lt.s32.totalorder %v291, 15
      %vm1592 = vcmp.lt.s32.totalorder %v292, 15
      %vm1593 = vcmp.lt.s32.totalorder %v293, 15
      %vm1594 = vcmp.lt.s32.totalorder %v294, 15
      %vm1595 = vcmp.lt.s32.totalorder %v295, 15
      %vm1596 = vcmp.lt.s32.totalorder %v296, 15
      %vm1597 = vcmp.lt.s32.totalorder %v297, 15
      %vm1598 = vcmp.lt.s32.totalorder %v298, 15
      %vm1599 = vcmp.lt.s32.totalorder %v299, 15
      %vm1600 = vcmp.lt.s32.totalorder %v300, 15
      %vm1601 = vcmp.lt.s32.totalorder %v301, 15
      %vm1602 = vcmp.lt.s32.totalorder %v302, 15
      %vm1603 = vcmp.lt.s32.totalorder %v303, 15
      %vm1604 = vcmp.lt.s32.totalorder %v304, 15
      %vm1605 = vcmp.lt.s32.totalorder %v305, 15
      %vm1606 = vcmp.lt.s32.totalorder %v306, 15
      %vm1607 = vcmp.lt.s32.totalorder %v307, 15
      %vm1608 = vcmp.lt.s32.totalorder %v308, 15
      %vm1609 = vcmp.lt.s32.totalorder %v309, 15
      %vm1610 = vcmp.lt.s32.totalorder %v310, 15
      %vm1611 = vcmp.lt.s32.totalorder %v311, 15
      %vm1612 = vcmp.lt.s32.totalorder %v312, 15
      %vm1613 = vcmp.lt.s32.totalorder %v313, 15
      %vm1614 = vcmp.lt.s32.totalorder %v314, 15
      %vm1615 = vcmp.lt.s32.totalorder %v315, 15
      %vm1616 = vcmp.lt.s32.totalorder %v316, 15
      %vm1617 = vmand %vm421, %vm1585
      %vm1618 = vmand %vm422, %vm1586
      %vm1619 = vmand %vm423, %vm1587
      %vm1620 = vmand %vm424, %vm1588
      %vm1621 = vmand %vm425, %vm1589
      %vm1622 = vmand %vm426, %vm1590
      %vm1623 = vmand %vm427, %vm1591
      %vm1624 = vmand %vm428, %vm1592
      %vm1625 = vmand %vm429, %vm1593
      %vm1626 = vmand %vm430, %vm1594
      %vm1627 = vmand %vm431, %vm1595
      %vm1628 = vmand %vm432, %vm1596
      %vm1629 = vmand %vm433, %vm1597
      %vm1630 = vmand %vm434, %vm1598
      %vm1631 = vmand %vm435, %vm1599
      %vm1632 = vmand %vm436, %vm1600
      %vm1633 = vmand %vm437, %vm1601
      %vm1634 = vmand %vm438, %vm1602
      %vm1635 = vmand %vm439, %vm1603
      %vm1636 = vmand %vm440, %vm1604
      %vm1637 = vmand %vm441, %vm1605
      %vm1638 = vmand %vm442, %vm1606
      %vm1639 = vmand %vm443, %vm1607
      %vm1640 = vmand %vm444, %vm1608
      %vm1641 = vmand %vm445, %vm1609
      %vm1642 = vmand %vm446, %vm1610
      %vm1643 = vmand %vm447, %vm1611
      %vm1644 = vmand %vm448, %vm1612
      %vm1645 = vmand %vm449, %vm1613
      %vm1646 = vmand %vm450, %vm1614
      %vm1647 = vmand %vm451, %vm1615
      %vm1648 = vmand %vm452, %vm1616
      %v1649 = vsel %vm1617, 1, 0
      %v1650 = vsel %vm1618, 1, 0
      %v1651 = vsel %vm1619, 1, 0
      %v1652 = vsel %vm1620, 1, 0
      %v1653 = vsel %vm1621, 1, 0
      %v1654 = vsel %vm1622, 1, 0
      %v1655 = vsel %vm1623, 1, 0
      %v1656 = vsel %vm1624, 1, 0
      %v1657 = vsel %vm1625, 1, 0
      %v1658 = vsel %vm1626, 1, 0
      %v1659 = vsel %vm1627, 1, 0
      %v1660 = vsel %vm1628, 1, 0
      %v1661 = vsel %vm1629, 1, 0
      %v1662 = vsel %vm1630, 1, 0
      %v1663 = vsel %vm1631, 1, 0
      %v1664 = vsel %vm1632, 1, 0
      %v1665 = vsel %vm1633, 1, 0
      %v1666 = vsel %vm1634, 1, 0
      %v1667 = vsel %vm1635, 1, 0
      %v1668 = vsel %vm1636, 1, 0
      %v1669 = vsel %vm1637, 1, 0
      %v1670 = vsel %vm1638, 1, 0
      %v1671 = vsel %vm1639, 1, 0
      %v1672 = vsel %vm1640, 1, 0
      %v1673 = vsel %vm1641, 1, 0
      %v1674 = vsel %vm1642, 1, 0
      %v1675 = vsel %vm1643, 1, 0
      %v1676 = vsel %vm1644, 1, 0
      %v1677 = vsel %vm1645, 1, 0
      %v1678 = vsel %vm1646, 1, 0
      %v1679 = vsel %vm1647, 1, 0
      %v1680 = vsel %vm1648, 1, 0
      %1681 = vset.pattern.permute.xlu0 0
      %1682 = vperm.xlu0 %1681, %v1649
      %v1683 = vpop.permute.xlu0 %1682
      %1684 = vset.pattern.permute.xlu0 0
      %1685 = vperm.xlu0 %1684, %v1650
      %v1686 = vpop.permute.xlu0 %1685
      %1687 = vset.pattern.permute.xlu0 0
      %1688 = vperm.xlu0 %1687, %v1651
      %v1689 = vpop.permute.xlu0 %1688
      %1690 = vset.pattern.permute.xlu0 0
      %1691 = vperm.xlu0 %1690, %v1652
      %v1692 = vpop.permute.xlu0 %1691
      %1693 = vset.pattern.permute.xlu0 0
      %1694 = vperm.xlu0 %1693, %v1653
      %v1695 = vpop.permute.xlu0 %1694
      %1696 = vset.pattern.permute.xlu0 0
      %1697 = vperm.xlu0 %1696, %v1654
      %v1698 = vpop.permute.xlu0 %1697
      %1699 = vset.pattern.permute.xlu0 0
      %1700 = vperm.xlu0 %1699, %v1655
      %v1701 = vpop.permute.xlu0 %1700
      %1702 = vset.pattern.permute.xlu0 0
      %1703 = vperm.xlu0 %1702, %v1656
      %v1704 = vpop.permute.xlu0 %1703
      %1705 = vset.pattern.permute.xlu0 0
      %1706 = vperm.xlu0 %1705, %v1657
      %v1707 = vpop.permute.xlu0 %1706
      %1708 = vset.pattern.permute.xlu0 0
      %1709 = vperm.xlu0 %1708, %v1658
      %v1710 = vpop.permute.xlu0 %1709
      %1711 = vset.pattern.permute.xlu0 0
      %1712 = vperm.xlu0 %1711, %v1659
      %v1713 = vpop.permute.xlu0 %1712
      %1714 = vset.pattern.permute.xlu0 0
      %1715 = vperm.xlu0 %1714, %v1660
      %v1716 = vpop.permute.xlu0 %1715
      %1717 = vset.pattern.permute.xlu0 0
      %1718 = vperm.xlu0 %1717, %v1661
      %v1719 = vpop.permute.xlu0 %1718
      %1720 = vset.pattern.permute.xlu0 0
      %1721 = vperm.xlu0 %1720, %v1662
      %v1722 = vpop.permute.xlu0 %1721
      %1723 = vset.pattern.permute.xlu0 0
      %1724 = vperm.xlu0 %1723, %v1663
      %v1725 = vpop.permute.xlu0 %1724
      %1726 = vset.pattern.permute.xlu0 0
      %1727 = vperm.xlu0 %1726, %v1664
      %v1728 = vpop.permute.xlu0 %1727
      %1729 = vset.pattern.permute.xlu0 0
      %1730 = vperm.xlu0 %1729, %v1665
      %v1731 = vpop.permute.xlu0 %1730
      %1732 = vset.pattern.permute.xlu0 0
      %1733 = vperm.xlu0 %1732, %v1666
      %v1734 = vpop.permute.xlu0 %1733
      %1735 = vset.pattern.permute.xlu0 0
      %1736 = vperm.xlu0 %1735, %v1667
      %v1737 = vpop.permute.xlu0 %1736
      %1738 = vset.pattern.permute.xlu0 0
      %1739 = vperm.xlu0 %1738, %v1668
      %v1740 = vpop.permute.xlu0 %1739
      %1741 = vset.pattern.permute.xlu0 0
      %1742 = vperm.xlu0 %1741, %v1669
      %v1743 = vpop.permute.xlu0 %1742
      %1744 = vset.pattern.permute.xlu0 0
      %1745 = vperm.xlu0 %1744, %v1670
      %v1746 = vpop.permute.xlu0 %1745
      %1747 = vset.pattern.permute.xlu0 0
      %1748 = vperm.xlu0 %1747, %v1671
      %v1749 = vpop.permute.xlu0 %1748
      %1750 = vset.pattern.permute.xlu0 0
      %1751 = vperm.xlu0 %1750, %v1672
      %v1752 = vpop.permute.xlu0 %1751
      %1753 = vset.pattern.permute.xlu0 0
      %1754 = vperm.xlu0 %1753, %v1673
      %v1755 = vpop.permute.xlu0 %1754
      %1756 = vset.pattern.permute.xlu0 0
      %1757 = vperm.xlu0 %1756, %v1674
      %v1758 = vpop.permute.xlu0 %1757
      %1759 = vset.pattern.permute.xlu0 0
      %1760 = vperm.xlu0 %1759, %v1675
      %v1761 = vpop.permute.xlu0 %1760
      %1762 = vset.pattern.permute.xlu0 0
      %1763 = vperm.xlu0 %1762, %v1676
      %v1764 = vpop.permute.xlu0 %1763
      %1765 = vset.pattern.permute.xlu0 0
      %1766 = vperm.xlu0 %1765, %v1677
      %v1767 = vpop.permute.xlu0 %1766
      %1768 = vset.pattern.permute.xlu0 0
      %1769 = vperm.xlu0 %1768, %v1678
      %v1770 = vpop.permute.xlu0 %1769
      %1771 = vset.pattern.permute.xlu0 0
      %1772 = vperm.xlu0 %1771, %v1679
      %v1773 = vpop.permute.xlu0 %1772
      %1774 = vset.pattern.permute.xlu0 0
      %1775 = vperm.xlu0 %1774, %v1680
      %v1776 = vpop.permute.xlu0 %1775
      %vm1777 = vcmp.eq.s32.totalorder %v1683, 1
      %vm1778 = vcmp.eq.s32.totalorder %v1686, 1
      %vm1779 = vcmp.eq.s32.totalorder %v1689, 1
      %vm1780 = vcmp.eq.s32.totalorder %v1692, 1
      %vm1781 = vcmp.eq.s32.totalorder %v1695, 1
      %vm1782 = vcmp.eq.s32.totalorder %v1698, 1
      %vm1783 = vcmp.eq.s32.totalorder %v1701, 1
      %vm1784 = vcmp.eq.s32.totalorder %v1704, 1
      %vm1785 = vcmp.eq.s32.totalorder %v1707, 1
      %vm1786 = vcmp.eq.s32.totalorder %v1710, 1
      %vm1787 = vcmp.eq.s32.totalorder %v1713, 1
      %vm1788 = vcmp.eq.s32.totalorder %v1716, 1
      %vm1789 = vcmp.eq.s32.totalorder %v1719, 1
      %vm1790 = vcmp.eq.s32.totalorder %v1722, 1
      %vm1791 = vcmp.eq.s32.totalorder %v1725, 1
      %vm1792 = vcmp.eq.s32.totalorder %v1728, 1
      %vm1793 = vcmp.eq.s32.totalorder %v1731, 1
      %vm1794 = vcmp.eq.s32.totalorder %v1734, 1
      %vm1795 = vcmp.eq.s32.totalorder %v1737, 1
      %vm1796 = vcmp.eq.s32.totalorder %v1740, 1
      %vm1797 = vcmp.eq.s32.totalorder %v1743, 1
      %vm1798 = vcmp.eq.s32.totalorder %v1746, 1
      %vm1799 = vcmp.eq.s32.totalorder %v1749, 1
      %vm1800 = vcmp.eq.s32.totalorder %v1752, 1
      %vm1801 = vcmp.eq.s32.totalorder %v1755, 1
      %vm1802 = vcmp.eq.s32.totalorder %v1758, 1
      %vm1803 = vcmp.eq.s32.totalorder %v1761, 1
      %vm1804 = vcmp.eq.s32.totalorder %v1764, 1
      %vm1805 = vcmp.eq.s32.totalorder %v1767, 1
      %vm1806 = vcmp.eq.s32.totalorder %v1770, 1
      %vm1807 = vcmp.eq.s32.totalorder %v1773, 1
      %vm1808 = vcmp.eq.s32.totalorder %v1776, 1
      %v1809 = vsel %vm1777, %v1553, 0.0
      %v1810 = vsel %vm1778, %v1554, 0.0
      %v1811 = vsel %vm1779, %v1555, 0.0
      %v1812 = vsel %vm1780, %v1556, 0.0
      %v1813 = vsel %vm1781, %v1557, 0.0
      %v1814 = vsel %vm1782, %v1558, 0.0
      %v1815 = vsel %vm1783, %v1559, 0.0
      %v1816 = vsel %vm1784, %v1560, 0.0
      %v1817 = vsel %vm1785, %v1561, 0.0
      %v1818 = vsel %vm1786, %v1562, 0.0
      %v1819 = vsel %vm1787, %v1563, 0.0
      %v1820 = vsel %vm1788, %v1564, 0.0
      %v1821 = vsel %vm1789, %v1565, 0.0
      %v1822 = vsel %vm1790, %v1566, 0.0
      %v1823 = vsel %vm1791, %v1567, 0.0
      %v1824 = vsel %vm1792, %v1568, 0.0
      %v1825 = vsel %vm1793, %v1569, 0.0
      %v1826 = vsel %vm1794, %v1570, 0.0
      %v1827 = vsel %vm1795, %v1571, 0.0
      %v1828 = vsel %vm1796, %v1572, 0.0
      %v1829 = vsel %vm1797, %v1573, 0.0
      %v1830 = vsel %vm1798, %v1574, 0.0
      %v1831 = vsel %vm1799, %v1575, 0.0
      %v1832 = vsel %vm1800, %v1576, 0.0
      %v1833 = vsel %vm1801, %v1577, 0.0
      %v1834 = vsel %vm1802, %v1578, 0.0
      %v1835 = vsel %vm1803, %v1579, 0.0
      %v1836 = vsel %vm1804, %v1580, 0.0
      %v1837 = vsel %vm1805, %v1581, 0.0
      %v1838 = vsel %vm1806, %v1582, 0.0
      %v1839 = vsel %vm1807, %v1583, 0.0
      %v1840 = vsel %vm1808, %v1584, 0.0
      %s1841 = scalar_lea.vmem %s2, 8
      %v1842 = vld [vmem:[%s1841] sm:$0x7]
      %v1844 = vsel %vm349, %v1809, 0
      %v1847 = vsel %vm349, %v1810, 0
      %v1850 = vsel %vm349, %v1811, 0
      %v1853 = vsel %vm349, %v1812, 0
      %v1856 = vsel %vm349, %v1813, 0
      %v1859 = vsel %vm349, %v1814, 0
      %v1862 = vsel %vm349, %v1815, 0
      %v1865 = vsel %vm349, %v1816, 0
      %v1868 = vsel %vm349, %v1817, 0
      %v1871 = vsel %vm349, %v1818, 0
      %v1874 = vsel %vm349, %v1819, 0
      %v1877 = vsel %vm349, %v1820, 0
      %v1880 = vsel %vm349, %v1821, 0
      %v1883 = vsel %vm349, %v1822, 0
      %v1886 = vsel %vm349, %v1823, 0
      %v1889 = vsel %vm349, %v1824, 0
      %v1892 = vsel %vm349, %v1825, 0
      %v1895 = vsel %vm349, %v1826, 0
      %v1898 = vsel %vm349, %v1827, 0
      %v1901 = vsel %vm349, %v1828, 0
      %v1904 = vsel %vm349, %v1829, 0
      %v1907 = vsel %vm349, %v1830, 0
      %v1910 = vsel %vm349, %v1831, 0
      %v1913 = vsel %vm349, %v1832, 0
      %v1916 = vsel %vm349, %v1833, 0
      %v1919 = vsel %vm349, %v1834, 0
      %v1922 = vsel %vm349, %v1835, 0
      %v1925 = vsel %vm349, %v1836, 0
      %v1928 = vsel %vm349, %v1837, 0
      %v1931 = vsel %vm349, %v1838, 0
      %v1934 = vsel %vm349, %v1839, 0
      %v1937 = vsel %vm349, %v1840, 0
      %v1940 = vsel %vm806, %v1842, 0
      %1942 = vmatprep.subr.mxu0 0.0
      %1943 = vmatpush1.msra.mxu0 0.0
      %1944 = vmatprep.subr.mxu0 0.0
      %1945 = vmatpush1.msra.mxu0 0.0
      %1946 = vmatprep.subr.mxu0 0.0
      %1947 = vmatpush1.msra.mxu0 0.0
      %1948 = vmatprep.subr.mxu0 0.0
      %1949 = vmatpush1.msra.mxu0 0.0
      %1950 = vmatprep.subr.mxu0 0.0
      %1951 = vmatpush1.msra.mxu0 0.0
      %1952 = vmatprep.subr.mxu0 0.0
      %1953 = vmatpush1.msra.mxu0 0.0
      %1954 = vmatprep.subr.mxu0 0.0
      %1955 = vmatpush1.msra.mxu0 0.0
      %1956 = vmatprep.subr.mxu0 0.0
      %1957 = vmatpush1.msra.mxu0 0.0
      %1958 = vmatprep.subr.mxu0 0.0
      %1959 = vmatpush1.msra.mxu0 0.0
      %1960 = vmatprep.subr.mxu0 0.0
      %1961 = vmatpush1.msra.mxu0 0.0
      %1962 = vmatprep.subr.mxu0 0.0
      %1963 = vmatpush1.msra.mxu0 0.0
      %1964 = vmatprep.subr.mxu0 0.0
      %1965 = vmatpush1.msra.mxu0 0.0
      %1966 = vmatprep.subr.mxu0 0.0
      %1967 = vmatpush1.msra.mxu0 0.0
      %1968 = vmatprep.subr.mxu0 0.0
      %1969 = vmatpush1.msra.mxu0 0.0
      %1970 = vmatprep.subr.mxu0 0.0
      %1971 = vmatpush1.msra.mxu0 0.0
      %1972 = vmatprep.subr.mxu0 0.0
      %1973 = vmatpush1.msra.mxu0 %v1940
      %1974 = vmatprep.subr.mxu0 0.0
      %1975 = vmatpush2.msra.mxu0 0.0
      %1976 = vmatprep.subr.mxu0 0.0
      %1977 = vmatpush2.msra.mxu0 0.0
      %1978 = vmatprep.subr.mxu0 0.0
      %1979 = vmatpush2.msra.mxu0 0.0
      %1980 = vmatprep.subr.mxu0 0.0
      %1981 = vmatpush2.msra.mxu0 0.0
      %1982 = vmatprep.subr.mxu0 0.0
      %1983 = vmatpush2.msra.mxu0 0.0
      %1984 = vmatprep.subr.mxu0 0.0
      %1985 = vmatpush2.msra.mxu0 0.0
      %1986 = vmatprep.subr.mxu0 0.0
      %1987 = vmatpush2.msra.mxu0 0.0
      %1988 = vmatprep.subr.mxu0 0.0
      %1989 = vmatpush2.msra.mxu0 0.0
      %1990 = vmatprep.subr.mxu0 0.0
      %1991 = vmatpush2.msra.mxu0 0.0
      %1992 = vmatprep.subr.mxu0 0.0
      %1993 = vmatpush2.msra.mxu0 0.0
      %1994 = vmatprep.subr.mxu0 0.0
      %1995 = vmatpush2.msra.mxu0 0.0
      %1996 = vmatprep.subr.mxu0 0.0
      %1997 = vmatpush2.msra.mxu0 0.0
      %1998 = vmatprep.subr.mxu0 0.0
      %1999 = vmatpush2.msra.mxu0 0.0
      %2000 = vmatprep.subr.mxu0 0.0
      %2001 = vmatpush2.msra.mxu0 0.0
      %2002 = vmatprep.subr.mxu0 0.0
      %2003 = vmatpush2.msra.mxu0 0.0
      %2004 = vmatprep.subr.mxu0 0.0
      %2005 = vmatpush2.msra.mxu0 0.0
      %2006 = vmatprep.mubr.f32.mxu0 0.0
      %2007 = vmatmul.mubr.f32.gmra.mxu0 %v1844
      %v2008 = vpop.f32.mrf.mxu0
      %v2009 = vadd.f32 0.0, %v2008
      %v2010 = vpop.f32.mrf.mxu0
      %2011 = vmatprep.mubr.f32.mxu0 0.0
      %2012 = vmatmul.mubr.f32.gmra.mxu0 %v1847
      %v2013 = vpop.f32.mrf.mxu0
      %v2014 = vadd.f32 0.0, %v2013
      %v2015 = vpop.f32.mrf.mxu0
      %2016 = vmatprep.mubr.f32.mxu0 0.0
      %2017 = vmatmul.mubr.f32.gmra.mxu0 %v1850
      %v2018 = vpop.f32.mrf.mxu0
      %v2019 = vadd.f32 0.0, %v2018
      %v2020 = vpop.f32.mrf.mxu0
      %2021 = vmatprep.mubr.f32.mxu0 0.0
      %2022 = vmatmul.mubr.f32.gmra.mxu0 %v1853
      %v2023 = vpop.f32.mrf.mxu0
      %v2024 = vadd.f32 0.0, %v2023
      %v2025 = vpop.f32.mrf.mxu0
      %2026 = vmatprep.mubr.f32.mxu0 0.0
      %2027 = vmatmul.mubr.f32.gmra.mxu0 %v1856
      %v2028 = vpop.f32.mrf.mxu0
      %v2029 = vadd.f32 0.0, %v2028
      %v2030 = vpop.f32.mrf.mxu0
      %2031 = vmatprep.mubr.f32.mxu0 0.0
      %2032 = vmatmul.mubr.f32.gmra.mxu0 %v1859
      %v2033 = vpop.f32.mrf.mxu0
      %v2034 = vadd.f32 0.0, %v2033
      %v2035 = vpop.f32.mrf.mxu0
      %2036 = vmatprep.mubr.f32.mxu0 0.0
      %2037 = vmatmul.mubr.f32.gmra.mxu0 %v1862
      %v2038 = vpop.f32.mrf.mxu0
      %v2039 = vadd.f32 0.0, %v2038
      %v2040 = vpop.f32.mrf.mxu0
      %2041 = vmatprep.mubr.f32.mxu0 0.0
      %2042 = vmatmul.mubr.f32.gmra.mxu0 %v1865
      %v2043 = vpop.f32.mrf.mxu0
      %v2044 = vadd.f32 0.0, %v2043
      %v2045 = vpop.f32.mrf.mxu0
      %2046 = vmatprep.mubr.f32.mxu0 0.0
      %2047 = vmatmul.mubr.f32.gmra.mxu0 %v1868
      %v2048 = vpop.f32.mrf.mxu0
      %v2049 = vadd.f32 0.0, %v2048
      %v2050 = vpop.f32.mrf.mxu0
      %2051 = vmatprep.mubr.f32.mxu0 0.0
      %2052 = vmatmul.mubr.f32.gmra.mxu0 %v1871
      %v2053 = vpop.f32.mrf.mxu0
      %v2054 = vadd.f32 0.0, %v2053
      %v2055 = vpop.f32.mrf.mxu0
      %2056 = vmatprep.mubr.f32.mxu0 0.0
      %2057 = vmatmul.mubr.f32.gmra.mxu0 %v1874
      %v2058 = vpop.f32.mrf.mxu0
      %v2059 = vadd.f32 0.0, %v2058
      %v2060 = vpop.f32.mrf.mxu0
      %2061 = vmatprep.mubr.f32.mxu0 0.0
      %2062 = vmatmul.mubr.f32.gmra.mxu0 %v1877
      %v2063 = vpop.f32.mrf.mxu0
      %v2064 = vadd.f32 0.0, %v2063
      %v2065 = vpop.f32.mrf.mxu0
      %2066 = vmatprep.mubr.f32.mxu0 0.0
      %2067 = vmatmul.mubr.f32.gmra.mxu0 %v1880
      %v2068 = vpop.f32.mrf.mxu0
      %v2069 = vadd.f32 0.0, %v2068
      %v2070 = vpop.f32.mrf.mxu0
      %2071 = vmatprep.mubr.f32.mxu0 0.0
      %2072 = vmatmul.mubr.f32.gmra.mxu0 %v1883
      %v2073 = vpop.f32.mrf.mxu0
      %v2074 = vadd.f32 0.0, %v2073
      %v2075 = vpop.f32.mrf.mxu0
      %2076 = vmatprep.mubr.f32.mxu0 0.0
      %2077 = vmatmul.mubr.f32.gmra.mxu0 %v1886
      %v2078 = vpop.f32.mrf.mxu0
      %v2079 = vadd.f32 0.0, %v2078
      %v2080 = vpop.f32.mrf.mxu0
      %2081 = vmatprep.mubr.f32.mxu0 0.0
      %2082 = vmatmul.mubr.f32.gmra.mxu0 %v1889
      %v2083 = vpop.f32.mrf.mxu0
      %v2084 = vadd.f32 0.0, %v2083
      %v2085 = vpop.f32.mrf.mxu0
      %2086 = vmatprep.mubr.f32.mxu0 0.0
      %2087 = vmatmul.mubr.f32.gmra.mxu0 %v1892
      %v2088 = vpop.f32.mrf.mxu0
      %v2089 = vadd.f32 0.0, %v2088
      %v2090 = vpop.f32.mrf.mxu0
      %2091 = vmatprep.mubr.f32.mxu0 0.0
      %2092 = vmatmul.mubr.f32.gmra.mxu0 %v1895
      %v2093 = vpop.f32.mrf.mxu0
      %v2094 = vadd.f32 0.0, %v2093
      %v2095 = vpop.f32.mrf.mxu0
      %2096 = vmatprep.mubr.f32.mxu0 0.0
      %2097 = vmatmul.mubr.f32.gmra.mxu0 %v1898
      %v2098 = vpop.f32.mrf.mxu0
      %v2099 = vadd.f32 0.0, %v2098
      %v2100 = vpop.f32.mrf.mxu0
      %2101 = vmatprep.mubr.f32.mxu0 0.0
      %2102 = vmatmul.mubr.f32.gmra.mxu0 %v1901
      %v2103 = vpop.f32.mrf.mxu0
      %v2104 = vadd.f32 0.0, %v2103
      %v2105 = vpop.f32.mrf.mxu0
      %2106 = vmatprep.mubr.f32.mxu0 0.0
      %2107 = vmatmul.mubr.f32.gmra.mxu0 %v1904
      %v2108 = vpop.f32.mrf.mxu0
      %v2109 = vadd.f32 0.0, %v2108
      %v2110 = vpop.f32.mrf.mxu0
      %2111 = vmatprep.mubr.f32.mxu0 0.0
      %2112 = vmatmul.mubr.f32.gmra.mxu0 %v1907
      %v2113 = vpop.f32.mrf.mxu0
      %v2114 = vadd.f32 0.0, %v2113
      %v2115 = vpop.f32.mrf.mxu0
      %2116 = vmatprep.mubr.f32.mxu0 0.0
      %2117 = vmatmul.mubr.f32.gmra.mxu0 %v1910
      %v2118 = vpop.f32.mrf.mxu0
      %v2119 = vadd.f32 0.0, %v2118
      %v2120 = vpop.f32.mrf.mxu0
      %2121 = vmatprep.mubr.f32.mxu0 0.0
      %2122 = vmatmul.mubr.f32.gmra.mxu0 %v1913
      %v2123 = vpop.f32.mrf.mxu0
      %v2124 = vadd.f32 0.0, %v2123
      %v2125 = vpop.f32.mrf.mxu0
      %2126 = vmatprep.mubr.f32.mxu0 0.0
      %2127 = vmatmul.mubr.f32.gmra.mxu0 %v1916
      %v2128 = vpop.f32.mrf.mxu0
      %v2129 = vadd.f32 0.0, %v2128
      %v2130 = vpop.f32.mrf.mxu0
      %2131 = vmatprep.mubr.f32.mxu0 0.0
      %2132 = vmatmul.mubr.f32.gmra.mxu0 %v1919
      %v2133 = vpop.f32.mrf.mxu0
      %v2134 = vadd.f32 0.0, %v2133
      %v2135 = vpop.f32.mrf.mxu0
      %2136 = vmatprep.mubr.f32.mxu0 0.0
      %2137 = vmatmul.mubr.f32.gmra.mxu0 %v1922
      %v2138 = vpop.f32.mrf.mxu0
      %v2139 = vadd.f32 0.0, %v2138
      %v2140 = vpop.f32.mrf.mxu0
      %2141 = vmatprep.mubr.f32.mxu0 0.0
      %2142 = vmatmul.mubr.f32.gmra.mxu0 %v1925
      %v2143 = vpop.f32.mrf.mxu0
      %v2144 = vadd.f32 0.0, %v2143
      %v2145 = vpop.f32.mrf.mxu0
      %2146 = vmatprep.mubr.f32.mxu0 0.0
      %2147 = vmatmul.mubr.f32.gmra.mxu0 %v1928
      %v2148 = vpop.f32.mrf.mxu0
      %v2149 = vadd.f32 0.0, %v2148
      %v2150 = vpop.f32.mrf.mxu0
      %2151 = vmatprep.mubr.f32.mxu0 0.0
      %2152 = vmatmul.mubr.f32.gmra.mxu0 %v1931
      %v2153 = vpop.f32.mrf.mxu0
      %v2154 = vadd.f32 0.0, %v2153
      %v2155 = vpop.f32.mrf.mxu0
      %2156 = vmatprep.mubr.f32.mxu0 0.0
      %2157 = vmatmul.mubr.f32.gmra.mxu0 %v1934
      %v2158 = vpop.f32.mrf.mxu0
      %v2159 = vadd.f32 0.0, %v2158
      %v2160 = vpop.f32.mrf.mxu0
      %2161 = vmatprep.mubr.f32.mxu0 0.0
      %2162 = vmatmul.mubr.f32.gmra.mxu0 %v1937
      %v2163 = vpop.f32.mrf.mxu0
      %v2164 = vadd.f32 0.0, %v2163
      %v2165 = vpop.f32.mrf.mxu0
      %2166 = vdwg.mxu0
      %v2167 = vadd.f32 %v1521, %v2009
      %v2168 = vadd.f32 %v1522, %v2014
      %v2169 = vadd.f32 %v1523, %v2019
      %v2170 = vadd.f32 %v1524, %v2024
      %v2171 = vadd.f32 %v1525, %v2029
      %v2172 = vadd.f32 %v1526, %v2034
      %v2173 = vadd.f32 %v1527, %v2039
      %v2174 = vadd.f32 %v1528, %v2044
      %v2175 = vadd.f32 %v1529, %v2049
      %v2176 = vadd.f32 %v1530, %v2054
      %v2177 = vadd.f32 %v1531, %v2059
      %v2178 = vadd.f32 %v1532, %v2064
      %v2179 = vadd.f32 %v1533, %v2069
      %v2180 = vadd.f32 %v1534, %v2074
      %v2181 = vadd.f32 %v1535, %v2079
      %v2182 = vadd.f32 %v1536, %v2084
      %v2183 = vadd.f32 %v1537, %v2089
      %v2184 = vadd.f32 %v1538, %v2094
      %v2185 = vadd.f32 %v1539, %v2099
      %v2186 = vadd.f32 %v1540, %v2104
      %v2187 = vadd.f32 %v1541, %v2109
      %v2188 = vadd.f32 %v1542, %v2114
      %v2189 = vadd.f32 %v1543, %v2119
      %v2190 = vadd.f32 %v1544, %v2124
      %v2191 = vadd.f32 %v1545, %v2129
      %v2192 = vadd.f32 %v1546, %v2134
      %v2193 = vadd.f32 %v1547, %v2139
      %v2194 = vadd.f32 %v1548, %v2144
      %v2195 = vadd.f32 %v1549, %v2149
      %v2196 = vadd.f32 %v1550, %v2154
      %v2197 = vadd.f32 %v1551, %v2159
      %v2198 = vadd.f32 %v1552, %v2164
      %v2199 = vld [vmem:[#allocation2 + $0x17] sm:$0xff]
      %v2200 = vld [vmem:[#allocation2 + $0x1f] sm:$0xff]
      %v2201 = vld [vmem:[#allocation2 + $0x27] sm:$0xff]
      %v2202 = vld [vmem:[#allocation2 + $0x2f] sm:$0xff]
      %v2203 = vld [vmem:[#allocation2 + $0x37] sm:$0xff]
      %v2204 = vld [vmem:[#allocation2 + $0x3f] sm:$0xff]
      %v2205 = vld [vmem:[#allocation2 + $0x47] sm:$0xff]
      %v2206 = vld [vmem:[#allocation2 + $0x4f] sm:$0xff]
      %v2207 = vld [vmem:[#allocation2 + $0x57] sm:$0xff]
      %v2208 = vld [vmem:[#allocation2 + $0x5f] sm:$0xff]
      %v2209 = vld [vmem:[#allocation2 + $0x67] sm:$0xff]
      %v2210 = vld [vmem:[#allocation2 + $0x6f] sm:$0xff]
      %v2211 = vld [vmem:[#allocation2 + $0x77] sm:$0xff]
      %v2212 = vld [vmem:[#allocation2 + $0x7f] sm:$0xff]
      %v2213 = vld [vmem:[#allocation2 + $0x87] sm:$0xff]
      %v2214 = vld [vmem:[#allocation2 + $0x8f] sm:$0xff]
      %v2215 = vld [vmem:[#allocation2 + $0x97] sm:$0xff]
      %v2216 = vld [vmem:[#allocation2 + $0x9f] sm:$0xff]
      %v2217 = vld [vmem:[#allocation2 + $0xa7] sm:$0xff]
      %v2218 = vld [vmem:[#allocation2 + $0xaf] sm:$0xff]
      %v2219 = vld [vmem:[#allocation2 + $0xb7] sm:$0xff]
      %v2220 = vld [vmem:[#allocation2 + $0xbf] sm:$0xff]
      %v2221 = vld [vmem:[#allocation2 + $0xc7] sm:$0xff]
      %v2222 = vld [vmem:[#allocation2 + $0xcf] sm:$0xff]
      %v2223 = vld [vmem:[#allocation2 + $0xd7] sm:$0xff]
      %v2224 = vld [vmem:[#allocation2 + $0xdf] sm:$0xff]
      %v2225 = vld [vmem:[#allocation2 + $0xe7] sm:$0xff]
      %v2226 = vld [vmem:[#allocation2 + $0xef] sm:$0xff]
      %v2227 = vld [vmem:[#allocation2 + $0xf7] sm:$0xff]
      %v2228 = vld [vmem:[#allocation2 + $0xff] sm:$0xff]
      %v2229 = vld [vmem:[#allocation2 + $0x107] sm:$0xff]
      %v2230 = vld [vmem:[#allocation2 + $0x10f] sm:$0xff]
      %v2231 = vsel %vm453, 1, 0
      %v2232 = vsel %vm454, 1, 0
      %v2233 = vsel %vm455, 1, 0
      %v2234 = vsel %vm456, 1, 0
      %v2235 = vsel %vm457, 1, 0
      %v2236 = vsel %vm458, 1, 0
      %v2237 = vsel %vm459, 1, 0
      %v2238 = vsel %vm460, 1, 0
      %v2239 = vsel %vm461, 1, 0
      %v2240 = vsel %vm462, 1, 0
      %v2241 = vsel %vm463, 1, 0
      %v2242 = vsel %vm464, 1, 0
      %v2243 = vsel %vm465, 1, 0
      %v2244 = vsel %vm466, 1, 0
      %v2245 = vsel %vm467, 1, 0
      %v2246 = vsel %vm468, 1, 0
      %v2247 = vsel %vm469, 1, 0
      %v2248 = vsel %vm470, 1, 0
      %v2249 = vsel %vm471, 1, 0
      %v2250 = vsel %vm472, 1, 0
      %v2251 = vsel %vm473, 1, 0
      %v2252 = vsel %vm474, 1, 0
      %v2253 = vsel %vm475, 1, 0
      %v2254 = vsel %vm476, 1, 0
      %v2255 = vsel %vm477, 1, 0
      %v2256 = vsel %vm478, 1, 0
      %v2257 = vsel %vm479, 1, 0
      %v2258 = vsel %vm480, 1, 0
      %v2259 = vsel %vm481, 1, 0
      %v2260 = vsel %vm482, 1, 0
      %v2261 = vsel %vm483, 1, 0
      %v2262 = vsel %vm484, 1, 0
      %2263 = vset.pattern.permute.xlu0 0
      %2264 = vperm.xlu0 %2263, %v2231
      %v2265 = vpop.permute.xlu0 %2264
      %2266 = vset.pattern.permute.xlu0 0
      %2267 = vperm.xlu0 %2266, %v2232
      %v2268 = vpop.permute.xlu0 %2267
      %2269 = vset.pattern.permute.xlu0 0
      %2270 = vperm.xlu0 %2269, %v2233
      %v2271 = vpop.permute.xlu0 %2270
      %2272 = vset.pattern.permute.xlu0 0
      %2273 = vperm.xlu0 %2272, %v2234
      %v2274 = vpop.permute.xlu0 %2273
      %2275 = vset.pattern.permute.xlu0 0
      %2276 = vperm.xlu0 %2275, %v2235
      %v2277 = vpop.permute.xlu0 %2276
      %2278 = vset.pattern.permute.xlu0 0
      %2279 = vperm.xlu0 %2278, %v2236
      %v2280 = vpop.permute.xlu0 %2279
      %2281 = vset.pattern.permute.xlu0 0
      %2282 = vperm.xlu0 %2281, %v2237
      %v2283 = vpop.permute.xlu0 %2282
      %2284 = vset.pattern.permute.xlu0 0
      %2285 = vperm.xlu0 %2284, %v2238
      %v2286 = vpop.permute.xlu0 %2285
      %2287 = vset.pattern.permute.xlu0 0
      %2288 = vperm.xlu0 %2287, %v2239
      %v2289 = vpop.permute.xlu0 %2288
      %2290 = vset.pattern.permute.xlu0 0
      %2291 = vperm.xlu0 %2290, %v2240
      %v2292 = vpop.permute.xlu0 %2291
      %2293 = vset.pattern.permute.xlu0 0
      %2294 = vperm.xlu0 %2293, %v2241
      %v2295 = vpop.permute.xlu0 %2294
      %2296 = vset.pattern.permute.xlu0 0
      %2297 = vperm.xlu0 %2296, %v2242
      %v2298 = vpop.permute.xlu0 %2297
      %2299 = vset.pattern.permute.xlu0 0
      %2300 = vperm.xlu0 %2299, %v2243
      %v2301 = vpop.permute.xlu0 %2300
      %2302 = vset.pattern.permute.xlu0 0
      %2303 = vperm.xlu0 %2302, %v2244
      %v2304 = vpop.permute.xlu0 %2303
      %2305 = vset.pattern.permute.xlu0 0
      %2306 = vperm.xlu0 %2305, %v2245
      %v2307 = vpop.permute.xlu0 %2306
      %2308 = vset.pattern.permute.xlu0 0
      %2309 = vperm.xlu0 %2308, %v2246
      %v2310 = vpop.permute.xlu0 %2309
      %2311 = vset.pattern.permute.xlu0 0
      %2312 = vperm.xlu0 %2311, %v2247
      %v2313 = vpop.permute.xlu0 %2312
      %2314 = vset.pattern.permute.xlu0 0
      %2315 = vperm.xlu0 %2314, %v2248
      %v2316 = vpop.permute.xlu0 %2315
      %2317 = vset.pattern.permute.xlu0 0
      %2318 = vperm.xlu0 %2317, %v2249
      %v2319 = vpop.permute.xlu0 %2318
      %2320 = vset.pattern.permute.xlu0 0
      %2321 = vperm.xlu0 %2320, %v2250
      %v2322 = vpop.permute.xlu0 %2321
      %2323 = vset.pattern.permute.xlu0 0
      %2324 = vperm.xlu0 %2323, %v2251
      %v2325 = vpop.permute.xlu0 %2324
      %2326 = vset.pattern.permute.xlu0 0
      %2327 = vperm.xlu0 %2326, %v2252
      %v2328 = vpop.permute.xlu0 %2327
      %2329 = vset.pattern.permute.xlu0 0
      %2330 = vperm.xlu0 %2329, %v2253
      %v2331 = vpop.permute.xlu0 %2330
      %2332 = vset.pattern.permute.xlu0 0
      %2333 = vperm.xlu0 %2332, %v2254
      %v2334 = vpop.permute.xlu0 %2333
      %2335 = vset.pattern.permute.xlu0 0
      %2336 = vperm.xlu0 %2335, %v2255
      %v2337 = vpop.permute.xlu0 %2336
      %2338 = vset.pattern.permute.xlu0 0
      %2339 = vperm.xlu0 %2338, %v2256
      %v2340 = vpop.permute.xlu0 %2339
      %2341 = vset.pattern.permute.xlu0 0
      %2342 = vperm.xlu0 %2341, %v2257
      %v2343 = vpop.permute.xlu0 %2342
      %2344 = vset.pattern.permute.xlu0 0
      %2345 = vperm.xlu0 %2344, %v2258
      %v2346 = vpop.permute.xlu0 %2345
      %2347 = vset.pattern.permute.xlu0 0
      %2348 = vperm.xlu0 %2347, %v2259
      %v2349 = vpop.permute.xlu0 %2348
      %2350 = vset.pattern.permute.xlu0 0
      %2351 = vperm.xlu0 %2350, %v2260
      %v2352 = vpop.permute.xlu0 %2351
      %2353 = vset.pattern.permute.xlu0 0
      %2354 = vperm.xlu0 %2353, %v2261
      %v2355 = vpop.permute.xlu0 %2354
      %2356 = vset.pattern.permute.xlu0 0
      %2357 = vperm.xlu0 %2356, %v2262
      %v2358 = vpop.permute.xlu0 %2357
      %vm2359 = vcmp.eq.s32.totalorder %v2265, 1
      %vm2360 = vcmp.eq.s32.totalorder %v2268, 1
      %vm2361 = vcmp.eq.s32.totalorder %v2271, 1
      %vm2362 = vcmp.eq.s32.totalorder %v2274, 1
      %vm2363 = vcmp.eq.s32.totalorder %v2277, 1
      %vm2364 = vcmp.eq.s32.totalorder %v2280, 1
      %vm2365 = vcmp.eq.s32.totalorder %v2283, 1
      %vm2366 = vcmp.eq.s32.totalorder %v2286, 1
      %vm2367 = vcmp.eq.s32.totalorder %v2289, 1
      %vm2368 = vcmp.eq.s32.totalorder %v2292, 1
      %vm2369 = vcmp.eq.s32.totalorder %v2295, 1
      %vm2370 = vcmp.eq.s32.totalorder %v2298, 1
      %vm2371 = vcmp.eq.s32.totalorder %v2301, 1
      %vm2372 = vcmp.eq.s32.totalorder %v2304, 1
      %vm2373 = vcmp.eq.s32.totalorder %v2307, 1
      %vm2374 = vcmp.eq.s32.totalorder %v2310, 1
      %vm2375 = vcmp.eq.s32.totalorder %v2313, 1
      %vm2376 = vcmp.eq.s32.totalorder %v2316, 1
      %vm2377 = vcmp.eq.s32.totalorder %v2319, 1
      %vm2378 = vcmp.eq.s32.totalorder %v2322, 1
      %vm2379 = vcmp.eq.s32.totalorder %v2325, 1
      %vm2380 = vcmp.eq.s32.totalorder %v2328, 1
      %vm2381 = vcmp.eq.s32.totalorder %v2331, 1
      %vm2382 = vcmp.eq.s32.totalorder %v2334, 1
      %vm2383 = vcmp.eq.s32.totalorder %v2337, 1
      %vm2384 = vcmp.eq.s32.totalorder %v2340, 1
      %vm2385 = vcmp.eq.s32.totalorder %v2343, 1
      %vm2386 = vcmp.eq.s32.totalorder %v2346, 1
      %vm2387 = vcmp.eq.s32.totalorder %v2349, 1
      %vm2388 = vcmp.eq.s32.totalorder %v2352, 1
      %vm2389 = vcmp.eq.s32.totalorder %v2355, 1
      %vm2390 = vcmp.eq.s32.totalorder %v2358, 1
      %v2391 = vsel %vm2359, %v2199, 0.0
      %v2392 = vsel %vm2360, %v2200, 0.0
      %v2393 = vsel %vm2361, %v2201, 0.0
      %v2394 = vsel %vm2362, %v2202, 0.0
      %v2395 = vsel %vm2363, %v2203, 0.0
      %v2396 = vsel %vm2364, %v2204, 0.0
      %v2397 = vsel %vm2365, %v2205, 0.0
      %v2398 = vsel %vm2366, %v2206, 0.0
      %v2399 = vsel %vm2367, %v2207, 0.0
      %v2400 = vsel %vm2368, %v2208, 0.0
      %v2401 = vsel %vm2369, %v2209, 0.0
      %v2402 = vsel %vm2370, %v2210, 0.0
      %v2403 = vsel %vm2371, %v2211, 0.0
      %v2404 = vsel %vm2372, %v2212, 0.0
      %v2405 = vsel %vm2373, %v2213, 0.0
      %v2406 = vsel %vm2374, %v2214, 0.0
      %v2407 = vsel %vm2375, %v2215, 0.0
      %v2408 = vsel %vm2376, %v2216, 0.0
      %v2409 = vsel %vm2377, %v2217, 0.0
      %v2410 = vsel %vm2378, %v2218, 0.0
      %v2411 = vsel %vm2379, %v2219, 0.0
      %v2412 = vsel %vm2380, %v2220, 0.0
      %v2413 = vsel %vm2381, %v2221, 0.0
      %v2414 = vsel %vm2382, %v2222, 0.0
      %v2415 = vsel %vm2383, %v2223, 0.0
      %v2416 = vsel %vm2384, %v2224, 0.0
      %v2417 = vsel %vm2385, %v2225, 0.0
      %v2418 = vsel %vm2386, %v2226, 0.0
      %v2419 = vsel %vm2387, %v2227, 0.0
      %v2420 = vsel %vm2388, %v2228, 0.0
      %v2421 = vsel %vm2389, %v2229, 0.0
      %v2422 = vsel %vm2390, %v2230, 0.0
      %s2423 = scalar_lea.vmem %s2, 12
      %v2424 = vld [vmem:[%s2423] sm:$0x7]
      %v2426 = vsel %vm349, %v2391, 0
      %v2429 = vsel %vm349, %v2392, 0
      %v2432 = vsel %vm349, %v2393, 0
      %v2435 = vsel %vm349, %v2394, 0
      %v2438 = vsel %vm349, %v2395, 0
      %v2441 = vsel %vm349, %v2396, 0
      %v2444 = vsel %vm349, %v2397, 0
      %v2447 = vsel %vm349, %v2398, 0
      %v2450 = vsel %vm349, %v2399, 0
      %v2453 = vsel %vm349, %v2400, 0
      %v2456 = vsel %vm349, %v2401, 0
      %v2459 = vsel %vm349, %v2402, 0
      %v2462 = vsel %vm349, %v2403, 0
      %v2465 = vsel %vm349, %v2404, 0
      %v2468 = vsel %vm349, %v2405, 0
      %v2471 = vsel %vm349, %v2406, 0
      %v2474 = vsel %vm349, %v2407, 0
      %v2477 = vsel %vm349, %v2408, 0
      %v2480 = vsel %vm349, %v2409, 0
      %v2483 = vsel %vm349, %v2410, 0
      %v2486 = vsel %vm349, %v2411, 0
      %v2489 = vsel %vm349, %v2412, 0
      %v2492 = vsel %vm349, %v2413, 0
      %v2495 = vsel %vm349, %v2414, 0
      %v2498 = vsel %vm349, %v2415, 0
      %v2501 = vsel %vm349, %v2416, 0
      %v2504 = vsel %vm349, %v2417, 0
      %v2507 = vsel %vm349, %v2418, 0
      %v2510 = vsel %vm349, %v2419, 0
      %v2513 = vsel %vm349, %v2420, 0
      %v2516 = vsel %vm349, %v2421, 0
      %v2519 = vsel %vm349, %v2422, 0
      %v2522 = vsel %vm806, %v2424, 0
      %2524 = vmatprep.subr.mxu0 0.0
      %2525 = vmatpush1.msra.mxu0 0.0
      %2526 = vmatprep.subr.mxu0 0.0
      %2527 = vmatpush1.msra.mxu0 0.0
      %2528 = vmatprep.subr.mxu0 0.0
      %2529 = vmatpush1.msra.mxu0 0.0
      %2530 = vmatprep.subr.mxu0 0.0
      %2531 = vmatpush1.msra.mxu0 0.0
      %2532 = vmatprep.subr.mxu0 0.0
      %2533 = vmatpush1.msra.mxu0 0.0
      %2534 = vmatprep.subr.mxu0 0.0
      %2535 = vmatpush1.msra.mxu0 0.0
      %2536 = vmatprep.subr.mxu0 0.0
      %2537 = vmatpush1.msra.mxu0 0.0
      %2538 = vmatprep.subr.mxu0 0.0
      %2539 = vmatpush1.msra.mxu0 0.0
      %2540 = vmatprep.subr.mxu0 0.0
      %2541 = vmatpush1.msra.mxu0 0.0
      %2542 = vmatprep.subr.mxu0 0.0
      %2543 = vmatpush1.msra.mxu0 0.0
      %2544 = vmatprep.subr.mxu0 0.0
      %2545 = vmatpush1.msra.mxu0 0.0
      %2546 = vmatprep.subr.mxu0 0.0
      %2547 = vmatpush1.msra.mxu0 0.0
      %2548 = vmatprep.subr.mxu0 0.0
      %2549 = vmatpush1.msra.mxu0 0.0
      %2550 = vmatprep.subr.mxu0 0.0
      %2551 = vmatpush1.msra.mxu0 0.0
      %2552 = vmatprep.subr.mxu0 0.0
      %2553 = vmatpush1.msra.mxu0 0.0
      %2554 = vmatprep.subr.mxu0 0.0
      %2555 = vmatpush1.msra.mxu0 %v2522
      %2556 = vmatprep.subr.mxu0 0.0
      %2557 = vmatpush2.msra.mxu0 0.0
      %2558 = vmatprep.subr.mxu0 0.0
      %2559 = vmatpush2.msra.mxu0 0.0
      %2560 = vmatprep.subr.mxu0 0.0
      %2561 = vmatpush2.msra.mxu0 0.0
      %2562 = vmatprep.subr.mxu0 0.0
      %2563 = vmatpush2.msra.mxu0 0.0
      %2564 = vmatprep.subr.mxu0 0.0
      %2565 = vmatpush2.msra.mxu0 0.0
      %2566 = vmatprep.subr.mxu0 0.0
      %2567 = vmatpush2.msra.mxu0 0.0
      %2568 = vmatprep.subr.mxu0 0.0
      %2569 = vmatpush2.msra.mxu0 0.0
      %2570 = vmatprep.subr.mxu0 0.0
      %2571 = vmatpush2.msra.mxu0 0.0
      %2572 = vmatprep.subr.mxu0 0.0
      %2573 = vmatpush2.msra.mxu0 0.0
      %2574 = vmatprep.subr.mxu0 0.0
      %2575 = vmatpush2.msra.mxu0 0.0
      %2576 = vmatprep.subr.mxu0 0.0
      %2577 = vmatpush2.msra.mxu0 0.0
      %2578 = vmatprep.subr.mxu0 0.0
      %2579 = vmatpush2.msra.mxu0 0.0
      %2580 = vmatprep.subr.mxu0 0.0
      %2581 = vmatpush2.msra.mxu0 0.0
      %2582 = vmatprep.subr.mxu0 0.0
      %2583 = vmatpush2.msra.mxu0 0.0
      %2584 = vmatprep.subr.mxu0 0.0
      %2585 = vmatpush2.msra.mxu0 0.0
      %2586 = vmatprep.subr.mxu0 0.0
      %2587 = vmatpush2.msra.mxu0 0.0
      %2588 = vmatprep.mubr.f32.mxu0 0.0
      %2589 = vmatmul.mubr.f32.gmra.mxu0 %v2426
      %v2590 = vpop.f32.mrf.mxu0
      %v2591 = vadd.f32 0.0, %v2590
      %v2592 = vpop.f32.mrf.mxu0
      %2593 = vmatprep.mubr.f32.mxu0 0.0
      %2594 = vmatmul.mubr.f32.gmra.mxu0 %v2429
      %v2595 = vpop.f32.mrf.mxu0
      %v2596 = vadd.f32 0.0, %v2595
      %v2597 = vpop.f32.mrf.mxu0
      %2598 = vmatprep.mubr.f32.mxu0 0.0
      %2599 = vmatmul.mubr.f32.gmra.mxu0 %v2432
      %v2600 = vpop.f32.mrf.mxu0
      %v2601 = vadd.f32 0.0, %v2600
      %v2602 = vpop.f32.mrf.mxu0
      %2603 = vmatprep.mubr.f32.mxu0 0.0
      %2604 = vmatmul.mubr.f32.gmra.mxu0 %v2435
      %v2605 = vpop.f32.mrf.mxu0
      %v2606 = vadd.f32 0.0, %v2605
      %v2607 = vpop.f32.mrf.mxu0
      %2608 = vmatprep.mubr.f32.mxu0 0.0
      %2609 = vmatmul.mubr.f32.gmra.mxu0 %v2438
      %v2610 = vpop.f32.mrf.mxu0
      %v2611 = vadd.f32 0.0, %v2610
      %v2612 = vpop.f32.mrf.mxu0
      %2613 = vmatprep.mubr.f32.mxu0 0.0
      %2614 = vmatmul.mubr.f32.gmra.mxu0 %v2441
      %v2615 = vpop.f32.mrf.mxu0
      %v2616 = vadd.f32 0.0, %v2615
      %v2617 = vpop.f32.mrf.mxu0
      %2618 = vmatprep.mubr.f32.mxu0 0.0
      %2619 = vmatmul.mubr.f32.gmra.mxu0 %v2444
      %v2620 = vpop.f32.mrf.mxu0
      %v2621 = vadd.f32 0.0, %v2620
      %v2622 = vpop.f32.mrf.mxu0
      %2623 = vmatprep.mubr.f32.mxu0 0.0
      %2624 = vmatmul.mubr.f32.gmra.mxu0 %v2447
      %v2625 = vpop.f32.mrf.mxu0
      %v2626 = vadd.f32 0.0, %v2625
      %v2627 = vpop.f32.mrf.mxu0
      %2628 = vmatprep.mubr.f32.mxu0 0.0
      %2629 = vmatmul.mubr.f32.gmra.mxu0 %v2450
      %v2630 = vpop.f32.mrf.mxu0
      %v2631 = vadd.f32 0.0, %v2630
      %v2632 = vpop.f32.mrf.mxu0
      %2633 = vmatprep.mubr.f32.mxu0 0.0
      %2634 = vmatmul.mubr.f32.gmra.mxu0 %v2453
      %v2635 = vpop.f32.mrf.mxu0
      %v2636 = vadd.f32 0.0, %v2635
      %v2637 = vpop.f32.mrf.mxu0
      %2638 = vmatprep.mubr.f32.mxu0 0.0
      %2639 = vmatmul.mubr.f32.gmra.mxu0 %v2456
      %v2640 = vpop.f32.mrf.mxu0
      %v2641 = vadd.f32 0.0, %v2640
      %v2642 = vpop.f32.mrf.mxu0
      %2643 = vmatprep.mubr.f32.mxu0 0.0
      %2644 = vmatmul.mubr.f32.gmra.mxu0 %v2459
      %v2645 = vpop.f32.mrf.mxu0
      %v2646 = vadd.f32 0.0, %v2645
      %v2647 = vpop.f32.mrf.mxu0
      %2648 = vmatprep.mubr.f32.mxu0 0.0
      %2649 = vmatmul.mubr.f32.gmra.mxu0 %v2462
      %v2650 = vpop.f32.mrf.mxu0
      %v2651 = vadd.f32 0.0, %v2650
      %v2652 = vpop.f32.mrf.mxu0
      %2653 = vmatprep.mubr.f32.mxu0 0.0
      %2654 = vmatmul.mubr.f32.gmra.mxu0 %v2465
      %v2655 = vpop.f32.mrf.mxu0
      %v2656 = vadd.f32 0.0, %v2655
      %v2657 = vpop.f32.mrf.mxu0
      %2658 = vmatprep.mubr.f32.mxu0 0.0
      %2659 = vmatmul.mubr.f32.gmra.mxu0 %v2468
      %v2660 = vpop.f32.mrf.mxu0
      %v2661 = vadd.f32 0.0, %v2660
      %v2662 = vpop.f32.mrf.mxu0
      %2663 = vmatprep.mubr.f32.mxu0 0.0
      %2664 = vmatmul.mubr.f32.gmra.mxu0 %v2471
      %v2665 = vpop.f32.mrf.mxu0
      %v2666 = vadd.f32 0.0, %v2665
      %v2667 = vpop.f32.mrf.mxu0
      %2668 = vmatprep.mubr.f32.mxu0 0.0
      %2669 = vmatmul.mubr.f32.gmra.mxu0 %v2474
      %v2670 = vpop.f32.mrf.mxu0
      %v2671 = vadd.f32 0.0, %v2670
      %v2672 = vpop.f32.mrf.mxu0
      %2673 = vmatprep.mubr.f32.mxu0 0.0
      %2674 = vmatmul.mubr.f32.gmra.mxu0 %v2477
      %v2675 = vpop.f32.mrf.mxu0
      %v2676 = vadd.f32 0.0, %v2675
      %v2677 = vpop.f32.mrf.mxu0
      %2678 = vmatprep.mubr.f32.mxu0 0.0
      %2679 = vmatmul.mubr.f32.gmra.mxu0 %v2480
      %v2680 = vpop.f32.mrf.mxu0
      %v2681 = vadd.f32 0.0, %v2680
      %v2682 = vpop.f32.mrf.mxu0
      %2683 = vmatprep.mubr.f32.mxu0 0.0
      %2684 = vmatmul.mubr.f32.gmra.mxu0 %v2483
      %v2685 = vpop.f32.mrf.mxu0
      %v2686 = vadd.f32 0.0, %v2685
      %v2687 = vpop.f32.mrf.mxu0
      %2688 = vmatprep.mubr.f32.mxu0 0.0
      %2689 = vmatmul.mubr.f32.gmra.mxu0 %v2486
      %v2690 = vpop.f32.mrf.mxu0
      %v2691 = vadd.f32 0.0, %v2690
      %v2692 = vpop.f32.mrf.mxu0
      %2693 = vmatprep.mubr.f32.mxu0 0.0
      %2694 = vmatmul.mubr.f32.gmra.mxu0 %v2489
      %v2695 = vpop.f32.mrf.mxu0
      %v2696 = vadd.f32 0.0, %v2695
      %v2697 = vpop.f32.mrf.mxu0
      %2698 = vmatprep.mubr.f32.mxu0 0.0
      %2699 = vmatmul.mubr.f32.gmra.mxu0 %v2492
      %v2700 = vpop.f32.mrf.mxu0
      %v2701 = vadd.f32 0.0, %v2700
      %v2702 = vpop.f32.mrf.mxu0
      %2703 = vmatprep.mubr.f32.mxu0 0.0
      %2704 = vmatmul.mubr.f32.gmra.mxu0 %v2495
      %v2705 = vpop.f32.mrf.mxu0
      %v2706 = vadd.f32 0.0, %v2705
      %v2707 = vpop.f32.mrf.mxu0
      %2708 = vmatprep.mubr.f32.mxu0 0.0
      %2709 = vmatmul.mubr.f32.gmra.mxu0 %v2498
      %v2710 = vpop.f32.mrf.mxu0
      %v2711 = vadd.f32 0.0, %v2710
      %v2712 = vpop.f32.mrf.mxu0
      %2713 = vmatprep.mubr.f32.mxu0 0.0
      %2714 = vmatmul.mubr.f32.gmra.mxu0 %v2501
      %v2715 = vpop.f32.mrf.mxu0
      %v2716 = vadd.f32 0.0, %v2715
      %v2717 = vpop.f32.mrf.mxu0
      %2718 = vmatprep.mubr.f32.mxu0 0.0
      %2719 = vmatmul.mubr.f32.gmra.mxu0 %v2504
      %v2720 = vpop.f32.mrf.mxu0
      %v2721 = vadd.f32 0.0, %v2720
      %v2722 = vpop.f32.mrf.mxu0
      %2723 = vmatprep.mubr.f32.mxu0 0.0
      %2724 = vmatmul.mubr.f32.gmra.mxu0 %v2507
      %v2725 = vpop.f32.mrf.mxu0
      %v2726 = vadd.f32 0.0, %v2725
      %v2727 = vpop.f32.mrf.mxu0
      %2728 = vmatprep.mubr.f32.mxu0 0.0
      %2729 = vmatmul.mubr.f32.gmra.mxu0 %v2510
      %v2730 = vpop.f32.mrf.mxu0
      %v2731 = vadd.f32 0.0, %v2730
      %v2732 = vpop.f32.mrf.mxu0
      %2733 = vmatprep.mubr.f32.mxu0 0.0
      %2734 = vmatmul.mubr.f32.gmra.mxu0 %v2513
      %v2735 = vpop.f32.mrf.mxu0
      %v2736 = vadd.f32 0.0, %v2735
      %v2737 = vpop.f32.mrf.mxu0
      %2738 = vmatprep.mubr.f32.mxu0 0.0
      %2739 = vmatmul.mubr.f32.gmra.mxu0 %v2516
      %v2740 = vpop.f32.mrf.mxu0
      %v2741 = vadd.f32 0.0, %v2740
      %v2742 = vpop.f32.mrf.mxu0
      %2743 = vmatprep.mubr.f32.mxu0 0.0
      %2744 = vmatmul.mubr.f32.gmra.mxu0 %v2519
      %v2745 = vpop.f32.mrf.mxu0
      %v2746 = vadd.f32 0.0, %v2745
      %v2747 = vpop.f32.mrf.mxu0
      %2748 = vdwg.mxu0
      %v2749 = vadd.f32 %v2167, %v2591
      %v2750 = vadd.f32 %v2168, %v2596
      %v2751 = vadd.f32 %v2169, %v2601
      %v2752 = vadd.f32 %v2170, %v2606
      %v2753 = vadd.f32 %v2171, %v2611
      %v2754 = vadd.f32 %v2172, %v2616
      %v2755 = vadd.f32 %v2173, %v2621
      %v2756 = vadd.f32 %v2174, %v2626
      %v2757 = vadd.f32 %v2175, %v2631
      %v2758 = vadd.f32 %v2176, %v2636
      %v2759 = vadd.f32 %v2177, %v2641
      %v2760 = vadd.f32 %v2178, %v2646
      %v2761 = vadd.f32 %v2179, %v2651
      %v2762 = vadd.f32 %v2180, %v2656
      %v2763 = vadd.f32 %v2181, %v2661
      %v2764 = vadd.f32 %v2182, %v2666
      %v2765 = vadd.f32 %v2183, %v2671
      %v2766 = vadd.f32 %v2184, %v2676
      %v2767 = vadd.f32 %v2185, %v2681
      %v2768 = vadd.f32 %v2186, %v2686
      %v2769 = vadd.f32 %v2187, %v2691
      %v2770 = vadd.f32 %v2188, %v2696
      %v2771 = vadd.f32 %v2189, %v2701
      %v2772 = vadd.f32 %v2190, %v2706
      %v2773 = vadd.f32 %v2191, %v2711
      %v2774 = vadd.f32 %v2192, %v2716
      %v2775 = vadd.f32 %v2193, %v2721
      %v2776 = vadd.f32 %v2194, %v2726
      %v2777 = vadd.f32 %v2195, %v2731
      %v2778 = vadd.f32 %v2196, %v2736
      %v2779 = vadd.f32 %v2197, %v2741
      %v2780 = vadd.f32 %v2198, %v2746
      %v2781 = vld [vmem:[#allocation2 + $0x18] sm:$0xff]
      %v2782 = vld [vmem:[#allocation2 + $0x20] sm:$0xff]
      %v2783 = vld [vmem:[#allocation2 + $0x28] sm:$0xff]
      %v2784 = vld [vmem:[#allocation2 + $0x30] sm:$0xff]
      %v2785 = vld [vmem:[#allocation2 + $0x38] sm:$0xff]
      %v2786 = vld [vmem:[#allocation2 + $0x40] sm:$0xff]
      %v2787 = vld [vmem:[#allocation2 + $0x48] sm:$0xff]
      %v2788 = vld [vmem:[#allocation2 + $0x50] sm:$0xff]
      %v2789 = vld [vmem:[#allocation2 + $0x58] sm:$0xff]
      %v2790 = vld [vmem:[#allocation2 + $0x60] sm:$0xff]
      %v2791 = vld [vmem:[#allocation2 + $0x68] sm:$0xff]
      %v2792 = vld [vmem:[#allocation2 + $0x70] sm:$0xff]
      %v2793 = vld [vmem:[#allocation2 + $0x78] sm:$0xff]
      %v2794 = vld [vmem:[#allocation2 + $0x80] sm:$0xff]
      %v2795 = vld [vmem:[#allocation2 + $0x88] sm:$0xff]
      %v2796 = vld [vmem:[#allocation2 + $0x90] sm:$0xff]
      %v2797 = vld [vmem:[#allocation2 + $0x98] sm:$0xff]
      %v2798 = vld [vmem:[#allocation2 + $0xa0] sm:$0xff]
      %v2799 = vld [vmem:[#allocation2 + $0xa8] sm:$0xff]
      %v2800 = vld [vmem:[#allocation2 + $0xb0] sm:$0xff]
      %v2801 = vld [vmem:[#allocation2 + $0xb8] sm:$0xff]
      %v2802 = vld [vmem:[#allocation2 + $0xc0] sm:$0xff]
      %v2803 = vld [vmem:[#allocation2 + $0xc8] sm:$0xff]
      %v2804 = vld [vmem:[#allocation2 + $0xd0] sm:$0xff]
      %v2805 = vld [vmem:[#allocation2 + $0xd8] sm:$0xff]
      %v2806 = vld [vmem:[#allocation2 + $0xe0] sm:$0xff]
      %v2807 = vld [vmem:[#allocation2 + $0xe8] sm:$0xff]
      %v2808 = vld [vmem:[#allocation2 + $0xf0] sm:$0xff]
      %v2809 = vld [vmem:[#allocation2 + $0xf8] sm:$0xff]
      %v2810 = vld [vmem:[#allocation2 + $0x100] sm:$0xff]
      %v2811 = vld [vmem:[#allocation2 + $0x108] sm:$0xff]
      %v2812 = vld [vmem:[#allocation2 + $0x110] sm:$0xff]
      %s2813 = scalar_lea.vmem %s2, 16
      %v2814 = vld [vmem:[%s2813] sm:$0x7]
      %v2816 = vsel %vm349, %v2781, 0
      %v2819 = vsel %vm349, %v2782, 0
      %v2822 = vsel %vm349, %v2783, 0
      %v2825 = vsel %vm349, %v2784, 0
      %v2828 = vsel %vm349, %v2785, 0
      %v2831 = vsel %vm349, %v2786, 0
      %v2834 = vsel %vm349, %v2787, 0
      %v2837 = vsel %vm349, %v2788, 0
      %v2840 = vsel %vm349, %v2789, 0
      %v2843 = vsel %vm349, %v2790, 0
      %v2846 = vsel %vm349, %v2791, 0
      %v2849 = vsel %vm349, %v2792, 0
      %v2852 = vsel %vm349, %v2793, 0
      %v2855 = vsel %vm349, %v2794, 0
      %v2858 = vsel %vm349, %v2795, 0
      %v2861 = vsel %vm349, %v2796, 0
      %v2864 = vsel %vm349, %v2797, 0
      %v2867 = vsel %vm349, %v2798, 0
      %v2870 = vsel %vm349, %v2799, 0
      %v2873 = vsel %vm349, %v2800, 0
      %v2876 = vsel %vm349, %v2801, 0
      %v2879 = vsel %vm349, %v2802, 0
      %v2882 = vsel %vm349, %v2803, 0
      %v2885 = vsel %vm349, %v2804, 0
      %v2888 = vsel %vm349, %v2805, 0
      %v2891 = vsel %vm349, %v2806, 0
      %v2894 = vsel %vm349, %v2807, 0
      %v2897 = vsel %vm349, %v2808, 0
      %v2900 = vsel %vm349, %v2809, 0
      %v2903 = vsel %vm349, %v2810, 0
      %v2906 = vsel %vm349, %v2811, 0
      %v2909 = vsel %vm349, %v2812, 0
      %v2912 = vsel %vm806, %v2814, 0
      %2914 = vmatprep.subr.mxu0 0.0
      %2915 = vmatpush1.msra.mxu0 0.0
      %2916 = vmatprep.subr.mxu0 0.0
      %2917 = vmatpush1.msra.mxu0 0.0
      %2918 = vmatprep.subr.mxu0 0.0
      %2919 = vmatpush1.msra.mxu0 0.0
      %2920 = vmatprep.subr.mxu0 0.0
      %2921 = vmatpush1.msra.mxu0 0.0
      %2922 = vmatprep.subr.mxu0 0.0
      %2923 = vmatpush1.msra.mxu0 0.0
      %2924 = vmatprep.subr.mxu0 0.0
      %2925 = vmatpush1.msra.mxu0 0.0
      %2926 = vmatprep.subr.mxu0 0.0
      %2927 = vmatpush1.msra.mxu0 0.0
      %2928 = vmatprep.subr.mxu0 0.0
      %2929 = vmatpush1.msra.mxu0 0.0
      %2930 = vmatprep.subr.mxu0 0.0
      %2931 = vmatpush1.msra.mxu0 0.0
      %2932 = vmatprep.subr.mxu0 0.0
      %2933 = vmatpush1.msra.mxu0 0.0
      %2934 = vmatprep.subr.mxu0 0.0
      %2935 = vmatpush1.msra.mxu0 0.0
      %2936 = vmatprep.subr.mxu0 0.0
      %2937 = vmatpush1.msra.mxu0 0.0
      %2938 = vmatprep.subr.mxu0 0.0
      %2939 = vmatpush1.msra.mxu0 0.0
      %2940 = vmatprep.subr.mxu0 0.0
      %2941 = vmatpush1.msra.mxu0 0.0
      %2942 = vmatprep.subr.mxu0 0.0
      %2943 = vmatpush1.msra.mxu0 0.0
      %2944 = vmatprep.subr.mxu0 0.0
      %2945 = vmatpush1.msra.mxu0 %v2912
      %2946 = vmatprep.subr.mxu0 0.0
      %2947 = vmatpush2.msra.mxu0 0.0
      %2948 = vmatprep.subr.mxu0 0.0
      %2949 = vmatpush2.msra.mxu0 0.0
      %2950 = vmatprep.subr.mxu0 0.0
      %2951 = vmatpush2.msra.mxu0 0.0
      %2952 = vmatprep.subr.mxu0 0.0
      %2953 = vmatpush2.msra.mxu0 0.0
      %2954 = vmatprep.subr.mxu0 0.0
      %2955 = vmatpush2.msra.mxu0 0.0
      %2956 = vmatprep.subr.mxu0 0.0
      %2957 = vmatpush2.msra.mxu0 0.0
      %2958 = vmatprep.subr.mxu0 0.0
      %2959 = vmatpush2.msra.mxu0 0.0
      %2960 = vmatprep.subr.mxu0 0.0
      %2961 = vmatpush2.msra.mxu0 0.0
      %2962 = vmatprep.subr.mxu0 0.0
      %2963 = vmatpush2.msra.mxu0 0.0
      %2964 = vmatprep.subr.mxu0 0.0
      %2965 = vmatpush2.msra.mxu0 0.0
      %2966 = vmatprep.subr.mxu0 0.0
      %2967 = vmatpush2.msra.mxu0 0.0
      %2968 = vmatprep.subr.mxu0 0.0
      %2969 = vmatpush2.msra.mxu0 0.0
      %2970 = vmatprep.subr.mxu0 0.0
      %2971 = vmatpush2.msra.mxu0 0.0
      %2972 = vmatprep.subr.mxu0 0.0
      %2973 = vmatpush2.msra.mxu0 0.0
      %2974 = vmatprep.subr.mxu0 0.0
      %2975 = vmatpush2.msra.mxu0 0.0
      %2976 = vmatprep.subr.mxu0 0.0
      %2977 = vmatpush2.msra.mxu0 0.0
      %2978 = vmatprep.mubr.f32.mxu0 0.0
      %2979 = vmatmul.mubr.f32.gmra.mxu0 %v2816
      %v2980 = vpop.f32.mrf.mxu0
      %v2981 = vadd.f32 0.0, %v2980
      %v2982 = vpop.f32.mrf.mxu0
      %2983 = vmatprep.mubr.f32.mxu0 0.0
      %2984 = vmatmul.mubr.f32.gmra.mxu0 %v2819
      %v2985 = vpop.f32.mrf.mxu0
      %v2986 = vadd.f32 0.0, %v2985
      %v2987 = vpop.f32.mrf.mxu0
      %2988 = vmatprep.mubr.f32.mxu0 0.0
      %2989 = vmatmul.mubr.f32.gmra.mxu0 %v2822
      %v2990 = vpop.f32.mrf.mxu0
      %v2991 = vadd.f32 0.0, %v2990
      %v2992 = vpop.f32.mrf.mxu0
      %2993 = vmatprep.mubr.f32.mxu0 0.0
      %2994 = vmatmul.mubr.f32.gmra.mxu0 %v2825
      %v2995 = vpop.f32.mrf.mxu0
      %v2996 = vadd.f32 0.0, %v2995
      %v2997 = vpop.f32.mrf.mxu0
      %2998 = vmatprep.mubr.f32.mxu0 0.0
      %2999 = vmatmul.mubr.f32.gmra.mxu0 %v2828
      %v3000 = vpop.f32.mrf.mxu0
      %v3001 = vadd.f32 0.0, %v3000
      %v3002 = vpop.f32.mrf.mxu0
      %3003 = vmatprep.mubr.f32.mxu0 0.0
      %3004 = vmatmul.mubr.f32.gmra.mxu0 %v2831
      %v3005 = vpop.f32.mrf.mxu0
      %v3006 = vadd.f32 0.0, %v3005
      %v3007 = vpop.f32.mrf.mxu0
      %3008 = vmatprep.mubr.f32.mxu0 0.0
      %3009 = vmatmul.mubr.f32.gmra.mxu0 %v2834
      %v3010 = vpop.f32.mrf.mxu0
      %v3011 = vadd.f32 0.0, %v3010
      %v3012 = vpop.f32.mrf.mxu0
      %3013 = vmatprep.mubr.f32.mxu0 0.0
      %3014 = vmatmul.mubr.f32.gmra.mxu0 %v2837
      %v3015 = vpop.f32.mrf.mxu0
      %v3016 = vadd.f32 0.0, %v3015
      %v3017 = vpop.f32.mrf.mxu0
      %3018 = vmatprep.mubr.f32.mxu0 0.0
      %3019 = vmatmul.mubr.f32.gmra.mxu0 %v2840
      %v3020 = vpop.f32.mrf.mxu0
      %v3021 = vadd.f32 0.0, %v3020
      %v3022 = vpop.f32.mrf.mxu0
      %3023 = vmatprep.mubr.f32.mxu0 0.0
      %3024 = vmatmul.mubr.f32.gmra.mxu0 %v2843
      %v3025 = vpop.f32.mrf.mxu0
      %v3026 = vadd.f32 0.0, %v3025
      %v3027 = vpop.f32.mrf.mxu0
      %3028 = vmatprep.mubr.f32.mxu0 0.0
      %3029 = vmatmul.mubr.f32.gmra.mxu0 %v2846
      %v3030 = vpop.f32.mrf.mxu0
      %v3031 = vadd.f32 0.0, %v3030
      %v3032 = vpop.f32.mrf.mxu0
      %3033 = vmatprep.mubr.f32.mxu0 0.0
      %3034 = vmatmul.mubr.f32.gmra.mxu0 %v2849
      %v3035 = vpop.f32.mrf.mxu0
      %v3036 = vadd.f32 0.0, %v3035
      %v3037 = vpop.f32.mrf.mxu0
      %3038 = vmatprep.mubr.f32.mxu0 0.0
      %3039 = vmatmul.mubr.f32.gmra.mxu0 %v2852
      %v3040 = vpop.f32.mrf.mxu0
      %v3041 = vadd.f32 0.0, %v3040
      %v3042 = vpop.f32.mrf.mxu0
      %3043 = vmatprep.mubr.f32.mxu0 0.0
      %3044 = vmatmul.mubr.f32.gmra.mxu0 %v2855
      %v3045 = vpop.f32.mrf.mxu0
      %v3046 = vadd.f32 0.0, %v3045
      %v3047 = vpop.f32.mrf.mxu0
      %3048 = vmatprep.mubr.f32.mxu0 0.0
      %3049 = vmatmul.mubr.f32.gmra.mxu0 %v2858
      %v3050 = vpop.f32.mrf.mxu0
      %v3051 = vadd.f32 0.0, %v3050
      %v3052 = vpop.f32.mrf.mxu0
      %3053 = vmatprep.mubr.f32.mxu0 0.0
      %3054 = vmatmul.mubr.f32.gmra.mxu0 %v2861
      %v3055 = vpop.f32.mrf.mxu0
      %v3056 = vadd.f32 0.0, %v3055
      %v3057 = vpop.f32.mrf.mxu0
      %3058 = vmatprep.mubr.f32.mxu0 0.0
      %3059 = vmatmul.mubr.f32.gmra.mxu0 %v2864
      %v3060 = vpop.f32.mrf.mxu0
      %v3061 = vadd.f32 0.0, %v3060
      %v3062 = vpop.f32.mrf.mxu0
      %3063 = vmatprep.mubr.f32.mxu0 0.0
      %3064 = vmatmul.mubr.f32.gmra.mxu0 %v2867
      %v3065 = vpop.f32.mrf.mxu0
      %v3066 = vadd.f32 0.0, %v3065
      %v3067 = vpop.f32.mrf.mxu0
      %3068 = vmatprep.mubr.f32.mxu0 0.0
      %3069 = vmatmul.mubr.f32.gmra.mxu0 %v2870
      %v3070 = vpop.f32.mrf.mxu0
      %v3071 = vadd.f32 0.0, %v3070
      %v3072 = vpop.f32.mrf.mxu0
      %3073 = vmatprep.mubr.f32.mxu0 0.0
      %3074 = vmatmul.mubr.f32.gmra.mxu0 %v2873
      %v3075 = vpop.f32.mrf.mxu0
      %v3076 = vadd.f32 0.0, %v3075
      %v3077 = vpop.f32.mrf.mxu0
      %3078 = vmatprep.mubr.f32.mxu0 0.0
      %3079 = vmatmul.mubr.f32.gmra.mxu0 %v2876
      %v3080 = vpop.f32.mrf.mxu0
      %v3081 = vadd.f32 0.0, %v3080
      %v3082 = vpop.f32.mrf.mxu0
      %3083 = vmatprep.mubr.f32.mxu0 0.0
      %3084 = vmatmul.mubr.f32.gmra.mxu0 %v2879
      %v3085 = vpop.f32.mrf.mxu0
      %v3086 = vadd.f32 0.0, %v3085
      %v3087 = vpop.f32.mrf.mxu0
      %3088 = vmatprep.mubr.f32.mxu0 0.0
      %3089 = vmatmul.mubr.f32.gmra.mxu0 %v2882
      %v3090 = vpop.f32.mrf.mxu0
      %v3091 = vadd.f32 0.0, %v3090
      %v3092 = vpop.f32.mrf.mxu0
      %3093 = vmatprep.mubr.f32.mxu0 0.0
      %3094 = vmatmul.mubr.f32.gmra.mxu0 %v2885
      %v3095 = vpop.f32.mrf.mxu0
      %v3096 = vadd.f32 0.0, %v3095
      %v3097 = vpop.f32.mrf.mxu0
      %3098 = vmatprep.mubr.f32.mxu0 0.0
      %3099 = vmatmul.mubr.f32.gmra.mxu0 %v2888
      %v3100 = vpop.f32.mrf.mxu0
      %v3101 = vadd.f32 0.0, %v3100
      %v3102 = vpop.f32.mrf.mxu0
      %3103 = vmatprep.mubr.f32.mxu0 0.0
      %3104 = vmatmul.mubr.f32.gmra.mxu0 %v2891
      %v3105 = vpop.f32.mrf.mxu0
      %v3106 = vadd.f32 0.0, %v3105
      %v3107 = vpop.f32.mrf.mxu0
      %3108 = vmatprep.mubr.f32.mxu0 0.0
      %3109 = vmatmul.mubr.f32.gmra.mxu0 %v2894
      %v3110 = vpop.f32.mrf.mxu0
      %v3111 = vadd.f32 0.0, %v3110
      %v3112 = vpop.f32.mrf.mxu0
      %3113 = vmatprep.mubr.f32.mxu0 0.0
      %3114 = vmatmul.mubr.f32.gmra.mxu0 %v2897
      %v3115 = vpop.f32.mrf.mxu0
      %v3116 = vadd.f32 0.0, %v3115
      %v3117 = vpop.f32.mrf.mxu0
      %3118 = vmatprep.mubr.f32.mxu0 0.0
      %3119 = vmatmul.mubr.f32.gmra.mxu0 %v2900
      %v3120 = vpop.f32.mrf.mxu0
      %v3121 = vadd.f32 0.0, %v3120
      %v3122 = vpop.f32.mrf.mxu0
      %3123 = vmatprep.mubr.f32.mxu0 0.0
      %3124 = vmatmul.mubr.f32.gmra.mxu0 %v2903
      %v3125 = vpop.f32.mrf.mxu0
      %v3126 = vadd.f32 0.0, %v3125
      %v3127 = vpop.f32.mrf.mxu0
      %3128 = vmatprep.mubr.f32.mxu0 0.0
      %3129 = vmatmul.mubr.f32.gmra.mxu0 %v2906
      %v3130 = vpop.f32.mrf.mxu0
      %v3131 = vadd.f32 0.0, %v3130
      %v3132 = vpop.f32.mrf.mxu0
      %3133 = vmatprep.mubr.f32.mxu0 0.0
      %3134 = vmatmul.mubr.f32.gmra.mxu0 %v2909
      %v3135 = vpop.f32.mrf.mxu0
      %v3136 = vadd.f32 0.0, %v3135
      %v3137 = vpop.f32.mrf.mxu0
      %3138 = vdwg.mxu0
      %v3139 = vadd.f32 %v2749, %v2981
      %v3140 = vadd.f32 %v2750, %v2986
      %v3141 = vadd.f32 %v2751, %v2991
      %v3142 = vadd.f32 %v2752, %v2996
      %v3143 = vadd.f32 %v2753, %v3001
      %v3144 = vadd.f32 %v2754, %v3006
      %v3145 = vadd.f32 %v2755, %v3011
      %v3146 = vadd.f32 %v2756, %v3016
      %v3147 = vadd.f32 %v2757, %v3021
      %v3148 = vadd.f32 %v2758, %v3026
      %v3149 = vadd.f32 %v2759, %v3031
      %v3150 = vadd.f32 %v2760, %v3036
      %v3151 = vadd.f32 %v2761, %v3041
      %v3152 = vadd.f32 %v2762, %v3046
      %v3153 = vadd.f32 %v2763, %v3051
      %v3154 = vadd.f32 %v2764, %v3056
      %v3155 = vadd.f32 %v2765, %v3061
      %v3156 = vadd.f32 %v2766, %v3066
      %v3157 = vadd.f32 %v2767, %v3071
      %v3158 = vadd.f32 %v2768, %v3076
      %v3159 = vadd.f32 %v2769, %v3081
      %v3160 = vadd.f32 %v2770, %v3086
      %v3161 = vadd.f32 %v2771, %v3091
      %v3162 = vadd.f32 %v2772, %v3096
      %v3163 = vadd.f32 %v2773, %v3101
      %v3164 = vadd.f32 %v2774, %v3106
      %v3165 = vadd.f32 %v2775, %v3111
      %v3166 = vadd.f32 %v2776, %v3116
      %v3167 = vadd.f32 %v2777, %v3121
      %v3168 = vadd.f32 %v2778, %v3126
      %v3169 = vadd.f32 %v2779, %v3131
      %v3170 = vadd.f32 %v2780, %v3136
      %v3171 = vld [vmem:[#allocation2 + $0x19] sm:$0xff]
      %v3172 = vld [vmem:[#allocation2 + $0x21] sm:$0xff]
      %v3173 = vld [vmem:[#allocation2 + $0x29] sm:$0xff]
      %v3174 = vld [vmem:[#allocation2 + $0x31] sm:$0xff]
      %v3175 = vld [vmem:[#allocation2 + $0x39] sm:$0xff]
      %v3176 = vld [vmem:[#allocation2 + $0x41] sm:$0xff]
      %v3177 = vld [vmem:[#allocation2 + $0x49] sm:$0xff]
      %v3178 = vld [vmem:[#allocation2 + $0x51] sm:$0xff]
      %v3179 = vld [vmem:[#allocation2 + $0x59] sm:$0xff]
      %v3180 = vld [vmem:[#allocation2 + $0x61] sm:$0xff]
      %v3181 = vld [vmem:[#allocation2 + $0x69] sm:$0xff]
      %v3182 = vld [vmem:[#allocation2 + $0x71] sm:$0xff]
      %v3183 = vld [vmem:[#allocation2 + $0x79] sm:$0xff]
      %v3184 = vld [vmem:[#allocation2 + $0x81] sm:$0xff]
      %v3185 = vld [vmem:[#allocation2 + $0x89] sm:$0xff]
      %v3186 = vld [vmem:[#allocation2 + $0x91] sm:$0xff]
      %v3187 = vld [vmem:[#allocation2 + $0x99] sm:$0xff]
      %v3188 = vld [vmem:[#allocation2 + $0xa1] sm:$0xff]
      %v3189 = vld [vmem:[#allocation2 + $0xa9] sm:$0xff]
      %v3190 = vld [vmem:[#allocation2 + $0xb1] sm:$0xff]
      %v3191 = vld [vmem:[#allocation2 + $0xb9] sm:$0xff]
      %v3192 = vld [vmem:[#allocation2 + $0xc1] sm:$0xff]
      %v3193 = vld [vmem:[#allocation2 + $0xc9] sm:$0xff]
      %v3194 = vld [vmem:[#allocation2 + $0xd1] sm:$0xff]
      %v3195 = vld [vmem:[#allocation2 + $0xd9] sm:$0xff]
      %v3196 = vld [vmem:[#allocation2 + $0xe1] sm:$0xff]
      %v3197 = vld [vmem:[#allocation2 + $0xe9] sm:$0xff]
      %v3198 = vld [vmem:[#allocation2 + $0xf1] sm:$0xff]
      %v3199 = vld [vmem:[#allocation2 + $0xf9] sm:$0xff]
      %v3200 = vld [vmem:[#allocation2 + $0x101] sm:$0xff]
      %v3201 = vld [vmem:[#allocation2 + $0x109] sm:$0xff]
      %v3202 = vld [vmem:[#allocation2 + $0x111] sm:$0xff]
      %v3203 = vsel %vm1585, 1, 0
      %v3204 = vsel %vm1586, 1, 0
      %v3205 = vsel %vm1587, 1, 0
      %v3206 = vsel %vm1588, 1, 0
      %v3207 = vsel %vm1589, 1, 0
      %v3208 = vsel %vm1590, 1, 0
      %v3209 = vsel %vm1591, 1, 0
      %v3210 = vsel %vm1592, 1, 0
      %v3211 = vsel %vm1593, 1, 0
      %v3212 = vsel %vm1594, 1, 0
      %v3213 = vsel %vm1595, 1, 0
      %v3214 = vsel %vm1596, 1, 0
      %v3215 = vsel %vm1597, 1, 0
      %v3216 = vsel %vm1598, 1, 0
      %v3217 = vsel %vm1599, 1, 0
      %v3218 = vsel %vm1600, 1, 0
      %v3219 = vsel %vm1601, 1, 0
      %v3220 = vsel %vm1602, 1, 0
      %v3221 = vsel %vm1603, 1, 0
      %v3222 = vsel %vm1604, 1, 0
      %v3223 = vsel %vm1605, 1, 0
      %v3224 = vsel %vm1606, 1, 0
      %v3225 = vsel %vm1607, 1, 0
      %v3226 = vsel %vm1608, 1, 0
      %v3227 = vsel %vm1609, 1, 0
      %v3228 = vsel %vm1610, 1, 0
      %v3229 = vsel %vm1611, 1, 0
      %v3230 = vsel %vm1612, 1, 0
      %v3231 = vsel %vm1613, 1, 0
      %v3232 = vsel %vm1614, 1, 0
      %v3233 = vsel %vm1615, 1, 0
      %v3234 = vsel %vm1616, 1, 0
      %3235 = vset.pattern.permute.xlu0 0
      %3236 = vperm.xlu0 %3235, %v3203
      %v3237 = vpop.permute.xlu0 %3236
      %3238 = vset.pattern.permute.xlu0 0
      %3239 = vperm.xlu0 %3238, %v3204
      %v3240 = vpop.permute.xlu0 %3239
      %3241 = vset.pattern.permute.xlu0 0
      %3242 = vperm.xlu0 %3241, %v3205
      %v3243 = vpop.permute.xlu0 %3242
      %3244 = vset.pattern.permute.xlu0 0
      %3245 = vperm.xlu0 %3244, %v3206
      %v3246 = vpop.permute.xlu0 %3245
      %3247 = vset.pattern.permute.xlu0 0
      %3248 = vperm.xlu0 %3247, %v3207
      %v3249 = vpop.permute.xlu0 %3248
      %3250 = vset.pattern.permute.xlu0 0
      %3251 = vperm.xlu0 %3250, %v3208
      %v3252 = vpop.permute.xlu0 %3251
      %3253 = vset.pattern.permute.xlu0 0
      %3254 = vperm.xlu0 %3253, %v3209
      %v3255 = vpop.permute.xlu0 %3254
      %3256 = vset.pattern.permute.xlu0 0
      %3257 = vperm.xlu0 %3256, %v3210
      %v3258 = vpop.permute.xlu0 %3257
      %3259 = vset.pattern.permute.xlu0 0
      %3260 = vperm.xlu0 %3259, %v3211
      %v3261 = vpop.permute.xlu0 %3260
      %3262 = vset.pattern.permute.xlu0 0
      %3263 = vperm.xlu0 %3262, %v3212
      %v3264 = vpop.permute.xlu0 %3263
      %3265 = vset.pattern.permute.xlu0 0
      %3266 = vperm.xlu0 %3265, %v3213
      %v3267 = vpop.permute.xlu0 %3266
      %3268 = vset.pattern.permute.xlu0 0
      %3269 = vperm.xlu0 %3268, %v3214
      %v3270 = vpop.permute.xlu0 %3269
      %3271 = vset.pattern.permute.xlu0 0
      %3272 = vperm.xlu0 %3271, %v3215
      %v3273 = vpop.permute.xlu0 %3272
      %3274 = vset.pattern.permute.xlu0 0
      %3275 = vperm.xlu0 %3274, %v3216
      %v3276 = vpop.permute.xlu0 %3275
      %3277 = vset.pattern.permute.xlu0 0
      %3278 = vperm.xlu0 %3277, %v3217
      %v3279 = vpop.permute.xlu0 %3278
      %3280 = vset.pattern.permute.xlu0 0
      %3281 = vperm.xlu0 %3280, %v3218
      %v3282 = vpop.permute.xlu0 %3281
      %3283 = vset.pattern.permute.xlu0 0
      %3284 = vperm.xlu0 %3283, %v3219
      %v3285 = vpop.permute.xlu0 %3284
      %3286 = vset.pattern.permute.xlu0 0
      %3287 = vperm.xlu0 %3286, %v3220
      %v3288 = vpop.permute.xlu0 %3287
      %3289 = vset.pattern.permute.xlu0 0
      %3290 = vperm.xlu0 %3289, %v3221
      %v3291 = vpop.permute.xlu0 %3290
      %3292 = vset.pattern.permute.xlu0 0
      %3293 = vperm.xlu0 %3292, %v3222
      %v3294 = vpop.permute.xlu0 %3293
      %3295 = vset.pattern.permute.xlu0 0
      %3296 = vperm.xlu0 %3295, %v3223
      %v3297 = vpop.permute.xlu0 %3296
      %3298 = vset.pattern.permute.xlu0 0
      %3299 = vperm.xlu0 %3298, %v3224
      %v3300 = vpop.permute.xlu0 %3299
      %3301 = vset.pattern.permute.xlu0 0
      %3302 = vperm.xlu0 %3301, %v3225
      %v3303 = vpop.permute.xlu0 %3302
      %3304 = vset.pattern.permute.xlu0 0
      %3305 = vperm.xlu0 %3304, %v3226
      %v3306 = vpop.permute.xlu0 %3305
      %3307 = vset.pattern.permute.xlu0 0
      %3308 = vperm.xlu0 %3307, %v3227
      %v3309 = vpop.permute.xlu0 %3308
      %3310 = vset.pattern.permute.xlu0 0
      %3311 = vperm.xlu0 %3310, %v3228
      %v3312 = vpop.permute.xlu0 %3311
      %3313 = vset.pattern.permute.xlu0 0
      %3314 = vperm.xlu0 %3313, %v3229
      %v3315 = vpop.permute.xlu0 %3314
      %3316 = vset.pattern.permute.xlu0 0
      %3317 = vperm.xlu0 %3316, %v3230
      %v3318 = vpop.permute.xlu0 %3317
      %3319 = vset.pattern.permute.xlu0 0
      %3320 = vperm.xlu0 %3319, %v3231
      %v3321 = vpop.permute.xlu0 %3320
      %3322 = vset.pattern.permute.xlu0 0
      %3323 = vperm.xlu0 %3322, %v3232
      %v3324 = vpop.permute.xlu0 %3323
      %3325 = vset.pattern.permute.xlu0 0
      %3326 = vperm.xlu0 %3325, %v3233
      %v3327 = vpop.permute.xlu0 %3326
      %3328 = vset.pattern.permute.xlu0 0
      %3329 = vperm.xlu0 %3328, %v3234
      %v3330 = vpop.permute.xlu0 %3329
      %vm3331 = vcmp.eq.s32.totalorder %v3237, 1
      %vm3332 = vcmp.eq.s32.totalorder %v3240, 1
      %vm3333 = vcmp.eq.s32.totalorder %v3243, 1
      %vm3334 = vcmp.eq.s32.totalorder %v3246, 1
      %vm3335 = vcmp.eq.s32.totalorder %v3249, 1
      %vm3336 = vcmp.eq.s32.totalorder %v3252, 1
      %vm3337 = vcmp.eq.s32.totalorder %v3255, 1
      %vm3338 = vcmp.eq.s32.totalorder %v3258, 1
      %vm3339 = vcmp.eq.s32.totalorder %v3261, 1
      %vm3340 = vcmp.eq.s32.totalorder %v3264, 1
      %vm3341 = vcmp.eq.s32.totalorder %v3267, 1
      %vm3342 = vcmp.eq.s32.totalorder %v3270, 1
      %vm3343 = vcmp.eq.s32.totalorder %v3273, 1
      %vm3344 = vcmp.eq.s32.totalorder %v3276, 1
      %vm3345 = vcmp.eq.s32.totalorder %v3279, 1
      %vm3346 = vcmp.eq.s32.totalorder %v3282, 1
      %vm3347 = vcmp.eq.s32.totalorder %v3285, 1
      %vm3348 = vcmp.eq.s32.totalorder %v3288, 1
      %vm3349 = vcmp.eq.s32.totalorder %v3291, 1
      %vm3350 = vcmp.eq.s32.totalorder %v3294, 1
      %vm3351 = vcmp.eq.s32.totalorder %v3297, 1
      %vm3352 = vcmp.eq.s32.totalorder %v3300, 1
      %vm3353 = vcmp.eq.s32.totalorder %v3303, 1
      %vm3354 = vcmp.eq.s32.totalorder %v3306, 1
      %vm3355 = vcmp.eq.s32.totalorder %v3309, 1
      %vm3356 = vcmp.eq.s32.totalorder %v3312, 1
      %vm3357 = vcmp.eq.s32.totalorder %v3315, 1
      %vm3358 = vcmp.eq.s32.totalorder %v3318, 1
      %vm3359 = vcmp.eq.s32.totalorder %v3321, 1
      %vm3360 = vcmp.eq.s32.totalorder %v3324, 1
      %vm3361 = vcmp.eq.s32.totalorder %v3327, 1
      %vm3362 = vcmp.eq.s32.totalorder %v3330, 1
      %v3363 = vsel %vm3331, %v3171, 0.0
      %v3364 = vsel %vm3332, %v3172, 0.0
      %v3365 = vsel %vm3333, %v3173, 0.0
      %v3366 = vsel %vm3334, %v3174, 0.0
      %v3367 = vsel %vm3335, %v3175, 0.0
      %v3368 = vsel %vm3336, %v3176, 0.0
      %v3369 = vsel %vm3337, %v3177, 0.0
      %v3370 = vsel %vm3338, %v3178, 0.0
      %v3371 = vsel %vm3339, %v3179, 0.0
      %v3372 = vsel %vm3340, %v3180, 0.0
      %v3373 = vsel %vm3341, %v3181, 0.0
      %v3374 = vsel %vm3342, %v3182, 0.0
      %v3375 = vsel %vm3343, %v3183, 0.0
      %v3376 = vsel %vm3344, %v3184, 0.0
      %v3377 = vsel %vm3345, %v3185, 0.0
      %v3378 = vsel %vm3346, %v3186, 0.0
      %v3379 = vsel %vm3347, %v3187, 0.0
      %v3380 = vsel %vm3348, %v3188, 0.0
      %v3381 = vsel %vm3349, %v3189, 0.0
      %v3382 = vsel %vm3350, %v3190, 0.0
      %v3383 = vsel %vm3351, %v3191, 0.0
      %v3384 = vsel %vm3352, %v3192, 0.0
      %v3385 = vsel %vm3353, %v3193, 0.0
      %v3386 = vsel %vm3354, %v3194, 0.0
      %v3387 = vsel %vm3355, %v3195, 0.0
      %v3388 = vsel %vm3356, %v3196, 0.0
      %v3389 = vsel %vm3357, %v3197, 0.0
      %v3390 = vsel %vm3358, %v3198, 0.0
      %v3391 = vsel %vm3359, %v3199, 0.0
      %v3392 = vsel %vm3360, %v3200, 0.0
      %v3393 = vsel %vm3361, %v3201, 0.0
      %v3394 = vsel %vm3362, %v3202, 0.0
      %s3395 = scalar_lea.vmem %s2, 20
      %v3396 = vld [vmem:[%s3395] sm:$0x7]
      %v3398 = vsel %vm349, %v3363, 0
      %v3401 = vsel %vm349, %v3364, 0
      %v3404 = vsel %vm349, %v3365, 0
      %v3407 = vsel %vm349, %v3366, 0
      %v3410 = vsel %vm349, %v3367, 0
      %v3413 = vsel %vm349, %v3368, 0
      %v3416 = vsel %vm349, %v3369, 0
      %v3419 = vsel %vm349, %v3370, 0
      %v3422 = vsel %vm349, %v3371, 0
      %v3425 = vsel %vm349, %v3372, 0
      %v3428 = vsel %vm349, %v3373, 0
      %v3431 = vsel %vm349, %v3374, 0
      %v3434 = vsel %vm349, %v3375, 0
      %v3437 = vsel %vm349, %v3376, 0
      %v3440 = vsel %vm349, %v3377, 0
      %v3443 = vsel %vm349, %v3378, 0
      %v3446 = vsel %vm349, %v3379, 0
      %v3449 = vsel %vm349, %v3380, 0
      %v3452 = vsel %vm349, %v3381, 0
      %v3455 = vsel %vm349, %v3382, 0
      %v3458 = vsel %vm349, %v3383, 0
      %v3461 = vsel %vm349, %v3384, 0
      %v3464 = vsel %vm349, %v3385, 0
      %v3467 = vsel %vm349, %v3386, 0
      %v3470 = vsel %vm349, %v3387, 0
      %v3473 = vsel %vm349, %v3388, 0
      %v3476 = vsel %vm349, %v3389, 0
      %v3479 = vsel %vm349, %v3390, 0
      %v3482 = vsel %vm349, %v3391, 0
      %v3485 = vsel %vm349, %v3392, 0
      %v3488 = vsel %vm349, %v3393, 0
      %v3491 = vsel %vm349, %v3394, 0
      %v3494 = vsel %vm806, %v3396, 0
      %3496 = vmatprep.subr.mxu0 0.0
      %3497 = vmatpush1.msra.mxu0 0.0
      %3498 = vmatprep.subr.mxu0 0.0
      %3499 = vmatpush1.msra.mxu0 0.0
      %3500 = vmatprep.subr.mxu0 0.0
      %3501 = vmatpush1.msra.mxu0 0.0
      %3502 = vmatprep.subr.mxu0 0.0
      %3503 = vmatpush1.msra.mxu0 0.0
      %3504 = vmatprep.subr.mxu0 0.0
      %3505 = vmatpush1.msra.mxu0 0.0
      %3506 = vmatprep.subr.mxu0 0.0
      %3507 = vmatpush1.msra.mxu0 0.0
      %3508 = vmatprep.subr.mxu0 0.0
      %3509 = vmatpush1.msra.mxu0 0.0
      %3510 = vmatprep.subr.mxu0 0.0
      %3511 = vmatpush1.msra.mxu0 0.0
      %3512 = vmatprep.subr.mxu0 0.0
      %3513 = vmatpush1.msra.mxu0 0.0
      %3514 = vmatprep.subr.mxu0 0.0
      %3515 = vmatpush1.msra.mxu0 0.0
      %3516 = vmatprep.subr.mxu0 0.0
      %3517 = vmatpush1.msra.mxu0 0.0
      %3518 = vmatprep.subr.mxu0 0.0
      %3519 = vmatpush1.msra.mxu0 0.0
      %3520 = vmatprep.subr.mxu0 0.0
      %3521 = vmatpush1.msra.mxu0 0.0
      %3522 = vmatprep.subr.mxu0 0.0
      %3523 = vmatpush1.msra.mxu0 0.0
      %3524 = vmatprep.subr.mxu0 0.0
      %3525 = vmatpush1.msra.mxu0 0.0
      %3526 = vmatprep.subr.mxu0 0.0
      %3527 = vmatpush1.msra.mxu0 %v3494
      %3528 = vmatprep.subr.mxu0 0.0
      %3529 = vmatpush2.msra.mxu0 0.0
      %3530 = vmatprep.subr.mxu0 0.0
      %3531 = vmatpush2.msra.mxu0 0.0
      %3532 = vmatprep.subr.mxu0 0.0
      %3533 = vmatpush2.msra.mxu0 0.0
      %3534 = vmatprep.subr.mxu0 0.0
      %3535 = vmatpush2.msra.mxu0 0.0
      %3536 = vmatprep.subr.mxu0 0.0
      %3537 = vmatpush2.msra.mxu0 0.0
      %3538 = vmatprep.subr.mxu0 0.0
      %3539 = vmatpush2.msra.mxu0 0.0
      %3540 = vmatprep.subr.mxu0 0.0
      %3541 = vmatpush2.msra.mxu0 0.0
      %3542 = vmatprep.subr.mxu0 0.0
      %3543 = vmatpush2.msra.mxu0 0.0
      %3544 = vmatprep.subr.mxu0 0.0
      %3545 = vmatpush2.msra.mxu0 0.0
      %3546 = vmatprep.subr.mxu0 0.0
      %3547 = vmatpush2.msra.mxu0 0.0
      %3548 = vmatprep.subr.mxu0 0.0
      %3549 = vmatpush2.msra.mxu0 0.0
      %3550 = vmatprep.subr.mxu0 0.0
      %3551 = vmatpush2.msra.mxu0 0.0
      %3552 = vmatprep.subr.mxu0 0.0
      %3553 = vmatpush2.msra.mxu0 0.0
      %3554 = vmatprep.subr.mxu0 0.0
      %3555 = vmatpush2.msra.mxu0 0.0
      %3556 = vmatprep.subr.mxu0 0.0
      %3557 = vmatpush2.msra.mxu0 0.0
      %3558 = vmatprep.subr.mxu0 0.0
      %3559 = vmatpush2.msra.mxu0 0.0
      %3560 = vmatprep.mubr.f32.mxu0 0.0
      %3561 = vmatmul.mubr.f32.gmra.mxu0 %v3398
      %v3562 = vpop.f32.mrf.mxu0
      %v3563 = vadd.f32 0.0, %v3562
      %v3564 = vpop.f32.mrf.mxu0
      %3565 = vmatprep.mubr.f32.mxu0 0.0
      %3566 = vmatmul.mubr.f32.gmra.mxu0 %v3401
      %v3567 = vpop.f32.mrf.mxu0
      %v3568 = vadd.f32 0.0, %v3567
      %v3569 = vpop.f32.mrf.mxu0
      %3570 = vmatprep.mubr.f32.mxu0 0.0
      %3571 = vmatmul.mubr.f32.gmra.mxu0 %v3404
      %v3572 = vpop.f32.mrf.mxu0
      %v3573 = vadd.f32 0.0, %v3572
      %v3574 = vpop.f32.mrf.mxu0
      %3575 = vmatprep.mubr.f32.mxu0 0.0
      %3576 = vmatmul.mubr.f32.gmra.mxu0 %v3407
      %v3577 = vpop.f32.mrf.mxu0
      %v3578 = vadd.f32 0.0, %v3577
      %v3579 = vpop.f32.mrf.mxu0
      %3580 = vmatprep.mubr.f32.mxu0 0.0
      %3581 = vmatmul.mubr.f32.gmra.mxu0 %v3410
      %v3582 = vpop.f32.mrf.mxu0
      %v3583 = vadd.f32 0.0, %v3582
      %v3584 = vpop.f32.mrf.mxu0
      %3585 = vmatprep.mubr.f32.mxu0 0.0
      %3586 = vmatmul.mubr.f32.gmra.mxu0 %v3413
      %v3587 = vpop.f32.mrf.mxu0
      %v3588 = vadd.f32 0.0, %v3587
      %v3589 = vpop.f32.mrf.mxu0
      %3590 = vmatprep.mubr.f32.mxu0 0.0
      %3591 = vmatmul.mubr.f32.gmra.mxu0 %v3416
      %v3592 = vpop.f32.mrf.mxu0
      %v3593 = vadd.f32 0.0, %v3592
      %v3594 = vpop.f32.mrf.mxu0
      %3595 = vmatprep.mubr.f32.mxu0 0.0
      %3596 = vmatmul.mubr.f32.gmra.mxu0 %v3419
      %v3597 = vpop.f32.mrf.mxu0
      %v3598 = vadd.f32 0.0, %v3597
      %v3599 = vpop.f32.mrf.mxu0
      %3600 = vmatprep.mubr.f32.mxu0 0.0
      %3601 = vmatmul.mubr.f32.gmra.mxu0 %v3422
      %v3602 = vpop.f32.mrf.mxu0
      %v3603 = vadd.f32 0.0, %v3602
      %v3604 = vpop.f32.mrf.mxu0
      %3605 = vmatprep.mubr.f32.mxu0 0.0
      %3606 = vmatmul.mubr.f32.gmra.mxu0 %v3425
      %v3607 = vpop.f32.mrf.mxu0
      %v3608 = vadd.f32 0.0, %v3607
      %v3609 = vpop.f32.mrf.mxu0
      %3610 = vmatprep.mubr.f32.mxu0 0.0
      %3611 = vmatmul.mubr.f32.gmra.mxu0 %v3428
      %v3612 = vpop.f32.mrf.mxu0
      %v3613 = vadd.f32 0.0, %v3612
      %v3614 = vpop.f32.mrf.mxu0
      %3615 = vmatprep.mubr.f32.mxu0 0.0
      %3616 = vmatmul.mubr.f32.gmra.mxu0 %v3431
      %v3617 = vpop.f32.mrf.mxu0
      %v3618 = vadd.f32 0.0, %v3617
      %v3619 = vpop.f32.mrf.mxu0
      %3620 = vmatprep.mubr.f32.mxu0 0.0
      %3621 = vmatmul.mubr.f32.gmra.mxu0 %v3434
      %v3622 = vpop.f32.mrf.mxu0
      %v3623 = vadd.f32 0.0, %v3622
      %v3624 = vpop.f32.mrf.mxu0
      %3625 = vmatprep.mubr.f32.mxu0 0.0
      %3626 = vmatmul.mubr.f32.gmra.mxu0 %v3437
      %v3627 = vpop.f32.mrf.mxu0
      %v3628 = vadd.f32 0.0, %v3627
      %v3629 = vpop.f32.mrf.mxu0
      %3630 = vmatprep.mubr.f32.mxu0 0.0
      %3631 = vmatmul.mubr.f32.gmra.mxu0 %v3440
      %v3632 = vpop.f32.mrf.mxu0
      %v3633 = vadd.f32 0.0, %v3632
      %v3634 = vpop.f32.mrf.mxu0
      %3635 = vmatprep.mubr.f32.mxu0 0.0
      %3636 = vmatmul.mubr.f32.gmra.mxu0 %v3443
      %v3637 = vpop.f32.mrf.mxu0
      %v3638 = vadd.f32 0.0, %v3637
      %v3639 = vpop.f32.mrf.mxu0
      %3640 = vmatprep.mubr.f32.mxu0 0.0
      %3641 = vmatmul.mubr.f32.gmra.mxu0 %v3446
      %v3642 = vpop.f32.mrf.mxu0
      %v3643 = vadd.f32 0.0, %v3642
      %v3644 = vpop.f32.mrf.mxu0
      %3645 = vmatprep.mubr.f32.mxu0 0.0
      %3646 = vmatmul.mubr.f32.gmra.mxu0 %v3449
      %v3647 = vpop.f32.mrf.mxu0
      %v3648 = vadd.f32 0.0, %v3647
      %v3649 = vpop.f32.mrf.mxu0
      %3650 = vmatprep.mubr.f32.mxu0 0.0
      %3651 = vmatmul.mubr.f32.gmra.mxu0 %v3452
      %v3652 = vpop.f32.mrf.mxu0
      %v3653 = vadd.f32 0.0, %v3652
      %v3654 = vpop.f32.mrf.mxu0
      %3655 = vmatprep.mubr.f32.mxu0 0.0
      %3656 = vmatmul.mubr.f32.gmra.mxu0 %v3455
      %v3657 = vpop.f32.mrf.mxu0
      %v3658 = vadd.f32 0.0, %v3657
      %v3659 = vpop.f32.mrf.mxu0
      %3660 = vmatprep.mubr.f32.mxu0 0.0
      %3661 = vmatmul.mubr.f32.gmra.mxu0 %v3458
      %v3662 = vpop.f32.mrf.mxu0
      %v3663 = vadd.f32 0.0, %v3662
      %v3664 = vpop.f32.mrf.mxu0
      %3665 = vmatprep.mubr.f32.mxu0 0.0
      %3666 = vmatmul.mubr.f32.gmra.mxu0 %v3461
      %v3667 = vpop.f32.mrf.mxu0
      %v3668 = vadd.f32 0.0, %v3667
      %v3669 = vpop.f32.mrf.mxu0
      %3670 = vmatprep.mubr.f32.mxu0 0.0
      %3671 = vmatmul.mubr.f32.gmra.mxu0 %v3464
      %v3672 = vpop.f32.mrf.mxu0
      %v3673 = vadd.f32 0.0, %v3672
      %v3674 = vpop.f32.mrf.mxu0
      %3675 = vmatprep.mubr.f32.mxu0 0.0
      %3676 = vmatmul.mubr.f32.gmra.mxu0 %v3467
      %v3677 = vpop.f32.mrf.mxu0
      %v3678 = vadd.f32 0.0, %v3677
      %v3679 = vpop.f32.mrf.mxu0
      %3680 = vmatprep.mubr.f32.mxu0 0.0
      %3681 = vmatmul.mubr.f32.gmra.mxu0 %v3470
      %v3682 = vpop.f32.mrf.mxu0
      %v3683 = vadd.f32 0.0, %v3682
      %v3684 = vpop.f32.mrf.mxu0
      %3685 = vmatprep.mubr.f32.mxu0 0.0
      %3686 = vmatmul.mubr.f32.gmra.mxu0 %v3473
      %v3687 = vpop.f32.mrf.mxu0
      %v3688 = vadd.f32 0.0, %v3687
      %v3689 = vpop.f32.mrf.mxu0
      %3690 = vmatprep.mubr.f32.mxu0 0.0
      %3691 = vmatmul.mubr.f32.gmra.mxu0 %v3476
      %v3692 = vpop.f32.mrf.mxu0
      %v3693 = vadd.f32 0.0, %v3692
      %v3694 = vpop.f32.mrf.mxu0
      %3695 = vmatprep.mubr.f32.mxu0 0.0
      %3696 = vmatmul.mubr.f32.gmra.mxu0 %v3479
      %v3697 = vpop.f32.mrf.mxu0
      %v3698 = vadd.f32 0.0, %v3697
      %v3699 = vpop.f32.mrf.mxu0
      %3700 = vmatprep.mubr.f32.mxu0 0.0
      %3701 = vmatmul.mubr.f32.gmra.mxu0 %v3482
      %v3702 = vpop.f32.mrf.mxu0
      %v3703 = vadd.f32 0.0, %v3702
      %v3704 = vpop.f32.mrf.mxu0
      %3705 = vmatprep.mubr.f32.mxu0 0.0
      %3706 = vmatmul.mubr.f32.gmra.mxu0 %v3485
      %v3707 = vpop.f32.mrf.mxu0
      %v3708 = vadd.f32 0.0, %v3707
      %v3709 = vpop.f32.mrf.mxu0
      %3710 = vmatprep.mubr.f32.mxu0 0.0
      %3711 = vmatmul.mubr.f32.gmra.mxu0 %v3488
      %v3712 = vpop.f32.mrf.mxu0
      %v3713 = vadd.f32 0.0, %v3712
      %v3714 = vpop.f32.mrf.mxu0
      %3715 = vmatprep.mubr.f32.mxu0 0.0
      %3716 = vmatmul.mubr.f32.gmra.mxu0 %v3491
      %v3717 = vpop.f32.mrf.mxu0
      %v3718 = vadd.f32 0.0, %v3717
      %v3719 = vpop.f32.mrf.mxu0
      %3720 = vdwg.mxu0
      %v3721 = vadd.f32 %v3139, %v3563
      %v3722 = vadd.f32 %v3140, %v3568
      %v3723 = vadd.f32 %v3141, %v3573
      %v3724 = vadd.f32 %v3142, %v3578
      %v3725 = vadd.f32 %v3143, %v3583
      %v3726 = vadd.f32 %v3144, %v3588
      %v3727 = vadd.f32 %v3145, %v3593
      %v3728 = vadd.f32 %v3146, %v3598
      %v3729 = vadd.f32 %v3147, %v3603
      %v3730 = vadd.f32 %v3148, %v3608
      %v3731 = vadd.f32 %v3149, %v3613
      %v3732 = vadd.f32 %v3150, %v3618
      %v3733 = vadd.f32 %v3151, %v3623
      %v3734 = vadd.f32 %v3152, %v3628
      %v3735 = vadd.f32 %v3153, %v3633
      %v3736 = vadd.f32 %v3154, %v3638
      %v3737 = vadd.f32 %v3155, %v3643
      %v3738 = vadd.f32 %v3156, %v3648
      %v3739 = vadd.f32 %v3157, %v3653
      %v3740 = vadd.f32 %v3158, %v3658
      %v3741 = vadd.f32 %v3159, %v3663
      %v3742 = vadd.f32 %v3160, %v3668
      %v3743 = vadd.f32 %v3161, %v3673
      %v3744 = vadd.f32 %v3162, %v3678
      %v3745 = vadd.f32 %v3163, %v3683
      %v3746 = vadd.f32 %v3164, %v3688
      %v3747 = vadd.f32 %v3165, %v3693
      %v3748 = vadd.f32 %v3166, %v3698
      %v3749 = vadd.f32 %v3167, %v3703
      %v3750 = vadd.f32 %v3168, %v3708
      %v3751 = vadd.f32 %v3169, %v3713
      %v3752 = vadd.f32 %v3170, %v3718
      %v3753 = vld [vmem:[#allocation2 + $0x27] sm:$0xff]
      %v3754 = vld [vmem:[#allocation2 + $0x2f] sm:$0xff]
      %v3755 = vld [vmem:[#allocation2 + $0x37] sm:$0xff]
      %v3756 = vld [vmem:[#allocation2 + $0x3f] sm:$0xff]
      %v3757 = vld [vmem:[#allocation2 + $0x47] sm:$0xff]
      %v3758 = vld [vmem:[#allocation2 + $0x4f] sm:$0xff]
      %v3759 = vld [vmem:[#allocation2 + $0x57] sm:$0xff]
      %v3760 = vld [vmem:[#allocation2 + $0x5f] sm:$0xff]
      %v3761 = vld [vmem:[#allocation2 + $0x67] sm:$0xff]
      %v3762 = vld [vmem:[#allocation2 + $0x6f] sm:$0xff]
      %v3763 = vld [vmem:[#allocation2 + $0x77] sm:$0xff]
      %v3764 = vld [vmem:[#allocation2 + $0x7f] sm:$0xff]
      %v3765 = vld [vmem:[#allocation2 + $0x87] sm:$0xff]
      %v3766 = vld [vmem:[#allocation2 + $0x8f] sm:$0xff]
      %v3767 = vld [vmem:[#allocation2 + $0x97] sm:$0xff]
      %v3768 = vld [vmem:[#allocation2 + $0x9f] sm:$0xff]
      %v3769 = vld [vmem:[#allocation2 + $0xa7] sm:$0xff]
      %v3770 = vld [vmem:[#allocation2 + $0xaf] sm:$0xff]
      %v3771 = vld [vmem:[#allocation2 + $0xb7] sm:$0xff]
      %v3772 = vld [vmem:[#allocation2 + $0xbf] sm:$0xff]
      %v3773 = vld [vmem:[#allocation2 + $0xc7] sm:$0xff]
      %v3774 = vld [vmem:[#allocation2 + $0xcf] sm:$0xff]
      %v3775 = vld [vmem:[#allocation2 + $0xd7] sm:$0xff]
      %v3776 = vld [vmem:[#allocation2 + $0xdf] sm:$0xff]
      %v3777 = vld [vmem:[#allocation2 + $0xe7] sm:$0xff]
      %v3778 = vld [vmem:[#allocation2 + $0xef] sm:$0xff]
      %v3779 = vld [vmem:[#allocation2 + $0xf7] sm:$0xff]
      %v3780 = vld [vmem:[#allocation2 + $0xff] sm:$0xff]
      %v3781 = vld [vmem:[#allocation2 + $0x107] sm:$0xff]
      %v3782 = vld [vmem:[#allocation2 + $0x10f] sm:$0xff]
      %v3783 = vld [vmem:[#allocation2 + $0x117] sm:$0xff]
      %v3784 = vld [vmem:[#allocation2 + $0x11f] sm:$0xff]
      %vm3785 = vcmp.lt.s32.totalorder %v253, 240
      %vm3786 = vcmp.lt.s32.totalorder %v254, 240
      %vm3787 = vcmp.lt.s32.totalorder %v255, 240
      %vm3788 = vcmp.lt.s32.totalorder %v256, 240
      %vm3789 = vcmp.lt.s32.totalorder %v257, 240
      %vm3790 = vcmp.lt.s32.totalorder %v258, 240
      %vm3791 = vcmp.lt.s32.totalorder %v259, 240
      %vm3792 = vcmp.lt.s32.totalorder %v260, 240
      %vm3793 = vcmp.lt.s32.totalorder %v261, 240
      %vm3794 = vcmp.lt.s32.totalorder %v262, 240
      %vm3795 = vcmp.lt.s32.totalorder %v263, 240
      %vm3796 = vcmp.lt.s32.totalorder %v264, 240
      %vm3797 = vcmp.lt.s32.totalorder %v265, 240
      %vm3798 = vcmp.lt.s32.totalorder %v266, 240
      %vm3799 = vcmp.lt.s32.totalorder %v267, 240
      %vm3800 = vcmp.lt.s32.totalorder %v268, 240
      %vm3801 = vcmp.lt.s32.totalorder %v269, 240
      %vm3802 = vcmp.lt.s32.totalorder %v270, 240
      %vm3803 = vcmp.lt.s32.totalorder %v271, 240
      %vm3804 = vcmp.lt.s32.totalorder %v272, 240
      %vm3805 = vcmp.lt.s32.totalorder %v273, 240
      %vm3806 = vcmp.lt.s32.totalorder %v274, 240
      %vm3807 = vcmp.lt.s32.totalorder %v275, 240
      %vm3808 = vcmp.lt.s32.totalorder %v276, 240
      %vm3809 = vcmp.lt.s32.totalorder %v277, 240
      %vm3810 = vcmp.lt.s32.totalorder %v278, 240
      %vm3811 = vcmp.lt.s32.totalorder %v279, 240
      %vm3812 = vcmp.lt.s32.totalorder %v280, 240
      %vm3813 = vcmp.lt.s32.totalorder %v281, 240
      %vm3814 = vcmp.lt.s32.totalorder %v282, 240
      %vm3815 = vcmp.lt.s32.totalorder %v283, 240
      %vm3816 = vcmp.lt.s32.totalorder %v284, 240
      %vm3817 = vmand %vm3785, %vm453
      %vm3818 = vmand %vm3786, %vm454
      %vm3819 = vmand %vm3787, %vm455
      %vm3820 = vmand %vm3788, %vm456
      %vm3821 = vmand %vm3789, %vm457
      %vm3822 = vmand %vm3790, %vm458
      %vm3823 = vmand %vm3791, %vm459
      %vm3824 = vmand %vm3792, %vm460
      %vm3825 = vmand %vm3793, %vm461
      %vm3826 = vmand %vm3794, %vm462
      %vm3827 = vmand %vm3795, %vm463
      %vm3828 = vmand %vm3796, %vm464
      %vm3829 = vmand %vm3797, %vm465
      %vm3830 = vmand %vm3798, %vm466
      %vm3831 = vmand %vm3799, %vm467
      %vm3832 = vmand %vm3800, %vm468
      %vm3833 = vmand %vm3801, %vm469
      %vm3834 = vmand %vm3802, %vm470
      %vm3835 = vmand %vm3803, %vm471
      %vm3836 = vmand %vm3804, %vm472
      %vm3837 = vmand %vm3805, %vm473
      %vm3838 = vmand %vm3806, %vm474
      %vm3839 = vmand %vm3807, %vm475
      %vm3840 = vmand %vm3808, %vm476
      %vm3841 = vmand %vm3809, %vm477
      %vm3842 = vmand %vm3810, %vm478
      %vm3843 = vmand %vm3811, %vm479
      %vm3844 = vmand %vm3812, %vm480
      %vm3845 = vmand %vm3813, %vm481
      %vm3846 = vmand %vm3814, %vm482
      %vm3847 = vmand %vm3815, %vm483
      %vm3848 = vmand %vm3816, %vm484
      %v3849 = vsel %vm3817, 1, 0
      %v3850 = vsel %vm3818, 1, 0
      %v3851 = vsel %vm3819, 1, 0
      %v3852 = vsel %vm3820, 1, 0
      %v3853 = vsel %vm3821, 1, 0
      %v3854 = vsel %vm3822, 1, 0
      %v3855 = vsel %vm3823, 1, 0
      %v3856 = vsel %vm3824, 1, 0
      %v3857 = vsel %vm3825, 1, 0
      %v3858 = vsel %vm3826, 1, 0
      %v3859 = vsel %vm3827, 1, 0
      %v3860 = vsel %vm3828, 1, 0
      %v3861 = vsel %vm3829, 1, 0
      %v3862 = vsel %vm3830, 1, 0
      %v3863 = vsel %vm3831, 1, 0
      %v3864 = vsel %vm3832, 1, 0
      %v3865 = vsel %vm3833, 1, 0
      %v3866 = vsel %vm3834, 1, 0
      %v3867 = vsel %vm3835, 1, 0
      %v3868 = vsel %vm3836, 1, 0
      %v3869 = vsel %vm3837, 1, 0
      %v3870 = vsel %vm3838, 1, 0
      %v3871 = vsel %vm3839, 1, 0
      %v3872 = vsel %vm3840, 1, 0
      %v3873 = vsel %vm3841, 1, 0
      %v3874 = vsel %vm3842, 1, 0
      %v3875 = vsel %vm3843, 1, 0
      %v3876 = vsel %vm3844, 1, 0
      %v3877 = vsel %vm3845, 1, 0
      %v3878 = vsel %vm3846, 1, 0
      %v3879 = vsel %vm3847, 1, 0
      %v3880 = vsel %vm3848, 1, 0
      %3881 = vset.pattern.permute.xlu0 0
      %3882 = vperm.xlu0 %3881, %v3849
      %v3883 = vpop.permute.xlu0 %3882
      %3884 = vset.pattern.permute.xlu0 0
      %3885 = vperm.xlu0 %3884, %v3850
      %v3886 = vpop.permute.xlu0 %3885
      %3887 = vset.pattern.permute.xlu0 0
      %3888 = vperm.xlu0 %3887, %v3851
      %v3889 = vpop.permute.xlu0 %3888
      %3890 = vset.pattern.permute.xlu0 0
      %3891 = vperm.xlu0 %3890, %v3852
      %v3892 = vpop.permute.xlu0 %3891
      %3893 = vset.pattern.permute.xlu0 0
      %3894 = vperm.xlu0 %3893, %v3853
      %v3895 = vpop.permute.xlu0 %3894
      %3896 = vset.pattern.permute.xlu0 0
      %3897 = vperm.xlu0 %3896, %v3854
      %v3898 = vpop.permute.xlu0 %3897
      %3899 = vset.pattern.permute.xlu0 0
      %3900 = vperm.xlu0 %3899, %v3855
      %v3901 = vpop.permute.xlu0 %3900
      %3902 = vset.pattern.permute.xlu0 0
      %3903 = vperm.xlu0 %3902, %v3856
      %v3904 = vpop.permute.xlu0 %3903
      %3905 = vset.pattern.permute.xlu0 0
      %3906 = vperm.xlu0 %3905, %v3857
      %v3907 = vpop.permute.xlu0 %3906
      %3908 = vset.pattern.permute.xlu0 0
      %3909 = vperm.xlu0 %3908, %v3858
      %v3910 = vpop.permute.xlu0 %3909
      %3911 = vset.pattern.permute.xlu0 0
      %3912 = vperm.xlu0 %3911, %v3859
      %v3913 = vpop.permute.xlu0 %3912
      %3914 = vset.pattern.permute.xlu0 0
      %3915 = vperm.xlu0 %3914, %v3860
      %v3916 = vpop.permute.xlu0 %3915
      %3917 = vset.pattern.permute.xlu0 0
      %3918 = vperm.xlu0 %3917, %v3861
      %v3919 = vpop.permute.xlu0 %3918
      %3920 = vset.pattern.permute.xlu0 0
      %3921 = vperm.xlu0 %3920, %v3862
      %v3922 = vpop.permute.xlu0 %3921
      %3923 = vset.pattern.permute.xlu0 0
      %3924 = vperm.xlu0 %3923, %v3863
      %v3925 = vpop.permute.xlu0 %3924
      %3926 = vset.pattern.permute.xlu0 0
      %3927 = vperm.xlu0 %3926, %v3864
      %v3928 = vpop.permute.xlu0 %3927
      %3929 = vset.pattern.permute.xlu0 0
      %3930 = vperm.xlu0 %3929, %v3865
      %v3931 = vpop.permute.xlu0 %3930
      %3932 = vset.pattern.permute.xlu0 0
      %3933 = vperm.xlu0 %3932, %v3866
      %v3934 = vpop.permute.xlu0 %3933
      %3935 = vset.pattern.permute.xlu0 0
      %3936 = vperm.xlu0 %3935, %v3867
      %v3937 = vpop.permute.xlu0 %3936
      %3938 = vset.pattern.permute.xlu0 0
      %3939 = vperm.xlu0 %3938, %v3868
      %v3940 = vpop.permute.xlu0 %3939
      %3941 = vset.pattern.permute.xlu0 0
      %3942 = vperm.xlu0 %3941, %v3869
      %v3943 = vpop.permute.xlu0 %3942
      %3944 = vset.pattern.permute.xlu0 0
      %3945 = vperm.xlu0 %3944, %v3870
      %v3946 = vpop.permute.xlu0 %3945
      %3947 = vset.pattern.permute.xlu0 0
      %3948 = vperm.xlu0 %3947, %v3871
      %v3949 = vpop.permute.xlu0 %3948
      %3950 = vset.pattern.permute.xlu0 0
      %3951 = vperm.xlu0 %3950, %v3872
      %v3952 = vpop.permute.xlu0 %3951
      %3953 = vset.pattern.permute.xlu0 0
      %3954 = vperm.xlu0 %3953, %v3873
      %v3955 = vpop.permute.xlu0 %3954
      %3956 = vset.pattern.permute.xlu0 0
      %3957 = vperm.xlu0 %3956, %v3874
      %v3958 = vpop.permute.xlu0 %3957
      %3959 = vset.pattern.permute.xlu0 0
      %3960 = vperm.xlu0 %3959, %v3875
      %v3961 = vpop.permute.xlu0 %3960
      %3962 = vset.pattern.permute.xlu0 0
      %3963 = vperm.xlu0 %3962, %v3876
      %v3964 = vpop.permute.xlu0 %3963
      %3965 = vset.pattern.permute.xlu0 0
      %3966 = vperm.xlu0 %3965, %v3877
      %v3967 = vpop.permute.xlu0 %3966
      %3968 = vset.pattern.permute.xlu0 0
      %3969 = vperm.xlu0 %3968, %v3878
      %v3970 = vpop.permute.xlu0 %3969
      %3971 = vset.pattern.permute.xlu0 0
      %3972 = vperm.xlu0 %3971, %v3879
      %v3973 = vpop.permute.xlu0 %3972
      %3974 = vset.pattern.permute.xlu0 0
      %3975 = vperm.xlu0 %3974, %v3880
      %v3976 = vpop.permute.xlu0 %3975
      %vm3977 = vcmp.eq.s32.totalorder %v3883, 1
      %vm3978 = vcmp.eq.s32.totalorder %v3886, 1
      %vm3979 = vcmp.eq.s32.totalorder %v3889, 1
      %vm3980 = vcmp.eq.s32.totalorder %v3892, 1
      %vm3981 = vcmp.eq.s32.totalorder %v3895, 1
      %vm3982 = vcmp.eq.s32.totalorder %v3898, 1
      %vm3983 = vcmp.eq.s32.totalorder %v3901, 1
      %vm3984 = vcmp.eq.s32.totalorder %v3904, 1
      %vm3985 = vcmp.eq.s32.totalorder %v3907, 1
      %vm3986 = vcmp.eq.s32.totalorder %v3910, 1
      %vm3987 = vcmp.eq.s32.totalorder %v3913, 1
      %vm3988 = vcmp.eq.s32.totalorder %v3916, 1
      %vm3989 = vcmp.eq.s32.totalorder %v3919, 1
      %vm3990 = vcmp.eq.s32.totalorder %v3922, 1
      %vm3991 = vcmp.eq.s32.totalorder %v3925, 1
      %vm3992 = vcmp.eq.s32.totalorder %v3928, 1
      %vm3993 = vcmp.eq.s32.totalorder %v3931, 1
      %vm3994 = vcmp.eq.s32.totalorder %v3934, 1
      %vm3995 = vcmp.eq.s32.totalorder %v3937, 1
      %vm3996 = vcmp.eq.s32.totalorder %v3940, 1
      %vm3997 = vcmp.eq.s32.totalorder %v3943, 1
      %vm3998 = vcmp.eq.s32.totalorder %v3946, 1
      %vm3999 = vcmp.eq.s32.totalorder %v3949, 1
      %vm4000 = vcmp.eq.s32.totalorder %v3952, 1
      %vm4001 = vcmp.eq.s32.totalorder %v3955, 1
      %vm4002 = vcmp.eq.s32.totalorder %v3958, 1
      %vm4003 = vcmp.eq.s32.totalorder %v3961, 1
      %vm4004 = vcmp.eq.s32.totalorder %v3964, 1
      %vm4005 = vcmp.eq.s32.totalorder %v3967, 1
      %vm4006 = vcmp.eq.s32.totalorder %v3970, 1
      %vm4007 = vcmp.eq.s32.totalorder %v3973, 1
      %vm4008 = vcmp.eq.s32.totalorder %v3976, 1
      %v4009 = vsel %vm3977, %v3753, 0.0
      %v4010 = vsel %vm3978, %v3754, 0.0
      %v4011 = vsel %vm3979, %v3755, 0.0
      %v4012 = vsel %vm3980, %v3756, 0.0
      %v4013 = vsel %vm3981, %v3757, 0.0
      %v4014 = vsel %vm3982, %v3758, 0.0
      %v4015 = vsel %vm3983, %v3759, 0.0
      %v4016 = vsel %vm3984, %v3760, 0.0
      %v4017 = vsel %vm3985, %v3761, 0.0
      %v4018 = vsel %vm3986, %v3762, 0.0
      %v4019 = vsel %vm3987, %v3763, 0.0
      %v4020 = vsel %vm3988, %v3764, 0.0
      %v4021 = vsel %vm3989, %v3765, 0.0
      %v4022 = vsel %vm3990, %v3766, 0.0
      %v4023 = vsel %vm3991, %v3767, 0.0
      %v4024 = vsel %vm3992, %v3768, 0.0
      %v4025 = vsel %vm3993, %v3769, 0.0
      %v4026 = vsel %vm3994, %v3770, 0.0
      %v4027 = vsel %vm3995, %v3771, 0.0
      %v4028 = vsel %vm3996, %v3772, 0.0
      %v4029 = vsel %vm3997, %v3773, 0.0
      %v4030 = vsel %vm3998, %v3774, 0.0
      %v4031 = vsel %vm3999, %v3775, 0.0
      %v4032 = vsel %vm4000, %v3776, 0.0
      %v4033 = vsel %vm4001, %v3777, 0.0
      %v4034 = vsel %vm4002, %v3778, 0.0
      %v4035 = vsel %vm4003, %v3779, 0.0
      %v4036 = vsel %vm4004, %v3780, 0.0
      %v4037 = vsel %vm4005, %v3781, 0.0
      %v4038 = vsel %vm4006, %v3782, 0.0
      %v4039 = vsel %vm4007, %v3783, 0.0
      %v4040 = vsel %vm4008, %v3784, 0.0
      %s4041 = scalar_lea.vmem %s2, 24
      %v4042 = vld [vmem:[%s4041] sm:$0x7]
      %v4044 = vsel %vm349, %v4009, 0
      %v4047 = vsel %vm349, %v4010, 0
      %v4050 = vsel %vm349, %v4011, 0
      %v4053 = vsel %vm349, %v4012, 0
      %v4056 = vsel %vm349, %v4013, 0
      %v4059 = vsel %vm349, %v4014, 0
      %v4062 = vsel %vm349, %v4015, 0
      %v4065 = vsel %vm349, %v4016, 0
      %v4068 = vsel %vm349, %v4017, 0
      %v4071 = vsel %vm349, %v4018, 0
      %v4074 = vsel %vm349, %v4019, 0
      %v4077 = vsel %vm349, %v4020, 0
      %v4080 = vsel %vm349, %v4021, 0
      %v4083 = vsel %vm349, %v4022, 0
      %v4086 = vsel %vm349, %v4023, 0
      %v4089 = vsel %vm349, %v4024, 0
      %v4092 = vsel %vm349, %v4025, 0
      %v4095 = vsel %vm349, %v4026, 0
      %v4098 = vsel %vm349, %v4027, 0
      %v4101 = vsel %vm349, %v4028, 0
      %v4104 = vsel %vm349, %v4029, 0
      %v4107 = vsel %vm349, %v4030, 0
      %v4110 = vsel %vm349, %v4031, 0
      %v4113 = vsel %vm349, %v4032, 0
      %v4116 = vsel %vm349, %v4033, 0
      %v4119 = vsel %vm349, %v4034, 0
      %v4122 = vsel %vm349, %v4035, 0
      %v4125 = vsel %vm349, %v4036, 0
      %v4128 = vsel %vm349, %v4037, 0
      %v4131 = vsel %vm349, %v4038, 0
      %v4134 = vsel %vm349, %v4039, 0
      %v4137 = vsel %vm349, %v4040, 0
      %v4140 = vsel %vm806, %v4042, 0
      %4142 = vmatprep.subr.mxu0 0.0
      %4143 = vmatpush1.msra.mxu0 0.0
      %4144 = vmatprep.subr.mxu0 0.0
      %4145 = vmatpush1.msra.mxu0 0.0
      %4146 = vmatprep.subr.mxu0 0.0
      %4147 = vmatpush1.msra.mxu0 0.0
      %4148 = vmatprep.subr.mxu0 0.0
      %4149 = vmatpush1.msra.mxu0 0.0
      %4150 = vmatprep.subr.mxu0 0.0
      %4151 = vmatpush1.msra.mxu0 0.0
      %4152 = vmatprep.subr.mxu0 0.0
      %4153 = vmatpush1.msra.mxu0 0.0
      %4154 = vmatprep.subr.mxu0 0.0
      %4155 = vmatpush1.msra.mxu0 0.0
      %4156 = vmatprep.subr.mxu0 0.0
      %4157 = vmatpush1.msra.mxu0 0.0
      %4158 = vmatprep.subr.mxu0 0.0
      %4159 = vmatpush1.msra.mxu0 0.0
      %4160 = vmatprep.subr.mxu0 0.0
      %4161 = vmatpush1.msra.mxu0 0.0
      %4162 = vmatprep.subr.mxu0 0.0
      %4163 = vmatpush1.msra.mxu0 0.0
      %4164 = vmatprep.subr.mxu0 0.0
      %4165 = vmatpush1.msra.mxu0 0.0
      %4166 = vmatprep.subr.mxu0 0.0
      %4167 = vmatpush1.msra.mxu0 0.0
      %4168 = vmatprep.subr.mxu0 0.0
      %4169 = vmatpush1.msra.mxu0 0.0
      %4170 = vmatprep.subr.mxu0 0.0
      %4171 = vmatpush1.msra.mxu0 0.0
      %4172 = vmatprep.subr.mxu0 0.0
      %4173 = vmatpush1.msra.mxu0 %v4140
      %4174 = vmatprep.subr.mxu0 0.0
      %4175 = vmatpush2.msra.mxu0 0.0
      %4176 = vmatprep.subr.mxu0 0.0
      %4177 = vmatpush2.msra.mxu0 0.0
      %4178 = vmatprep.subr.mxu0 0.0
      %4179 = vmatpush2.msra.mxu0 0.0
      %4180 = vmatprep.subr.mxu0 0.0
      %4181 = vmatpush2.msra.mxu0 0.0
      %4182 = vmatprep.subr.mxu0 0.0
      %4183 = vmatpush2.msra.mxu0 0.0
      %4184 = vmatprep.subr.mxu0 0.0
      %4185 = vmatpush2.msra.mxu0 0.0
      %4186 = vmatprep.subr.mxu0 0.0
      %4187 = vmatpush2.msra.mxu0 0.0
      %4188 = vmatprep.subr.mxu0 0.0
      %4189 = vmatpush2.msra.mxu0 0.0
      %4190 = vmatprep.subr.mxu0 0.0
      %4191 = vmatpush2.msra.mxu0 0.0
      %4192 = vmatprep.subr.mxu0 0.0
      %4193 = vmatpush2.msra.mxu0 0.0
      %4194 = vmatprep.subr.mxu0 0.0
      %4195 = vmatpush2.msra.mxu0 0.0
      %4196 = vmatprep.subr.mxu0 0.0
      %4197 = vmatpush2.msra.mxu0 0.0
      %4198 = vmatprep.subr.mxu0 0.0
      %4199 = vmatpush2.msra.mxu0 0.0
      %4200 = vmatprep.subr.mxu0 0.0
      %4201 = vmatpush2.msra.mxu0 0.0
      %4202 = vmatprep.subr.mxu0 0.0
      %4203 = vmatpush2.msra.mxu0 0.0
      %4204 = vmatprep.subr.mxu0 0.0
      %4205 = vmatpush2.msra.mxu0 0.0
      %4206 = vmatprep.mubr.f32.mxu0 0.0
      %4207 = vmatmul.mubr.f32.gmra.mxu0 %v4044
      %v4208 = vpop.f32.mrf.mxu0
      %v4209 = vadd.f32 0.0, %v4208
      %v4210 = vpop.f32.mrf.mxu0
      %4211 = vmatprep.mubr.f32.mxu0 0.0
      %4212 = vmatmul.mubr.f32.gmra.mxu0 %v4047
      %v4213 = vpop.f32.mrf.mxu0
      %v4214 = vadd.f32 0.0, %v4213
      %v4215 = vpop.f32.mrf.mxu0
      %4216 = vmatprep.mubr.f32.mxu0 0.0
      %4217 = vmatmul.mubr.f32.gmra.mxu0 %v4050
      %v4218 = vpop.f32.mrf.mxu0
      %v4219 = vadd.f32 0.0, %v4218
      %v4220 = vpop.f32.mrf.mxu0
      %4221 = vmatprep.mubr.f32.mxu0 0.0
      %4222 = vmatmul.mubr.f32.gmra.mxu0 %v4053
      %v4223 = vpop.f32.mrf.mxu0
      %v4224 = vadd.f32 0.0, %v4223
      %v4225 = vpop.f32.mrf.mxu0
      %4226 = vmatprep.mubr.f32.mxu0 0.0
      %4227 = vmatmul.mubr.f32.gmra.mxu0 %v4056
      %v4228 = vpop.f32.mrf.mxu0
      %v4229 = vadd.f32 0.0, %v4228
      %v4230 = vpop.f32.mrf.mxu0
      %4231 = vmatprep.mubr.f32.mxu0 0.0
      %4232 = vmatmul.mubr.f32.gmra.mxu0 %v4059
      %v4233 = vpop.f32.mrf.mxu0
      %v4234 = vadd.f32 0.0, %v4233
      %v4235 = vpop.f32.mrf.mxu0
      %4236 = vmatprep.mubr.f32.mxu0 0.0
      %4237 = vmatmul.mubr.f32.gmra.mxu0 %v4062
      %v4238 = vpop.f32.mrf.mxu0
      %v4239 = vadd.f32 0.0, %v4238
      %v4240 = vpop.f32.mrf.mxu0
      %4241 = vmatprep.mubr.f32.mxu0 0.0
      %4242 = vmatmul.mubr.f32.gmra.mxu0 %v4065
      %v4243 = vpop.f32.mrf.mxu0
      %v4244 = vadd.f32 0.0, %v4243
      %v4245 = vpop.f32.mrf.mxu0
      %4246 = vmatprep.mubr.f32.mxu0 0.0
      %4247 = vmatmul.mubr.f32.gmra.mxu0 %v4068
      %v4248 = vpop.f32.mrf.mxu0
      %v4249 = vadd.f32 0.0, %v4248
      %v4250 = vpop.f32.mrf.mxu0
      %4251 = vmatprep.mubr.f32.mxu0 0.0
      %4252 = vmatmul.mubr.f32.gmra.mxu0 %v4071
      %v4253 = vpop.f32.mrf.mxu0
      %v4254 = vadd.f32 0.0, %v4253
      %v4255 = vpop.f32.mrf.mxu0
      %4256 = vmatprep.mubr.f32.mxu0 0.0
      %4257 = vmatmul.mubr.f32.gmra.mxu0 %v4074
      %v4258 = vpop.f32.mrf.mxu0
      %v4259 = vadd.f32 0.0, %v4258
      %v4260 = vpop.f32.mrf.mxu0
      %4261 = vmatprep.mubr.f32.mxu0 0.0
      %4262 = vmatmul.mubr.f32.gmra.mxu0 %v4077
      %v4263 = vpop.f32.mrf.mxu0
      %v4264 = vadd.f32 0.0, %v4263
      %v4265 = vpop.f32.mrf.mxu0
      %4266 = vmatprep.mubr.f32.mxu0 0.0
      %4267 = vmatmul.mubr.f32.gmra.mxu0 %v4080
      %v4268 = vpop.f32.mrf.mxu0
      %v4269 = vadd.f32 0.0, %v4268
      %v4270 = vpop.f32.mrf.mxu0
      %4271 = vmatprep.mubr.f32.mxu0 0.0
      %4272 = vmatmul.mubr.f32.gmra.mxu0 %v4083
      %v4273 = vpop.f32.mrf.mxu0
      %v4274 = vadd.f32 0.0, %v4273
      %v4275 = vpop.f32.mrf.mxu0
      %4276 = vmatprep.mubr.f32.mxu0 0.0
      %4277 = vmatmul.mubr.f32.gmra.mxu0 %v4086
      %v4278 = vpop.f32.mrf.mxu0
      %v4279 = vadd.f32 0.0, %v4278
      %v4280 = vpop.f32.mrf.mxu0
      %4281 = vmatprep.mubr.f32.mxu0 0.0
      %4282 = vmatmul.mubr.f32.gmra.mxu0 %v4089
      %v4283 = vpop.f32.mrf.mxu0
      %v4284 = vadd.f32 0.0, %v4283
      %v4285 = vpop.f32.mrf.mxu0
      %4286 = vmatprep.mubr.f32.mxu0 0.0
      %4287 = vmatmul.mubr.f32.gmra.mxu0 %v4092
      %v4288 = vpop.f32.mrf.mxu0
      %v4289 = vadd.f32 0.0, %v4288
      %v4290 = vpop.f32.mrf.mxu0
      %4291 = vmatprep.mubr.f32.mxu0 0.0
      %4292 = vmatmul.mubr.f32.gmra.mxu0 %v4095
      %v4293 = vpop.f32.mrf.mxu0
      %v4294 = vadd.f32 0.0, %v4293
      %v4295 = vpop.f32.mrf.mxu0
      %4296 = vmatprep.mubr.f32.mxu0 0.0
      %4297 = vmatmul.mubr.f32.gmra.mxu0 %v4098
      %v4298 = vpop.f32.mrf.mxu0
      %v4299 = vadd.f32 0.0, %v4298
      %v4300 = vpop.f32.mrf.mxu0
      %4301 = vmatprep.mubr.f32.mxu0 0.0
      %4302 = vmatmul.mubr.f32.gmra.mxu0 %v4101
      %v4303 = vpop.f32.mrf.mxu0
      %v4304 = vadd.f32 0.0, %v4303
      %v4305 = vpop.f32.mrf.mxu0
      %4306 = vmatprep.mubr.f32.mxu0 0.0
      %4307 = vmatmul.mubr.f32.gmra.mxu0 %v4104
      %v4308 = vpop.f32.mrf.mxu0
      %v4309 = vadd.f32 0.0, %v4308
      %v4310 = vpop.f32.mrf.mxu0
      %4311 = vmatprep.mubr.f32.mxu0 0.0
      %4312 = vmatmul.mubr.f32.gmra.mxu0 %v4107
      %v4313 = vpop.f32.mrf.mxu0
      %v4314 = vadd.f32 0.0, %v4313
      %v4315 = vpop.f32.mrf.mxu0
      %4316 = vmatprep.mubr.f32.mxu0 0.0
      %4317 = vmatmul.mubr.f32.gmra.mxu0 %v4110
      %v4318 = vpop.f32.mrf.mxu0
      %v4319 = vadd.f32 0.0, %v4318
      %v4320 = vpop.f32.mrf.mxu0
      %4321 = vmatprep.mubr.f32.mxu0 0.0
      %4322 = vmatmul.mubr.f32.gmra.mxu0 %v4113
      %v4323 = vpop.f32.mrf.mxu0
      %v4324 = vadd.f32 0.0, %v4323
      %v4325 = vpop.f32.mrf.mxu0
      %4326 = vmatprep.mubr.f32.mxu0 0.0
      %4327 = vmatmul.mubr.f32.gmra.mxu0 %v4116
      %v4328 = vpop.f32.mrf.mxu0
      %v4329 = vadd.f32 0.0, %v4328
      %v4330 = vpop.f32.mrf.mxu0
      %4331 = vmatprep.mubr.f32.mxu0 0.0
      %4332 = vmatmul.mubr.f32.gmra.mxu0 %v4119
      %v4333 = vpop.f32.mrf.mxu0
      %v4334 = vadd.f32 0.0, %v4333
      %v4335 = vpop.f32.mrf.mxu0
      %4336 = vmatprep.mubr.f32.mxu0 0.0
      %4337 = vmatmul.mubr.f32.gmra.mxu0 %v4122
      %v4338 = vpop.f32.mrf.mxu0
      %v4339 = vadd.f32 0.0, %v4338
      %v4340 = vpop.f32.mrf.mxu0
      %4341 = vmatprep.mubr.f32.mxu0 0.0
      %4342 = vmatmul.mubr.f32.gmra.mxu0 %v4125
      %v4343 = vpop.f32.mrf.mxu0
      %v4344 = vadd.f32 0.0, %v4343
      %v4345 = vpop.f32.mrf.mxu0
      %4346 = vmatprep.mubr.f32.mxu0 0.0
      %4347 = vmatmul.mubr.f32.gmra.mxu0 %v4128
      %v4348 = vpop.f32.mrf.mxu0
      %v4349 = vadd.f32 0.0, %v4348
      %v4350 = vpop.f32.mrf.mxu0
      %4351 = vmatprep.mubr.f32.mxu0 0.0
      %4352 = vmatmul.mubr.f32.gmra.mxu0 %v4131
      %v4353 = vpop.f32.mrf.mxu0
      %v4354 = vadd.f32 0.0, %v4353
      %v4355 = vpop.f32.mrf.mxu0
      %4356 = vmatprep.mubr.f32.mxu0 0.0
      %4357 = vmatmul.mubr.f32.gmra.mxu0 %v4134
      %v4358 = vpop.f32.mrf.mxu0
      %v4359 = vadd.f32 0.0, %v4358
      %v4360 = vpop.f32.mrf.mxu0
      %4361 = vmatprep.mubr.f32.mxu0 0.0
      %4362 = vmatmul.mubr.f32.gmra.mxu0 %v4137
      %v4363 = vpop.f32.mrf.mxu0
      %v4364 = vadd.f32 0.0, %v4363
      %v4365 = vpop.f32.mrf.mxu0
      %4366 = vdwg.mxu0
      %v4367 = vadd.f32 %v3721, %v4209
      %v4368 = vadd.f32 %v3722, %v4214
      %v4369 = vadd.f32 %v3723, %v4219
      %v4370 = vadd.f32 %v3724, %v4224
      %v4371 = vadd.f32 %v3725, %v4229
      %v4372 = vadd.f32 %v3726, %v4234
      %v4373 = vadd.f32 %v3727, %v4239
      %v4374 = vadd.f32 %v3728, %v4244
      %v4375 = vadd.f32 %v3729, %v4249
      %v4376 = vadd.f32 %v3730, %v4254
      %v4377 = vadd.f32 %v3731, %v4259
      %v4378 = vadd.f32 %v3732, %v4264
      %v4379 = vadd.f32 %v3733, %v4269
      %v4380 = vadd.f32 %v3734, %v4274
      %v4381 = vadd.f32 %v3735, %v4279
      %v4382 = vadd.f32 %v3736, %v4284
      %v4383 = vadd.f32 %v3737, %v4289
      %v4384 = vadd.f32 %v3738, %v4294
      %v4385 = vadd.f32 %v3739, %v4299
      %v4386 = vadd.f32 %v3740, %v4304
      %v4387 = vadd.f32 %v3741, %v4309
      %v4388 = vadd.f32 %v3742, %v4314
      %v4389 = vadd.f32 %v3743, %v4319
      %v4390 = vadd.f32 %v3744, %v4324
      %v4391 = vadd.f32 %v3745, %v4329
      %v4392 = vadd.f32 %v3746, %v4334
      %v4393 = vadd.f32 %v3747, %v4339
      %v4394 = vadd.f32 %v3748, %v4344
      %v4395 = vadd.f32 %v3749, %v4349
      %v4396 = vadd.f32 %v3750, %v4354
      %v4397 = vadd.f32 %v3751, %v4359
      %v4398 = vadd.f32 %v3752, %v4364
      %v4399 = vld [vmem:[#allocation2 + $0x28] sm:$0xff]
      %v4400 = vld [vmem:[#allocation2 + $0x30] sm:$0xff]
      %v4401 = vld [vmem:[#allocation2 + $0x38] sm:$0xff]
      %v4402 = vld [vmem:[#allocation2 + $0x40] sm:$0xff]
      %v4403 = vld [vmem:[#allocation2 + $0x48] sm:$0xff]
      %v4404 = vld [vmem:[#allocation2 + $0x50] sm:$0xff]
      %v4405 = vld [vmem:[#allocation2 + $0x58] sm:$0xff]
      %v4406 = vld [vmem:[#allocation2 + $0x60] sm:$0xff]
      %v4407 = vld [vmem:[#allocation2 + $0x68] sm:$0xff]
      %v4408 = vld [vmem:[#allocation2 + $0x70] sm:$0xff]
      %v4409 = vld [vmem:[#allocation2 + $0x78] sm:$0xff]
      %v4410 = vld [vmem:[#allocation2 + $0x80] sm:$0xff]
      %v4411 = vld [vmem:[#allocation2 + $0x88] sm:$0xff]
      %v4412 = vld [vmem:[#allocation2 + $0x90] sm:$0xff]
      %v4413 = vld [vmem:[#allocation2 + $0x98] sm:$0xff]
      %v4414 = vld [vmem:[#allocation2 + $0xa0] sm:$0xff]
      %v4415 = vld [vmem:[#allocation2 + $0xa8] sm:$0xff]
      %v4416 = vld [vmem:[#allocation2 + $0xb0] sm:$0xff]
      %v4417 = vld [vmem:[#allocation2 + $0xb8] sm:$0xff]
      %v4418 = vld [vmem:[#allocation2 + $0xc0] sm:$0xff]
      %v4419 = vld [vmem:[#allocation2 + $0xc8] sm:$0xff]
      %v4420 = vld [vmem:[#allocation2 + $0xd0] sm:$0xff]
      %v4421 = vld [vmem:[#allocation2 + $0xd8] sm:$0xff]
      %v4422 = vld [vmem:[#allocation2 + $0xe0] sm:$0xff]
      %v4423 = vld [vmem:[#allocation2 + $0xe8] sm:$0xff]
      %v4424 = vld [vmem:[#allocation2 + $0xf0] sm:$0xff]
      %v4425 = vld [vmem:[#allocation2 + $0xf8] sm:$0xff]
      %v4426 = vld [vmem:[#allocation2 + $0x100] sm:$0xff]
      %v4427 = vld [vmem:[#allocation2 + $0x108] sm:$0xff]
      %v4428 = vld [vmem:[#allocation2 + $0x110] sm:$0xff]
      %v4429 = vld [vmem:[#allocation2 + $0x118] sm:$0xff]
      %v4430 = vld [vmem:[#allocation2 + $0x120] sm:$0xff]
      %v4431 = vsel %vm3785, 1, 0
      %v4432 = vsel %vm3786, 1, 0
      %v4433 = vsel %vm3787, 1, 0
      %v4434 = vsel %vm3788, 1, 0
      %v4435 = vsel %vm3789, 1, 0
      %v4436 = vsel %vm3790, 1, 0
      %v4437 = vsel %vm3791, 1, 0
      %v4438 = vsel %vm3792, 1, 0
      %v4439 = vsel %vm3793, 1, 0
      %v4440 = vsel %vm3794, 1, 0
      %v4441 = vsel %vm3795, 1, 0
      %v4442 = vsel %vm3796, 1, 0
      %v4443 = vsel %vm3797, 1, 0
      %v4444 = vsel %vm3798, 1, 0
      %v4445 = vsel %vm3799, 1, 0
      %v4446 = vsel %vm3800, 1, 0
      %v4447 = vsel %vm3801, 1, 0
      %v4448 = vsel %vm3802, 1, 0
      %v4449 = vsel %vm3803, 1, 0
      %v4450 = vsel %vm3804, 1, 0
      %v4451 = vsel %vm3805, 1, 0
      %v4452 = vsel %vm3806, 1, 0
      %v4453 = vsel %vm3807, 1, 0
      %v4454 = vsel %vm3808, 1, 0
      %v4455 = vsel %vm3809, 1, 0
      %v4456 = vsel %vm3810, 1, 0
      %v4457 = vsel %vm3811, 1, 0
      %v4458 = vsel %vm3812, 1, 0
      %v4459 = vsel %vm3813, 1, 0
      %v4460 = vsel %vm3814, 1, 0
      %v4461 = vsel %vm3815, 1, 0
      %v4462 = vsel %vm3816, 1, 0
      %vm4463 = vcmp.eq.s32.totalorder %v4431, 1
      %vm4464 = vcmp.eq.s32.totalorder %v4432, 1
      %vm4465 = vcmp.eq.s32.totalorder %v4433, 1
      %vm4466 = vcmp.eq.s32.totalorder %v4434, 1
      %vm4467 = vcmp.eq.s32.totalorder %v4435, 1
      %vm4468 = vcmp.eq.s32.totalorder %v4436, 1
      %vm4469 = vcmp.eq.s32.totalorder %v4437, 1
      %vm4470 = vcmp.eq.s32.totalorder %v4438, 1
      %vm4471 = vcmp.eq.s32.totalorder %v4439, 1
      %vm4472 = vcmp.eq.s32.totalorder %v4440, 1
      %vm4473 = vcmp.eq.s32.totalorder %v4441, 1
      %vm4474 = vcmp.eq.s32.totalorder %v4442, 1
      %vm4475 = vcmp.eq.s32.totalorder %v4443, 1
      %vm4476 = vcmp.eq.s32.totalorder %v4444, 1
      %vm4477 = vcmp.eq.s32.totalorder %v4445, 1
      %vm4478 = vcmp.eq.s32.totalorder %v4446, 1
      %vm4479 = vcmp.eq.s32.totalorder %v4447, 1
      %vm4480 = vcmp.eq.s32.totalorder %v4448, 1
      %vm4481 = vcmp.eq.s32.totalorder %v4449, 1
      %vm4482 = vcmp.eq.s32.totalorder %v4450, 1
      %vm4483 = vcmp.eq.s32.totalorder %v4451, 1
      %vm4484 = vcmp.eq.s32.totalorder %v4452, 1
      %vm4485 = vcmp.eq.s32.totalorder %v4453, 1
      %vm4486 = vcmp.eq.s32.totalorder %v4454, 1
      %vm4487 = vcmp.eq.s32.totalorder %v4455, 1
      %vm4488 = vcmp.eq.s32.totalorder %v4456, 1
      %vm4489 = vcmp.eq.s32.totalorder %v4457, 1
      %vm4490 = vcmp.eq.s32.totalorder %v4458, 1
      %vm4491 = vcmp.eq.s32.totalorder %v4459, 1
      %vm4492 = vcmp.eq.s32.totalorder %v4460, 1
      %vm4493 = vcmp.eq.s32.totalorder %v4461, 1
      %vm4494 = vcmp.eq.s32.totalorder %v4462, 1
      %v4495 = vsel %vm4463, %v4399, 0.0
      %v4496 = vsel %vm4464, %v4400, 0.0
      %v4497 = vsel %vm4465, %v4401, 0.0
      %v4498 = vsel %vm4466, %v4402, 0.0
      %v4499 = vsel %vm4467, %v4403, 0.0
      %v4500 = vsel %vm4468, %v4404, 0.0
      %v4501 = vsel %vm4469, %v4405, 0.0
      %v4502 = vsel %vm4470, %v4406, 0.0
      %v4503 = vsel %vm4471, %v4407, 0.0
      %v4504 = vsel %vm4472, %v4408, 0.0
      %v4505 = vsel %vm4473, %v4409, 0.0
      %v4506 = vsel %vm4474, %v4410, 0.0
      %v4507 = vsel %vm4475, %v4411, 0.0
      %v4508 = vsel %vm4476, %v4412, 0.0
      %v4509 = vsel %vm4477, %v4413, 0.0
      %v4510 = vsel %vm4478, %v4414, 0.0
      %v4511 = vsel %vm4479, %v4415, 0.0
      %v4512 = vsel %vm4480, %v4416, 0.0
      %v4513 = vsel %vm4481, %v4417, 0.0
      %v4514 = vsel %vm4482, %v4418, 0.0
      %v4515 = vsel %vm4483, %v4419, 0.0
      %v4516 = vsel %vm4484, %v4420, 0.0
      %v4517 = vsel %vm4485, %v4421, 0.0
      %v4518 = vsel %vm4486, %v4422, 0.0
      %v4519 = vsel %vm4487, %v4423, 0.0
      %v4520 = vsel %vm4488, %v4424, 0.0
      %v4521 = vsel %vm4489, %v4425, 0.0
      %v4522 = vsel %vm4490, %v4426, 0.0
      %v4523 = vsel %vm4491, %v4427, 0.0
      %v4524 = vsel %vm4492, %v4428, 0.0
      %v4525 = vsel %vm4493, %v4429, 0.0
      %v4526 = vsel %vm4494, %v4430, 0.0
      %s4527 = scalar_lea.vmem %s2, 28
      %v4528 = vld [vmem:[%s4527] sm:$0x7]
      %v4530 = vsel %vm349, %v4495, 0
      %v4533 = vsel %vm349, %v4496, 0
      %v4536 = vsel %vm349, %v4497, 0
      %v4539 = vsel %vm349, %v4498, 0
      %v4542 = vsel %vm349, %v4499, 0
      %v4545 = vsel %vm349, %v4500, 0
      %v4548 = vsel %vm349, %v4501, 0
      %v4551 = vsel %vm349, %v4502, 0
      %v4554 = vsel %vm349, %v4503, 0
      %v4557 = vsel %vm349, %v4504, 0
      %v4560 = vsel %vm349, %v4505, 0
      %v4563 = vsel %vm349, %v4506, 0
      %v4566 = vsel %vm349, %v4507, 0
      %v4569 = vsel %vm349, %v4508, 0
      %v4572 = vsel %vm349, %v4509, 0
      %v4575 = vsel %vm349, %v4510, 0
      %v4578 = vsel %vm349, %v4511, 0
      %v4581 = vsel %vm349, %v4512, 0
      %v4584 = vsel %vm349, %v4513, 0
      %v4587 = vsel %vm349, %v4514, 0
      %v4590 = vsel %vm349, %v4515, 0
      %v4593 = vsel %vm349, %v4516, 0
      %v4596 = vsel %vm349, %v4517, 0
      %v4599 = vsel %vm349, %v4518, 0
      %v4602 = vsel %vm349, %v4519, 0
      %v4605 = vsel %vm349, %v4520, 0
      %v4608 = vsel %vm349, %v4521, 0
      %v4611 = vsel %vm349, %v4522, 0
      %v4614 = vsel %vm349, %v4523, 0
      %v4617 = vsel %vm349, %v4524, 0
      %v4620 = vsel %vm349, %v4525, 0
      %v4623 = vsel %vm349, %v4526, 0
      %v4626 = vsel %vm806, %v4528, 0
      %4628 = vmatprep.subr.mxu0 0.0
      %4629 = vmatpush1.msra.mxu0 0.0
      %4630 = vmatprep.subr.mxu0 0.0
      %4631 = vmatpush1.msra.mxu0 0.0
      %4632 = vmatprep.subr.mxu0 0.0
      %4633 = vmatpush1.msra.mxu0 0.0
      %4634 = vmatprep.subr.mxu0 0.0
      %4635 = vmatpush1.msra.mxu0 0.0
      %4636 = vmatprep.subr.mxu0 0.0
      %4637 = vmatpush1.msra.mxu0 0.0
      %4638 = vmatprep.subr.mxu0 0.0
      %4639 = vmatpush1.msra.mxu0 0.0
      %4640 = vmatprep.subr.mxu0 0.0
      %4641 = vmatpush1.msra.mxu0 0.0
      %4642 = vmatprep.subr.mxu0 0.0
      %4643 = vmatpush1.msra.mxu0 0.0
      %4644 = vmatprep.subr.mxu0 0.0
      %4645 = vmatpush1.msra.mxu0 0.0
      %4646 = vmatprep.subr.mxu0 0.0
      %4647 = vmatpush1.msra.mxu0 0.0
      %4648 = vmatprep.subr.mxu0 0.0
      %4649 = vmatpush1.msra.mxu0 0.0
      %4650 = vmatprep.subr.mxu0 0.0
      %4651 = vmatpush1.msra.mxu0 0.0
      %4652 = vmatprep.subr.mxu0 0.0
      %4653 = vmatpush1.msra.mxu0 0.0
      %4654 = vmatprep.subr.mxu0 0.0
      %4655 = vmatpush1.msra.mxu0 0.0
      %4656 = vmatprep.subr.mxu0 0.0
      %4657 = vmatpush1.msra.mxu0 0.0
      %4658 = vmatprep.subr.mxu0 0.0
      %4659 = vmatpush1.msra.mxu0 %v4626
      %4660 = vmatprep.subr.mxu0 0.0
      %4661 = vmatpush2.msra.mxu0 0.0
      %4662 = vmatprep.subr.mxu0 0.0
      %4663 = vmatpush2.msra.mxu0 0.0
      %4664 = vmatprep.subr.mxu0 0.0
      %4665 = vmatpush2.msra.mxu0 0.0
      %4666 = vmatprep.subr.mxu0 0.0
      %4667 = vmatpush2.msra.mxu0 0.0
      %4668 = vmatprep.subr.mxu0 0.0
      %4669 = vmatpush2.msra.mxu0 0.0
      %4670 = vmatprep.subr.mxu0 0.0
      %4671 = vmatpush2.msra.mxu0 0.0
      %4672 = vmatprep.subr.mxu0 0.0
      %4673 = vmatpush2.msra.mxu0 0.0
      %4674 = vmatprep.subr.mxu0 0.0
      %4675 = vmatpush2.msra.mxu0 0.0
      %4676 = vmatprep.subr.mxu0 0.0
      %4677 = vmatpush2.msra.mxu0 0.0
      %4678 = vmatprep.subr.mxu0 0.0
      %4679 = vmatpush2.msra.mxu0 0.0
      %4680 = vmatprep.subr.mxu0 0.0
      %4681 = vmatpush2.msra.mxu0 0.0
      %4682 = vmatprep.subr.mxu0 0.0
      %4683 = vmatpush2.msra.mxu0 0.0
      %4684 = vmatprep.subr.mxu0 0.0
      %4685 = vmatpush2.msra.mxu0 0.0
      %4686 = vmatprep.subr.mxu0 0.0
      %4687 = vmatpush2.msra.mxu0 0.0
      %4688 = vmatprep.subr.mxu0 0.0
      %4689 = vmatpush2.msra.mxu0 0.0
      %4690 = vmatprep.subr.mxu0 0.0
      %4691 = vmatpush2.msra.mxu0 0.0
      %4692 = vmatprep.mubr.f32.mxu0 0.0
      %4693 = vmatmul.mubr.f32.gmra.mxu0 %v4530
      %v4694 = vpop.f32.mrf.mxu0
      %v4695 = vadd.f32 0.0, %v4694
      %v4696 = vpop.f32.mrf.mxu0
      %4697 = vmatprep.mubr.f32.mxu0 0.0
      %4698 = vmatmul.mubr.f32.gmra.mxu0 %v4533
      %v4699 = vpop.f32.mrf.mxu0
      %v4700 = vadd.f32 0.0, %v4699
      %v4701 = vpop.f32.mrf.mxu0
      %4702 = vmatprep.mubr.f32.mxu0 0.0
      %4703 = vmatmul.mubr.f32.gmra.mxu0 %v4536
      %v4704 = vpop.f32.mrf.mxu0
      %v4705 = vadd.f32 0.0, %v4704
      %v4706 = vpop.f32.mrf.mxu0
      %4707 = vmatprep.mubr.f32.mxu0 0.0
      %4708 = vmatmul.mubr.f32.gmra.mxu0 %v4539
      %v4709 = vpop.f32.mrf.mxu0
      %v4710 = vadd.f32 0.0, %v4709
      %v4711 = vpop.f32.mrf.mxu0
      %4712 = vmatprep.mubr.f32.mxu0 0.0
      %4713 = vmatmul.mubr.f32.gmra.mxu0 %v4542
      %v4714 = vpop.f32.mrf.mxu0
      %v4715 = vadd.f32 0.0, %v4714
      %v4716 = vpop.f32.mrf.mxu0
      %4717 = vmatprep.mubr.f32.mxu0 0.0
      %4718 = vmatmul.mubr.f32.gmra.mxu0 %v4545
      %v4719 = vpop.f32.mrf.mxu0
      %v4720 = vadd.f32 0.0, %v4719
      %v4721 = vpop.f32.mrf.mxu0
      %4722 = vmatprep.mubr.f32.mxu0 0.0
      %4723 = vmatmul.mubr.f32.gmra.mxu0 %v4548
      %v4724 = vpop.f32.mrf.mxu0
      %v4725 = vadd.f32 0.0, %v4724
      %v4726 = vpop.f32.mrf.mxu0
      %4727 = vmatprep.mubr.f32.mxu0 0.0
      %4728 = vmatmul.mubr.f32.gmra.mxu0 %v4551
      %v4729 = vpop.f32.mrf.mxu0
      %v4730 = vadd.f32 0.0, %v4729
      %v4731 = vpop.f32.mrf.mxu0
      %4732 = vmatprep.mubr.f32.mxu0 0.0
      %4733 = vmatmul.mubr.f32.gmra.mxu0 %v4554
      %v4734 = vpop.f32.mrf.mxu0
      %v4735 = vadd.f32 0.0, %v4734
      %v4736 = vpop.f32.mrf.mxu0
      %4737 = vmatprep.mubr.f32.mxu0 0.0
      %4738 = vmatmul.mubr.f32.gmra.mxu0 %v4557
      %v4739 = vpop.f32.mrf.mxu0
      %v4740 = vadd.f32 0.0, %v4739
      %v4741 = vpop.f32.mrf.mxu0
      %4742 = vmatprep.mubr.f32.mxu0 0.0
      %4743 = vmatmul.mubr.f32.gmra.mxu0 %v4560
      %v4744 = vpop.f32.mrf.mxu0
      %v4745 = vadd.f32 0.0, %v4744
      %v4746 = vpop.f32.mrf.mxu0
      %4747 = vmatprep.mubr.f32.mxu0 0.0
      %4748 = vmatmul.mubr.f32.gmra.mxu0 %v4563
      %v4749 = vpop.f32.mrf.mxu0
      %v4750 = vadd.f32 0.0, %v4749
      %v4751 = vpop.f32.mrf.mxu0
      %4752 = vmatprep.mubr.f32.mxu0 0.0
      %4753 = vmatmul.mubr.f32.gmra.mxu0 %v4566
      %v4754 = vpop.f32.mrf.mxu0
      %v4755 = vadd.f32 0.0, %v4754
      %v4756 = vpop.f32.mrf.mxu0
      %4757 = vmatprep.mubr.f32.mxu0 0.0
      %4758 = vmatmul.mubr.f32.gmra.mxu0 %v4569
      %v4759 = vpop.f32.mrf.mxu0
      %v4760 = vadd.f32 0.0, %v4759
      %v4761 = vpop.f32.mrf.mxu0
      %4762 = vmatprep.mubr.f32.mxu0 0.0
      %4763 = vmatmul.mubr.f32.gmra.mxu0 %v4572
      %v4764 = vpop.f32.mrf.mxu0
      %v4765 = vadd.f32 0.0, %v4764
      %v4766 = vpop.f32.mrf.mxu0
      %4767 = vmatprep.mubr.f32.mxu0 0.0
      %4768 = vmatmul.mubr.f32.gmra.mxu0 %v4575
      %v4769 = vpop.f32.mrf.mxu0
      %v4770 = vadd.f32 0.0, %v4769
      %v4771 = vpop.f32.mrf.mxu0
      %4772 = vmatprep.mubr.f32.mxu0 0.0
      %4773 = vmatmul.mubr.f32.gmra.mxu0 %v4578
      %v4774 = vpop.f32.mrf.mxu0
      %v4775 = vadd.f32 0.0, %v4774
      %v4776 = vpop.f32.mrf.mxu0
      %4777 = vmatprep.mubr.f32.mxu0 0.0
      %4778 = vmatmul.mubr.f32.gmra.mxu0 %v4581
      %v4779 = vpop.f32.mrf.mxu0
      %v4780 = vadd.f32 0.0, %v4779
      %v4781 = vpop.f32.mrf.mxu0
      %4782 = vmatprep.mubr.f32.mxu0 0.0
      %4783 = vmatmul.mubr.f32.gmra.mxu0 %v4584
      %v4784 = vpop.f32.mrf.mxu0
      %v4785 = vadd.f32 0.0, %v4784
      %v4786 = vpop.f32.mrf.mxu0
      %4787 = vmatprep.mubr.f32.mxu0 0.0
      %4788 = vmatmul.mubr.f32.gmra.mxu0 %v4587
      %v4789 = vpop.f32.mrf.mxu0
      %v4790 = vadd.f32 0.0, %v4789
      %v4791 = vpop.f32.mrf.mxu0
      %4792 = vmatprep.mubr.f32.mxu0 0.0
      %4793 = vmatmul.mubr.f32.gmra.mxu0 %v4590
      %v4794 = vpop.f32.mrf.mxu0
      %v4795 = vadd.f32 0.0, %v4794
      %v4796 = vpop.f32.mrf.mxu0
      %4797 = vmatprep.mubr.f32.mxu0 0.0
      %4798 = vmatmul.mubr.f32.gmra.mxu0 %v4593
      %v4799 = vpop.f32.mrf.mxu0
      %v4800 = vadd.f32 0.0, %v4799
      %v4801 = vpop.f32.mrf.mxu0
      %4802 = vmatprep.mubr.f32.mxu0 0.0
      %4803 = vmatmul.mubr.f32.gmra.mxu0 %v4596
      %v4804 = vpop.f32.mrf.mxu0
      %v4805 = vadd.f32 0.0, %v4804
      %v4806 = vpop.f32.mrf.mxu0
      %4807 = vmatprep.mubr.f32.mxu0 0.0
      %4808 = vmatmul.mubr.f32.gmra.mxu0 %v4599
      %v4809 = vpop.f32.mrf.mxu0
      %v4810 = vadd.f32 0.0, %v4809
      %v4811 = vpop.f32.mrf.mxu0
      %4812 = vmatprep.mubr.f32.mxu0 0.0
      %4813 = vmatmul.mubr.f32.gmra.mxu0 %v4602
      %v4814 = vpop.f32.mrf.mxu0
      %v4815 = vadd.f32 0.0, %v4814
      %v4816 = vpop.f32.mrf.mxu0
      %4817 = vmatprep.mubr.f32.mxu0 0.0
      %4818 = vmatmul.mubr.f32.gmra.mxu0 %v4605
      %v4819 = vpop.f32.mrf.mxu0
      %v4820 = vadd.f32 0.0, %v4819
      %v4821 = vpop.f32.mrf.mxu0
      %4822 = vmatprep.mubr.f32.mxu0 0.0
      %4823 = vmatmul.mubr.f32.gmra.mxu0 %v4608
      %v4824 = vpop.f32.mrf.mxu0
      %v4825 = vadd.f32 0.0, %v4824
      %v4826 = vpop.f32.mrf.mxu0
      %4827 = vmatprep.mubr.f32.mxu0 0.0
      %4828 = vmatmul.mubr.f32.gmra.mxu0 %v4611
      %v4829 = vpop.f32.mrf.mxu0
      %v4830 = vadd.f32 0.0, %v4829
      %v4831 = vpop.f32.mrf.mxu0
      %4832 = vmatprep.mubr.f32.mxu0 0.0
      %4833 = vmatmul.mubr.f32.gmra.mxu0 %v4614
      %v4834 = vpop.f32.mrf.mxu0
      %v4835 = vadd.f32 0.0, %v4834
      %v4836 = vpop.f32.mrf.mxu0
      %4837 = vmatprep.mubr.f32.mxu0 0.0
      %4838 = vmatmul.mubr.f32.gmra.mxu0 %v4617
      %v4839 = vpop.f32.mrf.mxu0
      %v4840 = vadd.f32 0.0, %v4839
      %v4841 = vpop.f32.mrf.mxu0
      %4842 = vmatprep.mubr.f32.mxu0 0.0
      %4843 = vmatmul.mubr.f32.gmra.mxu0 %v4620
      %v4844 = vpop.f32.mrf.mxu0
      %v4845 = vadd.f32 0.0, %v4844
      %v4846 = vpop.f32.mrf.mxu0
      %4847 = vmatprep.mubr.f32.mxu0 0.0
      %4848 = vmatmul.mubr.f32.gmra.mxu0 %v4623
      %v4849 = vpop.f32.mrf.mxu0
      %v4850 = vadd.f32 0.0, %v4849
      %v4851 = vpop.f32.mrf.mxu0
      %4852 = vdwg.mxu0
      %v4853 = vadd.f32 %v4367, %v4695
      %v4854 = vadd.f32 %v4368, %v4700
      %v4855 = vadd.f32 %v4369, %v4705
      %v4856 = vadd.f32 %v4370, %v4710
      %v4857 = vadd.f32 %v4371, %v4715
      %v4858 = vadd.f32 %v4372, %v4720
      %v4859 = vadd.f32 %v4373, %v4725
      %v4860 = vadd.f32 %v4374, %v4730
      %v4861 = vadd.f32 %v4375, %v4735
      %v4862 = vadd.f32 %v4376, %v4740
      %v4863 = vadd.f32 %v4377, %v4745
      %v4864 = vadd.f32 %v4378, %v4750
      %v4865 = vadd.f32 %v4379, %v4755
      %v4866 = vadd.f32 %v4380, %v4760
      %v4867 = vadd.f32 %v4381, %v4765
      %v4868 = vadd.f32 %v4382, %v4770
      %v4869 = vadd.f32 %v4383, %v4775
      %v4870 = vadd.f32 %v4384, %v4780
      %v4871 = vadd.f32 %v4385, %v4785
      %v4872 = vadd.f32 %v4386, %v4790
      %v4873 = vadd.f32 %v4387, %v4795
      %v4874 = vadd.f32 %v4388, %v4800
      %v4875 = vadd.f32 %v4389, %v4805
      %v4876 = vadd.f32 %v4390, %v4810
      %v4877 = vadd.f32 %v4391, %v4815
      %v4878 = vadd.f32 %v4392, %v4820
      %v4879 = vadd.f32 %v4393, %v4825
      %v4880 = vadd.f32 %v4394, %v4830
      %v4881 = vadd.f32 %v4395, %v4835
      %v4882 = vadd.f32 %v4396, %v4840
      %v4883 = vadd.f32 %v4397, %v4845
      %v4884 = vadd.f32 %v4398, %v4850
      %v4885 = vld [vmem:[#allocation2 + $0x29] sm:$0xff]
      %v4886 = vld [vmem:[#allocation2 + $0x31] sm:$0xff]
      %v4887 = vld [vmem:[#allocation2 + $0x39] sm:$0xff]
      %v4888 = vld [vmem:[#allocation2 + $0x41] sm:$0xff]
      %v4889 = vld [vmem:[#allocation2 + $0x49] sm:$0xff]
      %v4890 = vld [vmem:[#allocation2 + $0x51] sm:$0xff]
      %v4891 = vld [vmem:[#allocation2 + $0x59] sm:$0xff]
      %v4892 = vld [vmem:[#allocation2 + $0x61] sm:$0xff]
      %v4893 = vld [vmem:[#allocation2 + $0x69] sm:$0xff]
      %v4894 = vld [vmem:[#allocation2 + $0x71] sm:$0xff]
      %v4895 = vld [vmem:[#allocation2 + $0x79] sm:$0xff]
      %v4896 = vld [vmem:[#allocation2 + $0x81] sm:$0xff]
      %v4897 = vld [vmem:[#allocation2 + $0x89] sm:$0xff]
      %v4898 = vld [vmem:[#allocation2 + $0x91] sm:$0xff]
      %v4899 = vld [vmem:[#allocation2 + $0x99] sm:$0xff]
      %v4900 = vld [vmem:[#allocation2 + $0xa1] sm:$0xff]
      %v4901 = vld [vmem:[#allocation2 + $0xa9] sm:$0xff]
      %v4902 = vld [vmem:[#allocation2 + $0xb1] sm:$0xff]
      %v4903 = vld [vmem:[#allocation2 + $0xb9] sm:$0xff]
      %v4904 = vld [vmem:[#allocation2 + $0xc1] sm:$0xff]
      %v4905 = vld [vmem:[#allocation2 + $0xc9] sm:$0xff]
      %v4906 = vld [vmem:[#allocation2 + $0xd1] sm:$0xff]
      %v4907 = vld [vmem:[#allocation2 + $0xd9] sm:$0xff]
      %v4908 = vld [vmem:[#allocation2 + $0xe1] sm:$0xff]
      %v4909 = vld [vmem:[#allocation2 + $0xe9] sm:$0xff]
      %v4910 = vld [vmem:[#allocation2 + $0xf1] sm:$0xff]
      %v4911 = vld [vmem:[#allocation2 + $0xf9] sm:$0xff]
      %v4912 = vld [vmem:[#allocation2 + $0x101] sm:$0xff]
      %v4913 = vld [vmem:[#allocation2 + $0x109] sm:$0xff]
      %v4914 = vld [vmem:[#allocation2 + $0x111] sm:$0xff]
      %v4915 = vld [vmem:[#allocation2 + $0x119] sm:$0xff]
      %v4916 = vld [vmem:[#allocation2 + $0x121] sm:$0xff]
      %vm4917 = vmand %vm3785, %vm1585
      %vm4918 = vmand %vm3786, %vm1586
      %vm4919 = vmand %vm3787, %vm1587
      %vm4920 = vmand %vm3788, %vm1588
      %vm4921 = vmand %vm3789, %vm1589
      %vm4922 = vmand %vm3790, %vm1590
      %vm4923 = vmand %vm3791, %vm1591
      %vm4924 = vmand %vm3792, %vm1592
      %vm4925 = vmand %vm3793, %vm1593
      %vm4926 = vmand %vm3794, %vm1594
      %vm4927 = vmand %vm3795, %vm1595
      %vm4928 = vmand %vm3796, %vm1596
      %vm4929 = vmand %vm3797, %vm1597
      %vm4930 = vmand %vm3798, %vm1598
      %vm4931 = vmand %vm3799, %vm1599
      %vm4932 = vmand %vm3800, %vm1600
      %vm4933 = vmand %vm3801, %vm1601
      %vm4934 = vmand %vm3802, %vm1602
      %vm4935 = vmand %vm3803, %vm1603
      %vm4936 = vmand %vm3804, %vm1604
      %vm4937 = vmand %vm3805, %vm1605
      %vm4938 = vmand %vm3806, %vm1606
      %vm4939 = vmand %vm3807, %vm1607
      %vm4940 = vmand %vm3808, %vm1608
      %vm4941 = vmand %vm3809, %vm1609
      %vm4942 = vmand %vm3810, %vm1610
      %vm4943 = vmand %vm3811, %vm1611
      %vm4944 = vmand %vm3812, %vm1612
      %vm4945 = vmand %vm3813, %vm1613
      %vm4946 = vmand %vm3814, %vm1614
      %vm4947 = vmand %vm3815, %vm1615
      %vm4948 = vmand %vm3816, %vm1616
      %v4949 = vsel %vm4917, 1, 0
      %v4950 = vsel %vm4918, 1, 0
      %v4951 = vsel %vm4919, 1, 0
      %v4952 = vsel %vm4920, 1, 0
      %v4953 = vsel %vm4921, 1, 0
      %v4954 = vsel %vm4922, 1, 0
      %v4955 = vsel %vm4923, 1, 0
      %v4956 = vsel %vm4924, 1, 0
      %v4957 = vsel %vm4925, 1, 0
      %v4958 = vsel %vm4926, 1, 0
      %v4959 = vsel %vm4927, 1, 0
      %v4960 = vsel %vm4928, 1, 0
      %v4961 = vsel %vm4929, 1, 0
      %v4962 = vsel %vm4930, 1, 0
      %v4963 = vsel %vm4931, 1, 0
      %v4964 = vsel %vm4932, 1, 0
      %v4965 = vsel %vm4933, 1, 0
      %v4966 = vsel %vm4934, 1, 0
      %v4967 = vsel %vm4935, 1, 0
      %v4968 = vsel %vm4936, 1, 0
      %v4969 = vsel %vm4937, 1, 0
      %v4970 = vsel %vm4938, 1, 0
      %v4971 = vsel %vm4939, 1, 0
      %v4972 = vsel %vm4940, 1, 0
      %v4973 = vsel %vm4941, 1, 0
      %v4974 = vsel %vm4942, 1, 0
      %v4975 = vsel %vm4943, 1, 0
      %v4976 = vsel %vm4944, 1, 0
      %v4977 = vsel %vm4945, 1, 0
      %v4978 = vsel %vm4946, 1, 0
      %v4979 = vsel %vm4947, 1, 0
      %v4980 = vsel %vm4948, 1, 0
      %4981 = vset.pattern.permute.xlu0 0
      %4982 = vperm.xlu0 %4981, %v4949
      %v4983 = vpop.permute.xlu0 %4982
      %4984 = vset.pattern.permute.xlu0 0
      %4985 = vperm.xlu0 %4984, %v4950
      %v4986 = vpop.permute.xlu0 %4985
      %4987 = vset.pattern.permute.xlu0 0
      %4988 = vperm.xlu0 %4987, %v4951
      %v4989 = vpop.permute.xlu0 %4988
      %4990 = vset.pattern.permute.xlu0 0
      %4991 = vperm.xlu0 %4990, %v4952
      %v4992 = vpop.permute.xlu0 %4991
      %4993 = vset.pattern.permute.xlu0 0
      %4994 = vperm.xlu0 %4993, %v4953
      %v4995 = vpop.permute.xlu0 %4994
      %4996 = vset.pattern.permute.xlu0 0
      %4997 = vperm.xlu0 %4996, %v4954
      %v4998 = vpop.permute.xlu0 %4997
      %4999 = vset.pattern.permute.xlu0 0
      %5000 = vperm.xlu0 %4999, %v4955
      %v5001 = vpop.permute.xlu0 %5000
      %5002 = vset.pattern.permute.xlu0 0
      %5003 = vperm.xlu0 %5002, %v4956
      %v5004 = vpop.permute.xlu0 %5003
      %5005 = vset.pattern.permute.xlu0 0
      %5006 = vperm.xlu0 %5005, %v4957
      %v5007 = vpop.permute.xlu0 %5006
      %5008 = vset.pattern.permute.xlu0 0
      %5009 = vperm.xlu0 %5008, %v4958
      %v5010 = vpop.permute.xlu0 %5009
      %5011 = vset.pattern.permute.xlu0 0
      %5012 = vperm.xlu0 %5011, %v4959
      %v5013 = vpop.permute.xlu0 %5012
      %5014 = vset.pattern.permute.xlu0 0
      %5015 = vperm.xlu0 %5014, %v4960
      %v5016 = vpop.permute.xlu0 %5015
      %5017 = vset.pattern.permute.xlu0 0
      %5018 = vperm.xlu0 %5017, %v4961
      %v5019 = vpop.permute.xlu0 %5018
      %5020 = vset.pattern.permute.xlu0 0
      %5021 = vperm.xlu0 %5020, %v4962
      %v5022 = vpop.permute.xlu0 %5021
      %5023 = vset.pattern.permute.xlu0 0
      %5024 = vperm.xlu0 %5023, %v4963
      %v5025 = vpop.permute.xlu0 %5024
      %5026 = vset.pattern.permute.xlu0 0
      %5027 = vperm.xlu0 %5026, %v4964
      %v5028 = vpop.permute.xlu0 %5027
      %5029 = vset.pattern.permute.xlu0 0
      %5030 = vperm.xlu0 %5029, %v4965
      %v5031 = vpop.permute.xlu0 %5030
      %5032 = vset.pattern.permute.xlu0 0
      %5033 = vperm.xlu0 %5032, %v4966
      %v5034 = vpop.permute.xlu0 %5033
      %5035 = vset.pattern.permute.xlu0 0
      %5036 = vperm.xlu0 %5035, %v4967
      %v5037 = vpop.permute.xlu0 %5036
      %5038 = vset.pattern.permute.xlu0 0
      %5039 = vperm.xlu0 %5038, %v4968
      %v5040 = vpop.permute.xlu0 %5039
      %5041 = vset.pattern.permute.xlu0 0
      %5042 = vperm.xlu0 %5041, %v4969
      %v5043 = vpop.permute.xlu0 %5042
      %5044 = vset.pattern.permute.xlu0 0
      %5045 = vperm.xlu0 %5044, %v4970
      %v5046 = vpop.permute.xlu0 %5045
      %5047 = vset.pattern.permute.xlu0 0
      %5048 = vperm.xlu0 %5047, %v4971
      %v5049 = vpop.permute.xlu0 %5048
      %5050 = vset.pattern.permute.xlu0 0
      %5051 = vperm.xlu0 %5050, %v4972
      %v5052 = vpop.permute.xlu0 %5051
      %5053 = vset.pattern.permute.xlu0 0
      %5054 = vperm.xlu0 %5053, %v4973
      %v5055 = vpop.permute.xlu0 %5054
      %5056 = vset.pattern.permute.xlu0 0
      %5057 = vperm.xlu0 %5056, %v4974
      %v5058 = vpop.permute.xlu0 %5057
      %5059 = vset.pattern.permute.xlu0 0
      %5060 = vperm.xlu0 %5059, %v4975
      %v5061 = vpop.permute.xlu0 %5060
      %5062 = vset.pattern.permute.xlu0 0
      %5063 = vperm.xlu0 %5062, %v4976
      %v5064 = vpop.permute.xlu0 %5063
      %5065 = vset.pattern.permute.xlu0 0
      %5066 = vperm.xlu0 %5065, %v4977
      %v5067 = vpop.permute.xlu0 %5066
      %5068 = vset.pattern.permute.xlu0 0
      %5069 = vperm.xlu0 %5068, %v4978
      %v5070 = vpop.permute.xlu0 %5069
      %5071 = vset.pattern.permute.xlu0 0
      %5072 = vperm.xlu0 %5071, %v4979
      %v5073 = vpop.permute.xlu0 %5072
      %5074 = vset.pattern.permute.xlu0 0
      %5075 = vperm.xlu0 %5074, %v4980
      %v5076 = vpop.permute.xlu0 %5075
      %vm5077 = vcmp.eq.s32.totalorder %v4983, 1
      %vm5078 = vcmp.eq.s32.totalorder %v4986, 1
      %vm5079 = vcmp.eq.s32.totalorder %v4989, 1
      %vm5080 = vcmp.eq.s32.totalorder %v4992, 1
      %vm5081 = vcmp.eq.s32.totalorder %v4995, 1
      %vm5082 = vcmp.eq.s32.totalorder %v4998, 1
      %vm5083 = vcmp.eq.s32.totalorder %v5001, 1
      %vm5084 = vcmp.eq.s32.totalorder %v5004, 1
      %vm5085 = vcmp.eq.s32.totalorder %v5007, 1
      %vm5086 = vcmp.eq.s32.totalorder %v5010, 1
      %vm5087 = vcmp.eq.s32.totalorder %v5013, 1
      %vm5088 = vcmp.eq.s32.totalorder %v5016, 1
      %vm5089 = vcmp.eq.s32.totalorder %v5019, 1
      %vm5090 = vcmp.eq.s32.totalorder %v5022, 1
      %vm5091 = vcmp.eq.s32.totalorder %v5025, 1
      %vm5092 = vcmp.eq.s32.totalorder %v5028, 1
      %vm5093 = vcmp.eq.s32.totalorder %v5031, 1
      %vm5094 = vcmp.eq.s32.totalorder %v5034, 1
      %vm5095 = vcmp.eq.s32.totalorder %v5037, 1
      %vm5096 = vcmp.eq.s32.totalorder %v5040, 1
      %vm5097 = vcmp.eq.s32.totalorder %v5043, 1
      %vm5098 = vcmp.eq.s32.totalorder %v5046, 1
      %vm5099 = vcmp.eq.s32.totalorder %v5049, 1
      %vm5100 = vcmp.eq.s32.totalorder %v5052, 1
      %vm5101 = vcmp.eq.s32.totalorder %v5055, 1
      %vm5102 = vcmp.eq.s32.totalorder %v5058, 1
      %vm5103 = vcmp.eq.s32.totalorder %v5061, 1
      %vm5104 = vcmp.eq.s32.totalorder %v5064, 1
      %vm5105 = vcmp.eq.s32.totalorder %v5067, 1
      %vm5106 = vcmp.eq.s32.totalorder %v5070, 1
      %vm5107 = vcmp.eq.s32.totalorder %v5073, 1
      %vm5108 = vcmp.eq.s32.totalorder %v5076, 1
      %v5109 = vsel %vm5077, %v4885, 0.0
      %v5110 = vsel %vm5078, %v4886, 0.0
      %v5111 = vsel %vm5079, %v4887, 0.0
      %v5112 = vsel %vm5080, %v4888, 0.0
      %v5113 = vsel %vm5081, %v4889, 0.0
      %v5114 = vsel %vm5082, %v4890, 0.0
      %v5115 = vsel %vm5083, %v4891, 0.0
      %v5116 = vsel %vm5084, %v4892, 0.0
      %v5117 = vsel %vm5085, %v4893, 0.0
      %v5118 = vsel %vm5086, %v4894, 0.0
      %v5119 = vsel %vm5087, %v4895, 0.0
      %v5120 = vsel %vm5088, %v4896, 0.0
      %v5121 = vsel %vm5089, %v4897, 0.0
      %v5122 = vsel %vm5090, %v4898, 0.0
      %v5123 = vsel %vm5091, %v4899, 0.0
      %v5124 = vsel %vm5092, %v4900, 0.0
      %v5125 = vsel %vm5093, %v4901, 0.0
      %v5126 = vsel %vm5094, %v4902, 0.0
      %v5127 = vsel %vm5095, %v4903, 0.0
      %v5128 = vsel %vm5096, %v4904, 0.0
      %v5129 = vsel %vm5097, %v4905, 0.0
      %v5130 = vsel %vm5098, %v4906, 0.0
      %v5131 = vsel %vm5099, %v4907, 0.0
      %v5132 = vsel %vm5100, %v4908, 0.0
      %v5133 = vsel %vm5101, %v4909, 0.0
      %v5134 = vsel %vm5102, %v4910, 0.0
      %v5135 = vsel %vm5103, %v4911, 0.0
      %v5136 = vsel %vm5104, %v4912, 0.0
      %v5137 = vsel %vm5105, %v4913, 0.0
      %v5138 = vsel %vm5106, %v4914, 0.0
      %v5139 = vsel %vm5107, %v4915, 0.0
      %v5140 = vsel %vm5108, %v4916, 0.0
      %s5141 = scalar_lea.vmem %s2, 32
      %v5142 = vld [vmem:[%s5141] sm:$0x7]
      %v5144 = vsel %vm349, %v5109, 0
      %v5147 = vsel %vm349, %v5110, 0
      %v5150 = vsel %vm349, %v5111, 0
      %v5153 = vsel %vm349, %v5112, 0
      %v5156 = vsel %vm349, %v5113, 0
      %v5159 = vsel %vm349, %v5114, 0
      %v5162 = vsel %vm349, %v5115, 0
      %v5165 = vsel %vm349, %v5116, 0
      %v5168 = vsel %vm349, %v5117, 0
      %v5171 = vsel %vm349, %v5118, 0
      %v5174 = vsel %vm349, %v5119, 0
      %v5177 = vsel %vm349, %v5120, 0
      %v5180 = vsel %vm349, %v5121, 0
      %v5183 = vsel %vm349, %v5122, 0
      %v5186 = vsel %vm349, %v5123, 0
      %v5189 = vsel %vm349, %v5124, 0
      %v5192 = vsel %vm349, %v5125, 0
      %v5195 = vsel %vm349, %v5126, 0
      %v5198 = vsel %vm349, %v5127, 0
      %v5201 = vsel %vm349, %v5128, 0
      %v5204 = vsel %vm349, %v5129, 0
      %v5207 = vsel %vm349, %v5130, 0
      %v5210 = vsel %vm349, %v5131, 0
      %v5213 = vsel %vm349, %v5132, 0
      %v5216 = vsel %vm349, %v5133, 0
      %v5219 = vsel %vm349, %v5134, 0
      %v5222 = vsel %vm349, %v5135, 0
      %v5225 = vsel %vm349, %v5136, 0
      %v5228 = vsel %vm349, %v5137, 0
      %v5231 = vsel %vm349, %v5138, 0
      %v5234 = vsel %vm349, %v5139, 0
      %v5237 = vsel %vm349, %v5140, 0
      %v5240 = vsel %vm806, %v5142, 0
      %5242 = vmatprep.subr.mxu0 0.0
      %5243 = vmatpush1.msra.mxu0 0.0
      %5244 = vmatprep.subr.mxu0 0.0
      %5245 = vmatpush1.msra.mxu0 0.0
      %5246 = vmatprep.subr.mxu0 0.0
      %5247 = vmatpush1.msra.mxu0 0.0
      %5248 = vmatprep.subr.mxu0 0.0
      %5249 = vmatpush1.msra.mxu0 0.0
      %5250 = vmatprep.subr.mxu0 0.0
      %5251 = vmatpush1.msra.mxu0 0.0
      %5252 = vmatprep.subr.mxu0 0.0
      %5253 = vmatpush1.msra.mxu0 0.0
      %5254 = vmatprep.subr.mxu0 0.0
      %5255 = vmatpush1.msra.mxu0 0.0
      %5256 = vmatprep.subr.mxu0 0.0
      %5257 = vmatpush1.msra.mxu0 0.0
      %5258 = vmatprep.subr.mxu0 0.0
      %5259 = vmatpush1.msra.mxu0 0.0
      %5260 = vmatprep.subr.mxu0 0.0
      %5261 = vmatpush1.msra.mxu0 0.0
      %5262 = vmatprep.subr.mxu0 0.0
      %5263 = vmatpush1.msra.mxu0 0.0
      %5264 = vmatprep.subr.mxu0 0.0
      %5265 = vmatpush1.msra.mxu0 0.0
      %5266 = vmatprep.subr.mxu0 0.0
      %5267 = vmatpush1.msra.mxu0 0.0
      %5268 = vmatprep.subr.mxu0 0.0
      %5269 = vmatpush1.msra.mxu0 0.0
      %5270 = vmatprep.subr.mxu0 0.0
      %5271 = vmatpush1.msra.mxu0 0.0
      %5272 = vmatprep.subr.mxu0 0.0
      %5273 = vmatpush1.msra.mxu0 %v5240
      %5274 = vmatprep.subr.mxu0 0.0
      %5275 = vmatpush2.msra.mxu0 0.0
      %5276 = vmatprep.subr.mxu0 0.0
      %5277 = vmatpush2.msra.mxu0 0.0
      %5278 = vmatprep.subr.mxu0 0.0
      %5279 = vmatpush2.msra.mxu0 0.0
      %5280 = vmatprep.subr.mxu0 0.0
      %5281 = vmatpush2.msra.mxu0 0.0
      %5282 = vmatprep.subr.mxu0 0.0
      %5283 = vmatpush2.msra.mxu0 0.0
      %5284 = vmatprep.subr.mxu0 0.0
      %5285 = vmatpush2.msra.mxu0 0.0
      %5286 = vmatprep.subr.mxu0 0.0
      %5287 = vmatpush2.msra.mxu0 0.0
      %5288 = vmatprep.subr.mxu0 0.0
      %5289 = vmatpush2.msra.mxu0 0.0
      %5290 = vmatprep.subr.mxu0 0.0
      %5291 = vmatpush2.msra.mxu0 0.0
      %5292 = vmatprep.subr.mxu0 0.0
      %5293 = vmatpush2.msra.mxu0 0.0
      %5294 = vmatprep.subr.mxu0 0.0
      %5295 = vmatpush2.msra.mxu0 0.0
      %5296 = vmatprep.subr.mxu0 0.0
      %5297 = vmatpush2.msra.mxu0 0.0
      %5298 = vmatprep.subr.mxu0 0.0
      %5299 = vmatpush2.msra.mxu0 0.0
      %5300 = vmatprep.subr.mxu0 0.0
      %5301 = vmatpush2.msra.mxu0 0.0
      %5302 = vmatprep.subr.mxu0 0.0
      %5303 = vmatpush2.msra.mxu0 0.0
      %5304 = vmatprep.subr.mxu0 0.0
      %5305 = vmatpush2.msra.mxu0 0.0
      %5306 = vmatprep.mubr.f32.mxu0 0.0
      %5307 = vmatmul.mubr.f32.gmra.mxu0 %v5144
      %v5308 = vpop.f32.mrf.mxu0
      %v5309 = vadd.f32 0.0, %v5308
      %v5310 = vpop.f32.mrf.mxu0
      %5311 = vmatprep.mubr.f32.mxu0 0.0
      %5312 = vmatmul.mubr.f32.gmra.mxu0 %v5147
      %v5313 = vpop.f32.mrf.mxu0
      %v5314 = vadd.f32 0.0, %v5313
      %v5315 = vpop.f32.mrf.mxu0
      %5316 = vmatprep.mubr.f32.mxu0 0.0
      %5317 = vmatmul.mubr.f32.gmra.mxu0 %v5150
      %v5318 = vpop.f32.mrf.mxu0
      %v5319 = vadd.f32 0.0, %v5318
      %v5320 = vpop.f32.mrf.mxu0
      %5321 = vmatprep.mubr.f32.mxu0 0.0
      %5322 = vmatmul.mubr.f32.gmra.mxu0 %v5153
      %v5323 = vpop.f32.mrf.mxu0
      %v5324 = vadd.f32 0.0, %v5323
      %v5325 = vpop.f32.mrf.mxu0
      %5326 = vmatprep.mubr.f32.mxu0 0.0
      %5327 = vmatmul.mubr.f32.gmra.mxu0 %v5156
      %v5328 = vpop.f32.mrf.mxu0
      %v5329 = vadd.f32 0.0, %v5328
      %v5330 = vpop.f32.mrf.mxu0
      %5331 = vmatprep.mubr.f32.mxu0 0.0
      %5332 = vmatmul.mubr.f32.gmra.mxu0 %v5159
      %v5333 = vpop.f32.mrf.mxu0
      %v5334 = vadd.f32 0.0, %v5333
      %v5335 = vpop.f32.mrf.mxu0
      %5336 = vmatprep.mubr.f32.mxu0 0.0
      %5337 = vmatmul.mubr.f32.gmra.mxu0 %v5162
      %v5338 = vpop.f32.mrf.mxu0
      %v5339 = vadd.f32 0.0, %v5338
      %v5340 = vpop.f32.mrf.mxu0
      %5341 = vmatprep.mubr.f32.mxu0 0.0
      %5342 = vmatmul.mubr.f32.gmra.mxu0 %v5165
      %v5343 = vpop.f32.mrf.mxu0
      %v5344 = vadd.f32 0.0, %v5343
      %v5345 = vpop.f32.mrf.mxu0
      %5346 = vmatprep.mubr.f32.mxu0 0.0
      %5347 = vmatmul.mubr.f32.gmra.mxu0 %v5168
      %v5348 = vpop.f32.mrf.mxu0
      %v5349 = vadd.f32 0.0, %v5348
      %v5350 = vpop.f32.mrf.mxu0
      %5351 = vmatprep.mubr.f32.mxu0 0.0
      %5352 = vmatmul.mubr.f32.gmra.mxu0 %v5171
      %v5353 = vpop.f32.mrf.mxu0
      %v5354 = vadd.f32 0.0, %v5353
      %v5355 = vpop.f32.mrf.mxu0
      %5356 = vmatprep.mubr.f32.mxu0 0.0
      %5357 = vmatmul.mubr.f32.gmra.mxu0 %v5174
      %v5358 = vpop.f32.mrf.mxu0
      %v5359 = vadd.f32 0.0, %v5358
      %v5360 = vpop.f32.mrf.mxu0
      %5361 = vmatprep.mubr.f32.mxu0 0.0
      %5362 = vmatmul.mubr.f32.gmra.mxu0 %v5177
      %v5363 = vpop.f32.mrf.mxu0
      %v5364 = vadd.f32 0.0, %v5363
      %v5365 = vpop.f32.mrf.mxu0
      %5366 = vmatprep.mubr.f32.mxu0 0.0
      %5367 = vmatmul.mubr.f32.gmra.mxu0 %v5180
      %v5368 = vpop.f32.mrf.mxu0
      %v5369 = vadd.f32 0.0, %v5368
      %v5370 = vpop.f32.mrf.mxu0
      %5371 = vmatprep.mubr.f32.mxu0 0.0
      %5372 = vmatmul.mubr.f32.gmra.mxu0 %v5183
      %v5373 = vpop.f32.mrf.mxu0
      %v5374 = vadd.f32 0.0, %v5373
      %v5375 = vpop.f32.mrf.mxu0
      %5376 = vmatprep.mubr.f32.mxu0 0.0
      %5377 = vmatmul.mubr.f32.gmra.mxu0 %v5186
      %v5378 = vpop.f32.mrf.mxu0
      %v5379 = vadd.f32 0.0, %v5378
      %v5380 = vpop.f32.mrf.mxu0
      %5381 = vmatprep.mubr.f32.mxu0 0.0
      %5382 = vmatmul.mubr.f32.gmra.mxu0 %v5189
      %v5383 = vpop.f32.mrf.mxu0
      %v5384 = vadd.f32 0.0, %v5383
      %v5385 = vpop.f32.mrf.mxu0
      %5386 = vmatprep.mubr.f32.mxu0 0.0
      %5387 = vmatmul.mubr.f32.gmra.mxu0 %v5192
      %v5388 = vpop.f32.mrf.mxu0
      %v5389 = vadd.f32 0.0, %v5388
      %v5390 = vpop.f32.mrf.mxu0
      %5391 = vmatprep.mubr.f32.mxu0 0.0
      %5392 = vmatmul.mubr.f32.gmra.mxu0 %v5195
      %v5393 = vpop.f32.mrf.mxu0
      %v5394 = vadd.f32 0.0, %v5393
      %v5395 = vpop.f32.mrf.mxu0
      %5396 = vmatprep.mubr.f32.mxu0 0.0
      %5397 = vmatmul.mubr.f32.gmra.mxu0 %v5198
      %v5398 = vpop.f32.mrf.mxu0
      %v5399 = vadd.f32 0.0, %v5398
      %v5400 = vpop.f32.mrf.mxu0
      %5401 = vmatprep.mubr.f32.mxu0 0.0
      %5402 = vmatmul.mubr.f32.gmra.mxu0 %v5201
      %v5403 = vpop.f32.mrf.mxu0
      %v5404 = vadd.f32 0.0, %v5403
      %v5405 = vpop.f32.mrf.mxu0
      %5406 = vmatprep.mubr.f32.mxu0 0.0
      %5407 = vmatmul.mubr.f32.gmra.mxu0 %v5204
      %v5408 = vpop.f32.mrf.mxu0
      %v5409 = vadd.f32 0.0, %v5408
      %v5410 = vpop.f32.mrf.mxu0
      %5411 = vmatprep.mubr.f32.mxu0 0.0
      %5412 = vmatmul.mubr.f32.gmra.mxu0 %v5207
      %v5413 = vpop.f32.mrf.mxu0
      %v5414 = vadd.f32 0.0, %v5413
      %v5415 = vpop.f32.mrf.mxu0
      %5416 = vmatprep.mubr.f32.mxu0 0.0
      %5417 = vmatmul.mubr.f32.gmra.mxu0 %v5210
      %v5418 = vpop.f32.mrf.mxu0
      %v5419 = vadd.f32 0.0, %v5418
      %v5420 = vpop.f32.mrf.mxu0
      %5421 = vmatprep.mubr.f32.mxu0 0.0
      %5422 = vmatmul.mubr.f32.gmra.mxu0 %v5213
      %v5423 = vpop.f32.mrf.mxu0
      %v5424 = vadd.f32 0.0, %v5423
      %v5425 = vpop.f32.mrf.mxu0
      %5426 = vmatprep.mubr.f32.mxu0 0.0
      %5427 = vmatmul.mubr.f32.gmra.mxu0 %v5216
      %v5428 = vpop.f32.mrf.mxu0
      %v5429 = vadd.f32 0.0, %v5428
      %v5430 = vpop.f32.mrf.mxu0
      %5431 = vmatprep.mubr.f32.mxu0 0.0
      %5432 = vmatmul.mubr.f32.gmra.mxu0 %v5219
      %v5433 = vpop.f32.mrf.mxu0
      %v5434 = vadd.f32 0.0, %v5433
      %v5435 = vpop.f32.mrf.mxu0
      %5436 = vmatprep.mubr.f32.mxu0 0.0
      %5437 = vmatmul.mubr.f32.gmra.mxu0 %v5222
      %v5438 = vpop.f32.mrf.mxu0
      %v5439 = vadd.f32 0.0, %v5438
      %v5440 = vpop.f32.mrf.mxu0
      %5441 = vmatprep.mubr.f32.mxu0 0.0
      %5442 = vmatmul.mubr.f32.gmra.mxu0 %v5225
      %v5443 = vpop.f32.mrf.mxu0
      %v5444 = vadd.f32 0.0, %v5443
      %v5445 = vpop.f32.mrf.mxu0
      %5446 = vmatprep.mubr.f32.mxu0 0.0
      %5447 = vmatmul.mubr.f32.gmra.mxu0 %v5228
      %v5448 = vpop.f32.mrf.mxu0
      %v5449 = vadd.f32 0.0, %v5448
      %v5450 = vpop.f32.mrf.mxu0
      %5451 = vmatprep.mubr.f32.mxu0 0.0
      %5452 = vmatmul.mubr.f32.gmra.mxu0 %v5231
      %v5453 = vpop.f32.mrf.mxu0
      %v5454 = vadd.f32 0.0, %v5453
      %v5455 = vpop.f32.mrf.mxu0
      %5456 = vmatprep.mubr.f32.mxu0 0.0
      %5457 = vmatmul.mubr.f32.gmra.mxu0 %v5234
      %v5458 = vpop.f32.mrf.mxu0
      %v5459 = vadd.f32 0.0, %v5458
      %v5460 = vpop.f32.mrf.mxu0
      %5461 = vmatprep.mubr.f32.mxu0 0.0
      %5462 = vmatmul.mubr.f32.gmra.mxu0 %v5237
      %v5463 = vpop.f32.mrf.mxu0
      %v5464 = vadd.f32 0.0, %v5463
      %v5465 = vpop.f32.mrf.mxu0
      %5466 = vdwg.mxu0
      %v5467 = vadd.f32 %v4853, %v5309
      %v5468 = vadd.f32 %v4854, %v5314
      %v5469 = vadd.f32 %v4855, %v5319
      %v5470 = vadd.f32 %v4856, %v5324
      %v5471 = vadd.f32 %v4857, %v5329
      %v5472 = vadd.f32 %v4858, %v5334
      %v5473 = vadd.f32 %v4859, %v5339
      %v5474 = vadd.f32 %v4860, %v5344
      %v5475 = vadd.f32 %v4861, %v5349
      %v5476 = vadd.f32 %v4862, %v5354
      %v5477 = vadd.f32 %v4863, %v5359
      %v5478 = vadd.f32 %v4864, %v5364
      %v5479 = vadd.f32 %v4865, %v5369
      %v5480 = vadd.f32 %v4866, %v5374
      %v5481 = vadd.f32 %v4867, %v5379
      %v5482 = vadd.f32 %v4868, %v5384
      %v5483 = vadd.f32 %v4869, %v5389
      %v5484 = vadd.f32 %v4870, %v5394
      %v5485 = vadd.f32 %v4871, %v5399
      %v5486 = vadd.f32 %v4872, %v5404
      %v5487 = vadd.f32 %v4873, %v5409
      %v5488 = vadd.f32 %v4874, %v5414
      %v5489 = vadd.f32 %v4875, %v5419
      %v5490 = vadd.f32 %v4876, %v5424
      %v5491 = vadd.f32 %v4877, %v5429
      %v5492 = vadd.f32 %v4878, %v5434
      %v5493 = vadd.f32 %v4879, %v5439
      %v5494 = vadd.f32 %v4880, %v5444
      %v5495 = vadd.f32 %v4881, %v5449
      %v5496 = vadd.f32 %v4882, %v5454
      %v5497 = vadd.f32 %v4883, %v5459
      %v5498 = vadd.f32 %v4884, %v5464
      %v5499 = vmax.f32 %v5467, 0.0
      %v5500 = vmax.f32 %v5468, 0.0
      %v5501 = vmax.f32 %v5469, 0.0
      %v5502 = vmax.f32 %v5470, 0.0
      %v5503 = vmax.f32 %v5471, 0.0
      %v5504 = vmax.f32 %v5472, 0.0
      %v5505 = vmax.f32 %v5473, 0.0
      %v5506 = vmax.f32 %v5474, 0.0
      %v5507 = vmax.f32 %v5475, 0.0
      %v5508 = vmax.f32 %v5476, 0.0
      %v5509 = vmax.f32 %v5477, 0.0
      %v5510 = vmax.f32 %v5478, 0.0
      %v5511 = vmax.f32 %v5479, 0.0
      %v5512 = vmax.f32 %v5480, 0.0
      %v5513 = vmax.f32 %v5481, 0.0
      %v5514 = vmax.f32 %v5482, 0.0
      %v5515 = vmax.f32 %v5483, 0.0
      %v5516 = vmax.f32 %v5484, 0.0
      %v5517 = vmax.f32 %v5485, 0.0
      %v5518 = vmax.f32 %v5486, 0.0
      %v5519 = vmax.f32 %v5487, 0.0
      %v5520 = vmax.f32 %v5488, 0.0
      %v5521 = vmax.f32 %v5489, 0.0
      %v5522 = vmax.f32 %v5490, 0.0
      %v5523 = vmax.f32 %v5491, 0.0
      %v5524 = vmax.f32 %v5492, 0.0
      %v5525 = vmax.f32 %v5493, 0.0
      %v5526 = vmax.f32 %v5494, 0.0
      %v5527 = vmax.f32 %v5495, 0.0
      %v5528 = vmax.f32 %v5496, 0.0
      %v5529 = vmax.f32 %v5497, 0.0
      %v5530 = vmax.f32 %v5498, 0.0
      %vm5531 = vcmask 261120
      %5532 = vst.msk [vmem:[#allocation3 + $0x18] sm:$0xff] %vm5531, %v5499
      %5533 = vst.msk [vmem:[#allocation3 + $0x20] sm:$0xff] %vm5531, %v5500
      %5534 = vst.msk [vmem:[#allocation3 + $0x28] sm:$0xff] %vm5531, %v5501
      %5535 = vst.msk [vmem:[#allocation3 + $0x30] sm:$0xff] %vm5531, %v5502
      %5536 = vst.msk [vmem:[#allocation3 + $0x38] sm:$0xff] %vm5531, %v5503
      %5537 = vst.msk [vmem:[#allocation3 + $0x40] sm:$0xff] %vm5531, %v5504
      %5538 = vst.msk [vmem:[#allocation3 + $0x48] sm:$0xff] %vm5531, %v5505
      %5539 = vst.msk [vmem:[#allocation3 + $0x50] sm:$0xff] %vm5531, %v5506
      %5540 = vst.msk [vmem:[#allocation3 + $0x58] sm:$0xff] %vm5531, %v5507
      %5541 = vst.msk [vmem:[#allocation3 + $0x60] sm:$0xff] %vm5531, %v5508
      %5542 = vst.msk [vmem:[#allocation3 + $0x68] sm:$0xff] %vm5531, %v5509
      %5543 = vst.msk [vmem:[#allocation3 + $0x70] sm:$0xff] %vm5531, %v5510
      %5544 = vst.msk [vmem:[#allocation3 + $0x78] sm:$0xff] %vm5531, %v5511
      %5545 = vst.msk [vmem:[#allocation3 + $0x80] sm:$0xff] %vm5531, %v5512
      %5546 = vst.msk [vmem:[#allocation3 + $0x88] sm:$0xff] %vm5531, %v5513
      %5547 = vst.msk [vmem:[#allocation3 + $0x90] sm:$0xff] %vm5531, %v5514
      %5548 = vst.msk [vmem:[#allocation3 + $0x98] sm:$0xff] %vm5531, %v5515
      %5549 = vst.msk [vmem:[#allocation3 + $0xa0] sm:$0xff] %vm5531, %v5516
      %5550 = vst.msk [vmem:[#allocation3 + $0xa8] sm:$0xff] %vm5531, %v5517
      %5551 = vst.msk [vmem:[#allocation3 + $0xb0] sm:$0xff] %vm5531, %v5518
      %5552 = vst.msk [vmem:[#allocation3 + $0xb8] sm:$0xff] %vm5531, %v5519
      %5553 = vst.msk [vmem:[#allocation3 + $0xc0] sm:$0xff] %vm5531, %v5520
      %5554 = vst.msk [vmem:[#allocation3 + $0xc8] sm:$0xff] %vm5531, %v5521
      %5555 = vst.msk [vmem:[#allocation3 + $0xd0] sm:$0xff] %vm5531, %v5522
      %5556 = vst.msk [vmem:[#allocation3 + $0xd8] sm:$0xff] %vm5531, %v5523
      %5557 = vst.msk [vmem:[#allocation3 + $0xe0] sm:$0xff] %vm5531, %v5524
      %5558 = vst.msk [vmem:[#allocation3 + $0xe8] sm:$0xff] %vm5531, %v5525
      %5559 = vst.msk [vmem:[#allocation3 + $0xf0] sm:$0xff] %vm5531, %v5526
      %5560 = vst.msk [vmem:[#allocation3 + $0xf8] sm:$0xff] %vm5531, %v5527
      %5561 = vst.msk [vmem:[#allocation3 + $0x100] sm:$0xff] %vm5531, %v5528
      %5562 = vst.msk [vmem:[#allocation3 + $0x108] sm:$0xff] %vm5531, %v5529
      %5563 = vst.msk [vmem:[#allocation3 + $0x110] sm:$0xff] %vm5531, %v5530
      %v5564 = vld [vmem:[%s5] sm:$0x1]
      %v5566 = vlaneseq
      %v5567 = vshrl.u32 %v5566, 7
      %v5568 = vsub.s32 0, %v5567
      %v5569 = vrot.slane %v5564, %v5568
      %v5571 = vld [vmem:[#allocation3 + $0x7] sm:$0xff]
      %v5572 = vld [vmem:[#allocation3 + $0xf] sm:$0xff]
      %v5573 = vld [vmem:[#allocation3 + $0x17] sm:$0xff]
      %v5574 = vld [vmem:[#allocation3 + $0x1f] sm:$0xff]
      %v5575 = vld [vmem:[#allocation3 + $0x27] sm:$0xff]
      %v5576 = vld [vmem:[#allocation3 + $0x2f] sm:$0xff]
      %v5577 = vld [vmem:[#allocation3 + $0x37] sm:$0xff]
      %v5578 = vld [vmem:[#allocation3 + $0x3f] sm:$0xff]
      %v5579 = vld [vmem:[#allocation3 + $0x47] sm:$0xff]
      %v5580 = vld [vmem:[#allocation3 + $0x4f] sm:$0xff]
      %v5581 = vld [vmem:[#allocation3 + $0x57] sm:$0xff]
      %v5582 = vld [vmem:[#allocation3 + $0x5f] sm:$0xff]
      %v5583 = vld [vmem:[#allocation3 + $0x67] sm:$0xff]
      %v5584 = vld [vmem:[#allocation3 + $0x6f] sm:$0xff]
      %v5585 = vld [vmem:[#allocation3 + $0x77] sm:$0xff]
      %v5586 = vld [vmem:[#allocation3 + $0x7f] sm:$0xff]
      %v5587 = vld [vmem:[#allocation3 + $0x87] sm:$0xff]
      %v5588 = vld [vmem:[#allocation3 + $0x8f] sm:$0xff]
      %v5589 = vld [vmem:[#allocation3 + $0x97] sm:$0xff]
      %v5590 = vld [vmem:[#allocation3 + $0x9f] sm:$0xff]
      %v5591 = vld [vmem:[#allocation3 + $0xa7] sm:$0xff]
      %v5592 = vld [vmem:[#allocation3 + $0xaf] sm:$0xff]
      %v5593 = vld [vmem:[#allocation3 + $0xb7] sm:$0xff]
      %v5594 = vld [vmem:[#allocation3 + $0xbf] sm:$0xff]
      %v5595 = vld [vmem:[#allocation3 + $0xc7] sm:$0xff]
      %v5596 = vld [vmem:[#allocation3 + $0xcf] sm:$0xff]
      %v5597 = vld [vmem:[#allocation3 + $0xd7] sm:$0xff]
      %v5598 = vld [vmem:[#allocation3 + $0xdf] sm:$0xff]
      %v5599 = vld [vmem:[#allocation3 + $0xe7] sm:$0xff]
      %v5600 = vld [vmem:[#allocation3 + $0xef] sm:$0xff]
      %v5601 = vld [vmem:[#allocation3 + $0xf7] sm:$0xff]
      %v5602 = vld [vmem:[#allocation3 + $0xff] sm:$0xff]
      %v5603 = vsel %vm645, %v5571, 0.0
      %v5604 = vsel %vm646, %v5572, 0.0
      %v5605 = vsel %vm647, %v5573, 0.0
      %v5606 = vsel %vm648, %v5574, 0.0
      %v5607 = vsel %vm649, %v5575, 0.0
      %v5608 = vsel %vm650, %v5576, 0.0
      %v5609 = vsel %vm651, %v5577, 0.0
      %v5610 = vsel %vm652, %v5578, 0.0
      %v5611 = vsel %vm653, %v5579, 0.0
      %v5612 = vsel %vm654, %v5580, 0.0
      %v5613 = vsel %vm655, %v5581, 0.0
      %v5614 = vsel %vm656, %v5582, 0.0
      %v5615 = vsel %vm657, %v5583, 0.0
      %v5616 = vsel %vm658, %v5584, 0.0
      %v5617 = vsel %vm659, %v5585, 0.0
      %v5618 = vsel %vm660, %v5586, 0.0
      %v5619 = vsel %vm661, %v5587, 0.0
      %v5620 = vsel %vm662, %v5588, 0.0
      %v5621 = vsel %vm663, %v5589, 0.0
      %v5622 = vsel %vm664, %v5590, 0.0
      %v5623 = vsel %vm665, %v5591, 0.0
      %v5624 = vsel %vm666, %v5592, 0.0
      %v5625 = vsel %vm667, %v5593, 0.0
      %v5626 = vsel %vm668, %v5594, 0.0
      %v5627 = vsel %vm669, %v5595, 0.0
      %v5628 = vsel %vm670, %v5596, 0.0
      %v5629 = vsel %vm671, %v5597, 0.0
      %v5630 = vsel %vm672, %v5598, 0.0
      %v5631 = vsel %vm673, %v5599, 0.0
      %v5632 = vsel %vm674, %v5600, 0.0
      %v5633 = vsel %vm675, %v5601, 0.0
      %v5634 = vsel %vm676, %v5602, 0.0
      %v5635 = vld [vmem:[%s4] sm:$0xff]
      %v5636 = vld [vmem:[%s4 + $0x8] sm:$0xff]
      %v5637 = vld [vmem:[%s4 + $0x10] sm:$0xff]
      %v5638 = vld [vmem:[%s4 + $0x18] sm:$0xff]
      %v5640 = vsel %vm5531, %v5603, 0
      %v5643 = vsel %vm5531, %v5604, 0
      %v5646 = vsel %vm5531, %v5605, 0
      %v5649 = vsel %vm5531, %v5606, 0
      %v5652 = vsel %vm5531, %v5607, 0
      %v5655 = vsel %vm5531, %v5608, 0
      %v5658 = vsel %vm5531, %v5609, 0
      %v5661 = vsel %vm5531, %v5610, 0
      %v5664 = vsel %vm5531, %v5611, 0
      %v5667 = vsel %vm5531, %v5612, 0
      %v5670 = vsel %vm5531, %v5613, 0
      %v5673 = vsel %vm5531, %v5614, 0
      %v5676 = vsel %vm5531, %v5615, 0
      %v5679 = vsel %vm5531, %v5616, 0
      %v5682 = vsel %vm5531, %v5617, 0
      %v5685 = vsel %vm5531, %v5618, 0
      %v5688 = vsel %vm5531, %v5619, 0
      %v5691 = vsel %vm5531, %v5620, 0
      %v5694 = vsel %vm5531, %v5621, 0
      %v5697 = vsel %vm5531, %v5622, 0
      %v5700 = vsel %vm5531, %v5623, 0
      %v5703 = vsel %vm5531, %v5624, 0
      %v5706 = vsel %vm5531, %v5625, 0
      %v5709 = vsel %vm5531, %v5626, 0
      %v5712 = vsel %vm5531, %v5627, 0
      %v5715 = vsel %vm5531, %v5628, 0
      %v5718 = vsel %vm5531, %v5629, 0
      %v5721 = vsel %vm5531, %v5630, 0
      %v5724 = vsel %vm5531, %v5631, 0
      %v5727 = vsel %vm5531, %v5632, 0
      %v5730 = vsel %vm5531, %v5633, 0
      %v5733 = vsel %vm5531, %v5634, 0
      %5735 = vmatprep.subr.mxu0 0.0
      %5736 = vmatpush1.msra.mxu0 0.0
      %5737 = vmatprep.subr.mxu0 0.0
      %5738 = vmatpush1.msra.mxu0 0.0
      %5739 = vmatprep.subr.mxu0 0.0
      %5740 = vmatpush1.msra.mxu0 0.0
      %5741 = vmatprep.subr.mxu0 0.0
      %5742 = vmatpush1.msra.mxu0 0.0
      %5743 = vmatprep.subr.mxu0 0.0
      %5744 = vmatpush1.msra.mxu0 0.0
      %5745 = vmatprep.subr.mxu0 0.0
      %5746 = vmatpush1.msra.mxu0 0.0
      %5747 = vmatprep.subr.mxu0 0.0
      %5748 = vmatpush1.msra.mxu0 0.0
      %5749 = vmatprep.subr.mxu0 0.0
      %5750 = vmatpush1.msra.mxu0 0.0
      %5751 = vmatprep.subr.mxu0 0.0
      %5752 = vmatpush1.msra.mxu0 0.0
      %5753 = vmatprep.subr.mxu0 0.0
      %5754 = vmatpush1.msra.mxu0 0.0
      %5755 = vmatprep.subr.mxu0 0.0
      %5756 = vmatpush1.msra.mxu0 0.0
      %5757 = vmatprep.subr.mxu0 0.0
      %5758 = vmatpush1.msra.mxu0 0.0
      %5759 = vmatprep.subr.mxu0 0.0
      %5760 = vmatpush1.msra.mxu0 %v5638
      %5761 = vmatprep.subr.mxu0 0.0
      %5762 = vmatpush1.msra.mxu0 %v5637
      %5763 = vmatprep.subr.mxu0 0.0
      %5764 = vmatpush1.msra.mxu0 %v5636
      %5765 = vmatprep.subr.mxu0 0.0
      %5766 = vmatpush1.msra.mxu0 %v5635
      %5767 = vmatprep.subr.mxu0 0.0
      %5768 = vmatpush2.msra.mxu0 0.0
      %5769 = vmatprep.subr.mxu0 0.0
      %5770 = vmatpush2.msra.mxu0 0.0
      %5771 = vmatprep.subr.mxu0 0.0
      %5772 = vmatpush2.msra.mxu0 0.0
      %5773 = vmatprep.subr.mxu0 0.0
      %5774 = vmatpush2.msra.mxu0 0.0
      %5775 = vmatprep.subr.mxu0 0.0
      %5776 = vmatpush2.msra.mxu0 0.0
      %5777 = vmatprep.subr.mxu0 0.0
      %5778 = vmatpush2.msra.mxu0 0.0
      %5779 = vmatprep.subr.mxu0 0.0
      %5780 = vmatpush2.msra.mxu0 0.0
      %5781 = vmatprep.subr.mxu0 0.0
      %5782 = vmatpush2.msra.mxu0 0.0
      %5783 = vmatprep.subr.mxu0 0.0
      %5784 = vmatpush2.msra.mxu0 0.0
      %5785 = vmatprep.subr.mxu0 0.0
      %5786 = vmatpush2.msra.mxu0 0.0
      %5787 = vmatprep.subr.mxu0 0.0
      %5788 = vmatpush2.msra.mxu0 0.0
      %5789 = vmatprep.subr.mxu0 0.0
      %5790 = vmatpush2.msra.mxu0 0.0
      %5791 = vmatprep.subr.mxu0 0.0
      %5792 = vmatpush2.msra.mxu0 0.0
      %5793 = vmatprep.subr.mxu0 0.0
      %5794 = vmatpush2.msra.mxu0 0.0
      %5795 = vmatprep.subr.mxu0 0.0
      %5796 = vmatpush2.msra.mxu0 0.0
      %5797 = vmatprep.subr.mxu0 0.0
      %5798 = vmatpush2.msra.mxu0 0.0
      %5799 = vmatprep.mubr.f32.mxu0 0.0
      %5800 = vmatmul.mubr.f32.gmra.mxu0 %v5640
      %v5801 = vpop.f32.mrf.mxu0
      %v5802 = vadd.f32 0.0, %v5801
      %v5803 = vpop.f32.mrf.mxu0
      %5804 = vmatprep.mubr.f32.mxu0 0.0
      %5805 = vmatmul.mubr.f32.gmra.mxu0 %v5643
      %v5806 = vpop.f32.mrf.mxu0
      %v5807 = vadd.f32 0.0, %v5806
      %v5808 = vpop.f32.mrf.mxu0
      %5809 = vmatprep.mubr.f32.mxu0 0.0
      %5810 = vmatmul.mubr.f32.gmra.mxu0 %v5646
      %v5811 = vpop.f32.mrf.mxu0
      %v5812 = vadd.f32 0.0, %v5811
      %v5813 = vpop.f32.mrf.mxu0
      %5814 = vmatprep.mubr.f32.mxu0 0.0
      %5815 = vmatmul.mubr.f32.gmra.mxu0 %v5649
      %v5816 = vpop.f32.mrf.mxu0
      %v5817 = vadd.f32 0.0, %v5816
      %v5818 = vpop.f32.mrf.mxu0
      %5819 = vmatprep.mubr.f32.mxu0 0.0
      %5820 = vmatmul.mubr.f32.gmra.mxu0 %v5652
      %v5821 = vpop.f32.mrf.mxu0
      %v5822 = vadd.f32 0.0, %v5821
      %v5823 = vpop.f32.mrf.mxu0
      %5824 = vmatprep.mubr.f32.mxu0 0.0
      %5825 = vmatmul.mubr.f32.gmra.mxu0 %v5655
      %v5826 = vpop.f32.mrf.mxu0
      %v5827 = vadd.f32 0.0, %v5826
      %v5828 = vpop.f32.mrf.mxu0
      %5829 = vmatprep.mubr.f32.mxu0 0.0
      %5830 = vmatmul.mubr.f32.gmra.mxu0 %v5658
      %v5831 = vpop.f32.mrf.mxu0
      %v5832 = vadd.f32 0.0, %v5831
      %v5833 = vpop.f32.mrf.mxu0
      %5834 = vmatprep.mubr.f32.mxu0 0.0
      %5835 = vmatmul.mubr.f32.gmra.mxu0 %v5661
      %v5836 = vpop.f32.mrf.mxu0
      %v5837 = vadd.f32 0.0, %v5836
      %v5838 = vpop.f32.mrf.mxu0
      %5839 = vmatprep.mubr.f32.mxu0 0.0
      %5840 = vmatmul.mubr.f32.gmra.mxu0 %v5664
      %v5841 = vpop.f32.mrf.mxu0
      %v5842 = vadd.f32 0.0, %v5841
      %v5843 = vpop.f32.mrf.mxu0
      %5844 = vmatprep.mubr.f32.mxu0 0.0
      %5845 = vmatmul.mubr.f32.gmra.mxu0 %v5667
      %v5846 = vpop.f32.mrf.mxu0
      %v5847 = vadd.f32 0.0, %v5846
      %v5848 = vpop.f32.mrf.mxu0
      %5849 = vmatprep.mubr.f32.mxu0 0.0
      %5850 = vmatmul.mubr.f32.gmra.mxu0 %v5670
      %v5851 = vpop.f32.mrf.mxu0
      %v5852 = vadd.f32 0.0, %v5851
      %v5853 = vpop.f32.mrf.mxu0
      %5854 = vmatprep.mubr.f32.mxu0 0.0
      %5855 = vmatmul.mubr.f32.gmra.mxu0 %v5673
      %v5856 = vpop.f32.mrf.mxu0
      %v5857 = vadd.f32 0.0, %v5856
      %v5858 = vpop.f32.mrf.mxu0
      %5859 = vmatprep.mubr.f32.mxu0 0.0
      %5860 = vmatmul.mubr.f32.gmra.mxu0 %v5676
      %v5861 = vpop.f32.mrf.mxu0
      %v5862 = vadd.f32 0.0, %v5861
      %v5863 = vpop.f32.mrf.mxu0
      %5864 = vmatprep.mubr.f32.mxu0 0.0
      %5865 = vmatmul.mubr.f32.gmra.mxu0 %v5679
      %v5866 = vpop.f32.mrf.mxu0
      %v5867 = vadd.f32 0.0, %v5866
      %v5868 = vpop.f32.mrf.mxu0
      %5869 = vmatprep.mubr.f32.mxu0 0.0
      %5870 = vmatmul.mubr.f32.gmra.mxu0 %v5682
      %v5871 = vpop.f32.mrf.mxu0
      %v5872 = vadd.f32 0.0, %v5871
      %v5873 = vpop.f32.mrf.mxu0
      %5874 = vmatprep.mubr.f32.mxu0 0.0
      %5875 = vmatmul.mubr.f32.gmra.mxu0 %v5685
      %v5876 = vpop.f32.mrf.mxu0
      %v5877 = vadd.f32 0.0, %v5876
      %v5878 = vpop.f32.mrf.mxu0
      %5879 = vmatprep.mubr.f32.mxu0 0.0
      %5880 = vmatmul.mubr.f32.gmra.mxu0 %v5688
      %v5881 = vpop.f32.mrf.mxu0
      %v5882 = vadd.f32 0.0, %v5881
      %v5883 = vpop.f32.mrf.mxu0
      %5884 = vmatprep.mubr.f32.mxu0 0.0
      %5885 = vmatmul.mubr.f32.gmra.mxu0 %v5691
      %v5886 = vpop.f32.mrf.mxu0
      %v5887 = vadd.f32 0.0, %v5886
      %v5888 = vpop.f32.mrf.mxu0
      %5889 = vmatprep.mubr.f32.mxu0 0.0
      %5890 = vmatmul.mubr.f32.gmra.mxu0 %v5694
      %v5891 = vpop.f32.mrf.mxu0
      %v5892 = vadd.f32 0.0, %v5891
      %v5893 = vpop.f32.mrf.mxu0
      %5894 = vmatprep.mubr.f32.mxu0 0.0
      %5895 = vmatmul.mubr.f32.gmra.mxu0 %v5697
      %v5896 = vpop.f32.mrf.mxu0
      %v5897 = vadd.f32 0.0, %v5896
      %v5898 = vpop.f32.mrf.mxu0
      %5899 = vmatprep.mubr.f32.mxu0 0.0
      %5900 = vmatmul.mubr.f32.gmra.mxu0 %v5700
      %v5901 = vpop.f32.mrf.mxu0
      %v5902 = vadd.f32 0.0, %v5901
      %v5903 = vpop.f32.mrf.mxu0
      %5904 = vmatprep.mubr.f32.mxu0 0.0
      %5905 = vmatmul.mubr.f32.gmra.mxu0 %v5703
      %v5906 = vpop.f32.mrf.mxu0
      %v5907 = vadd.f32 0.0, %v5906
      %v5908 = vpop.f32.mrf.mxu0
      %5909 = vmatprep.mubr.f32.mxu0 0.0
      %5910 = vmatmul.mubr.f32.gmra.mxu0 %v5706
      %v5911 = vpop.f32.mrf.mxu0
      %v5912 = vadd.f32 0.0, %v5911
      %v5913 = vpop.f32.mrf.mxu0
      %5914 = vmatprep.mubr.f32.mxu0 0.0
      %5915 = vmatmul.mubr.f32.gmra.mxu0 %v5709
      %v5916 = vpop.f32.mrf.mxu0
      %v5917 = vadd.f32 0.0, %v5916
      %v5918 = vpop.f32.mrf.mxu0
      %5919 = vmatprep.mubr.f32.mxu0 0.0
      %5920 = vmatmul.mubr.f32.gmra.mxu0 %v5712
      %v5921 = vpop.f32.mrf.mxu0
      %v5922 = vadd.f32 0.0, %v5921
      %v5923 = vpop.f32.mrf.mxu0
      %5924 = vmatprep.mubr.f32.mxu0 0.0
      %5925 = vmatmul.mubr.f32.gmra.mxu0 %v5715
      %v5926 = vpop.f32.mrf.mxu0
      %v5927 = vadd.f32 0.0, %v5926
      %v5928 = vpop.f32.mrf.mxu0
      %5929 = vmatprep.mubr.f32.mxu0 0.0
      %5930 = vmatmul.mubr.f32.gmra.mxu0 %v5718
      %v5931 = vpop.f32.mrf.mxu0
      %v5932 = vadd.f32 0.0, %v5931
      %v5933 = vpop.f32.mrf.mxu0
      %5934 = vmatprep.mubr.f32.mxu0 0.0
      %5935 = vmatmul.mubr.f32.gmra.mxu0 %v5721
      %v5936 = vpop.f32.mrf.mxu0
      %v5937 = vadd.f32 0.0, %v5936
      %v5938 = vpop.f32.mrf.mxu0
      %5939 = vmatprep.mubr.f32.mxu0 0.0
      %5940 = vmatmul.mubr.f32.gmra.mxu0 %v5724
      %v5941 = vpop.f32.mrf.mxu0
      %v5942 = vadd.f32 0.0, %v5941
      %v5943 = vpop.f32.mrf.mxu0
      %5944 = vmatprep.mubr.f32.mxu0 0.0
      %5945 = vmatmul.mubr.f32.gmra.mxu0 %v5727
      %v5946 = vpop.f32.mrf.mxu0
      %v5947 = vadd.f32 0.0, %v5946
      %v5948 = vpop.f32.mrf.mxu0
      %5949 = vmatprep.mubr.f32.mxu0 0.0
      %5950 = vmatmul.mubr.f32.gmra.mxu0 %v5730
      %v5951 = vpop.f32.mrf.mxu0
      %v5952 = vadd.f32 0.0, %v5951
      %v5953 = vpop.f32.mrf.mxu0
      %5954 = vmatprep.mubr.f32.mxu0 0.0
      %5955 = vmatmul.mubr.f32.gmra.mxu0 %v5733
      %v5956 = vpop.f32.mrf.mxu0
      %v5957 = vadd.f32 0.0, %v5956
      %v5958 = vpop.f32.mrf.mxu0
      %5959 = vdwg.mxu0
      %v5960 = vadd.f32 %v5569, %v5802
      %v5961 = vadd.f32 %v5569, %v5807
      %v5962 = vadd.f32 %v5569, %v5812
      %v5963 = vadd.f32 %v5569, %v5817
      %v5964 = vadd.f32 %v5569, %v5822
      %v5965 = vadd.f32 %v5569, %v5827
      %v5966 = vadd.f32 %v5569, %v5832
      %v5967 = vadd.f32 %v5569, %v5837
      %v5968 = vadd.f32 %v5569, %v5842
      %v5969 = vadd.f32 %v5569, %v5847
      %v5970 = vadd.f32 %v5569, %v5852
      %v5971 = vadd.f32 %v5569, %v5857
      %v5972 = vadd.f32 %v5569, %v5862
      %v5973 = vadd.f32 %v5569, %v5867
      %v5974 = vadd.f32 %v5569, %v5872
      %v5975 = vadd.f32 %v5569, %v5877
      %v5976 = vadd.f32 %v5569, %v5882
      %v5977 = vadd.f32 %v5569, %v5887
      %v5978 = vadd.f32 %v5569, %v5892
      %v5979 = vadd.f32 %v5569, %v5897
      %v5980 = vadd.f32 %v5569, %v5902
      %v5981 = vadd.f32 %v5569, %v5907
      %v5982 = vadd.f32 %v5569, %v5912
      %v5983 = vadd.f32 %v5569, %v5917
      %v5984 = vadd.f32 %v5569, %v5922
      %v5985 = vadd.f32 %v5569, %v5927
      %v5986 = vadd.f32 %v5569, %v5932
      %v5987 = vadd.f32 %v5569, %v5937
      %v5988 = vadd.f32 %v5569, %v5942
      %v5989 = vadd.f32 %v5569, %v5947
      %v5990 = vadd.f32 %v5569, %v5952
      %v5991 = vadd.f32 %v5569, %v5957
      %v5992 = vld [vmem:[#allocation3 + $0x8] sm:$0xff]
      %v5993 = vld [vmem:[#allocation3 + $0x10] sm:$0xff]
      %v5994 = vld [vmem:[#allocation3 + $0x18] sm:$0xff]
      %v5995 = vld [vmem:[#allocation3 + $0x20] sm:$0xff]
      %v5996 = vld [vmem:[#allocation3 + $0x28] sm:$0xff]
      %v5997 = vld [vmem:[#allocation3 + $0x30] sm:$0xff]
      %v5998 = vld [vmem:[#allocation3 + $0x38] sm:$0xff]
      %v5999 = vld [vmem:[#allocation3 + $0x40] sm:$0xff]
      %v6000 = vld [vmem:[#allocation3 + $0x48] sm:$0xff]
      %v6001 = vld [vmem:[#allocation3 + $0x50] sm:$0xff]
      %v6002 = vld [vmem:[#allocation3 + $0x58] sm:$0xff]
      %v6003 = vld [vmem:[#allocation3 + $0x60] sm:$0xff]
      %v6004 = vld [vmem:[#allocation3 + $0x68] sm:$0xff]
      %v6005 = vld [vmem:[#allocation3 + $0x70] sm:$0xff]
      %v6006 = vld [vmem:[#allocation3 + $0x78] sm:$0xff]
      %v6007 = vld [vmem:[#allocation3 + $0x80] sm:$0xff]
      %v6008 = vld [vmem:[#allocation3 + $0x88] sm:$0xff]
      %v6009 = vld [vmem:[#allocation3 + $0x90] sm:$0xff]
      %v6010 = vld [vmem:[#allocation3 + $0x98] sm:$0xff]
      %v6011 = vld [vmem:[#allocation3 + $0xa0] sm:$0xff]
      %v6012 = vld [vmem:[#allocation3 + $0xa8] sm:$0xff]
      %v6013 = vld [vmem:[#allocation3 + $0xb0] sm:$0xff]
      %v6014 = vld [vmem:[#allocation3 + $0xb8] sm:$0xff]
      %v6015 = vld [vmem:[#allocation3 + $0xc0] sm:$0xff]
      %v6016 = vld [vmem:[#allocation3 + $0xc8] sm:$0xff]
      %v6017 = vld [vmem:[#allocation3 + $0xd0] sm:$0xff]
      %v6018 = vld [vmem:[#allocation3 + $0xd8] sm:$0xff]
      %v6019 = vld [vmem:[#allocation3 + $0xe0] sm:$0xff]
      %v6020 = vld [vmem:[#allocation3 + $0xe8] sm:$0xff]
      %v6021 = vld [vmem:[#allocation3 + $0xf0] sm:$0xff]
      %v6022 = vld [vmem:[#allocation3 + $0xf8] sm:$0xff]
      %v6023 = vld [vmem:[#allocation3 + $0x100] sm:$0xff]
      %v6024 = vsel %vm1131, %v5992, 0.0
      %v6025 = vsel %vm1132, %v5993, 0.0
      %v6026 = vsel %vm1133, %v5994, 0.0
      %v6027 = vsel %vm1134, %v5995, 0.0
      %v6028 = vsel %vm1135, %v5996, 0.0
      %v6029 = vsel %vm1136, %v5997, 0.0
      %v6030 = vsel %vm1137, %v5998, 0.0
      %v6031 = vsel %vm1138, %v5999, 0.0
      %v6032 = vsel %vm1139, %v6000, 0.0
      %v6033 = vsel %vm1140, %v6001, 0.0
      %v6034 = vsel %vm1141, %v6002, 0.0
      %v6035 = vsel %vm1142, %v6003, 0.0
      %v6036 = vsel %vm1143, %v6004, 0.0
      %v6037 = vsel %vm1144, %v6005, 0.0
      %v6038 = vsel %vm1145, %v6006, 0.0
      %v6039 = vsel %vm1146, %v6007, 0.0
      %v6040 = vsel %vm1147, %v6008, 0.0
      %v6041 = vsel %vm1148, %v6009, 0.0
      %v6042 = vsel %vm1149, %v6010, 0.0
      %v6043 = vsel %vm1150, %v6011, 0.0
      %v6044 = vsel %vm1151, %v6012, 0.0
      %v6045 = vsel %vm1152, %v6013, 0.0
      %v6046 = vsel %vm1153, %v6014, 0.0
      %v6047 = vsel %vm1154, %v6015, 0.0
      %v6048 = vsel %vm1155, %v6016, 0.0
      %v6049 = vsel %vm1156, %v6017, 0.0
      %v6050 = vsel %vm1157, %v6018, 0.0
      %v6051 = vsel %vm1158, %v6019, 0.0
      %v6052 = vsel %vm1159, %v6020, 0.0
      %v6053 = vsel %vm1160, %v6021, 0.0
      %v6054 = vsel %vm1161, %v6022, 0.0
      %v6055 = vsel %vm1162, %v6023, 0.0
      %s6056 = scalar_lea.vmem %s4, 32
      %v6057 = vld [vmem:[%s6056] sm:$0xff]
      %v6058 = vld [vmem:[%s6056 + $0x8] sm:$0xff]
      %v6059 = vld [vmem:[%s6056 + $0x10] sm:$0xff]
      %v6060 = vld [vmem:[%s6056 + $0x18] sm:$0xff]
      %v6062 = vsel %vm5531, %v6024, 0
      %v6065 = vsel %vm5531, %v6025, 0
      %v6068 = vsel %vm5531, %v6026, 0
      %v6071 = vsel %vm5531, %v6027, 0
      %v6074 = vsel %vm5531, %v6028, 0
      %v6077 = vsel %vm5531, %v6029, 0
      %v6080 = vsel %vm5531, %v6030, 0
      %v6083 = vsel %vm5531, %v6031, 0
      %v6086 = vsel %vm5531, %v6032, 0
      %v6089 = vsel %vm5531, %v6033, 0
      %v6092 = vsel %vm5531, %v6034, 0
      %v6095 = vsel %vm5531, %v6035, 0
      %v6098 = vsel %vm5531, %v6036, 0
      %v6101 = vsel %vm5531, %v6037, 0
      %v6104 = vsel %vm5531, %v6038, 0
      %v6107 = vsel %vm5531, %v6039, 0
      %v6110 = vsel %vm5531, %v6040, 0
      %v6113 = vsel %vm5531, %v6041, 0
      %v6116 = vsel %vm5531, %v6042, 0
      %v6119 = vsel %vm5531, %v6043, 0
      %v6122 = vsel %vm5531, %v6044, 0
      %v6125 = vsel %vm5531, %v6045, 0
      %v6128 = vsel %vm5531, %v6046, 0
      %v6131 = vsel %vm5531, %v6047, 0
      %v6134 = vsel %vm5531, %v6048, 0
      %v6137 = vsel %vm5531, %v6049, 0
      %v6140 = vsel %vm5531, %v6050, 0
      %v6143 = vsel %vm5531, %v6051, 0
      %v6146 = vsel %vm5531, %v6052, 0
      %v6149 = vsel %vm5531, %v6053, 0
      %v6152 = vsel %vm5531, %v6054, 0
      %v6155 = vsel %vm5531, %v6055, 0
      %6157 = vmatprep.subr.mxu0 0.0
      %6158 = vmatpush1.msra.mxu0 0.0
      %6159 = vmatprep.subr.mxu0 0.0
      %6160 = vmatpush1.msra.mxu0 0.0
      %6161 = vmatprep.subr.mxu0 0.0
      %6162 = vmatpush1.msra.mxu0 0.0
      %6163 = vmatprep.subr.mxu0 0.0
      %6164 = vmatpush1.msra.mxu0 0.0
      %6165 = vmatprep.subr.mxu0 0.0
      %6166 = vmatpush1.msra.mxu0 0.0
      %6167 = vmatprep.subr.mxu0 0.0
      %6168 = vmatpush1.msra.mxu0 0.0
      %6169 = vmatprep.subr.mxu0 0.0
      %6170 = vmatpush1.msra.mxu0 0.0
      %6171 = vmatprep.subr.mxu0 0.0
      %6172 = vmatpush1.msra.mxu0 0.0
      %6173 = vmatprep.subr.mxu0 0.0
      %6174 = vmatpush1.msra.mxu0 0.0
      %6175 = vmatprep.subr.mxu0 0.0
      %6176 = vmatpush1.msra.mxu0 0.0
      %6177 = vmatprep.subr.mxu0 0.0
      %6178 = vmatpush1.msra.mxu0 0.0
      %6179 = vmatprep.subr.mxu0 0.0
      %6180 = vmatpush1.msra.mxu0 0.0
      %6181 = vmatprep.subr.mxu0 0.0
      %6182 = vmatpush1.msra.mxu0 %v6060
      %6183 = vmatprep.subr.mxu0 0.0
      %6184 = vmatpush1.msra.mxu0 %v6059
      %6185 = vmatprep.subr.mxu0 0.0
      %6186 = vmatpush1.msra.mxu0 %v6058
      %6187 = vmatprep.subr.mxu0 0.0
      %6188 = vmatpush1.msra.mxu0 %v6057
      %6189 = vmatprep.subr.mxu0 0.0
      %6190 = vmatpush2.msra.mxu0 0.0
      %6191 = vmatprep.subr.mxu0 0.0
      %6192 = vmatpush2.msra.mxu0 0.0
      %6193 = vmatprep.subr.mxu0 0.0
      %6194 = vmatpush2.msra.mxu0 0.0
      %6195 = vmatprep.subr.mxu0 0.0
      %6196 = vmatpush2.msra.mxu0 0.0
      %6197 = vmatprep.subr.mxu0 0.0
      %6198 = vmatpush2.msra.mxu0 0.0
      %6199 = vmatprep.subr.mxu0 0.0
      %6200 = vmatpush2.msra.mxu0 0.0
      %6201 = vmatprep.subr.mxu0 0.0
      %6202 = vmatpush2.msra.mxu0 0.0
      %6203 = vmatprep.subr.mxu0 0.0
      %6204 = vmatpush2.msra.mxu0 0.0
      %6205 = vmatprep.subr.mxu0 0.0
      %6206 = vmatpush2.msra.mxu0 0.0
      %6207 = vmatprep.subr.mxu0 0.0
      %6208 = vmatpush2.msra.mxu0 0.0
      %6209 = vmatprep.subr.mxu0 0.0
      %6210 = vmatpush2.msra.mxu0 0.0
      %6211 = vmatprep.subr.mxu0 0.0
      %6212 = vmatpush2.msra.mxu0 0.0
      %6213 = vmatprep.subr.mxu0 0.0
      %6214 = vmatpush2.msra.mxu0 0.0
      %6215 = vmatprep.subr.mxu0 0.0
      %6216 = vmatpush2.msra.mxu0 0.0
      %6217 = vmatprep.subr.mxu0 0.0
      %6218 = vmatpush2.msra.mxu0 0.0
      %6219 = vmatprep.subr.mxu0 0.0
      %6220 = vmatpush2.msra.mxu0 0.0
      %6221 = vmatprep.mubr.f32.mxu0 0.0
      %6222 = vmatmul.mubr.f32.gmra.mxu0 %v6062
      %v6223 = vpop.f32.mrf.mxu0
      %v6224 = vadd.f32 0.0, %v6223
      %v6225 = vpop.f32.mrf.mxu0
      %6226 = vmatprep.mubr.f32.mxu0 0.0
      %6227 = vmatmul.mubr.f32.gmra.mxu0 %v6065
      %v6228 = vpop.f32.mrf.mxu0
      %v6229 = vadd.f32 0.0, %v6228
      %v6230 = vpop.f32.mrf.mxu0
      %6231 = vmatprep.mubr.f32.mxu0 0.0
      %6232 = vmatmul.mubr.f32.gmra.mxu0 %v6068
      %v6233 = vpop.f32.mrf.mxu0
      %v6234 = vadd.f32 0.0, %v6233
      %v6235 = vpop.f32.mrf.mxu0
      %6236 = vmatprep.mubr.f32.mxu0 0.0
      %6237 = vmatmul.mubr.f32.gmra.mxu0 %v6071
      %v6238 = vpop.f32.mrf.mxu0
      %v6239 = vadd.f32 0.0, %v6238
      %v6240 = vpop.f32.mrf.mxu0
      %6241 = vmatprep.mubr.f32.mxu0 0.0
      %6242 = vmatmul.mubr.f32.gmra.mxu0 %v6074
      %v6243 = vpop.f32.mrf.mxu0
      %v6244 = vadd.f32 0.0, %v6243
      %v6245 = vpop.f32.mrf.mxu0
      %6246 = vmatprep.mubr.f32.mxu0 0.0
      %6247 = vmatmul.mubr.f32.gmra.mxu0 %v6077
      %v6248 = vpop.f32.mrf.mxu0
      %v6249 = vadd.f32 0.0, %v6248
      %v6250 = vpop.f32.mrf.mxu0
      %6251 = vmatprep.mubr.f32.mxu0 0.0
      %6252 = vmatmul.mubr.f32.gmra.mxu0 %v6080
      %v6253 = vpop.f32.mrf.mxu0
      %v6254 = vadd.f32 0.0, %v6253
      %v6255 = vpop.f32.mrf.mxu0
      %6256 = vmatprep.mubr.f32.mxu0 0.0
      %6257 = vmatmul.mubr.f32.gmra.mxu0 %v6083
      %v6258 = vpop.f32.mrf.mxu0
      %v6259 = vadd.f32 0.0, %v6258
      %v6260 = vpop.f32.mrf.mxu0
      %6261 = vmatprep.mubr.f32.mxu0 0.0
      %6262 = vmatmul.mubr.f32.gmra.mxu0 %v6086
      %v6263 = vpop.f32.mrf.mxu0
      %v6264 = vadd.f32 0.0, %v6263
      %v6265 = vpop.f32.mrf.mxu0
      %6266 = vmatprep.mubr.f32.mxu0 0.0
      %6267 = vmatmul.mubr.f32.gmra.mxu0 %v6089
      %v6268 = vpop.f32.mrf.mxu0
      %v6269 = vadd.f32 0.0, %v6268
      %v6270 = vpop.f32.mrf.mxu0
      %6271 = vmatprep.mubr.f32.mxu0 0.0
      %6272 = vmatmul.mubr.f32.gmra.mxu0 %v6092
      %v6273 = vpop.f32.mrf.mxu0
      %v6274 = vadd.f32 0.0, %v6273
      %v6275 = vpop.f32.mrf.mxu0
      %6276 = vmatprep.mubr.f32.mxu0 0.0
      %6277 = vmatmul.mubr.f32.gmra.mxu0 %v6095
      %v6278 = vpop.f32.mrf.mxu0
      %v6279 = vadd.f32 0.0, %v6278
      %v6280 = vpop.f32.mrf.mxu0
      %6281 = vmatprep.mubr.f32.mxu0 0.0
      %6282 = vmatmul.mubr.f32.gmra.mxu0 %v6098
      %v6283 = vpop.f32.mrf.mxu0
      %v6284 = vadd.f32 0.0, %v6283
      %v6285 = vpop.f32.mrf.mxu0
      %6286 = vmatprep.mubr.f32.mxu0 0.0
      %6287 = vmatmul.mubr.f32.gmra.mxu0 %v6101
      %v6288 = vpop.f32.mrf.mxu0
      %v6289 = vadd.f32 0.0, %v6288
      %v6290 = vpop.f32.mrf.mxu0
      %6291 = vmatprep.mubr.f32.mxu0 0.0
      %6292 = vmatmul.mubr.f32.gmra.mxu0 %v6104
      %v6293 = vpop.f32.mrf.mxu0
      %v6294 = vadd.f32 0.0, %v6293
      %v6295 = vpop.f32.mrf.mxu0
      %6296 = vmatprep.mubr.f32.mxu0 0.0
      %6297 = vmatmul.mubr.f32.gmra.mxu0 %v6107
      %v6298 = vpop.f32.mrf.mxu0
      %v6299 = vadd.f32 0.0, %v6298
      %v6300 = vpop.f32.mrf.mxu0
      %6301 = vmatprep.mubr.f32.mxu0 0.0
      %6302 = vmatmul.mubr.f32.gmra.mxu0 %v6110
      %v6303 = vpop.f32.mrf.mxu0
      %v6304 = vadd.f32 0.0, %v6303
      %v6305 = vpop.f32.mrf.mxu0
      %6306 = vmatprep.mubr.f32.mxu0 0.0
      %6307 = vmatmul.mubr.f32.gmra.mxu0 %v6113
      %v6308 = vpop.f32.mrf.mxu0
      %v6309 = vadd.f32 0.0, %v6308
      %v6310 = vpop.f32.mrf.mxu0
      %6311 = vmatprep.mubr.f32.mxu0 0.0
      %6312 = vmatmul.mubr.f32.gmra.mxu0 %v6116
      %v6313 = vpop.f32.mrf.mxu0
      %v6314 = vadd.f32 0.0, %v6313
      %v6315 = vpop.f32.mrf.mxu0
      %6316 = vmatprep.mubr.f32.mxu0 0.0
      %6317 = vmatmul.mubr.f32.gmra.mxu0 %v6119
      %v6318 = vpop.f32.mrf.mxu0
      %v6319 = vadd.f32 0.0, %v6318
      %v6320 = vpop.f32.mrf.mxu0
      %6321 = vmatprep.mubr.f32.mxu0 0.0
      %6322 = vmatmul.mubr.f32.gmra.mxu0 %v6122
      %v6323 = vpop.f32.mrf.mxu0
      %v6324 = vadd.f32 0.0, %v6323
      %v6325 = vpop.f32.mrf.mxu0
      %6326 = vmatprep.mubr.f32.mxu0 0.0
      %6327 = vmatmul.mubr.f32.gmra.mxu0 %v6125
      %v6328 = vpop.f32.mrf.mxu0
      %v6329 = vadd.f32 0.0, %v6328
      %v6330 = vpop.f32.mrf.mxu0
      %6331 = vmatprep.mubr.f32.mxu0 0.0
      %6332 = vmatmul.mubr.f32.gmra.mxu0 %v6128
      %v6333 = vpop.f32.mrf.mxu0
      %v6334 = vadd.f32 0.0, %v6333
      %v6335 = vpop.f32.mrf.mxu0
      %6336 = vmatprep.mubr.f32.mxu0 0.0
      %6337 = vmatmul.mubr.f32.gmra.mxu0 %v6131
      %v6338 = vpop.f32.mrf.mxu0
      %v6339 = vadd.f32 0.0, %v6338
      %v6340 = vpop.f32.mrf.mxu0
      %6341 = vmatprep.mubr.f32.mxu0 0.0
      %6342 = vmatmul.mubr.f32.gmra.mxu0 %v6134
      %v6343 = vpop.f32.mrf.mxu0
      %v6344 = vadd.f32 0.0, %v6343
      %v6345 = vpop.f32.mrf.mxu0
      %6346 = vmatprep.mubr.f32.mxu0 0.0
      %6347 = vmatmul.mubr.f32.gmra.mxu0 %v6137
      %v6348 = vpop.f32.mrf.mxu0
      %v6349 = vadd.f32 0.0, %v6348
      %v6350 = vpop.f32.mrf.mxu0
      %6351 = vmatprep.mubr.f32.mxu0 0.0
      %6352 = vmatmul.mubr.f32.gmra.mxu0 %v6140
      %v6353 = vpop.f32.mrf.mxu0
      %v6354 = vadd.f32 0.0, %v6353
      %v6355 = vpop.f32.mrf.mxu0
      %6356 = vmatprep.mubr.f32.mxu0 0.0
      %6357 = vmatmul.mubr.f32.gmra.mxu0 %v6143
      %v6358 = vpop.f32.mrf.mxu0
      %v6359 = vadd.f32 0.0, %v6358
      %v6360 = vpop.f32.mrf.mxu0
      %6361 = vmatprep.mubr.f32.mxu0 0.0
      %6362 = vmatmul.mubr.f32.gmra.mxu0 %v6146
      %v6363 = vpop.f32.mrf.mxu0
      %v6364 = vadd.f32 0.0, %v6363
      %v6365 = vpop.f32.mrf.mxu0
      %6366 = vmatprep.mubr.f32.mxu0 0.0
      %6367 = vmatmul.mubr.f32.gmra.mxu0 %v6149
      %v6368 = vpop.f32.mrf.mxu0
      %v6369 = vadd.f32 0.0, %v6368
      %v6370 = vpop.f32.mrf.mxu0
      %6371 = vmatprep.mubr.f32.mxu0 0.0
      %6372 = vmatmul.mubr.f32.gmra.mxu0 %v6152
      %v6373 = vpop.f32.mrf.mxu0
      %v6374 = vadd.f32 0.0, %v6373
      %v6375 = vpop.f32.mrf.mxu0
      %6376 = vmatprep.mubr.f32.mxu0 0.0
      %6377 = vmatmul.mubr.f32.gmra.mxu0 %v6155
      %v6378 = vpop.f32.mrf.mxu0
      %v6379 = vadd.f32 0.0, %v6378
      %v6380 = vpop.f32.mrf.mxu0
      %6381 = vdwg.mxu0
      %v6382 = vadd.f32 %v5960, %v6224
      %v6383 = vadd.f32 %v5961, %v6229
      %v6384 = vadd.f32 %v5962, %v6234
      %v6385 = vadd.f32 %v5963, %v6239
      %v6386 = vadd.f32 %v5964, %v6244
      %v6387 = vadd.f32 %v5965, %v6249
      %v6388 = vadd.f32 %v5966, %v6254
      %v6389 = vadd.f32 %v5967, %v6259
      %v6390 = vadd.f32 %v5968, %v6264
      %v6391 = vadd.f32 %v5969, %v6269
      %v6392 = vadd.f32 %v5970, %v6274
      %v6393 = vadd.f32 %v5971, %v6279
      %v6394 = vadd.f32 %v5972, %v6284
      %v6395 = vadd.f32 %v5973, %v6289
      %v6396 = vadd.f32 %v5974, %v6294
      %v6397 = vadd.f32 %v5975, %v6299
      %v6398 = vadd.f32 %v5976, %v6304
      %v6399 = vadd.f32 %v5977, %v6309
      %v6400 = vadd.f32 %v5978, %v6314
      %v6401 = vadd.f32 %v5979, %v6319
      %v6402 = vadd.f32 %v5980, %v6324
      %v6403 = vadd.f32 %v5981, %v6329
      %v6404 = vadd.f32 %v5982, %v6334
      %v6405 = vadd.f32 %v5983, %v6339
      %v6406 = vadd.f32 %v5984, %v6344
      %v6407 = vadd.f32 %v5985, %v6349
      %v6408 = vadd.f32 %v5986, %v6354
      %v6409 = vadd.f32 %v5987, %v6359
      %v6410 = vadd.f32 %v5988, %v6364
      %v6411 = vadd.f32 %v5989, %v6369
      %v6412 = vadd.f32 %v5990, %v6374
      %v6413 = vadd.f32 %v5991, %v6379
      %v6414 = vld [vmem:[#allocation3 + $0x9] sm:$0xff]
      %v6415 = vld [vmem:[#allocation3 + $0x11] sm:$0xff]
      %v6416 = vld [vmem:[#allocation3 + $0x19] sm:$0xff]
      %v6417 = vld [vmem:[#allocation3 + $0x21] sm:$0xff]
      %v6418 = vld [vmem:[#allocation3 + $0x29] sm:$0xff]
      %v6419 = vld [vmem:[#allocation3 + $0x31] sm:$0xff]
      %v6420 = vld [vmem:[#allocation3 + $0x39] sm:$0xff]
      %v6421 = vld [vmem:[#allocation3 + $0x41] sm:$0xff]
      %v6422 = vld [vmem:[#allocation3 + $0x49] sm:$0xff]
      %v6423 = vld [vmem:[#allocation3 + $0x51] sm:$0xff]
      %v6424 = vld [vmem:[#allocation3 + $0x59] sm:$0xff]
      %v6425 = vld [vmem:[#allocation3 + $0x61] sm:$0xff]
      %v6426 = vld [vmem:[#allocation3 + $0x69] sm:$0xff]
      %v6427 = vld [vmem:[#allocation3 + $0x71] sm:$0xff]
      %v6428 = vld [vmem:[#allocation3 + $0x79] sm:$0xff]
      %v6429 = vld [vmem:[#allocation3 + $0x81] sm:$0xff]
      %v6430 = vld [vmem:[#allocation3 + $0x89] sm:$0xff]
      %v6431 = vld [vmem:[#allocation3 + $0x91] sm:$0xff]
      %v6432 = vld [vmem:[#allocation3 + $0x99] sm:$0xff]
      %v6433 = vld [vmem:[#allocation3 + $0xa1] sm:$0xff]
      %v6434 = vld [vmem:[#allocation3 + $0xa9] sm:$0xff]
      %v6435 = vld [vmem:[#allocation3 + $0xb1] sm:$0xff]
      %v6436 = vld [vmem:[#allocation3 + $0xb9] sm:$0xff]
      %v6437 = vld [vmem:[#allocation3 + $0xc1] sm:$0xff]
      %v6438 = vld [vmem:[#allocation3 + $0xc9] sm:$0xff]
      %v6439 = vld [vmem:[#allocation3 + $0xd1] sm:$0xff]
      %v6440 = vld [vmem:[#allocation3 + $0xd9] sm:$0xff]
      %v6441 = vld [vmem:[#allocation3 + $0xe1] sm:$0xff]
      %v6442 = vld [vmem:[#allocation3 + $0xe9] sm:$0xff]
      %v6443 = vld [vmem:[#allocation3 + $0xf1] sm:$0xff]
      %v6444 = vld [vmem:[#allocation3 + $0xf9] sm:$0xff]
      %v6445 = vld [vmem:[#allocation3 + $0x101] sm:$0xff]
      %v6446 = vsel %vm1777, %v6414, 0.0
      %v6447 = vsel %vm1778, %v6415, 0.0
      %v6448 = vsel %vm1779, %v6416, 0.0
      %v6449 = vsel %vm1780, %v6417, 0.0
      %v6450 = vsel %vm1781, %v6418, 0.0
      %v6451 = vsel %vm1782, %v6419, 0.0
      %v6452 = vsel %vm1783, %v6420, 0.0
      %v6453 = vsel %vm1784, %v6421, 0.0
      %v6454 = vsel %vm1785, %v6422, 0.0
      %v6455 = vsel %vm1786, %v6423, 0.0
      %v6456 = vsel %vm1787, %v6424, 0.0
      %v6457 = vsel %vm1788, %v6425, 0.0
      %v6458 = vsel %vm1789, %v6426, 0.0
      %v6459 = vsel %vm1790, %v6427, 0.0
      %v6460 = vsel %vm1791, %v6428, 0.0
      %v6461 = vsel %vm1792, %v6429, 0.0
      %v6462 = vsel %vm1793, %v6430, 0.0
      %v6463 = vsel %vm1794, %v6431, 0.0
      %v6464 = vsel %vm1795, %v6432, 0.0
      %v6465 = vsel %vm1796, %v6433, 0.0
      %v6466 = vsel %vm1797, %v6434, 0.0
      %v6467 = vsel %vm1798, %v6435, 0.0
      %v6468 = vsel %vm1799, %v6436, 0.0
      %v6469 = vsel %vm1800, %v6437, 0.0
      %v6470 = vsel %vm1801, %v6438, 0.0
      %v6471 = vsel %vm1802, %v6439, 0.0
      %v6472 = vsel %vm1803, %v6440, 0.0
      %v6473 = vsel %vm1804, %v6441, 0.0
      %v6474 = vsel %vm1805, %v6442, 0.0
      %v6475 = vsel %vm1806, %v6443, 0.0
      %v6476 = vsel %vm1807, %v6444, 0.0
      %v6477 = vsel %vm1808, %v6445, 0.0
      %s6478 = scalar_lea.vmem %s4, 64
      %v6479 = vld [vmem:[%s6478] sm:$0xff]
      %v6480 = vld [vmem:[%s6478 + $0x8] sm:$0xff]
      %v6481 = vld [vmem:[%s6478 + $0x10] sm:$0xff]
      %v6482 = vld [vmem:[%s6478 + $0x18] sm:$0xff]
      %v6484 = vsel %vm5531, %v6446, 0
      %v6487 = vsel %vm5531, %v6447, 0
      %v6490 = vsel %vm5531, %v6448, 0
      %v6493 = vsel %vm5531, %v6449, 0
      %v6496 = vsel %vm5531, %v6450, 0
      %v6499 = vsel %vm5531, %v6451, 0
      %v6502 = vsel %vm5531, %v6452, 0
      %v6505 = vsel %vm5531, %v6453, 0
      %v6508 = vsel %vm5531, %v6454, 0
      %v6511 = vsel %vm5531, %v6455, 0
      %v6514 = vsel %vm5531, %v6456, 0
      %v6517 = vsel %vm5531, %v6457, 0
      %v6520 = vsel %vm5531, %v6458, 0
      %v6523 = vsel %vm5531, %v6459, 0
      %v6526 = vsel %vm5531, %v6460, 0
      %v6529 = vsel %vm5531, %v6461, 0
      %v6532 = vsel %vm5531, %v6462, 0
      %v6535 = vsel %vm5531, %v6463, 0
      %v6538 = vsel %vm5531, %v6464, 0
      %v6541 = vsel %vm5531, %v6465, 0
      %v6544 = vsel %vm5531, %v6466, 0
      %v6547 = vsel %vm5531, %v6467, 0
      %v6550 = vsel %vm5531, %v6468, 0
      %v6553 = vsel %vm5531, %v6469, 0
      %v6556 = vsel %vm5531, %v6470, 0
      %v6559 = vsel %vm5531, %v6471, 0
      %v6562 = vsel %vm5531, %v6472, 0
      %v6565 = vsel %vm5531, %v6473, 0
      %v6568 = vsel %vm5531, %v6474, 0
      %v6571 = vsel %vm5531, %v6475, 0
      %v6574 = vsel %vm5531, %v6476, 0
      %v6577 = vsel %vm5531, %v6477, 0
      %6579 = vmatprep.subr.mxu0 0.0
      %6580 = vmatpush1.msra.mxu0 0.0
      %6581 = vmatprep.subr.mxu0 0.0
      %6582 = vmatpush1.msra.mxu0 0.0
      %6583 = vmatprep.subr.mxu0 0.0
      %6584 = vmatpush1.msra.mxu0 0.0
      %6585 = vmatprep.subr.mxu0 0.0
      %6586 = vmatpush1.msra.mxu0 0.0
      %6587 = vmatprep.subr.mxu0 0.0
      %6588 = vmatpush1.msra.mxu0 0.0
      %6589 = vmatprep.subr.mxu0 0.0
      %6590 = vmatpush1.msra.mxu0 0.0
      %6591 = vmatprep.subr.mxu0 0.0
      %6592 = vmatpush1.msra.mxu0 0.0
      %6593 = vmatprep.subr.mxu0 0.0
      %6594 = vmatpush1.msra.mxu0 0.0
      %6595 = vmatprep.subr.mxu0 0.0
      %6596 = vmatpush1.msra.mxu0 0.0
      %6597 = vmatprep.subr.mxu0 0.0
      %6598 = vmatpush1.msra.mxu0 0.0
      %6599 = vmatprep.subr.mxu0 0.0
      %6600 = vmatpush1.msra.mxu0 0.0
      %6601 = vmatprep.subr.mxu0 0.0
      %6602 = vmatpush1.msra.mxu0 0.0
      %6603 = vmatprep.subr.mxu0 0.0
      %6604 = vmatpush1.msra.mxu0 %v6482
      %6605 = vmatprep.subr.mxu0 0.0
      %6606 = vmatpush1.msra.mxu0 %v6481
      %6607 = vmatprep.subr.mxu0 0.0
      %6608 = vmatpush1.msra.mxu0 %v6480
      %6609 = vmatprep.subr.mxu0 0.0
      %6610 = vmatpush1.msra.mxu0 %v6479
      %6611 = vmatprep.subr.mxu0 0.0
      %6612 = vmatpush2.msra.mxu0 0.0
      %6613 = vmatprep.subr.mxu0 0.0
      %6614 = vmatpush2.msra.mxu0 0.0
      %6615 = vmatprep.subr.mxu0 0.0
      %6616 = vmatpush2.msra.mxu0 0.0
      %6617 = vmatprep.subr.mxu0 0.0
      %6618 = vmatpush2.msra.mxu0 0.0
      %6619 = vmatprep.subr.mxu0 0.0
      %6620 = vmatpush2.msra.mxu0 0.0
      %6621 = vmatprep.subr.mxu0 0.0
      %6622 = vmatpush2.msra.mxu0 0.0
      %6623 = vmatprep.subr.mxu0 0.0
      %6624 = vmatpush2.msra.mxu0 0.0
      %6625 = vmatprep.subr.mxu0 0.0
      %6626 = vmatpush2.msra.mxu0 0.0
      %6627 = vmatprep.subr.mxu0 0.0
      %6628 = vmatpush2.msra.mxu0 0.0
      %6629 = vmatprep.subr.mxu0 0.0
      %6630 = vmatpush2.msra.mxu0 0.0
      %6631 = vmatprep.subr.mxu0 0.0
      %6632 = vmatpush2.msra.mxu0 0.0
      %6633 = vmatprep.subr.mxu0 0.0
      %6634 = vmatpush2.msra.mxu0 0.0
      %6635 = vmatprep.subr.mxu0 0.0
      %6636 = vmatpush2.msra.mxu0 0.0
      %6637 = vmatprep.subr.mxu0 0.0
      %6638 = vmatpush2.msra.mxu0 0.0
      %6639 = vmatprep.subr.mxu0 0.0
      %6640 = vmatpush2.msra.mxu0 0.0
      %6641 = vmatprep.subr.mxu0 0.0
      %6642 = vmatpush2.msra.mxu0 0.0
      %6643 = vmatprep.mubr.f32.mxu0 0.0
      %6644 = vmatmul.mubr.f32.gmra.mxu0 %v6484
      %v6645 = vpop.f32.mrf.mxu0
      %v6646 = vadd.f32 0.0, %v6645
      %v6647 = vpop.f32.mrf.mxu0
      %6648 = vmatprep.mubr.f32.mxu0 0.0
      %6649 = vmatmul.mubr.f32.gmra.mxu0 %v6487
      %v6650 = vpop.f32.mrf.mxu0
      %v6651 = vadd.f32 0.0, %v6650
      %v6652 = vpop.f32.mrf.mxu0
      %6653 = vmatprep.mubr.f32.mxu0 0.0
      %6654 = vmatmul.mubr.f32.gmra.mxu0 %v6490
      %v6655 = vpop.f32.mrf.mxu0
      %v6656 = vadd.f32 0.0, %v6655
      %v6657 = vpop.f32.mrf.mxu0
      %6658 = vmatprep.mubr.f32.mxu0 0.0
      %6659 = vmatmul.mubr.f32.gmra.mxu0 %v6493
      %v6660 = vpop.f32.mrf.mxu0
      %v6661 = vadd.f32 0.0, %v6660
      %v6662 = vpop.f32.mrf.mxu0
      %6663 = vmatprep.mubr.f32.mxu0 0.0
      %6664 = vmatmul.mubr.f32.gmra.mxu0 %v6496
      %v6665 = vpop.f32.mrf.mxu0
      %v6666 = vadd.f32 0.0, %v6665
      %v6667 = vpop.f32.mrf.mxu0
      %6668 = vmatprep.mubr.f32.mxu0 0.0
      %6669 = vmatmul.mubr.f32.gmra.mxu0 %v6499
      %v6670 = vpop.f32.mrf.mxu0
      %v6671 = vadd.f32 0.0, %v6670
      %v6672 = vpop.f32.mrf.mxu0
      %6673 = vmatprep.mubr.f32.mxu0 0.0
      %6674 = vmatmul.mubr.f32.gmra.mxu0 %v6502
      %v6675 = vpop.f32.mrf.mxu0
      %v6676 = vadd.f32 0.0, %v6675
      %v6677 = vpop.f32.mrf.mxu0
      %6678 = vmatprep.mubr.f32.mxu0 0.0
      %6679 = vmatmul.mubr.f32.gmra.mxu0 %v6505
      %v6680 = vpop.f32.mrf.mxu0
      %v6681 = vadd.f32 0.0, %v6680
      %v6682 = vpop.f32.mrf.mxu0
      %6683 = vmatprep.mubr.f32.mxu0 0.0
      %6684 = vmatmul.mubr.f32.gmra.mxu0 %v6508
      %v6685 = vpop.f32.mrf.mxu0
      %v6686 = vadd.f32 0.0, %v6685
      %v6687 = vpop.f32.mrf.mxu0
      %6688 = vmatprep.mubr.f32.mxu0 0.0
      %6689 = vmatmul.mubr.f32.gmra.mxu0 %v6511
      %v6690 = vpop.f32.mrf.mxu0
      %v6691 = vadd.f32 0.0, %v6690
      %v6692 = vpop.f32.mrf.mxu0
      %6693 = vmatprep.mubr.f32.mxu0 0.0
      %6694 = vmatmul.mubr.f32.gmra.mxu0 %v6514
      %v6695 = vpop.f32.mrf.mxu0
      %v6696 = vadd.f32 0.0, %v6695
      %v6697 = vpop.f32.mrf.mxu0
      %6698 = vmatprep.mubr.f32.mxu0 0.0
      %6699 = vmatmul.mubr.f32.gmra.mxu0 %v6517
      %v6700 = vpop.f32.mrf.mxu0
      %v6701 = vadd.f32 0.0, %v6700
      %v6702 = vpop.f32.mrf.mxu0
      %6703 = vmatprep.mubr.f32.mxu0 0.0
      %6704 = vmatmul.mubr.f32.gmra.mxu0 %v6520
      %v6705 = vpop.f32.mrf.mxu0
      %v6706 = vadd.f32 0.0, %v6705
      %v6707 = vpop.f32.mrf.mxu0
      %6708 = vmatprep.mubr.f32.mxu0 0.0
      %6709 = vmatmul.mubr.f32.gmra.mxu0 %v6523
      %v6710 = vpop.f32.mrf.mxu0
      %v6711 = vadd.f32 0.0, %v6710
      %v6712 = vpop.f32.mrf.mxu0
      %6713 = vmatprep.mubr.f32.mxu0 0.0
      %6714 = vmatmul.mubr.f32.gmra.mxu0 %v6526
      %v6715 = vpop.f32.mrf.mxu0
      %v6716 = vadd.f32 0.0, %v6715
      %v6717 = vpop.f32.mrf.mxu0
      %6718 = vmatprep.mubr.f32.mxu0 0.0
      %6719 = vmatmul.mubr.f32.gmra.mxu0 %v6529
      %v6720 = vpop.f32.mrf.mxu0
      %v6721 = vadd.f32 0.0, %v6720
      %v6722 = vpop.f32.mrf.mxu0
      %6723 = vmatprep.mubr.f32.mxu0 0.0
      %6724 = vmatmul.mubr.f32.gmra.mxu0 %v6532
      %v6725 = vpop.f32.mrf.mxu0
      %v6726 = vadd.f32 0.0, %v6725
      %v6727 = vpop.f32.mrf.mxu0
      %6728 = vmatprep.mubr.f32.mxu0 0.0
      %6729 = vmatmul.mubr.f32.gmra.mxu0 %v6535
      %v6730 = vpop.f32.mrf.mxu0
      %v6731 = vadd.f32 0.0, %v6730
      %v6732 = vpop.f32.mrf.mxu0
      %6733 = vmatprep.mubr.f32.mxu0 0.0
      %6734 = vmatmul.mubr.f32.gmra.mxu0 %v6538
      %v6735 = vpop.f32.mrf.mxu0
      %v6736 = vadd.f32 0.0, %v6735
      %v6737 = vpop.f32.mrf.mxu0
      %6738 = vmatprep.mubr.f32.mxu0 0.0
      %6739 = vmatmul.mubr.f32.gmra.mxu0 %v6541
      %v6740 = vpop.f32.mrf.mxu0
      %v6741 = vadd.f32 0.0, %v6740
      %v6742 = vpop.f32.mrf.mxu0
      %6743 = vmatprep.mubr.f32.mxu0 0.0
      %6744 = vmatmul.mubr.f32.gmra.mxu0 %v6544
      %v6745 = vpop.f32.mrf.mxu0
      %v6746 = vadd.f32 0.0, %v6745
      %v6747 = vpop.f32.mrf.mxu0
      %6748 = vmatprep.mubr.f32.mxu0 0.0
      %6749 = vmatmul.mubr.f32.gmra.mxu0 %v6547
      %v6750 = vpop.f32.mrf.mxu0
      %v6751 = vadd.f32 0.0, %v6750
      %v6752 = vpop.f32.mrf.mxu0
      %6753 = vmatprep.mubr.f32.mxu0 0.0
      %6754 = vmatmul.mubr.f32.gmra.mxu0 %v6550
      %v6755 = vpop.f32.mrf.mxu0
      %v6756 = vadd.f32 0.0, %v6755
      %v6757 = vpop.f32.mrf.mxu0
      %6758 = vmatprep.mubr.f32.mxu0 0.0
      %6759 = vmatmul.mubr.f32.gmra.mxu0 %v6553
      %v6760 = vpop.f32.mrf.mxu0
      %v6761 = vadd.f32 0.0, %v6760
      %v6762 = vpop.f32.mrf.mxu0
      %6763 = vmatprep.mubr.f32.mxu0 0.0
      %6764 = vmatmul.mubr.f32.gmra.mxu0 %v6556
      %v6765 = vpop.f32.mrf.mxu0
      %v6766 = vadd.f32 0.0, %v6765
      %v6767 = vpop.f32.mrf.mxu0
      %6768 = vmatprep.mubr.f32.mxu0 0.0
      %6769 = vmatmul.mubr.f32.gmra.mxu0 %v6559
      %v6770 = vpop.f32.mrf.mxu0
      %v6771 = vadd.f32 0.0, %v6770
      %v6772 = vpop.f32.mrf.mxu0
      %6773 = vmatprep.mubr.f32.mxu0 0.0
      %6774 = vmatmul.mubr.f32.gmra.mxu0 %v6562
      %v6775 = vpop.f32.mrf.mxu0
      %v6776 = vadd.f32 0.0, %v6775
      %v6777 = vpop.f32.mrf.mxu0
      %6778 = vmatprep.mubr.f32.mxu0 0.0
      %6779 = vmatmul.mubr.f32.gmra.mxu0 %v6565
      %v6780 = vpop.f32.mrf.mxu0
      %v6781 = vadd.f32 0.0, %v6780
      %v6782 = vpop.f32.mrf.mxu0
      %6783 = vmatprep.mubr.f32.mxu0 0.0
      %6784 = vmatmul.mubr.f32.gmra.mxu0 %v6568
      %v6785 = vpop.f32.mrf.mxu0
      %v6786 = vadd.f32 0.0, %v6785
      %v6787 = vpop.f32.mrf.mxu0
      %6788 = vmatprep.mubr.f32.mxu0 0.0
      %6789 = vmatmul.mubr.f32.gmra.mxu0 %v6571
      %v6790 = vpop.f32.mrf.mxu0
      %v6791 = vadd.f32 0.0, %v6790
      %v6792 = vpop.f32.mrf.mxu0
      %6793 = vmatprep.mubr.f32.mxu0 0.0
      %6794 = vmatmul.mubr.f32.gmra.mxu0 %v6574
      %v6795 = vpop.f32.mrf.mxu0
      %v6796 = vadd.f32 0.0, %v6795
      %v6797 = vpop.f32.mrf.mxu0
      %6798 = vmatprep.mubr.f32.mxu0 0.0
      %6799 = vmatmul.mubr.f32.gmra.mxu0 %v6577
      %v6800 = vpop.f32.mrf.mxu0
      %v6801 = vadd.f32 0.0, %v6800
      %v6802 = vpop.f32.mrf.mxu0
      %6803 = vdwg.mxu0
      %v6804 = vadd.f32 %v6382, %v6646
      %v6805 = vadd.f32 %v6383, %v6651
      %v6806 = vadd.f32 %v6384, %v6656
      %v6807 = vadd.f32 %v6385, %v6661
      %v6808 = vadd.f32 %v6386, %v6666
      %v6809 = vadd.f32 %v6387, %v6671
      %v6810 = vadd.f32 %v6388, %v6676
      %v6811 = vadd.f32 %v6389, %v6681
      %v6812 = vadd.f32 %v6390, %v6686
      %v6813 = vadd.f32 %v6391, %v6691
      %v6814 = vadd.f32 %v6392, %v6696
      %v6815 = vadd.f32 %v6393, %v6701
      %v6816 = vadd.f32 %v6394, %v6706
      %v6817 = vadd.f32 %v6395, %v6711
      %v6818 = vadd.f32 %v6396, %v6716
      %v6819 = vadd.f32 %v6397, %v6721
      %v6820 = vadd.f32 %v6398, %v6726
      %v6821 = vadd.f32 %v6399, %v6731
      %v6822 = vadd.f32 %v6400, %v6736
      %v6823 = vadd.f32 %v6401, %v6741
      %v6824 = vadd.f32 %v6402, %v6746
      %v6825 = vadd.f32 %v6403, %v6751
      %v6826 = vadd.f32 %v6404, %v6756
      %v6827 = vadd.f32 %v6405, %v6761
      %v6828 = vadd.f32 %v6406, %v6766
      %v6829 = vadd.f32 %v6407, %v6771
      %v6830 = vadd.f32 %v6408, %v6776
      %v6831 = vadd.f32 %v6409, %v6781
      %v6832 = vadd.f32 %v6410, %v6786
      %v6833 = vadd.f32 %v6411, %v6791
      %v6834 = vadd.f32 %v6412, %v6796
      %v6835 = vadd.f32 %v6413, %v6801
      %v6836 = vld [vmem:[#allocation3 + $0x17] sm:$0xff]
      %v6837 = vld [vmem:[#allocation3 + $0x1f] sm:$0xff]
      %v6838 = vld [vmem:[#allocation3 + $0x27] sm:$0xff]
      %v6839 = vld [vmem:[#allocation3 + $0x2f] sm:$0xff]
      %v6840 = vld [vmem:[#allocation3 + $0x37] sm:$0xff]
      %v6841 = vld [vmem:[#allocation3 + $0x3f] sm:$0xff]
      %v6842 = vld [vmem:[#allocation3 + $0x47] sm:$0xff]
      %v6843 = vld [vmem:[#allocation3 + $0x4f] sm:$0xff]
      %v6844 = vld [vmem:[#allocation3 + $0x57] sm:$0xff]
      %v6845 = vld [vmem:[#allocation3 + $0x5f] sm:$0xff]
      %v6846 = vld [vmem:[#allocation3 + $0x67] sm:$0xff]
      %v6847 = vld [vmem:[#allocation3 + $0x6f] sm:$0xff]
      %v6848 = vld [vmem:[#allocation3 + $0x77] sm:$0xff]
      %v6849 = vld [vmem:[#allocation3 + $0x7f] sm:$0xff]
      %v6850 = vld [vmem:[#allocation3 + $0x87] sm:$0xff]
      %v6851 = vld [vmem:[#allocation3 + $0x8f] sm:$0xff]
      %v6852 = vld [vmem:[#allocation3 + $0x97] sm:$0xff]
      %v6853 = vld [vmem:[#allocation3 + $0x9f] sm:$0xff]
      %v6854 = vld [vmem:[#allocation3 + $0xa7] sm:$0xff]
      %v6855 = vld [vmem:[#allocation3 + $0xaf] sm:$0xff]
      %v6856 = vld [vmem:[#allocation3 + $0xb7] sm:$0xff]
      %v6857 = vld [vmem:[#allocation3 + $0xbf] sm:$0xff]
      %v6858 = vld [vmem:[#allocation3 + $0xc7] sm:$0xff]
      %v6859 = vld [vmem:[#allocation3 + $0xcf] sm:$0xff]
      %v6860 = vld [vmem:[#allocation3 + $0xd7] sm:$0xff]
      %v6861 = vld [vmem:[#allocation3 + $0xdf] sm:$0xff]
      %v6862 = vld [vmem:[#allocation3 + $0xe7] sm:$0xff]
      %v6863 = vld [vmem:[#allocation3 + $0xef] sm:$0xff]
      %v6864 = vld [vmem:[#allocation3 + $0xf7] sm:$0xff]
      %v6865 = vld [vmem:[#allocation3 + $0xff] sm:$0xff]
      %v6866 = vld [vmem:[#allocation3 + $0x107] sm:$0xff]
      %v6867 = vld [vmem:[#allocation3 + $0x10f] sm:$0xff]
      %v6868 = vsel %vm2359, %v6836, 0.0
      %v6869 = vsel %vm2360, %v6837, 0.0
      %v6870 = vsel %vm2361, %v6838, 0.0
      %v6871 = vsel %vm2362, %v6839, 0.0
      %v6872 = vsel %vm2363, %v6840, 0.0
      %v6873 = vsel %vm2364, %v6841, 0.0
      %v6874 = vsel %vm2365, %v6842, 0.0
      %v6875 = vsel %vm2366, %v6843, 0.0
      %v6876 = vsel %vm2367, %v6844, 0.0
      %v6877 = vsel %vm2368, %v6845, 0.0
      %v6878 = vsel %vm2369, %v6846, 0.0
      %v6879 = vsel %vm2370, %v6847, 0.0
      %v6880 = vsel %vm2371, %v6848, 0.0
      %v6881 = vsel %vm2372, %v6849, 0.0
      %v6882 = vsel %vm2373, %v6850, 0.0
      %v6883 = vsel %vm2374, %v6851, 0.0
      %v6884 = vsel %vm2375, %v6852, 0.0
      %v6885 = vsel %vm2376, %v6853, 0.0
      %v6886 = vsel %vm2377, %v6854, 0.0
      %v6887 = vsel %vm2378, %v6855, 0.0
      %v6888 = vsel %vm2379, %v6856, 0.0
      %v6889 = vsel %vm2380, %v6857, 0.0
      %v6890 = vsel %vm2381, %v6858, 0.0
      %v6891 = vsel %vm2382, %v6859, 0.0
      %v6892 = vsel %vm2383, %v6860, 0.0
      %v6893 = vsel %vm2384, %v6861, 0.0
      %v6894 = vsel %vm2385, %v6862, 0.0
      %v6895 = vsel %vm2386, %v6863, 0.0
      %v6896 = vsel %vm2387, %v6864, 0.0
      %v6897 = vsel %vm2388, %v6865, 0.0
      %v6898 = vsel %vm2389, %v6866, 0.0
      %v6899 = vsel %vm2390, %v6867, 0.0
      %s6900 = scalar_lea.vmem %s4, 96
      %v6901 = vld [vmem:[%s6900] sm:$0xff]
      %v6902 = vld [vmem:[%s6900 + $0x8] sm:$0xff]
      %v6903 = vld [vmem:[%s6900 + $0x10] sm:$0xff]
      %v6904 = vld [vmem:[%s6900 + $0x18] sm:$0xff]
      %v6906 = vsel %vm5531, %v6868, 0
      %v6909 = vsel %vm5531, %v6869, 0
      %v6912 = vsel %vm5531, %v6870, 0
      %v6915 = vsel %vm5531, %v6871, 0
      %v6918 = vsel %vm5531, %v6872, 0
      %v6921 = vsel %vm5531, %v6873, 0
      %v6924 = vsel %vm5531, %v6874, 0
      %v6927 = vsel %vm5531, %v6875, 0
      %v6930 = vsel %vm5531, %v6876, 0
      %v6933 = vsel %vm5531, %v6877, 0
      %v6936 = vsel %vm5531, %v6878, 0
      %v6939 = vsel %vm5531, %v6879, 0
      %v6942 = vsel %vm5531, %v6880, 0
      %v6945 = vsel %vm5531, %v6881, 0
      %v6948 = vsel %vm5531, %v6882, 0
      %v6951 = vsel %vm5531, %v6883, 0
      %v6954 = vsel %vm5531, %v6884, 0
      %v6957 = vsel %vm5531, %v6885, 0
      %v6960 = vsel %vm5531, %v6886, 0
      %v6963 = vsel %vm5531, %v6887, 0
      %v6966 = vsel %vm5531, %v6888, 0
      %v6969 = vsel %vm5531, %v6889, 0
      %v6972 = vsel %vm5531, %v6890, 0
      %v6975 = vsel %vm5531, %v6891, 0
      %v6978 = vsel %vm5531, %v6892, 0
      %v6981 = vsel %vm5531, %v6893, 0
      %v6984 = vsel %vm5531, %v6894, 0
      %v6987 = vsel %vm5531, %v6895, 0
      %v6990 = vsel %vm5531, %v6896, 0
      %v6993 = vsel %vm5531, %v6897, 0
      %v6996 = vsel %vm5531, %v6898, 0
      %v6999 = vsel %vm5531, %v6899, 0
      %7001 = vmatprep.subr.mxu0 0.0
      %7002 = vmatpush1.msra.mxu0 0.0
      %7003 = vmatprep.subr.mxu0 0.0
      %7004 = vmatpush1.msra.mxu0 0.0
      %7005 = vmatprep.subr.mxu0 0.0
      %7006 = vmatpush1.msra.mxu0 0.0
      %7007 = vmatprep.subr.mxu0 0.0
      %7008 = vmatpush1.msra.mxu0 0.0
      %7009 = vmatprep.subr.mxu0 0.0
      %7010 = vmatpush1.msra.mxu0 0.0
      %7011 = vmatprep.subr.mxu0 0.0
      %7012 = vmatpush1.msra.mxu0 0.0
      %7013 = vmatprep.subr.mxu0 0.0
      %7014 = vmatpush1.msra.mxu0 0.0
      %7015 = vmatprep.subr.mxu0 0.0
      %7016 = vmatpush1.msra.mxu0 0.0
      %7017 = vmatprep.subr.mxu0 0.0
      %7018 = vmatpush1.msra.mxu0 0.0
      %7019 = vmatprep.subr.mxu0 0.0
      %7020 = vmatpush1.msra.mxu0 0.0
      %7021 = vmatprep.subr.mxu0 0.0
      %7022 = vmatpush1.msra.mxu0 0.0
      %7023 = vmatprep.subr.mxu0 0.0
      %7024 = vmatpush1.msra.mxu0 0.0
      %7025 = vmatprep.subr.mxu0 0.0
      %7026 = vmatpush1.msra.mxu0 %v6904
      %7027 = vmatprep.subr.mxu0 0.0
      %7028 = vmatpush1.msra.mxu0 %v6903
      %7029 = vmatprep.subr.mxu0 0.0
      %7030 = vmatpush1.msra.mxu0 %v6902
      %7031 = vmatprep.subr.mxu0 0.0
      %7032 = vmatpush1.msra.mxu0 %v6901
      %7033 = vmatprep.subr.mxu0 0.0
      %7034 = vmatpush2.msra.mxu0 0.0
      %7035 = vmatprep.subr.mxu0 0.0
      %7036 = vmatpush2.msra.mxu0 0.0
      %7037 = vmatprep.subr.mxu0 0.0
      %7038 = vmatpush2.msra.mxu0 0.0
      %7039 = vmatprep.subr.mxu0 0.0
      %7040 = vmatpush2.msra.mxu0 0.0
      %7041 = vmatprep.subr.mxu0 0.0
      %7042 = vmatpush2.msra.mxu0 0.0
      %7043 = vmatprep.subr.mxu0 0.0
      %7044 = vmatpush2.msra.mxu0 0.0
      %7045 = vmatprep.subr.mxu0 0.0
      %7046 = vmatpush2.msra.mxu0 0.0
      %7047 = vmatprep.subr.mxu0 0.0
      %7048 = vmatpush2.msra.mxu0 0.0
      %7049 = vmatprep.subr.mxu0 0.0
      %7050 = vmatpush2.msra.mxu0 0.0
      %7051 = vmatprep.subr.mxu0 0.0
      %7052 = vmatpush2.msra.mxu0 0.0
      %7053 = vmatprep.subr.mxu0 0.0
      %7054 = vmatpush2.msra.mxu0 0.0
      %7055 = vmatprep.subr.mxu0 0.0
      %7056 = vmatpush2.msra.mxu0 0.0
      %7057 = vmatprep.subr.mxu0 0.0
      %7058 = vmatpush2.msra.mxu0 0.0
      %7059 = vmatprep.subr.mxu0 0.0
      %7060 = vmatpush2.msra.mxu0 0.0
      %7061 = vmatprep.subr.mxu0 0.0
      %7062 = vmatpush2.msra.mxu0 0.0
      %7063 = vmatprep.subr.mxu0 0.0
      %7064 = vmatpush2.msra.mxu0 0.0
      %7065 = vmatprep.mubr.f32.mxu0 0.0
      %7066 = vmatmul.mubr.f32.gmra.mxu0 %v6906
      %v7067 = vpop.f32.mrf.mxu0
      %v7068 = vadd.f32 0.0, %v7067
      %v7069 = vpop.f32.mrf.mxu0
      %7070 = vmatprep.mubr.f32.mxu0 0.0
      %7071 = vmatmul.mubr.f32.gmra.mxu0 %v6909
      %v7072 = vpop.f32.mrf.mxu0
      %v7073 = vadd.f32 0.0, %v7072
      %v7074 = vpop.f32.mrf.mxu0
      %7075 = vmatprep.mubr.f32.mxu0 0.0
      %7076 = vmatmul.mubr.f32.gmra.mxu0 %v6912
      %v7077 = vpop.f32.mrf.mxu0
      %v7078 = vadd.f32 0.0, %v7077
      %v7079 = vpop.f32.mrf.mxu0
      %7080 = vmatprep.mubr.f32.mxu0 0.0
      %7081 = vmatmul.mubr.f32.gmra.mxu0 %v6915
      %v7082 = vpop.f32.mrf.mxu0
      %v7083 = vadd.f32 0.0, %v7082
      %v7084 = vpop.f32.mrf.mxu0
      %7085 = vmatprep.mubr.f32.mxu0 0.0
      %7086 = vmatmul.mubr.f32.gmra.mxu0 %v6918
      %v7087 = vpop.f32.mrf.mxu0
      %v7088 = vadd.f32 0.0, %v7087
      %v7089 = vpop.f32.mrf.mxu0
      %7090 = vmatprep.mubr.f32.mxu0 0.0
      %7091 = vmatmul.mubr.f32.gmra.mxu0 %v6921
      %v7092 = vpop.f32.mrf.mxu0
      %v7093 = vadd.f32 0.0, %v7092
      %v7094 = vpop.f32.mrf.mxu0
      %7095 = vmatprep.mubr.f32.mxu0 0.0
      %7096 = vmatmul.mubr.f32.gmra.mxu0 %v6924
      %v7097 = vpop.f32.mrf.mxu0
      %v7098 = vadd.f32 0.0, %v7097
      %v7099 = vpop.f32.mrf.mxu0
      %7100 = vmatprep.mubr.f32.mxu0 0.0
      %7101 = vmatmul.mubr.f32.gmra.mxu0 %v6927
      %v7102 = vpop.f32.mrf.mxu0
      %v7103 = vadd.f32 0.0, %v7102
      %v7104 = vpop.f32.mrf.mxu0
      %7105 = vmatprep.mubr.f32.mxu0 0.0
      %7106 = vmatmul.mubr.f32.gmra.mxu0 %v6930
      %v7107 = vpop.f32.mrf.mxu0
      %v7108 = vadd.f32 0.0, %v7107
      %v7109 = vpop.f32.mrf.mxu0
      %7110 = vmatprep.mubr.f32.mxu0 0.0
      %7111 = vmatmul.mubr.f32.gmra.mxu0 %v6933
      %v7112 = vpop.f32.mrf.mxu0
      %v7113 = vadd.f32 0.0, %v7112
      %v7114 = vpop.f32.mrf.mxu0
      %7115 = vmatprep.mubr.f32.mxu0 0.0
      %7116 = vmatmul.mubr.f32.gmra.mxu0 %v6936
      %v7117 = vpop.f32.mrf.mxu0
      %v7118 = vadd.f32 0.0, %v7117
      %v7119 = vpop.f32.mrf.mxu0
      %7120 = vmatprep.mubr.f32.mxu0 0.0
      %7121 = vmatmul.mubr.f32.gmra.mxu0 %v6939
      %v7122 = vpop.f32.mrf.mxu0
      %v7123 = vadd.f32 0.0, %v7122
      %v7124 = vpop.f32.mrf.mxu0
      %7125 = vmatprep.mubr.f32.mxu0 0.0
      %7126 = vmatmul.mubr.f32.gmra.mxu0 %v6942
      %v7127 = vpop.f32.mrf.mxu0
      %v7128 = vadd.f32 0.0, %v7127
      %v7129 = vpop.f32.mrf.mxu0
      %7130 = vmatprep.mubr.f32.mxu0 0.0
      %7131 = vmatmul.mubr.f32.gmra.mxu0 %v6945
      %v7132 = vpop.f32.mrf.mxu0
      %v7133 = vadd.f32 0.0, %v7132
      %v7134 = vpop.f32.mrf.mxu0
      %7135 = vmatprep.mubr.f32.mxu0 0.0
      %7136 = vmatmul.mubr.f32.gmra.mxu0 %v6948
      %v7137 = vpop.f32.mrf.mxu0
      %v7138 = vadd.f32 0.0, %v7137
      %v7139 = vpop.f32.mrf.mxu0
      %7140 = vmatprep.mubr.f32.mxu0 0.0
      %7141 = vmatmul.mubr.f32.gmra.mxu0 %v6951
      %v7142 = vpop.f32.mrf.mxu0
      %v7143 = vadd.f32 0.0, %v7142
      %v7144 = vpop.f32.mrf.mxu0
      %7145 = vmatprep.mubr.f32.mxu0 0.0
      %7146 = vmatmul.mubr.f32.gmra.mxu0 %v6954
      %v7147 = vpop.f32.mrf.mxu0
      %v7148 = vadd.f32 0.0, %v7147
      %v7149 = vpop.f32.mrf.mxu0
      %7150 = vmatprep.mubr.f32.mxu0 0.0
      %7151 = vmatmul.mubr.f32.gmra.mxu0 %v6957
      %v7152 = vpop.f32.mrf.mxu0
      %v7153 = vadd.f32 0.0, %v7152
      %v7154 = vpop.f32.mrf.mxu0
      %7155 = vmatprep.mubr.f32.mxu0 0.0
      %7156 = vmatmul.mubr.f32.gmra.mxu0 %v6960
      %v7157 = vpop.f32.mrf.mxu0
      %v7158 = vadd.f32 0.0, %v7157
      %v7159 = vpop.f32.mrf.mxu0
      %7160 = vmatprep.mubr.f32.mxu0 0.0
      %7161 = vmatmul.mubr.f32.gmra.mxu0 %v6963
      %v7162 = vpop.f32.mrf.mxu0
      %v7163 = vadd.f32 0.0, %v7162
      %v7164 = vpop.f32.mrf.mxu0
      %7165 = vmatprep.mubr.f32.mxu0 0.0
      %7166 = vmatmul.mubr.f32.gmra.mxu0 %v6966
      %v7167 = vpop.f32.mrf.mxu0
      %v7168 = vadd.f32 0.0, %v7167
      %v7169 = vpop.f32.mrf.mxu0
      %7170 = vmatprep.mubr.f32.mxu0 0.0
      %7171 = vmatmul.mubr.f32.gmra.mxu0 %v6969
      %v7172 = vpop.f32.mrf.mxu0
      %v7173 = vadd.f32 0.0, %v7172
      %v7174 = vpop.f32.mrf.mxu0
      %7175 = vmatprep.mubr.f32.mxu0 0.0
      %7176 = vmatmul.mubr.f32.gmra.mxu0 %v6972
      %v7177 = vpop.f32.mrf.mxu0
      %v7178 = vadd.f32 0.0, %v7177
      %v7179 = vpop.f32.mrf.mxu0
      %7180 = vmatprep.mubr.f32.mxu0 0.0
      %7181 = vmatmul.mubr.f32.gmra.mxu0 %v6975
      %v7182 = vpop.f32.mrf.mxu0
      %v7183 = vadd.f32 0.0, %v7182
      %v7184 = vpop.f32.mrf.mxu0
      %7185 = vmatprep.mubr.f32.mxu0 0.0
      %7186 = vmatmul.mubr.f32.gmra.mxu0 %v6978
      %v7187 = vpop.f32.mrf.mxu0
      %v7188 = vadd.f32 0.0, %v7187
      %v7189 = vpop.f32.mrf.mxu0
      %7190 = vmatprep.mubr.f32.mxu0 0.0
      %7191 = vmatmul.mubr.f32.gmra.mxu0 %v6981
      %v7192 = vpop.f32.mrf.mxu0
      %v7193 = vadd.f32 0.0, %v7192
      %v7194 = vpop.f32.mrf.mxu0
      %7195 = vmatprep.mubr.f32.mxu0 0.0
      %7196 = vmatmul.mubr.f32.gmra.mxu0 %v6984
      %v7197 = vpop.f32.mrf.mxu0
      %v7198 = vadd.f32 0.0, %v7197
      %v7199 = vpop.f32.mrf.mxu0
      %7200 = vmatprep.mubr.f32.mxu0 0.0
      %7201 = vmatmul.mubr.f32.gmra.mxu0 %v6987
      %v7202 = vpop.f32.mrf.mxu0
      %v7203 = vadd.f32 0.0, %v7202
      %v7204 = vpop.f32.mrf.mxu0
      %7205 = vmatprep.mubr.f32.mxu0 0.0
      %7206 = vmatmul.mubr.f32.gmra.mxu0 %v6990
      %v7207 = vpop.f32.mrf.mxu0
      %v7208 = vadd.f32 0.0, %v7207
      %v7209 = vpop.f32.mrf.mxu0
      %7210 = vmatprep.mubr.f32.mxu0 0.0
      %7211 = vmatmul.mubr.f32.gmra.mxu0 %v6993
      %v7212 = vpop.f32.mrf.mxu0
      %v7213 = vadd.f32 0.0, %v7212
      %v7214 = vpop.f32.mrf.mxu0
      %7215 = vmatprep.mubr.f32.mxu0 0.0
      %7216 = vmatmul.mubr.f32.gmra.mxu0 %v6996
      %v7217 = vpop.f32.mrf.mxu0
      %v7218 = vadd.f32 0.0, %v7217
      %v7219 = vpop.f32.mrf.mxu0
      %7220 = vmatprep.mubr.f32.mxu0 0.0
      %7221 = vmatmul.mubr.f32.gmra.mxu0 %v6999
      %v7222 = vpop.f32.mrf.mxu0
      %v7223 = vadd.f32 0.0, %v7222
      %v7224 = vpop.f32.mrf.mxu0
      %7225 = vdwg.mxu0
      %v7226 = vadd.f32 %v6804, %v7068
      %v7227 = vadd.f32 %v6805, %v7073
      %v7228 = vadd.f32 %v6806, %v7078
      %v7229 = vadd.f32 %v6807, %v7083
      %v7230 = vadd.f32 %v6808, %v7088
      %v7231 = vadd.f32 %v6809, %v7093
      %v7232 = vadd.f32 %v6810, %v7098
      %v7233 = vadd.f32 %v6811, %v7103
      %v7234 = vadd.f32 %v6812, %v7108
      %v7235 = vadd.f32 %v6813, %v7113
      %v7236 = vadd.f32 %v6814, %v7118
      %v7237 = vadd.f32 %v6815, %v7123
      %v7238 = vadd.f32 %v6816, %v7128
      %v7239 = vadd.f32 %v6817, %v7133
      %v7240 = vadd.f32 %v6818, %v7138
      %v7241 = vadd.f32 %v6819, %v7143
      %v7242 = vadd.f32 %v6820, %v7148
      %v7243 = vadd.f32 %v6821, %v7153
      %v7244 = vadd.f32 %v6822, %v7158
      %v7245 = vadd.f32 %v6823, %v7163
      %v7246 = vadd.f32 %v6824, %v7168
      %v7247 = vadd.f32 %v6825, %v7173
      %v7248 = vadd.f32 %v6826, %v7178
      %v7249 = vadd.f32 %v6827, %v7183
      %v7250 = vadd.f32 %v6828, %v7188
      %v7251 = vadd.f32 %v6829, %v7193
      %v7252 = vadd.f32 %v6830, %v7198
      %v7253 = vadd.f32 %v6831, %v7203
      %v7254 = vadd.f32 %v6832, %v7208
      %v7255 = vadd.f32 %v6833, %v7213
      %v7256 = vadd.f32 %v6834, %v7218
      %v7257 = vadd.f32 %v6835, %v7223
      %v7258 = vld [vmem:[#allocation3 + $0x18] sm:$0xff]
      %v7259 = vld [vmem:[#allocation3 + $0x20] sm:$0xff]
      %v7260 = vld [vmem:[#allocation3 + $0x28] sm:$0xff]
      %v7261 = vld [vmem:[#allocation3 + $0x30] sm:$0xff]
      %v7262 = vld [vmem:[#allocation3 + $0x38] sm:$0xff]
      %v7263 = vld [vmem:[#allocation3 + $0x40] sm:$0xff]
      %v7264 = vld [vmem:[#allocation3 + $0x48] sm:$0xff]
      %v7265 = vld [vmem:[#allocation3 + $0x50] sm:$0xff]
      %v7266 = vld [vmem:[#allocation3 + $0x58] sm:$0xff]
      %v7267 = vld [vmem:[#allocation3 + $0x60] sm:$0xff]
      %v7268 = vld [vmem:[#allocation3 + $0x68] sm:$0xff]
      %v7269 = vld [vmem:[#allocation3 + $0x70] sm:$0xff]
      %v7270 = vld [vmem:[#allocation3 + $0x78] sm:$0xff]
      %v7271 = vld [vmem:[#allocation3 + $0x80] sm:$0xff]
      %v7272 = vld [vmem:[#allocation3 + $0x88] sm:$0xff]
      %v7273 = vld [vmem:[#allocation3 + $0x90] sm:$0xff]
      %v7274 = vld [vmem:[#allocation3 + $0x98] sm:$0xff]
      %v7275 = vld [vmem:[#allocation3 + $0xa0] sm:$0xff]
      %v7276 = vld [vmem:[#allocation3 + $0xa8] sm:$0xff]
      %v7277 = vld [vmem:[#allocation3 + $0xb0] sm:$0xff]
      %v7278 = vld [vmem:[#allocation3 + $0xb8] sm:$0xff]
      %v7279 = vld [vmem:[#allocation3 + $0xc0] sm:$0xff]
      %v7280 = vld [vmem:[#allocation3 + $0xc8] sm:$0xff]
      %v7281 = vld [vmem:[#allocation3 + $0xd0] sm:$0xff]
      %v7282 = vld [vmem:[#allocation3 + $0xd8] sm:$0xff]
      %v7283 = vld [vmem:[#allocation3 + $0xe0] sm:$0xff]
      %v7284 = vld [vmem:[#allocation3 + $0xe8] sm:$0xff]
      %v7285 = vld [vmem:[#allocation3 + $0xf0] sm:$0xff]
      %v7286 = vld [vmem:[#allocation3 + $0xf8] sm:$0xff]
      %v7287 = vld [vmem:[#allocation3 + $0x100] sm:$0xff]
      %v7288 = vld [vmem:[#allocation3 + $0x108] sm:$0xff]
      %v7289 = vld [vmem:[#allocation3 + $0x110] sm:$0xff]
      %s7290 = scalar_lea.vmem %s4, 128
      %v7291 = vld [vmem:[%s7290] sm:$0xff]
      %v7292 = vld [vmem:[%s7290 + $0x8] sm:$0xff]
      %v7293 = vld [vmem:[%s7290 + $0x10] sm:$0xff]
      %v7294 = vld [vmem:[%s7290 + $0x18] sm:$0xff]
      %v7296 = vsel %vm5531, %v7258, 0
      %v7299 = vsel %vm5531, %v7259, 0
      %v7302 = vsel %vm5531, %v7260, 0
      %v7305 = vsel %vm5531, %v7261, 0
      %v7308 = vsel %vm5531, %v7262, 0
      %v7311 = vsel %vm5531, %v7263, 0
      %v7314 = vsel %vm5531, %v7264, 0
      %v7317 = vsel %vm5531, %v7265, 0
      %v7320 = vsel %vm5531, %v7266, 0
      %v7323 = vsel %vm5531, %v7267, 0
      %v7326 = vsel %vm5531, %v7268, 0
      %v7329 = vsel %vm5531, %v7269, 0
      %v7332 = vsel %vm5531, %v7270, 0
      %v7335 = vsel %vm5531, %v7271, 0
      %v7338 = vsel %vm5531, %v7272, 0
      %v7341 = vsel %vm5531, %v7273, 0
      %v7344 = vsel %vm5531, %v7274, 0
      %v7347 = vsel %vm5531, %v7275, 0
      %v7350 = vsel %vm5531, %v7276, 0
      %v7353 = vsel %vm5531, %v7277, 0
      %v7356 = vsel %vm5531, %v7278, 0
      %v7359 = vsel %vm5531, %v7279, 0
      %v7362 = vsel %vm5531, %v7280, 0
      %v7365 = vsel %vm5531, %v7281, 0
      %v7368 = vsel %vm5531, %v7282, 0
      %v7371 = vsel %vm5531, %v7283, 0
      %v7374 = vsel %vm5531, %v7284, 0
      %v7377 = vsel %vm5531, %v7285, 0
      %v7380 = vsel %vm5531, %v7286, 0
      %v7383 = vsel %vm5531, %v7287, 0
      %v7386 = vsel %vm5531, %v7288, 0
      %v7389 = vsel %vm5531, %v7289, 0
      %7391 = vmatprep.subr.mxu0 0.0
      %7392 = vmatpush1.msra.mxu0 0.0
      %7393 = vmatprep.subr.mxu0 0.0
      %7394 = vmatpush1.msra.mxu0 0.0
      %7395 = vmatprep.subr.mxu0 0.0
      %7396 = vmatpush1.msra.mxu0 0.0
      %7397 = vmatprep.subr.mxu0 0.0
      %7398 = vmatpush1.msra.mxu0 0.0
      %7399 = vmatprep.subr.mxu0 0.0
      %7400 = vmatpush1.msra.mxu0 0.0
      %7401 = vmatprep.subr.mxu0 0.0
      %7402 = vmatpush1.msra.mxu0 0.0
      %7403 = vmatprep.subr.mxu0 0.0
      %7404 = vmatpush1.msra.mxu0 0.0
      %7405 = vmatprep.subr.mxu0 0.0
      %7406 = vmatpush1.msra.mxu0 0.0
      %7407 = vmatprep.subr.mxu0 0.0
      %7408 = vmatpush1.msra.mxu0 0.0
      %7409 = vmatprep.subr.mxu0 0.0
      %7410 = vmatpush1.msra.mxu0 0.0
      %7411 = vmatprep.subr.mxu0 0.0
      %7412 = vmatpush1.msra.mxu0 0.0
      %7413 = vmatprep.subr.mxu0 0.0
      %7414 = vmatpush1.msra.mxu0 0.0
      %7415 = vmatprep.subr.mxu0 0.0
      %7416 = vmatpush1.msra.mxu0 %v7294
      %7417 = vmatprep.subr.mxu0 0.0
      %7418 = vmatpush1.msra.mxu0 %v7293
      %7419 = vmatprep.subr.mxu0 0.0
      %7420 = vmatpush1.msra.mxu0 %v7292
      %7421 = vmatprep.subr.mxu0 0.0
      %7422 = vmatpush1.msra.mxu0 %v7291
      %7423 = vmatprep.subr.mxu0 0.0
      %7424 = vmatpush2.msra.mxu0 0.0
      %7425 = vmatprep.subr.mxu0 0.0
      %7426 = vmatpush2.msra.mxu0 0.0
      %7427 = vmatprep.subr.mxu0 0.0
      %7428 = vmatpush2.msra.mxu0 0.0
      %7429 = vmatprep.subr.mxu0 0.0
      %7430 = vmatpush2.msra.mxu0 0.0
      %7431 = vmatprep.subr.mxu0 0.0
      %7432 = vmatpush2.msra.mxu0 0.0
      %7433 = vmatprep.subr.mxu0 0.0
      %7434 = vmatpush2.msra.mxu0 0.0
      %7435 = vmatprep.subr.mxu0 0.0
      %7436 = vmatpush2.msra.mxu0 0.0
      %7437 = vmatprep.subr.mxu0 0.0
      %7438 = vmatpush2.msra.mxu0 0.0
      %7439 = vmatprep.subr.mxu0 0.0
      %7440 = vmatpush2.msra.mxu0 0.0
      %7441 = vmatprep.subr.mxu0 0.0
      %7442 = vmatpush2.msra.mxu0 0.0
      %7443 = vmatprep.subr.mxu0 0.0
      %7444 = vmatpush2.msra.mxu0 0.0
      %7445 = vmatprep.subr.mxu0 0.0
      %7446 = vmatpush2.msra.mxu0 0.0
      %7447 = vmatprep.subr.mxu0 0.0
      %7448 = vmatpush2.msra.mxu0 0.0
      %7449 = vmatprep.subr.mxu0 0.0
      %7450 = vmatpush2.msra.mxu0 0.0
      %7451 = vmatprep.subr.mxu0 0.0
      %7452 = vmatpush2.msra.mxu0 0.0
      %7453 = vmatprep.subr.mxu0 0.0
      %7454 = vmatpush2.msra.mxu0 0.0
      %7455 = vmatprep.mubr.f32.mxu0 0.0
      %7456 = vmatmul.mubr.f32.gmra.mxu0 %v7296
      %v7457 = vpop.f32.mrf.mxu0
      %v7458 = vadd.f32 0.0, %v7457
      %v7459 = vpop.f32.mrf.mxu0
      %7460 = vmatprep.mubr.f32.mxu0 0.0
      %7461 = vmatmul.mubr.f32.gmra.mxu0 %v7299
      %v7462 = vpop.f32.mrf.mxu0
      %v7463 = vadd.f32 0.0, %v7462
      %v7464 = vpop.f32.mrf.mxu0
      %7465 = vmatprep.mubr.f32.mxu0 0.0
      %7466 = vmatmul.mubr.f32.gmra.mxu0 %v7302
      %v7467 = vpop.f32.mrf.mxu0
      %v7468 = vadd.f32 0.0, %v7467
      %v7469 = vpop.f32.mrf.mxu0
      %7470 = vmatprep.mubr.f32.mxu0 0.0
      %7471 = vmatmul.mubr.f32.gmra.mxu0 %v7305
      %v7472 = vpop.f32.mrf.mxu0
      %v7473 = vadd.f32 0.0, %v7472
      %v7474 = vpop.f32.mrf.mxu0
      %7475 = vmatprep.mubr.f32.mxu0 0.0
      %7476 = vmatmul.mubr.f32.gmra.mxu0 %v7308
      %v7477 = vpop.f32.mrf.mxu0
      %v7478 = vadd.f32 0.0, %v7477
      %v7479 = vpop.f32.mrf.mxu0
      %7480 = vmatprep.mubr.f32.mxu0 0.0
      %7481 = vmatmul.mubr.f32.gmra.mxu0 %v7311
      %v7482 = vpop.f32.mrf.mxu0
      %v7483 = vadd.f32 0.0, %v7482
      %v7484 = vpop.f32.mrf.mxu0
      %7485 = vmatprep.mubr.f32.mxu0 0.0
      %7486 = vmatmul.mubr.f32.gmra.mxu0 %v7314
      %v7487 = vpop.f32.mrf.mxu0
      %v7488 = vadd.f32 0.0, %v7487
      %v7489 = vpop.f32.mrf.mxu0
      %7490 = vmatprep.mubr.f32.mxu0 0.0
      %7491 = vmatmul.mubr.f32.gmra.mxu0 %v7317
      %v7492 = vpop.f32.mrf.mxu0
      %v7493 = vadd.f32 0.0, %v7492
      %v7494 = vpop.f32.mrf.mxu0
      %7495 = vmatprep.mubr.f32.mxu0 0.0
      %7496 = vmatmul.mubr.f32.gmra.mxu0 %v7320
      %v7497 = vpop.f32.mrf.mxu0
      %v7498 = vadd.f32 0.0, %v7497
      %v7499 = vpop.f32.mrf.mxu0
      %7500 = vmatprep.mubr.f32.mxu0 0.0
      %7501 = vmatmul.mubr.f32.gmra.mxu0 %v7323
      %v7502 = vpop.f32.mrf.mxu0
      %v7503 = vadd.f32 0.0, %v7502
      %v7504 = vpop.f32.mrf.mxu0
      %7505 = vmatprep.mubr.f32.mxu0 0.0
      %7506 = vmatmul.mubr.f32.gmra.mxu0 %v7326
      %v7507 = vpop.f32.mrf.mxu0
      %v7508 = vadd.f32 0.0, %v7507
      %v7509 = vpop.f32.mrf.mxu0
      %7510 = vmatprep.mubr.f32.mxu0 0.0
      %7511 = vmatmul.mubr.f32.gmra.mxu0 %v7329
      %v7512 = vpop.f32.mrf.mxu0
      %v7513 = vadd.f32 0.0, %v7512
      %v7514 = vpop.f32.mrf.mxu0
      %7515 = vmatprep.mubr.f32.mxu0 0.0
      %7516 = vmatmul.mubr.f32.gmra.mxu0 %v7332
      %v7517 = vpop.f32.mrf.mxu0
      %v7518 = vadd.f32 0.0, %v7517
      %v7519 = vpop.f32.mrf.mxu0
      %7520 = vmatprep.mubr.f32.mxu0 0.0
      %7521 = vmatmul.mubr.f32.gmra.mxu0 %v7335
      %v7522 = vpop.f32.mrf.mxu0
      %v7523 = vadd.f32 0.0, %v7522
      %v7524 = vpop.f32.mrf.mxu0
      %7525 = vmatprep.mubr.f32.mxu0 0.0
      %7526 = vmatmul.mubr.f32.gmra.mxu0 %v7338
      %v7527 = vpop.f32.mrf.mxu0
      %v7528 = vadd.f32 0.0, %v7527
      %v7529 = vpop.f32.mrf.mxu0
      %7530 = vmatprep.mubr.f32.mxu0 0.0
      %7531 = vmatmul.mubr.f32.gmra.mxu0 %v7341
      %v7532 = vpop.f32.mrf.mxu0
      %v7533 = vadd.f32 0.0, %v7532
      %v7534 = vpop.f32.mrf.mxu0
      %7535 = vmatprep.mubr.f32.mxu0 0.0
      %7536 = vmatmul.mubr.f32.gmra.mxu0 %v7344
      %v7537 = vpop.f32.mrf.mxu0
      %v7538 = vadd.f32 0.0, %v7537
      %v7539 = vpop.f32.mrf.mxu0
      %7540 = vmatprep.mubr.f32.mxu0 0.0
      %7541 = vmatmul.mubr.f32.gmra.mxu0 %v7347
      %v7542 = vpop.f32.mrf.mxu0
      %v7543 = vadd.f32 0.0, %v7542
      %v7544 = vpop.f32.mrf.mxu0
      %7545 = vmatprep.mubr.f32.mxu0 0.0
      %7546 = vmatmul.mubr.f32.gmra.mxu0 %v7350
      %v7547 = vpop.f32.mrf.mxu0
      %v7548 = vadd.f32 0.0, %v7547
      %v7549 = vpop.f32.mrf.mxu0
      %7550 = vmatprep.mubr.f32.mxu0 0.0
      %7551 = vmatmul.mubr.f32.gmra.mxu0 %v7353
      %v7552 = vpop.f32.mrf.mxu0
      %v7553 = vadd.f32 0.0, %v7552
      %v7554 = vpop.f32.mrf.mxu0
      %7555 = vmatprep.mubr.f32.mxu0 0.0
      %7556 = vmatmul.mubr.f32.gmra.mxu0 %v7356
      %v7557 = vpop.f32.mrf.mxu0
      %v7558 = vadd.f32 0.0, %v7557
      %v7559 = vpop.f32.mrf.mxu0
      %7560 = vmatprep.mubr.f32.mxu0 0.0
      %7561 = vmatmul.mubr.f32.gmra.mxu0 %v7359
      %v7562 = vpop.f32.mrf.mxu0
      %v7563 = vadd.f32 0.0, %v7562
      %v7564 = vpop.f32.mrf.mxu0
      %7565 = vmatprep.mubr.f32.mxu0 0.0
      %7566 = vmatmul.mubr.f32.gmra.mxu0 %v7362
      %v7567 = vpop.f32.mrf.mxu0
      %v7568 = vadd.f32 0.0, %v7567
      %v7569 = vpop.f32.mrf.mxu0
      %7570 = vmatprep.mubr.f32.mxu0 0.0
      %7571 = vmatmul.mubr.f32.gmra.mxu0 %v7365
      %v7572 = vpop.f32.mrf.mxu0
      %v7573 = vadd.f32 0.0, %v7572
      %v7574 = vpop.f32.mrf.mxu0
      %7575 = vmatprep.mubr.f32.mxu0 0.0
      %7576 = vmatmul.mubr.f32.gmra.mxu0 %v7368
      %v7577 = vpop.f32.mrf.mxu0
      %v7578 = vadd.f32 0.0, %v7577
      %v7579 = vpop.f32.mrf.mxu0
      %7580 = vmatprep.mubr.f32.mxu0 0.0
      %7581 = vmatmul.mubr.f32.gmra.mxu0 %v7371
      %v7582 = vpop.f32.mrf.mxu0
      %v7583 = vadd.f32 0.0, %v7582
      %v7584 = vpop.f32.mrf.mxu0
      %7585 = vmatprep.mubr.f32.mxu0 0.0
      %7586 = vmatmul.mubr.f32.gmra.mxu0 %v7374
      %v7587 = vpop.f32.mrf.mxu0
      %v7588 = vadd.f32 0.0, %v7587
      %v7589 = vpop.f32.mrf.mxu0
      %7590 = vmatprep.mubr.f32.mxu0 0.0
      %7591 = vmatmul.mubr.f32.gmra.mxu0 %v7377
      %v7592 = vpop.f32.mrf.mxu0
      %v7593 = vadd.f32 0.0, %v7592
      %v7594 = vpop.f32.mrf.mxu0
      %7595 = vmatprep.mubr.f32.mxu0 0.0
      %7596 = vmatmul.mubr.f32.gmra.mxu0 %v7380
      %v7597 = vpop.f32.mrf.mxu0
      %v7598 = vadd.f32 0.0, %v7597
      %v7599 = vpop.f32.mrf.mxu0
      %7600 = vmatprep.mubr.f32.mxu0 0.0
      %7601 = vmatmul.mubr.f32.gmra.mxu0 %v7383
      %v7602 = vpop.f32.mrf.mxu0
      %v7603 = vadd.f32 0.0, %v7602
      %v7604 = vpop.f32.mrf.mxu0
      %7605 = vmatprep.mubr.f32.mxu0 0.0
      %7606 = vmatmul.mubr.f32.gmra.mxu0 %v7386
      %v7607 = vpop.f32.mrf.mxu0
      %v7608 = vadd.f32 0.0, %v7607
      %v7609 = vpop.f32.mrf.mxu0
      %7610 = vmatprep.mubr.f32.mxu0 0.0
      %7611 = vmatmul.mubr.f32.gmra.mxu0 %v7389
      %v7612 = vpop.f32.mrf.mxu0
      %v7613 = vadd.f32 0.0, %v7612
      %v7614 = vpop.f32.mrf.mxu0
      %7615 = vdwg.mxu0
      %v7616 = vadd.f32 %v7226, %v7458
      %v7617 = vadd.f32 %v7227, %v7463
      %v7618 = vadd.f32 %v7228, %v7468
      %v7619 = vadd.f32 %v7229, %v7473
      %v7620 = vadd.f32 %v7230, %v7478
      %v7621 = vadd.f32 %v7231, %v7483
      %v7622 = vadd.f32 %v7232, %v7488
      %v7623 = vadd.f32 %v7233, %v7493
      %v7624 = vadd.f32 %v7234, %v7498
      %v7625 = vadd.f32 %v7235, %v7503
      %v7626 = vadd.f32 %v7236, %v7508
      %v7627 = vadd.f32 %v7237, %v7513
      %v7628 = vadd.f32 %v7238, %v7518
      %v7629 = vadd.f32 %v7239, %v7523
      %v7630 = vadd.f32 %v7240, %v7528
      %v7631 = vadd.f32 %v7241, %v7533
      %v7632 = vadd.f32 %v7242, %v7538
      %v7633 = vadd.f32 %v7243, %v7543
      %v7634 = vadd.f32 %v7244, %v7548
      %v7635 = vadd.f32 %v7245, %v7553
      %v7636 = vadd.f32 %v7246, %v7558
      %v7637 = vadd.f32 %v7247, %v7563
      %v7638 = vadd.f32 %v7248, %v7568
      %v7639 = vadd.f32 %v7249, %v7573
      %v7640 = vadd.f32 %v7250, %v7578
      %v7641 = vadd.f32 %v7251, %v7583
      %v7642 = vadd.f32 %v7252, %v7588
      %v7643 = vadd.f32 %v7253, %v7593
      %v7644 = vadd.f32 %v7254, %v7598
      %v7645 = vadd.f32 %v7255, %v7603
      %v7646 = vadd.f32 %v7256, %v7608
      %v7647 = vadd.f32 %v7257, %v7613
      %v7648 = vld [vmem:[#allocation3 + $0x19] sm:$0xff]
      %v7649 = vld [vmem:[#allocation3 + $0x21] sm:$0xff]
      %v7650 = vld [vmem:[#allocation3 + $0x29] sm:$0xff]
      %v7651 = vld [vmem:[#allocation3 + $0x31] sm:$0xff]
      %v7652 = vld [vmem:[#allocation3 + $0x39] sm:$0xff]
      %v7653 = vld [vmem:[#allocation3 + $0x41] sm:$0xff]
      %v7654 = vld [vmem:[#allocation3 + $0x49] sm:$0xff]
      %v7655 = vld [vmem:[#allocation3 + $0x51] sm:$0xff]
      %v7656 = vld [vmem:[#allocation3 + $0x59] sm:$0xff]
      %v7657 = vld [vmem:[#allocation3 + $0x61] sm:$0xff]
      %v7658 = vld [vmem:[#allocation3 + $0x69] sm:$0xff]
      %v7659 = vld [vmem:[#allocation3 + $0x71] sm:$0xff]
      %v7660 = vld [vmem:[#allocation3 + $0x79] sm:$0xff]
      %v7661 = vld [vmem:[#allocation3 + $0x81] sm:$0xff]
      %v7662 = vld [vmem:[#allocation3 + $0x89] sm:$0xff]
      %v7663 = vld [vmem:[#allocation3 + $0x91] sm:$0xff]
      %v7664 = vld [vmem:[#allocation3 + $0x99] sm:$0xff]
      %v7665 = vld [vmem:[#allocation3 + $0xa1] sm:$0xff]
      %v7666 = vld [vmem:[#allocation3 + $0xa9] sm:$0xff]
      %v7667 = vld [vmem:[#allocation3 + $0xb1] sm:$0xff]
      %v7668 = vld [vmem:[#allocation3 + $0xb9] sm:$0xff]
      %v7669 = vld [vmem:[#allocation3 + $0xc1] sm:$0xff]
      %v7670 = vld [vmem:[#allocation3 + $0xc9] sm:$0xff]
      %v7671 = vld [vmem:[#allocation3 + $0xd1] sm:$0xff]
      %v7672 = vld [vmem:[#allocation3 + $0xd9] sm:$0xff]
      %v7673 = vld [vmem:[#allocation3 + $0xe1] sm:$0xff]
      %v7674 = vld [vmem:[#allocation3 + $0xe9] sm:$0xff]
      %v7675 = vld [vmem:[#allocation3 + $0xf1] sm:$0xff]
      %v7676 = vld [vmem:[#allocation3 + $0xf9] sm:$0xff]
      %v7677 = vld [vmem:[#allocation3 + $0x101] sm:$0xff]
      %v7678 = vld [vmem:[#allocation3 + $0x109] sm:$0xff]
      %v7679 = vld [vmem:[#allocation3 + $0x111] sm:$0xff]
      %v7680 = vsel %vm3331, %v7648, 0.0
      %v7681 = vsel %vm3332, %v7649, 0.0
      %v7682 = vsel %vm3333, %v7650, 0.0
      %v7683 = vsel %vm3334, %v7651, 0.0
      %v7684 = vsel %vm3335, %v7652, 0.0
      %v7685 = vsel %vm3336, %v7653, 0.0
      %v7686 = vsel %vm3337, %v7654, 0.0
      %v7687 = vsel %vm3338, %v7655, 0.0
      %v7688 = vsel %vm3339, %v7656, 0.0
      %v7689 = vsel %vm3340, %v7657, 0.0
      %v7690 = vsel %vm3341, %v7658, 0.0
      %v7691 = vsel %vm3342, %v7659, 0.0
      %v7692 = vsel %vm3343, %v7660, 0.0
      %v7693 = vsel %vm3344, %v7661, 0.0
      %v7694 = vsel %vm3345, %v7662, 0.0
      %v7695 = vsel %vm3346, %v7663, 0.0
      %v7696 = vsel %vm3347, %v7664, 0.0
      %v7697 = vsel %vm3348, %v7665, 0.0
      %v7698 = vsel %vm3349, %v7666, 0.0
      %v7699 = vsel %vm3350, %v7667, 0.0
      %v7700 = vsel %vm3351, %v7668, 0.0
      %v7701 = vsel %vm3352, %v7669, 0.0
      %v7702 = vsel %vm3353, %v7670, 0.0
      %v7703 = vsel %vm3354, %v7671, 0.0
      %v7704 = vsel %vm3355, %v7672, 0.0
      %v7705 = vsel %vm3356, %v7673, 0.0
      %v7706 = vsel %vm3357, %v7674, 0.0
      %v7707 = vsel %vm3358, %v7675, 0.0
      %v7708 = vsel %vm3359, %v7676, 0.0
      %v7709 = vsel %vm3360, %v7677, 0.0
      %v7710 = vsel %vm3361, %v7678, 0.0
      %v7711 = vsel %vm3362, %v7679, 0.0
      %s7712 = scalar_lea.vmem %s4, 160
      %v7713 = vld [vmem:[%s7712] sm:$0xff]
      %v7714 = vld [vmem:[%s7712 + $0x8] sm:$0xff]
      %v7715 = vld [vmem:[%s7712 + $0x10] sm:$0xff]
      %v7716 = vld [vmem:[%s7712 + $0x18] sm:$0xff]
      %v7718 = vsel %vm5531, %v7680, 0
      %v7721 = vsel %vm5531, %v7681, 0
      %v7724 = vsel %vm5531, %v7682, 0
      %v7727 = vsel %vm5531, %v7683, 0
      %v7730 = vsel %vm5531, %v7684, 0
      %v7733 = vsel %vm5531, %v7685, 0
      %v7736 = vsel %vm5531, %v7686, 0
      %v7739 = vsel %vm5531, %v7687, 0
      %v7742 = vsel %vm5531, %v7688, 0
      %v7745 = vsel %vm5531, %v7689, 0
      %v7748 = vsel %vm5531, %v7690, 0
      %v7751 = vsel %vm5531, %v7691, 0
      %v7754 = vsel %vm5531, %v7692, 0
      %v7757 = vsel %vm5531, %v7693, 0
      %v7760 = vsel %vm5531, %v7694, 0
      %v7763 = vsel %vm5531, %v7695, 0
      %v7766 = vsel %vm5531, %v7696, 0
      %v7769 = vsel %vm5531, %v7697, 0
      %v7772 = vsel %vm5531, %v7698, 0
      %v7775 = vsel %vm5531, %v7699, 0
      %v7778 = vsel %vm5531, %v7700, 0
      %v7781 = vsel %vm5531, %v7701, 0
      %v7784 = vsel %vm5531, %v7702, 0
      %v7787 = vsel %vm5531, %v7703, 0
      %v7790 = vsel %vm5531, %v7704, 0
      %v7793 = vsel %vm5531, %v7705, 0
      %v7796 = vsel %vm5531, %v7706, 0
      %v7799 = vsel %vm5531, %v7707, 0
      %v7802 = vsel %vm5531, %v7708, 0
      %v7805 = vsel %vm5531, %v7709, 0
      %v7808 = vsel %vm5531, %v7710, 0
      %v7811 = vsel %vm5531, %v7711, 0
      %7813 = vmatprep.subr.mxu0 0.0
      %7814 = vmatpush1.msra.mxu0 0.0
      %7815 = vmatprep.subr.mxu0 0.0
      %7816 = vmatpush1.msra.mxu0 0.0
      %7817 = vmatprep.subr.mxu0 0.0
      %7818 = vmatpush1.msra.mxu0 0.0
      %7819 = vmatprep.subr.mxu0 0.0
      %7820 = vmatpush1.msra.mxu0 0.0
      %7821 = vmatprep.subr.mxu0 0.0
      %7822 = vmatpush1.msra.mxu0 0.0
      %7823 = vmatprep.subr.mxu0 0.0
      %7824 = vmatpush1.msra.mxu0 0.0
      %7825 = vmatprep.subr.mxu0 0.0
      %7826 = vmatpush1.msra.mxu0 0.0
      %7827 = vmatprep.subr.mxu0 0.0
      %7828 = vmatpush1.msra.mxu0 0.0
      %7829 = vmatprep.subr.mxu0 0.0
      %7830 = vmatpush1.msra.mxu0 0.0
      %7831 = vmatprep.subr.mxu0 0.0
      %7832 = vmatpush1.msra.mxu0 0.0
      %7833 = vmatprep.subr.mxu0 0.0
      %7834 = vmatpush1.msra.mxu0 0.0
      %7835 = vmatprep.subr.mxu0 0.0
      %7836 = vmatpush1.msra.mxu0 0.0
      %7837 = vmatprep.subr.mxu0 0.0
      %7838 = vmatpush1.msra.mxu0 %v7716
      %7839 = vmatprep.subr.mxu0 0.0
      %7840 = vmatpush1.msra.mxu0 %v7715
      %7841 = vmatprep.subr.mxu0 0.0
      %7842 = vmatpush1.msra.mxu0 %v7714
      %7843 = vmatprep.subr.mxu0 0.0
      %7844 = vmatpush1.msra.mxu0 %v7713
      %7845 = vmatprep.subr.mxu0 0.0
      %7846 = vmatpush2.msra.mxu0 0.0
      %7847 = vmatprep.subr.mxu0 0.0
      %7848 = vmatpush2.msra.mxu0 0.0
      %7849 = vmatprep.subr.mxu0 0.0
      %7850 = vmatpush2.msra.mxu0 0.0
      %7851 = vmatprep.subr.mxu0 0.0
      %7852 = vmatpush2.msra.mxu0 0.0
      %7853 = vmatprep.subr.mxu0 0.0
      %7854 = vmatpush2.msra.mxu0 0.0
      %7855 = vmatprep.subr.mxu0 0.0
      %7856 = vmatpush2.msra.mxu0 0.0
      %7857 = vmatprep.subr.mxu0 0.0
      %7858 = vmatpush2.msra.mxu0 0.0
      %7859 = vmatprep.subr.mxu0 0.0
      %7860 = vmatpush2.msra.mxu0 0.0
      %7861 = vmatprep.subr.mxu0 0.0
      %7862 = vmatpush2.msra.mxu0 0.0
      %7863 = vmatprep.subr.mxu0 0.0
      %7864 = vmatpush2.msra.mxu0 0.0
      %7865 = vmatprep.subr.mxu0 0.0
      %7866 = vmatpush2.msra.mxu0 0.0
      %7867 = vmatprep.subr.mxu0 0.0
      %7868 = vmatpush2.msra.mxu0 0.0
      %7869 = vmatprep.subr.mxu0 0.0
      %7870 = vmatpush2.msra.mxu0 0.0
      %7871 = vmatprep.subr.mxu0 0.0
      %7872 = vmatpush2.msra.mxu0 0.0
      %7873 = vmatprep.subr.mxu0 0.0
      %7874 = vmatpush2.msra.mxu0 0.0
      %7875 = vmatprep.subr.mxu0 0.0
      %7876 = vmatpush2.msra.mxu0 0.0
      %7877 = vmatprep.mubr.f32.mxu0 0.0
      %7878 = vmatmul.mubr.f32.gmra.mxu0 %v7718
      %v7879 = vpop.f32.mrf.mxu0
      %v7880 = vadd.f32 0.0, %v7879
      %v7881 = vpop.f32.mrf.mxu0
      %7882 = vmatprep.mubr.f32.mxu0 0.0
      %7883 = vmatmul.mubr.f32.gmra.mxu0 %v7721
      %v7884 = vpop.f32.mrf.mxu0
      %v7885 = vadd.f32 0.0, %v7884
      %v7886 = vpop.f32.mrf.mxu0
      %7887 = vmatprep.mubr.f32.mxu0 0.0
      %7888 = vmatmul.mubr.f32.gmra.mxu0 %v7724
      %v7889 = vpop.f32.mrf.mxu0
      %v7890 = vadd.f32 0.0, %v7889
      %v7891 = vpop.f32.mrf.mxu0
      %7892 = vmatprep.mubr.f32.mxu0 0.0
      %7893 = vmatmul.mubr.f32.gmra.mxu0 %v7727
      %v7894 = vpop.f32.mrf.mxu0
      %v7895 = vadd.f32 0.0, %v7894
      %v7896 = vpop.f32.mrf.mxu0
      %7897 = vmatprep.mubr.f32.mxu0 0.0
      %7898 = vmatmul.mubr.f32.gmra.mxu0 %v7730
      %v7899 = vpop.f32.mrf.mxu0
      %v7900 = vadd.f32 0.0, %v7899
      %v7901 = vpop.f32.mrf.mxu0
      %7902 = vmatprep.mubr.f32.mxu0 0.0
      %7903 = vmatmul.mubr.f32.gmra.mxu0 %v7733
      %v7904 = vpop.f32.mrf.mxu0
      %v7905 = vadd.f32 0.0, %v7904
      %v7906 = vpop.f32.mrf.mxu0
      %7907 = vmatprep.mubr.f32.mxu0 0.0
      %7908 = vmatmul.mubr.f32.gmra.mxu0 %v7736
      %v7909 = vpop.f32.mrf.mxu0
      %v7910 = vadd.f32 0.0, %v7909
      %v7911 = vpop.f32.mrf.mxu0
      %7912 = vmatprep.mubr.f32.mxu0 0.0
      %7913 = vmatmul.mubr.f32.gmra.mxu0 %v7739
      %v7914 = vpop.f32.mrf.mxu0
      %v7915 = vadd.f32 0.0, %v7914
      %v7916 = vpop.f32.mrf.mxu0
      %7917 = vmatprep.mubr.f32.mxu0 0.0
      %7918 = vmatmul.mubr.f32.gmra.mxu0 %v7742
      %v7919 = vpop.f32.mrf.mxu0
      %v7920 = vadd.f32 0.0, %v7919
      %v7921 = vpop.f32.mrf.mxu0
      %7922 = vmatprep.mubr.f32.mxu0 0.0
      %7923 = vmatmul.mubr.f32.gmra.mxu0 %v7745
      %v7924 = vpop.f32.mrf.mxu0
      %v7925 = vadd.f32 0.0, %v7924
      %v7926 = vpop.f32.mrf.mxu0
      %7927 = vmatprep.mubr.f32.mxu0 0.0
      %7928 = vmatmul.mubr.f32.gmra.mxu0 %v7748
      %v7929 = vpop.f32.mrf.mxu0
      %v7930 = vadd.f32 0.0, %v7929
      %v7931 = vpop.f32.mrf.mxu0
      %7932 = vmatprep.mubr.f32.mxu0 0.0
      %7933 = vmatmul.mubr.f32.gmra.mxu0 %v7751
      %v7934 = vpop.f32.mrf.mxu0
      %v7935 = vadd.f32 0.0, %v7934
      %v7936 = vpop.f32.mrf.mxu0
      %7937 = vmatprep.mubr.f32.mxu0 0.0
      %7938 = vmatmul.mubr.f32.gmra.mxu0 %v7754
      %v7939 = vpop.f32.mrf.mxu0
      %v7940 = vadd.f32 0.0, %v7939
      %v7941 = vpop.f32.mrf.mxu0
      %7942 = vmatprep.mubr.f32.mxu0 0.0
      %7943 = vmatmul.mubr.f32.gmra.mxu0 %v7757
      %v7944 = vpop.f32.mrf.mxu0
      %v7945 = vadd.f32 0.0, %v7944
      %v7946 = vpop.f32.mrf.mxu0
      %7947 = vmatprep.mubr.f32.mxu0 0.0
      %7948 = vmatmul.mubr.f32.gmra.mxu0 %v7760
      %v7949 = vpop.f32.mrf.mxu0
      %v7950 = vadd.f32 0.0, %v7949
      %v7951 = vpop.f32.mrf.mxu0
      %7952 = vmatprep.mubr.f32.mxu0 0.0
      %7953 = vmatmul.mubr.f32.gmra.mxu0 %v7763
      %v7954 = vpop.f32.mrf.mxu0
      %v7955 = vadd.f32 0.0, %v7954
      %v7956 = vpop.f32.mrf.mxu0
      %7957 = vmatprep.mubr.f32.mxu0 0.0
      %7958 = vmatmul.mubr.f32.gmra.mxu0 %v7766
      %v7959 = vpop.f32.mrf.mxu0
      %v7960 = vadd.f32 0.0, %v7959
      %v7961 = vpop.f32.mrf.mxu0
      %7962 = vmatprep.mubr.f32.mxu0 0.0
      %7963 = vmatmul.mubr.f32.gmra.mxu0 %v7769
      %v7964 = vpop.f32.mrf.mxu0
      %v7965 = vadd.f32 0.0, %v7964
      %v7966 = vpop.f32.mrf.mxu0
      %7967 = vmatprep.mubr.f32.mxu0 0.0
      %7968 = vmatmul.mubr.f32.gmra.mxu0 %v7772
      %v7969 = vpop.f32.mrf.mxu0
      %v7970 = vadd.f32 0.0, %v7969
      %v7971 = vpop.f32.mrf.mxu0
      %7972 = vmatprep.mubr.f32.mxu0 0.0
      %7973 = vmatmul.mubr.f32.gmra.mxu0 %v7775
      %v7974 = vpop.f32.mrf.mxu0
      %v7975 = vadd.f32 0.0, %v7974
      %v7976 = vpop.f32.mrf.mxu0
      %7977 = vmatprep.mubr.f32.mxu0 0.0
      %7978 = vmatmul.mubr.f32.gmra.mxu0 %v7778
      %v7979 = vpop.f32.mrf.mxu0
      %v7980 = vadd.f32 0.0, %v7979
      %v7981 = vpop.f32.mrf.mxu0
      %7982 = vmatprep.mubr.f32.mxu0 0.0
      %7983 = vmatmul.mubr.f32.gmra.mxu0 %v7781
      %v7984 = vpop.f32.mrf.mxu0
      %v7985 = vadd.f32 0.0, %v7984
      %v7986 = vpop.f32.mrf.mxu0
      %7987 = vmatprep.mubr.f32.mxu0 0.0
      %7988 = vmatmul.mubr.f32.gmra.mxu0 %v7784
      %v7989 = vpop.f32.mrf.mxu0
      %v7990 = vadd.f32 0.0, %v7989
      %v7991 = vpop.f32.mrf.mxu0
      %7992 = vmatprep.mubr.f32.mxu0 0.0
      %7993 = vmatmul.mubr.f32.gmra.mxu0 %v7787
      %v7994 = vpop.f32.mrf.mxu0
      %v7995 = vadd.f32 0.0, %v7994
      %v7996 = vpop.f32.mrf.mxu0
      %7997 = vmatprep.mubr.f32.mxu0 0.0
      %7998 = vmatmul.mubr.f32.gmra.mxu0 %v7790
      %v7999 = vpop.f32.mrf.mxu0
      %v8000 = vadd.f32 0.0, %v7999
      %v8001 = vpop.f32.mrf.mxu0
      %8002 = vmatprep.mubr.f32.mxu0 0.0
      %8003 = vmatmul.mubr.f32.gmra.mxu0 %v7793
      %v8004 = vpop.f32.mrf.mxu0
      %v8005 = vadd.f32 0.0, %v8004
      %v8006 = vpop.f32.mrf.mxu0
      %8007 = vmatprep.mubr.f32.mxu0 0.0
      %8008 = vmatmul.mubr.f32.gmra.mxu0 %v7796
      %v8009 = vpop.f32.mrf.mxu0
      %v8010 = vadd.f32 0.0, %v8009
      %v8011 = vpop.f32.mrf.mxu0
      %8012 = vmatprep.mubr.f32.mxu0 0.0
      %8013 = vmatmul.mubr.f32.gmra.mxu0 %v7799
      %v8014 = vpop.f32.mrf.mxu0
      %v8015 = vadd.f32 0.0, %v8014
      %v8016 = vpop.f32.mrf.mxu0
      %8017 = vmatprep.mubr.f32.mxu0 0.0
      %8018 = vmatmul.mubr.f32.gmra.mxu0 %v7802
      %v8019 = vpop.f32.mrf.mxu0
      %v8020 = vadd.f32 0.0, %v8019
      %v8021 = vpop.f32.mrf.mxu0
      %8022 = vmatprep.mubr.f32.mxu0 0.0
      %8023 = vmatmul.mubr.f32.gmra.mxu0 %v7805
      %v8024 = vpop.f32.mrf.mxu0
      %v8025 = vadd.f32 0.0, %v8024
      %v8026 = vpop.f32.mrf.mxu0
      %8027 = vmatprep.mubr.f32.mxu0 0.0
      %8028 = vmatmul.mubr.f32.gmra.mxu0 %v7808
      %v8029 = vpop.f32.mrf.mxu0
      %v8030 = vadd.f32 0.0, %v8029
      %v8031 = vpop.f32.mrf.mxu0
      %8032 = vmatprep.mubr.f32.mxu0 0.0
      %8033 = vmatmul.mubr.f32.gmra.mxu0 %v7811
      %v8034 = vpop.f32.mrf.mxu0
      %v8035 = vadd.f32 0.0, %v8034
      %v8036 = vpop.f32.mrf.mxu0
      %8037 = vdwg.mxu0
      %v8038 = vadd.f32 %v7616, %v7880
      %v8039 = vadd.f32 %v7617, %v7885
      %v8040 = vadd.f32 %v7618, %v7890
      %v8041 = vadd.f32 %v7619, %v7895
      %v8042 = vadd.f32 %v7620, %v7900
      %v8043 = vadd.f32 %v7621, %v7905
      %v8044 = vadd.f32 %v7622, %v7910
      %v8045 = vadd.f32 %v7623, %v7915
      %v8046 = vadd.f32 %v7624, %v7920
      %v8047 = vadd.f32 %v7625, %v7925
      %v8048 = vadd.f32 %v7626, %v7930
      %v8049 = vadd.f32 %v7627, %v7935
      %v8050 = vadd.f32 %v7628, %v7940
      %v8051 = vadd.f32 %v7629, %v7945
      %v8052 = vadd.f32 %v7630, %v7950
      %v8053 = vadd.f32 %v7631, %v7955
      %v8054 = vadd.f32 %v7632, %v7960
      %v8055 = vadd.f32 %v7633, %v7965
      %v8056 = vadd.f32 %v7634, %v7970
      %v8057 = vadd.f32 %v7635, %v7975
      %v8058 = vadd.f32 %v7636, %v7980
      %v8059 = vadd.f32 %v7637, %v7985
      %v8060 = vadd.f32 %v7638, %v7990
      %v8061 = vadd.f32 %v7639, %v7995
      %v8062 = vadd.f32 %v7640, %v8000
      %v8063 = vadd.f32 %v7641, %v8005
      %v8064 = vadd.f32 %v7642, %v8010
      %v8065 = vadd.f32 %v7643, %v8015
      %v8066 = vadd.f32 %v7644, %v8020
      %v8067 = vadd.f32 %v7645, %v8025
      %v8068 = vadd.f32 %v7646, %v8030
      %v8069 = vadd.f32 %v7647, %v8035
      %v8070 = vld [vmem:[#allocation3 + $0x27] sm:$0xff]
      %v8071 = vld [vmem:[#allocation3 + $0x2f] sm:$0xff]
      %v8072 = vld [vmem:[#allocation3 + $0x37] sm:$0xff]
      %v8073 = vld [vmem:[#allocation3 + $0x3f] sm:$0xff]
      %v8074 = vld [vmem:[#allocation3 + $0x47] sm:$0xff]
      %v8075 = vld [vmem:[#allocation3 + $0x4f] sm:$0xff]
      %v8076 = vld [vmem:[#allocation3 + $0x57] sm:$0xff]
      %v8077 = vld [vmem:[#allocation3 + $0x5f] sm:$0xff]
      %v8078 = vld [vmem:[#allocation3 + $0x67] sm:$0xff]
      %v8079 = vld [vmem:[#allocation3 + $0x6f] sm:$0xff]
      %v8080 = vld [vmem:[#allocation3 + $0x77] sm:$0xff]
      %v8081 = vld [vmem:[#allocation3 + $0x7f] sm:$0xff]
      %v8082 = vld [vmem:[#allocation3 + $0x87] sm:$0xff]
      %v8083 = vld [vmem:[#allocation3 + $0x8f] sm:$0xff]
      %v8084 = vld [vmem:[#allocation3 + $0x97] sm:$0xff]
      %v8085 = vld [vmem:[#allocation3 + $0x9f] sm:$0xff]
      %v8086 = vld [vmem:[#allocation3 + $0xa7] sm:$0xff]
      %v8087 = vld [vmem:[#allocation3 + $0xaf] sm:$0xff]
      %v8088 = vld [vmem:[#allocation3 + $0xb7] sm:$0xff]
      %v8089 = vld [vmem:[#allocation3 + $0xbf] sm:$0xff]
      %v8090 = vld [vmem:[#allocation3 + $0xc7] sm:$0xff]
      %v8091 = vld [vmem:[#allocation3 + $0xcf] sm:$0xff]
      %v8092 = vld [vmem:[#allocation3 + $0xd7] sm:$0xff]
      %v8093 = vld [vmem:[#allocation3 + $0xdf] sm:$0xff]
      %v8094 = vld [vmem:[#allocation3 + $0xe7] sm:$0xff]
      %v8095 = vld [vmem:[#allocation3 + $0xef] sm:$0xff]
      %v8096 = vld [vmem:[#allocation3 + $0xf7] sm:$0xff]
      %v8097 = vld [vmem:[#allocation3 + $0xff] sm:$0xff]
      %v8098 = vld [vmem:[#allocation3 + $0x107] sm:$0xff]
      %v8099 = vld [vmem:[#allocation3 + $0x10f] sm:$0xff]
      %v8100 = vld [vmem:[#allocation3 + $0x117] sm:$0xff]
      %v8101 = vld [vmem:[#allocation3 + $0x11f] sm:$0xff]
      %v8102 = vsel %vm3977, %v8070, 0.0
      %v8103 = vsel %vm3978, %v8071, 0.0
      %v8104 = vsel %vm3979, %v8072, 0.0
      %v8105 = vsel %vm3980, %v8073, 0.0
      %v8106 = vsel %vm3981, %v8074, 0.0
      %v8107 = vsel %vm3982, %v8075, 0.0
      %v8108 = vsel %vm3983, %v8076, 0.0
      %v8109 = vsel %vm3984, %v8077, 0.0
      %v8110 = vsel %vm3985, %v8078, 0.0
      %v8111 = vsel %vm3986, %v8079, 0.0
      %v8112 = vsel %vm3987, %v8080, 0.0
      %v8113 = vsel %vm3988, %v8081, 0.0
      %v8114 = vsel %vm3989, %v8082, 0.0
      %v8115 = vsel %vm3990, %v8083, 0.0
      %v8116 = vsel %vm3991, %v8084, 0.0
      %v8117 = vsel %vm3992, %v8085, 0.0
      %v8118 = vsel %vm3993, %v8086, 0.0
      %v8119 = vsel %vm3994, %v8087, 0.0
      %v8120 = vsel %vm3995, %v8088, 0.0
      %v8121 = vsel %vm3996, %v8089, 0.0
      %v8122 = vsel %vm3997, %v8090, 0.0
      %v8123 = vsel %vm3998, %v8091, 0.0
      %v8124 = vsel %vm3999, %v8092, 0.0
      %v8125 = vsel %vm4000, %v8093, 0.0
      %v8126 = vsel %vm4001, %v8094, 0.0
      %v8127 = vsel %vm4002, %v8095, 0.0
      %v8128 = vsel %vm4003, %v8096, 0.0
      %v8129 = vsel %vm4004, %v8097, 0.0
      %v8130 = vsel %vm4005, %v8098, 0.0
      %v8131 = vsel %vm4006, %v8099, 0.0
      %v8132 = vsel %vm4007, %v8100, 0.0
      %v8133 = vsel %vm4008, %v8101, 0.0
      %s8134 = scalar_lea.vmem %s4, 192
      %v8135 = vld [vmem:[%s8134] sm:$0xff]
      %v8136 = vld [vmem:[%s8134 + $0x8] sm:$0xff]
      %v8137 = vld [vmem:[%s8134 + $0x10] sm:$0xff]
      %v8138 = vld [vmem:[%s8134 + $0x18] sm:$0xff]
      %v8140 = vsel %vm5531, %v8102, 0
      %v8143 = vsel %vm5531, %v8103, 0
      %v8146 = vsel %vm5531, %v8104, 0
      %v8149 = vsel %vm5531, %v8105, 0
      %v8152 = vsel %vm5531, %v8106, 0
      %v8155 = vsel %vm5531, %v8107, 0
      %v8158 = vsel %vm5531, %v8108, 0
      %v8161 = vsel %vm5531, %v8109, 0
      %v8164 = vsel %vm5531, %v8110, 0
      %v8167 = vsel %vm5531, %v8111, 0
      %v8170 = vsel %vm5531, %v8112, 0
      %v8173 = vsel %vm5531, %v8113, 0
      %v8176 = vsel %vm5531, %v8114, 0
      %v8179 = vsel %vm5531, %v8115, 0
      %v8182 = vsel %vm5531, %v8116, 0
      %v8185 = vsel %vm5531, %v8117, 0
      %v8188 = vsel %vm5531, %v8118, 0
      %v8191 = vsel %vm5531, %v8119, 0
      %v8194 = vsel %vm5531, %v8120, 0
      %v8197 = vsel %vm5531, %v8121, 0
      %v8200 = vsel %vm5531, %v8122, 0
      %v8203 = vsel %vm5531, %v8123, 0
      %v8206 = vsel %vm5531, %v8124, 0
      %v8209 = vsel %vm5531, %v8125, 0
      %v8212 = vsel %vm5531, %v8126, 0
      %v8215 = vsel %vm5531, %v8127, 0
      %v8218 = vsel %vm5531, %v8128, 0
      %v8221 = vsel %vm5531, %v8129, 0
      %v8224 = vsel %vm5531, %v8130, 0
      %v8227 = vsel %vm5531, %v8131, 0
      %v8230 = vsel %vm5531, %v8132, 0
      %v8233 = vsel %vm5531, %v8133, 0
      %8235 = vmatprep.subr.mxu0 0.0
      %8236 = vmatpush1.msra.mxu0 0.0
      %8237 = vmatprep.subr.mxu0 0.0
      %8238 = vmatpush1.msra.mxu0 0.0
      %8239 = vmatprep.subr.mxu0 0.0
      %8240 = vmatpush1.msra.mxu0 0.0
      %8241 = vmatprep.subr.mxu0 0.0
      %8242 = vmatpush1.msra.mxu0 0.0
      %8243 = vmatprep.subr.mxu0 0.0
      %8244 = vmatpush1.msra.mxu0 0.0
      %8245 = vmatprep.subr.mxu0 0.0
      %8246 = vmatpush1.msra.mxu0 0.0
      %8247 = vmatprep.subr.mxu0 0.0
      %8248 = vmatpush1.msra.mxu0 0.0
      %8249 = vmatprep.subr.mxu0 0.0
      %8250 = vmatpush1.msra.mxu0 0.0
      %8251 = vmatprep.subr.mxu0 0.0
      %8252 = vmatpush1.msra.mxu0 0.0
      %8253 = vmatprep.subr.mxu0 0.0
      %8254 = vmatpush1.msra.mxu0 0.0
      %8255 = vmatprep.subr.mxu0 0.0
      %8256 = vmatpush1.msra.mxu0 0.0
      %8257 = vmatprep.subr.mxu0 0.0
      %8258 = vmatpush1.msra.mxu0 0.0
      %8259 = vmatprep.subr.mxu0 0.0
      %8260 = vmatpush1.msra.mxu0 %v8138
      %8261 = vmatprep.subr.mxu0 0.0
      %8262 = vmatpush1.msra.mxu0 %v8137
      %8263 = vmatprep.subr.mxu0 0.0
      %8264 = vmatpush1.msra.mxu0 %v8136
      %8265 = vmatprep.subr.mxu0 0.0
      %8266 = vmatpush1.msra.mxu0 %v8135
      %8267 = vmatprep.subr.mxu0 0.0
      %8268 = vmatpush2.msra.mxu0 0.0
      %8269 = vmatprep.subr.mxu0 0.0
      %8270 = vmatpush2.msra.mxu0 0.0
      %8271 = vmatprep.subr.mxu0 0.0
      %8272 = vmatpush2.msra.mxu0 0.0
      %8273 = vmatprep.subr.mxu0 0.0
      %8274 = vmatpush2.msra.mxu0 0.0
      %8275 = vmatprep.subr.mxu0 0.0
      %8276 = vmatpush2.msra.mxu0 0.0
      %8277 = vmatprep.subr.mxu0 0.0
      %8278 = vmatpush2.msra.mxu0 0.0
      %8279 = vmatprep.subr.mxu0 0.0
      %8280 = vmatpush2.msra.mxu0 0.0
      %8281 = vmatprep.subr.mxu0 0.0
      %8282 = vmatpush2.msra.mxu0 0.0
      %8283 = vmatprep.subr.mxu0 0.0
      %8284 = vmatpush2.msra.mxu0 0.0
      %8285 = vmatprep.subr.mxu0 0.0
      %8286 = vmatpush2.msra.mxu0 0.0
      %8287 = vmatprep.subr.mxu0 0.0
      %8288 = vmatpush2.msra.mxu0 0.0
      %8289 = vmatprep.subr.mxu0 0.0
      %8290 = vmatpush2.msra.mxu0 0.0
      %8291 = vmatprep.subr.mxu0 0.0
      %8292 = vmatpush2.msra.mxu0 0.0
      %8293 = vmatprep.subr.mxu0 0.0
      %8294 = vmatpush2.msra.mxu0 0.0
      %8295 = vmatprep.subr.mxu0 0.0
      %8296 = vmatpush2.msra.mxu0 0.0
      %8297 = vmatprep.subr.mxu0 0.0
      %8298 = vmatpush2.msra.mxu0 0.0
      %8299 = vmatprep.mubr.f32.mxu0 0.0
      %8300 = vmatmul.mubr.f32.gmra.mxu0 %v8140
      %v8301 = vpop.f32.mrf.mxu0
      %v8302 = vadd.f32 0.0, %v8301
      %v8303 = vpop.f32.mrf.mxu0
      %8304 = vmatprep.mubr.f32.mxu0 0.0
      %8305 = vmatmul.mubr.f32.gmra.mxu0 %v8143
      %v8306 = vpop.f32.mrf.mxu0
      %v8307 = vadd.f32 0.0, %v8306
      %v8308 = vpop.f32.mrf.mxu0
      %8309 = vmatprep.mubr.f32.mxu0 0.0
      %8310 = vmatmul.mubr.f32.gmra.mxu0 %v8146
      %v8311 = vpop.f32.mrf.mxu0
      %v8312 = vadd.f32 0.0, %v8311
      %v8313 = vpop.f32.mrf.mxu0
      %8314 = vmatprep.mubr.f32.mxu0 0.0
      %8315 = vmatmul.mubr.f32.gmra.mxu0 %v8149
      %v8316 = vpop.f32.mrf.mxu0
      %v8317 = vadd.f32 0.0, %v8316
      %v8318 = vpop.f32.mrf.mxu0
      %8319 = vmatprep.mubr.f32.mxu0 0.0
      %8320 = vmatmul.mubr.f32.gmra.mxu0 %v8152
      %v8321 = vpop.f32.mrf.mxu0
      %v8322 = vadd.f32 0.0, %v8321
      %v8323 = vpop.f32.mrf.mxu0
      %8324 = vmatprep.mubr.f32.mxu0 0.0
      %8325 = vmatmul.mubr.f32.gmra.mxu0 %v8155
      %v8326 = vpop.f32.mrf.mxu0
      %v8327 = vadd.f32 0.0, %v8326
      %v8328 = vpop.f32.mrf.mxu0
      %8329 = vmatprep.mubr.f32.mxu0 0.0
      %8330 = vmatmul.mubr.f32.gmra.mxu0 %v8158
      %v8331 = vpop.f32.mrf.mxu0
      %v8332 = vadd.f32 0.0, %v8331
      %v8333 = vpop.f32.mrf.mxu0
      %8334 = vmatprep.mubr.f32.mxu0 0.0
      %8335 = vmatmul.mubr.f32.gmra.mxu0 %v8161
      %v8336 = vpop.f32.mrf.mxu0
      %v8337 = vadd.f32 0.0, %v8336
      %v8338 = vpop.f32.mrf.mxu0
      %8339 = vmatprep.mubr.f32.mxu0 0.0
      %8340 = vmatmul.mubr.f32.gmra.mxu0 %v8164
      %v8341 = vpop.f32.mrf.mxu0
      %v8342 = vadd.f32 0.0, %v8341
      %v8343 = vpop.f32.mrf.mxu0
      %8344 = vmatprep.mubr.f32.mxu0 0.0
      %8345 = vmatmul.mubr.f32.gmra.mxu0 %v8167
      %v8346 = vpop.f32.mrf.mxu0
      %v8347 = vadd.f32 0.0, %v8346
      %v8348 = vpop.f32.mrf.mxu0
      %8349 = vmatprep.mubr.f32.mxu0 0.0
      %8350 = vmatmul.mubr.f32.gmra.mxu0 %v8170
      %v8351 = vpop.f32.mrf.mxu0
      %v8352 = vadd.f32 0.0, %v8351
      %v8353 = vpop.f32.mrf.mxu0
      %8354 = vmatprep.mubr.f32.mxu0 0.0
      %8355 = vmatmul.mubr.f32.gmra.mxu0 %v8173
      %v8356 = vpop.f32.mrf.mxu0
      %v8357 = vadd.f32 0.0, %v8356
      %v8358 = vpop.f32.mrf.mxu0
      %8359 = vmatprep.mubr.f32.mxu0 0.0
      %8360 = vmatmul.mubr.f32.gmra.mxu0 %v8176
      %v8361 = vpop.f32.mrf.mxu0
      %v8362 = vadd.f32 0.0, %v8361
      %v8363 = vpop.f32.mrf.mxu0
      %8364 = vmatprep.mubr.f32.mxu0 0.0
      %8365 = vmatmul.mubr.f32.gmra.mxu0 %v8179
      %v8366 = vpop.f32.mrf.mxu0
      %v8367 = vadd.f32 0.0, %v8366
      %v8368 = vpop.f32.mrf.mxu0
      %8369 = vmatprep.mubr.f32.mxu0 0.0
      %8370 = vmatmul.mubr.f32.gmra.mxu0 %v8182
      %v8371 = vpop.f32.mrf.mxu0
      %v8372 = vadd.f32 0.0, %v8371
      %v8373 = vpop.f32.mrf.mxu0
      %8374 = vmatprep.mubr.f32.mxu0 0.0
      %8375 = vmatmul.mubr.f32.gmra.mxu0 %v8185
      %v8376 = vpop.f32.mrf.mxu0
      %v8377 = vadd.f32 0.0, %v8376
      %v8378 = vpop.f32.mrf.mxu0
      %8379 = vmatprep.mubr.f32.mxu0 0.0
      %8380 = vmatmul.mubr.f32.gmra.mxu0 %v8188
      %v8381 = vpop.f32.mrf.mxu0
      %v8382 = vadd.f32 0.0, %v8381
      %v8383 = vpop.f32.mrf.mxu0
      %8384 = vmatprep.mubr.f32.mxu0 0.0
      %8385 = vmatmul.mubr.f32.gmra.mxu0 %v8191
      %v8386 = vpop.f32.mrf.mxu0
      %v8387 = vadd.f32 0.0, %v8386
      %v8388 = vpop.f32.mrf.mxu0
      %8389 = vmatprep.mubr.f32.mxu0 0.0
      %8390 = vmatmul.mubr.f32.gmra.mxu0 %v8194
      %v8391 = vpop.f32.mrf.mxu0
      %v8392 = vadd.f32 0.0, %v8391
      %v8393 = vpop.f32.mrf.mxu0
      %8394 = vmatprep.mubr.f32.mxu0 0.0
      %8395 = vmatmul.mubr.f32.gmra.mxu0 %v8197
      %v8396 = vpop.f32.mrf.mxu0
      %v8397 = vadd.f32 0.0, %v8396
      %v8398 = vpop.f32.mrf.mxu0
      %8399 = vmatprep.mubr.f32.mxu0 0.0
      %8400 = vmatmul.mubr.f32.gmra.mxu0 %v8200
      %v8401 = vpop.f32.mrf.mxu0
      %v8402 = vadd.f32 0.0, %v8401
      %v8403 = vpop.f32.mrf.mxu0
      %8404 = vmatprep.mubr.f32.mxu0 0.0
      %8405 = vmatmul.mubr.f32.gmra.mxu0 %v8203
      %v8406 = vpop.f32.mrf.mxu0
      %v8407 = vadd.f32 0.0, %v8406
      %v8408 = vpop.f32.mrf.mxu0
      %8409 = vmatprep.mubr.f32.mxu0 0.0
      %8410 = vmatmul.mubr.f32.gmra.mxu0 %v8206
      %v8411 = vpop.f32.mrf.mxu0
      %v8412 = vadd.f32 0.0, %v8411
      %v8413 = vpop.f32.mrf.mxu0
      %8414 = vmatprep.mubr.f32.mxu0 0.0
      %8415 = vmatmul.mubr.f32.gmra.mxu0 %v8209
      %v8416 = vpop.f32.mrf.mxu0
      %v8417 = vadd.f32 0.0, %v8416
      %v8418 = vpop.f32.mrf.mxu0
      %8419 = vmatprep.mubr.f32.mxu0 0.0
      %8420 = vmatmul.mubr.f32.gmra.mxu0 %v8212
      %v8421 = vpop.f32.mrf.mxu0
      %v8422 = vadd.f32 0.0, %v8421
      %v8423 = vpop.f32.mrf.mxu0
      %8424 = vmatprep.mubr.f32.mxu0 0.0
      %8425 = vmatmul.mubr.f32.gmra.mxu0 %v8215
      %v8426 = vpop.f32.mrf.mxu0
      %v8427 = vadd.f32 0.0, %v8426
      %v8428 = vpop.f32.mrf.mxu0
      %8429 = vmatprep.mubr.f32.mxu0 0.0
      %8430 = vmatmul.mubr.f32.gmra.mxu0 %v8218
      %v8431 = vpop.f32.mrf.mxu0
      %v8432 = vadd.f32 0.0, %v8431
      %v8433 = vpop.f32.mrf.mxu0
      %8434 = vmatprep.mubr.f32.mxu0 0.0
      %8435 = vmatmul.mubr.f32.gmra.mxu0 %v8221
      %v8436 = vpop.f32.mrf.mxu0
      %v8437 = vadd.f32 0.0, %v8436
      %v8438 = vpop.f32.mrf.mxu0
      %8439 = vmatprep.mubr.f32.mxu0 0.0
      %8440 = vmatmul.mubr.f32.gmra.mxu0 %v8224
      %v8441 = vpop.f32.mrf.mxu0
      %v8442 = vadd.f32 0.0, %v8441
      %v8443 = vpop.f32.mrf.mxu0
      %8444 = vmatprep.mubr.f32.mxu0 0.0
      %8445 = vmatmul.mubr.f32.gmra.mxu0 %v8227
      %v8446 = vpop.f32.mrf.mxu0
      %v8447 = vadd.f32 0.0, %v8446
      %v8448 = vpop.f32.mrf.mxu0
      %8449 = vmatprep.mubr.f32.mxu0 0.0
      %8450 = vmatmul.mubr.f32.gmra.mxu0 %v8230
      %v8451 = vpop.f32.mrf.mxu0
      %v8452 = vadd.f32 0.0, %v8451
      %v8453 = vpop.f32.mrf.mxu0
      %8454 = vmatprep.mubr.f32.mxu0 0.0
      %8455 = vmatmul.mubr.f32.gmra.mxu0 %v8233
      %v8456 = vpop.f32.mrf.mxu0
      %v8457 = vadd.f32 0.0, %v8456
      %v8458 = vpop.f32.mrf.mxu0
      %8459 = vdwg.mxu0
      %v8460 = vadd.f32 %v8038, %v8302
      %v8461 = vadd.f32 %v8039, %v8307
      %v8462 = vadd.f32 %v8040, %v8312
      %v8463 = vadd.f32 %v8041, %v8317
      %v8464 = vadd.f32 %v8042, %v8322
      %v8465 = vadd.f32 %v8043, %v8327
      %v8466 = vadd.f32 %v8044, %v8332
      %v8467 = vadd.f32 %v8045, %v8337
      %v8468 = vadd.f32 %v8046, %v8342
      %v8469 = vadd.f32 %v8047, %v8347
      %v8470 = vadd.f32 %v8048, %v8352
      %v8471 = vadd.f32 %v8049, %v8357
      %v8472 = vadd.f32 %v8050, %v8362
      %v8473 = vadd.f32 %v8051, %v8367
      %v8474 = vadd.f32 %v8052, %v8372
      %v8475 = vadd.f32 %v8053, %v8377
      %v8476 = vadd.f32 %v8054, %v8382
      %v8477 = vadd.f32 %v8055, %v8387
      %v8478 = vadd.f32 %v8056, %v8392
      %v8479 = vadd.f32 %v8057, %v8397
      %v8480 = vadd.f32 %v8058, %v8402
      %v8481 = vadd.f32 %v8059, %v8407
      %v8482 = vadd.f32 %v8060, %v8412
      %v8483 = vadd.f32 %v8061, %v8417
      %v8484 = vadd.f32 %v8062, %v8422
      %v8485 = vadd.f32 %v8063, %v8427
      %v8486 = vadd.f32 %v8064, %v8432
      %v8487 = vadd.f32 %v8065, %v8437
      %v8488 = vadd.f32 %v8066, %v8442
      %v8489 = vadd.f32 %v8067, %v8447
      %v8490 = vadd.f32 %v8068, %v8452
      %v8491 = vadd.f32 %v8069, %v8457
      %v8492 = vld [vmem:[#allocation3 + $0x28] sm:$0xff]
      %v8493 = vld [vmem:[#allocation3 + $0x30] sm:$0xff]
      %v8494 = vld [vmem:[#allocation3 + $0x38] sm:$0xff]
      %v8495 = vld [vmem:[#allocation3 + $0x40] sm:$0xff]
      %v8496 = vld [vmem:[#allocation3 + $0x48] sm:$0xff]
      %v8497 = vld [vmem:[#allocation3 + $0x50] sm:$0xff]
      %v8498 = vld [vmem:[#allocation3 + $0x58] sm:$0xff]
      %v8499 = vld [vmem:[#allocation3 + $0x60] sm:$0xff]
      %v8500 = vld [vmem:[#allocation3 + $0x68] sm:$0xff]
      %v8501 = vld [vmem:[#allocation3 + $0x70] sm:$0xff]
      %v8502 = vld [vmem:[#allocation3 + $0x78] sm:$0xff]
      %v8503 = vld [vmem:[#allocation3 + $0x80] sm:$0xff]
      %v8504 = vld [vmem:[#allocation3 + $0x88] sm:$0xff]
      %v8505 = vld [vmem:[#allocation3 + $0x90] sm:$0xff]
      %v8506 = vld [vmem:[#allocation3 + $0x98] sm:$0xff]
      %v8507 = vld [vmem:[#allocation3 + $0xa0] sm:$0xff]
      %v8508 = vld [vmem:[#allocation3 + $0xa8] sm:$0xff]
      %v8509 = vld [vmem:[#allocation3 + $0xb0] sm:$0xff]
      %v8510 = vld [vmem:[#allocation3 + $0xb8] sm:$0xff]
      %v8511 = vld [vmem:[#allocation3 + $0xc0] sm:$0xff]
      %v8512 = vld [vmem:[#allocation3 + $0xc8] sm:$0xff]
      %v8513 = vld [vmem:[#allocation3 + $0xd0] sm:$0xff]
      %v8514 = vld [vmem:[#allocation3 + $0xd8] sm:$0xff]
      %v8515 = vld [vmem:[#allocation3 + $0xe0] sm:$0xff]
      %v8516 = vld [vmem:[#allocation3 + $0xe8] sm:$0xff]
      %v8517 = vld [vmem:[#allocation3 + $0xf0] sm:$0xff]
      %v8518 = vld [vmem:[#allocation3 + $0xf8] sm:$0xff]
      %v8519 = vld [vmem:[#allocation3 + $0x100] sm:$0xff]
      %v8520 = vld [vmem:[#allocation3 + $0x108] sm:$0xff]
      %v8521 = vld [vmem:[#allocation3 + $0x110] sm:$0xff]
      %v8522 = vld [vmem:[#allocation3 + $0x118] sm:$0xff]
      %v8523 = vld [vmem:[#allocation3 + $0x120] sm:$0xff]
      %v8524 = vsel %vm4463, %v8492, 0.0
      %v8525 = vsel %vm4464, %v8493, 0.0
      %v8526 = vsel %vm4465, %v8494, 0.0
      %v8527 = vsel %vm4466, %v8495, 0.0
      %v8528 = vsel %vm4467, %v8496, 0.0
      %v8529 = vsel %vm4468, %v8497, 0.0
      %v8530 = vsel %vm4469, %v8498, 0.0
      %v8531 = vsel %vm4470, %v8499, 0.0
      %v8532 = vsel %vm4471, %v8500, 0.0
      %v8533 = vsel %vm4472, %v8501, 0.0
      %v8534 = vsel %vm4473, %v8502, 0.0
      %v8535 = vsel %vm4474, %v8503, 0.0
      %v8536 = vsel %vm4475, %v8504, 0.0
      %v8537 = vsel %vm4476, %v8505, 0.0
      %v8538 = vsel %vm4477, %v8506, 0.0
      %v8539 = vsel %vm4478, %v8507, 0.0
      %v8540 = vsel %vm4479, %v8508, 0.0
      %v8541 = vsel %vm4480, %v8509, 0.0
      %v8542 = vsel %vm4481, %v8510, 0.0
      %v8543 = vsel %vm4482, %v8511, 0.0
      %v8544 = vsel %vm4483, %v8512, 0.0
      %v8545 = vsel %vm4484, %v8513, 0.0
      %v8546 = vsel %vm4485, %v8514, 0.0
      %v8547 = vsel %vm4486, %v8515, 0.0
      %v8548 = vsel %vm4487, %v8516, 0.0
      %v8549 = vsel %vm4488, %v8517, 0.0
      %v8550 = vsel %vm4489, %v8518, 0.0
      %v8551 = vsel %vm4490, %v8519, 0.0
      %v8552 = vsel %vm4491, %v8520, 0.0
      %v8553 = vsel %vm4492, %v8521, 0.0
      %v8554 = vsel %vm4493, %v8522, 0.0
      %v8555 = vsel %vm4494, %v8523, 0.0
      %s8556 = scalar_lea.vmem %s4, 224
      %v8557 = vld [vmem:[%s8556] sm:$0xff]
      %v8558 = vld [vmem:[%s8556 + $0x8] sm:$0xff]
      %v8559 = vld [vmem:[%s8556 + $0x10] sm:$0xff]
      %v8560 = vld [vmem:[%s8556 + $0x18] sm:$0xff]
      %v8562 = vsel %vm5531, %v8524, 0
      %v8565 = vsel %vm5531, %v8525, 0
      %v8568 = vsel %vm5531, %v8526, 0
      %v8571 = vsel %vm5531, %v8527, 0
      %v8574 = vsel %vm5531, %v8528, 0
      %v8577 = vsel %vm5531, %v8529, 0
      %v8580 = vsel %vm5531, %v8530, 0
      %v8583 = vsel %vm5531, %v8531, 0
      %v8586 = vsel %vm5531, %v8532, 0
      %v8589 = vsel %vm5531, %v8533, 0
      %v8592 = vsel %vm5531, %v8534, 0
      %v8595 = vsel %vm5531, %v8535, 0
      %v8598 = vsel %vm5531, %v8536, 0
      %v8601 = vsel %vm5531, %v8537, 0
      %v8604 = vsel %vm5531, %v8538, 0
      %v8607 = vsel %vm5531, %v8539, 0
      %v8610 = vsel %vm5531, %v8540, 0
      %v8613 = vsel %vm5531, %v8541, 0
      %v8616 = vsel %vm5531, %v8542, 0
      %v8619 = vsel %vm5531, %v8543, 0
      %v8622 = vsel %vm5531, %v8544, 0
      %v8625 = vsel %vm5531, %v8545, 0
      %v8628 = vsel %vm5531, %v8546, 0
      %v8631 = vsel %vm5531, %v8547, 0
      %v8634 = vsel %vm5531, %v8548, 0
      %v8637 = vsel %vm5531, %v8549, 0
      %v8640 = vsel %vm5531, %v8550, 0
      %v8643 = vsel %vm5531, %v8551, 0
      %v8646 = vsel %vm5531, %v8552, 0
      %v8649 = vsel %vm5531, %v8553, 0
      %v8652 = vsel %vm5531, %v8554, 0
      %v8655 = vsel %vm5531, %v8555, 0
      %8657 = vmatprep.subr.mxu0 0.0
      %8658 = vmatpush1.msra.mxu0 0.0
      %8659 = vmatprep.subr.mxu0 0.0
      %8660 = vmatpush1.msra.mxu0 0.0
      %8661 = vmatprep.subr.mxu0 0.0
      %8662 = vmatpush1.msra.mxu0 0.0
      %8663 = vmatprep.subr.mxu0 0.0
      %8664 = vmatpush1.msra.mxu0 0.0
      %8665 = vmatprep.subr.mxu0 0.0
      %8666 = vmatpush1.msra.mxu0 0.0
      %8667 = vmatprep.subr.mxu0 0.0
      %8668 = vmatpush1.msra.mxu0 0.0
      %8669 = vmatprep.subr.mxu0 0.0
      %8670 = vmatpush1.msra.mxu0 0.0
      %8671 = vmatprep.subr.mxu0 0.0
      %8672 = vmatpush1.msra.mxu0 0.0
      %8673 = vmatprep.subr.mxu0 0.0
      %8674 = vmatpush1.msra.mxu0 0.0
      %8675 = vmatprep.subr.mxu0 0.0
      %8676 = vmatpush1.msra.mxu0 0.0
      %8677 = vmatprep.subr.mxu0 0.0
      %8678 = vmatpush1.msra.mxu0 0.0
      %8679 = vmatprep.subr.mxu0 0.0
      %8680 = vmatpush1.msra.mxu0 0.0
      %8681 = vmatprep.subr.mxu0 0.0
      %8682 = vmatpush1.msra.mxu0 %v8560
      %8683 = vmatprep.subr.mxu0 0.0
      %8684 = vmatpush1.msra.mxu0 %v8559
      %8685 = vmatprep.subr.mxu0 0.0
      %8686 = vmatpush1.msra.mxu0 %v8558
      %8687 = vmatprep.subr.mxu0 0.0
      %8688 = vmatpush1.msra.mxu0 %v8557
      %8689 = vmatprep.subr.mxu0 0.0
      %8690 = vmatpush2.msra.mxu0 0.0
      %8691 = vmatprep.subr.mxu0 0.0
      %8692 = vmatpush2.msra.mxu0 0.0
      %8693 = vmatprep.subr.mxu0 0.0
      %8694 = vmatpush2.msra.mxu0 0.0
      %8695 = vmatprep.subr.mxu0 0.0
      %8696 = vmatpush2.msra.mxu0 0.0
      %8697 = vmatprep.subr.mxu0 0.0
      %8698 = vmatpush2.msra.mxu0 0.0
      %8699 = vmatprep.subr.mxu0 0.0
      %8700 = vmatpush2.msra.mxu0 0.0
      %8701 = vmatprep.subr.mxu0 0.0
      %8702 = vmatpush2.msra.mxu0 0.0
      %8703 = vmatprep.subr.mxu0 0.0
      %8704 = vmatpush2.msra.mxu0 0.0
      %8705 = vmatprep.subr.mxu0 0.0
      %8706 = vmatpush2.msra.mxu0 0.0
      %8707 = vmatprep.subr.mxu0 0.0
      %8708 = vmatpush2.msra.mxu0 0.0
      %8709 = vmatprep.subr.mxu0 0.0
      %8710 = vmatpush2.msra.mxu0 0.0
      %8711 = vmatprep.subr.mxu0 0.0
      %8712 = vmatpush2.msra.mxu0 0.0
      %8713 = vmatprep.subr.mxu0 0.0
      %8714 = vmatpush2.msra.mxu0 0.0
      %8715 = vmatprep.subr.mxu0 0.0
      %8716 = vmatpush2.msra.mxu0 0.0
      %8717 = vmatprep.subr.mxu0 0.0
      %8718 = vmatpush2.msra.mxu0 0.0
      %8719 = vmatprep.subr.mxu0 0.0
      %8720 = vmatpush2.msra.mxu0 0.0
      %8721 = vmatprep.mubr.f32.mxu0 0.0
      %8722 = vmatmul.mubr.f32.gmra.mxu0 %v8562
      %v8723 = vpop.f32.mrf.mxu0
      %v8724 = vadd.f32 0.0, %v8723
      %v8725 = vpop.f32.mrf.mxu0
      %8726 = vmatprep.mubr.f32.mxu0 0.0
      %8727 = vmatmul.mubr.f32.gmra.mxu0 %v8565
      %v8728 = vpop.f32.mrf.mxu0
      %v8729 = vadd.f32 0.0, %v8728
      %v8730 = vpop.f32.mrf.mxu0
      %8731 = vmatprep.mubr.f32.mxu0 0.0
      %8732 = vmatmul.mubr.f32.gmra.mxu0 %v8568
      %v8733 = vpop.f32.mrf.mxu0
      %v8734 = vadd.f32 0.0, %v8733
      %v8735 = vpop.f32.mrf.mxu0
      %8736 = vmatprep.mubr.f32.mxu0 0.0
      %8737 = vmatmul.mubr.f32.gmra.mxu0 %v8571
      %v8738 = vpop.f32.mrf.mxu0
      %v8739 = vadd.f32 0.0, %v8738
      %v8740 = vpop.f32.mrf.mxu0
      %8741 = vmatprep.mubr.f32.mxu0 0.0
      %8742 = vmatmul.mubr.f32.gmra.mxu0 %v8574
      %v8743 = vpop.f32.mrf.mxu0
      %v8744 = vadd.f32 0.0, %v8743
      %v8745 = vpop.f32.mrf.mxu0
      %8746 = vmatprep.mubr.f32.mxu0 0.0
      %8747 = vmatmul.mubr.f32.gmra.mxu0 %v8577
      %v8748 = vpop.f32.mrf.mxu0
      %v8749 = vadd.f32 0.0, %v8748
      %v8750 = vpop.f32.mrf.mxu0
      %8751 = vmatprep.mubr.f32.mxu0 0.0
      %8752 = vmatmul.mubr.f32.gmra.mxu0 %v8580
      %v8753 = vpop.f32.mrf.mxu0
      %v8754 = vadd.f32 0.0, %v8753
      %v8755 = vpop.f32.mrf.mxu0
      %8756 = vmatprep.mubr.f32.mxu0 0.0
      %8757 = vmatmul.mubr.f32.gmra.mxu0 %v8583
      %v8758 = vpop.f32.mrf.mxu0
      %v8759 = vadd.f32 0.0, %v8758
      %v8760 = vpop.f32.mrf.mxu0
      %8761 = vmatprep.mubr.f32.mxu0 0.0
      %8762 = vmatmul.mubr.f32.gmra.mxu0 %v8586
      %v8763 = vpop.f32.mrf.mxu0
      %v8764 = vadd.f32 0.0, %v8763
      %v8765 = vpop.f32.mrf.mxu0
      %8766 = vmatprep.mubr.f32.mxu0 0.0
      %8767 = vmatmul.mubr.f32.gmra.mxu0 %v8589
      %v8768 = vpop.f32.mrf.mxu0
      %v8769 = vadd.f32 0.0, %v8768
      %v8770 = vpop.f32.mrf.mxu0
      %8771 = vmatprep.mubr.f32.mxu0 0.0
      %8772 = vmatmul.mubr.f32.gmra.mxu0 %v8592
      %v8773 = vpop.f32.mrf.mxu0
      %v8774 = vadd.f32 0.0, %v8773
      %v8775 = vpop.f32.mrf.mxu0
      %8776 = vmatprep.mubr.f32.mxu0 0.0
      %8777 = vmatmul.mubr.f32.gmra.mxu0 %v8595
      %v8778 = vpop.f32.mrf.mxu0
      %v8779 = vadd.f32 0.0, %v8778
      %v8780 = vpop.f32.mrf.mxu0
      %8781 = vmatprep.mubr.f32.mxu0 0.0
      %8782 = vmatmul.mubr.f32.gmra.mxu0 %v8598
      %v8783 = vpop.f32.mrf.mxu0
      %v8784 = vadd.f32 0.0, %v8783
      %v8785 = vpop.f32.mrf.mxu0
      %8786 = vmatprep.mubr.f32.mxu0 0.0
      %8787 = vmatmul.mubr.f32.gmra.mxu0 %v8601
      %v8788 = vpop.f32.mrf.mxu0
      %v8789 = vadd.f32 0.0, %v8788
      %v8790 = vpop.f32.mrf.mxu0
      %8791 = vmatprep.mubr.f32.mxu0 0.0
      %8792 = vmatmul.mubr.f32.gmra.mxu0 %v8604
      %v8793 = vpop.f32.mrf.mxu0
      %v8794 = vadd.f32 0.0, %v8793
      %v8795 = vpop.f32.mrf.mxu0
      %8796 = vmatprep.mubr.f32.mxu0 0.0
      %8797 = vmatmul.mubr.f32.gmra.mxu0 %v8607
      %v8798 = vpop.f32.mrf.mxu0
      %v8799 = vadd.f32 0.0, %v8798
      %v8800 = vpop.f32.mrf.mxu0
      %8801 = vmatprep.mubr.f32.mxu0 0.0
      %8802 = vmatmul.mubr.f32.gmra.mxu0 %v8610
      %v8803 = vpop.f32.mrf.mxu0
      %v8804 = vadd.f32 0.0, %v8803
      %v8805 = vpop.f32.mrf.mxu0
      %8806 = vmatprep.mubr.f32.mxu0 0.0
      %8807 = vmatmul.mubr.f32.gmra.mxu0 %v8613
      %v8808 = vpop.f32.mrf.mxu0
      %v8809 = vadd.f32 0.0, %v8808
      %v8810 = vpop.f32.mrf.mxu0
      %8811 = vmatprep.mubr.f32.mxu0 0.0
      %8812 = vmatmul.mubr.f32.gmra.mxu0 %v8616
      %v8813 = vpop.f32.mrf.mxu0
      %v8814 = vadd.f32 0.0, %v8813
      %v8815 = vpop.f32.mrf.mxu0
      %8816 = vmatprep.mubr.f32.mxu0 0.0
      %8817 = vmatmul.mubr.f32.gmra.mxu0 %v8619
      %v8818 = vpop.f32.mrf.mxu0
      %v8819 = vadd.f32 0.0, %v8818
      %v8820 = vpop.f32.mrf.mxu0
      %8821 = vmatprep.mubr.f32.mxu0 0.0
      %8822 = vmatmul.mubr.f32.gmra.mxu0 %v8622
      %v8823 = vpop.f32.mrf.mxu0
      %v8824 = vadd.f32 0.0, %v8823
      %v8825 = vpop.f32.mrf.mxu0
      %8826 = vmatprep.mubr.f32.mxu0 0.0
      %8827 = vmatmul.mubr.f32.gmra.mxu0 %v8625
      %v8828 = vpop.f32.mrf.mxu0
      %v8829 = vadd.f32 0.0, %v8828
      %v8830 = vpop.f32.mrf.mxu0
      %8831 = vmatprep.mubr.f32.mxu0 0.0
      %8832 = vmatmul.mubr.f32.gmra.mxu0 %v8628
      %v8833 = vpop.f32.mrf.mxu0
      %v8834 = vadd.f32 0.0, %v8833
      %v8835 = vpop.f32.mrf.mxu0
      %8836 = vmatprep.mubr.f32.mxu0 0.0
      %8837 = vmatmul.mubr.f32.gmra.mxu0 %v8631
      %v8838 = vpop.f32.mrf.mxu0
      %v8839 = vadd.f32 0.0, %v8838
      %v8840 = vpop.f32.mrf.mxu0
      %8841 = vmatprep.mubr.f32.mxu0 0.0
      %8842 = vmatmul.mubr.f32.gmra.mxu0 %v8634
      %v8843 = vpop.f32.mrf.mxu0
      %v8844 = vadd.f32 0.0, %v8843
      %v8845 = vpop.f32.mrf.mxu0
      %8846 = vmatprep.mubr.f32.mxu0 0.0
      %8847 = vmatmul.mubr.f32.gmra.mxu0 %v8637
      %v8848 = vpop.f32.mrf.mxu0
      %v8849 = vadd.f32 0.0, %v8848
      %v8850 = vpop.f32.mrf.mxu0
      %8851 = vmatprep.mubr.f32.mxu0 0.0
      %8852 = vmatmul.mubr.f32.gmra.mxu0 %v8640
      %v8853 = vpop.f32.mrf.mxu0
      %v8854 = vadd.f32 0.0, %v8853
      %v8855 = vpop.f32.mrf.mxu0
      %8856 = vmatprep.mubr.f32.mxu0 0.0
      %8857 = vmatmul.mubr.f32.gmra.mxu0 %v8643
      %v8858 = vpop.f32.mrf.mxu0
      %v8859 = vadd.f32 0.0, %v8858
      %v8860 = vpop.f32.mrf.mxu0
      %8861 = vmatprep.mubr.f32.mxu0 0.0
      %8862 = vmatmul.mubr.f32.gmra.mxu0 %v8646
      %v8863 = vpop.f32.mrf.mxu0
      %v8864 = vadd.f32 0.0, %v8863
      %v8865 = vpop.f32.mrf.mxu0
      %8866 = vmatprep.mubr.f32.mxu0 0.0
      %8867 = vmatmul.mubr.f32.gmra.mxu0 %v8649
      %v8868 = vpop.f32.mrf.mxu0
      %v8869 = vadd.f32 0.0, %v8868
      %v8870 = vpop.f32.mrf.mxu0
      %8871 = vmatprep.mubr.f32.mxu0 0.0
      %8872 = vmatmul.mubr.f32.gmra.mxu0 %v8652
      %v8873 = vpop.f32.mrf.mxu0
      %v8874 = vadd.f32 0.0, %v8873
      %v8875 = vpop.f32.mrf.mxu0
      %8876 = vmatprep.mubr.f32.mxu0 0.0
      %8877 = vmatmul.mubr.f32.gmra.mxu0 %v8655
      %v8878 = vpop.f32.mrf.mxu0
      %v8879 = vadd.f32 0.0, %v8878
      %v8880 = vpop.f32.mrf.mxu0
      %8881 = vdwg.mxu0
      %v8882 = vadd.f32 %v8460, %v8724
      %v8883 = vadd.f32 %v8461, %v8729
      %v8884 = vadd.f32 %v8462, %v8734
      %v8885 = vadd.f32 %v8463, %v8739
      %v8886 = vadd.f32 %v8464, %v8744
      %v8887 = vadd.f32 %v8465, %v8749
      %v8888 = vadd.f32 %v8466, %v8754
      %v8889 = vadd.f32 %v8467, %v8759
      %v8890 = vadd.f32 %v8468, %v8764
      %v8891 = vadd.f32 %v8469, %v8769
      %v8892 = vadd.f32 %v8470, %v8774
      %v8893 = vadd.f32 %v8471, %v8779
      %v8894 = vadd.f32 %v8472, %v8784
      %v8895 = vadd.f32 %v8473, %v8789
      %v8896 = vadd.f32 %v8474, %v8794
      %v8897 = vadd.f32 %v8475, %v8799
      %v8898 = vadd.f32 %v8476, %v8804
      %v8899 = vadd.f32 %v8477, %v8809
      %v8900 = vadd.f32 %v8478, %v8814
      %v8901 = vadd.f32 %v8479, %v8819
      %v8902 = vadd.f32 %v8480, %v8824
      %v8903 = vadd.f32 %v8481, %v8829
      %v8904 = vadd.f32 %v8482, %v8834
      %v8905 = vadd.f32 %v8483, %v8839
      %v8906 = vadd.f32 %v8484, %v8844
      %v8907 = vadd.f32 %v8485, %v8849
      %v8908 = vadd.f32 %v8486, %v8854
      %v8909 = vadd.f32 %v8487, %v8859
      %v8910 = vadd.f32 %v8488, %v8864
      %v8911 = vadd.f32 %v8489, %v8869
      %v8912 = vadd.f32 %v8490, %v8874
      %v8913 = vadd.f32 %v8491, %v8879
      %v8914 = vld [vmem:[#allocation3 + $0x29] sm:$0xff]
      %v8915 = vld [vmem:[#allocation3 + $0x31] sm:$0xff]
      %v8916 = vld [vmem:[#allocation3 + $0x39] sm:$0xff]
      %v8917 = vld [vmem:[#allocation3 + $0x41] sm:$0xff]
      %v8918 = vld [vmem:[#allocation3 + $0x49] sm:$0xff]
      %v8919 = vld [vmem:[#allocation3 + $0x51] sm:$0xff]
      %v8920 = vld [vmem:[#allocation3 + $0x59] sm:$0xff]
      %v8921 = vld [vmem:[#allocation3 + $0x61] sm:$0xff]
      %v8922 = vld [vmem:[#allocation3 + $0x69] sm:$0xff]
      %v8923 = vld [vmem:[#allocation3 + $0x71] sm:$0xff]
      %v8924 = vld [vmem:[#allocation3 + $0x79] sm:$0xff]
      %v8925 = vld [vmem:[#allocation3 + $0x81] sm:$0xff]
      %v8926 = vld [vmem:[#allocation3 + $0x89] sm:$0xff]
      %v8927 = vld [vmem:[#allocation3 + $0x91] sm:$0xff]
      %v8928 = vld [vmem:[#allocation3 + $0x99] sm:$0xff]
      %v8929 = vld [vmem:[#allocation3 + $0xa1] sm:$0xff]
      %v8930 = vld [vmem:[#allocation3 + $0xa9] sm:$0xff]
      %v8931 = vld [vmem:[#allocation3 + $0xb1] sm:$0xff]
      %v8932 = vld [vmem:[#allocation3 + $0xb9] sm:$0xff]
      %v8933 = vld [vmem:[#allocation3 + $0xc1] sm:$0xff]
      %v8934 = vld [vmem:[#allocation3 + $0xc9] sm:$0xff]
      %v8935 = vld [vmem:[#allocation3 + $0xd1] sm:$0xff]
      %v8936 = vld [vmem:[#allocation3 + $0xd9] sm:$0xff]
      %v8937 = vld [vmem:[#allocation3 + $0xe1] sm:$0xff]
      %v8938 = vld [vmem:[#allocation3 + $0xe9] sm:$0xff]
      %v8939 = vld [vmem:[#allocation3 + $0xf1] sm:$0xff]
      %v8940 = vld [vmem:[#allocation3 + $0xf9] sm:$0xff]
      %v8941 = vld [vmem:[#allocation3 + $0x101] sm:$0xff]
      %v8942 = vld [vmem:[#allocation3 + $0x109] sm:$0xff]
      %v8943 = vld [vmem:[#allocation3 + $0x111] sm:$0xff]
      %v8944 = vld [vmem:[#allocation3 + $0x119] sm:$0xff]
      %v8945 = vld [vmem:[#allocation3 + $0x121] sm:$0xff]
      %v8946 = vsel %vm5077, %v8914, 0.0
      %v8947 = vsel %vm5078, %v8915, 0.0
      %v8948 = vsel %vm5079, %v8916, 0.0
      %v8949 = vsel %vm5080, %v8917, 0.0
      %v8950 = vsel %vm5081, %v8918, 0.0
      %v8951 = vsel %vm5082, %v8919, 0.0
      %v8952 = vsel %vm5083, %v8920, 0.0
      %v8953 = vsel %vm5084, %v8921, 0.0
      %v8954 = vsel %vm5085, %v8922, 0.0
      %v8955 = vsel %vm5086, %v8923, 0.0
      %v8956 = vsel %vm5087, %v8924, 0.0
      %v8957 = vsel %vm5088, %v8925, 0.0
      %v8958 = vsel %vm5089, %v8926, 0.0
      %v8959 = vsel %vm5090, %v8927, 0.0
      %v8960 = vsel %vm5091, %v8928, 0.0
      %v8961 = vsel %vm5092, %v8929, 0.0
      %v8962 = vsel %vm5093, %v8930, 0.0
      %v8963 = vsel %vm5094, %v8931, 0.0
      %v8964 = vsel %vm5095, %v8932, 0.0
      %v8965 = vsel %vm5096, %v8933, 0.0
      %v8966 = vsel %vm5097, %v8934, 0.0
      %v8967 = vsel %vm5098, %v8935, 0.0
      %v8968 = vsel %vm5099, %v8936, 0.0
      %v8969 = vsel %vm5100, %v8937, 0.0
      %v8970 = vsel %vm5101, %v8938, 0.0
      %v8971 = vsel %vm5102, %v8939, 0.0
      %v8972 = vsel %vm5103, %v8940, 0.0
      %v8973 = vsel %vm5104, %v8941, 0.0
      %v8974 = vsel %vm5105, %v8942, 0.0
      %v8975 = vsel %vm5106, %v8943, 0.0
      %v8976 = vsel %vm5107, %v8944, 0.0
      %v8977 = vsel %vm5108, %v8945, 0.0
      %s8978 = scalar_lea.vmem %s4, 256
      %v8979 = vld [vmem:[%s8978] sm:$0xff]
      %v8980 = vld [vmem:[%s8978 + $0x8] sm:$0xff]
      %v8981 = vld [vmem:[%s8978 + $0x10] sm:$0xff]
      %v8982 = vld [vmem:[%s8978 + $0x18] sm:$0xff]
      %v8984 = vsel %vm5531, %v8946, 0
      %v8987 = vsel %vm5531, %v8947, 0
      %v8990 = vsel %vm5531, %v8948, 0
      %v8993 = vsel %vm5531, %v8949, 0
      %v8996 = vsel %vm5531, %v8950, 0
      %v8999 = vsel %vm5531, %v8951, 0
      %v9002 = vsel %vm5531, %v8952, 0
      %v9005 = vsel %vm5531, %v8953, 0
      %v9008 = vsel %vm5531, %v8954, 0
      %v9011 = vsel %vm5531, %v8955, 0
      %v9014 = vsel %vm5531, %v8956, 0
      %v9017 = vsel %vm5531, %v8957, 0
      %v9020 = vsel %vm5531, %v8958, 0
      %v9023 = vsel %vm5531, %v8959, 0
      %v9026 = vsel %vm5531, %v8960, 0
      %v9029 = vsel %vm5531, %v8961, 0
      %v9032 = vsel %vm5531, %v8962, 0
      %v9035 = vsel %vm5531, %v8963, 0
      %v9038 = vsel %vm5531, %v8964, 0
      %v9041 = vsel %vm5531, %v8965, 0
      %v9044 = vsel %vm5531, %v8966, 0
      %v9047 = vsel %vm5531, %v8967, 0
      %v9050 = vsel %vm5531, %v8968, 0
      %v9053 = vsel %vm5531, %v8969, 0
      %v9056 = vsel %vm5531, %v8970, 0
      %v9059 = vsel %vm5531, %v8971, 0
      %v9062 = vsel %vm5531, %v8972, 0
      %v9065 = vsel %vm5531, %v8973, 0
      %v9068 = vsel %vm5531, %v8974, 0
      %v9071 = vsel %vm5531, %v8975, 0
      %v9074 = vsel %vm5531, %v8976, 0
      %v9077 = vsel %vm5531, %v8977, 0
      %9079 = vmatprep.subr.mxu0 0.0
      %9080 = vmatpush1.msra.mxu0 0.0
      %9081 = vmatprep.subr.mxu0 0.0
      %9082 = vmatpush1.msra.mxu0 0.0
      %9083 = vmatprep.subr.mxu0 0.0
      %9084 = vmatpush1.msra.mxu0 0.0
      %9085 = vmatprep.subr.mxu0 0.0
      %9086 = vmatpush1.msra.mxu0 0.0
      %9087 = vmatprep.subr.mxu0 0.0
      %9088 = vmatpush1.msra.mxu0 0.0
      %9089 = vmatprep.subr.mxu0 0.0
      %9090 = vmatpush1.msra.mxu0 0.0
      %9091 = vmatprep.subr.mxu0 0.0
      %9092 = vmatpush1.msra.mxu0 0.0
      %9093 = vmatprep.subr.mxu0 0.0
      %9094 = vmatpush1.msra.mxu0 0.0
      %9095 = vmatprep.subr.mxu0 0.0
      %9096 = vmatpush1.msra.mxu0 0.0
      %9097 = vmatprep.subr.mxu0 0.0
      %9098 = vmatpush1.msra.mxu0 0.0
      %9099 = vmatprep.subr.mxu0 0.0
      %9100 = vmatpush1.msra.mxu0 0.0
      %9101 = vmatprep.subr.mxu0 0.0
      %9102 = vmatpush1.msra.mxu0 0.0
      %9103 = vmatprep.subr.mxu0 0.0
      %9104 = vmatpush1.msra.mxu0 %v8982
      %9105 = vmatprep.subr.mxu0 0.0
      %9106 = vmatpush1.msra.mxu0 %v8981
      %9107 = vmatprep.subr.mxu0 0.0
      %9108 = vmatpush1.msra.mxu0 %v8980
      %9109 = vmatprep.subr.mxu0 0.0
      %9110 = vmatpush1.msra.mxu0 %v8979
      %9111 = vmatprep.subr.mxu0 0.0
      %9112 = vmatpush2.msra.mxu0 0.0
      %9113 = vmatprep.subr.mxu0 0.0
      %9114 = vmatpush2.msra.mxu0 0.0
      %9115 = vmatprep.subr.mxu0 0.0
      %9116 = vmatpush2.msra.mxu0 0.0
      %9117 = vmatprep.subr.mxu0 0.0
      %9118 = vmatpush2.msra.mxu0 0.0
      %9119 = vmatprep.subr.mxu0 0.0
      %9120 = vmatpush2.msra.mxu0 0.0
      %9121 = vmatprep.subr.mxu0 0.0
      %9122 = vmatpush2.msra.mxu0 0.0
      %9123 = vmatprep.subr.mxu0 0.0
      %9124 = vmatpush2.msra.mxu0 0.0
      %9125 = vmatprep.subr.mxu0 0.0
      %9126 = vmatpush2.msra.mxu0 0.0
      %9127 = vmatprep.subr.mxu0 0.0
      %9128 = vmatpush2.msra.mxu0 0.0
      %9129 = vmatprep.subr.mxu0 0.0
      %9130 = vmatpush2.msra.mxu0 0.0
      %9131 = vmatprep.subr.mxu0 0.0
      %9132 = vmatpush2.msra.mxu0 0.0
      %9133 = vmatprep.subr.mxu0 0.0
      %9134 = vmatpush2.msra.mxu0 0.0
      %9135 = vmatprep.subr.mxu0 0.0
      %9136 = vmatpush2.msra.mxu0 0.0
      %9137 = vmatprep.subr.mxu0 0.0
      %9138 = vmatpush2.msra.mxu0 0.0
      %9139 = vmatprep.subr.mxu0 0.0
      %9140 = vmatpush2.msra.mxu0 0.0
      %9141 = vmatprep.subr.mxu0 0.0
      %9142 = vmatpush2.msra.mxu0 0.0
      %9143 = vmatprep.mubr.f32.mxu0 0.0
      %9144 = vmatmul.mubr.f32.gmra.mxu0 %v8984
      %v9145 = vpop.f32.mrf.mxu0
      %v9146 = vadd.f32 0.0, %v9145
      %v9147 = vpop.f32.mrf.mxu0
      %9148 = vmatprep.mubr.f32.mxu0 0.0
      %9149 = vmatmul.mubr.f32.gmra.mxu0 %v8987
      %v9150 = vpop.f32.mrf.mxu0
      %v9151 = vadd.f32 0.0, %v9150
      %v9152 = vpop.f32.mrf.mxu0
      %9153 = vmatprep.mubr.f32.mxu0 0.0
      %9154 = vmatmul.mubr.f32.gmra.mxu0 %v8990
      %v9155 = vpop.f32.mrf.mxu0
      %v9156 = vadd.f32 0.0, %v9155
      %v9157 = vpop.f32.mrf.mxu0
      %9158 = vmatprep.mubr.f32.mxu0 0.0
      %9159 = vmatmul.mubr.f32.gmra.mxu0 %v8993
      %v9160 = vpop.f32.mrf.mxu0
      %v9161 = vadd.f32 0.0, %v9160
      %v9162 = vpop.f32.mrf.mxu0
      %9163 = vmatprep.mubr.f32.mxu0 0.0
      %9164 = vmatmul.mubr.f32.gmra.mxu0 %v8996
      %v9165 = vpop.f32.mrf.mxu0
      %v9166 = vadd.f32 0.0, %v9165
      %v9167 = vpop.f32.mrf.mxu0
      %9168 = vmatprep.mubr.f32.mxu0 0.0
      %9169 = vmatmul.mubr.f32.gmra.mxu0 %v8999
      %v9170 = vpop.f32.mrf.mxu0
      %v9171 = vadd.f32 0.0, %v9170
      %v9172 = vpop.f32.mrf.mxu0
      %9173 = vmatprep.mubr.f32.mxu0 0.0
      %9174 = vmatmul.mubr.f32.gmra.mxu0 %v9002
      %v9175 = vpop.f32.mrf.mxu0
      %v9176 = vadd.f32 0.0, %v9175
      %v9177 = vpop.f32.mrf.mxu0
      %9178 = vmatprep.mubr.f32.mxu0 0.0
      %9179 = vmatmul.mubr.f32.gmra.mxu0 %v9005
      %v9180 = vpop.f32.mrf.mxu0
      %v9181 = vadd.f32 0.0, %v9180
      %v9182 = vpop.f32.mrf.mxu0
      %9183 = vmatprep.mubr.f32.mxu0 0.0
      %9184 = vmatmul.mubr.f32.gmra.mxu0 %v9008
      %v9185 = vpop.f32.mrf.mxu0
      %v9186 = vadd.f32 0.0, %v9185
      %v9187 = vpop.f32.mrf.mxu0
      %9188 = vmatprep.mubr.f32.mxu0 0.0
      %9189 = vmatmul.mubr.f32.gmra.mxu0 %v9011
      %v9190 = vpop.f32.mrf.mxu0
      %v9191 = vadd.f32 0.0, %v9190
      %v9192 = vpop.f32.mrf.mxu0
      %9193 = vmatprep.mubr.f32.mxu0 0.0
      %9194 = vmatmul.mubr.f32.gmra.mxu0 %v9014
      %v9195 = vpop.f32.mrf.mxu0
      %v9196 = vadd.f32 0.0, %v9195
      %v9197 = vpop.f32.mrf.mxu0
      %9198 = vmatprep.mubr.f32.mxu0 0.0
      %9199 = vmatmul.mubr.f32.gmra.mxu0 %v9017
      %v9200 = vpop.f32.mrf.mxu0
      %v9201 = vadd.f32 0.0, %v9200
      %v9202 = vpop.f32.mrf.mxu0
      %9203 = vmatprep.mubr.f32.mxu0 0.0
      %9204 = vmatmul.mubr.f32.gmra.mxu0 %v9020
      %v9205 = vpop.f32.mrf.mxu0
      %v9206 = vadd.f32 0.0, %v9205
      %v9207 = vpop.f32.mrf.mxu0
      %9208 = vmatprep.mubr.f32.mxu0 0.0
      %9209 = vmatmul.mubr.f32.gmra.mxu0 %v9023
      %v9210 = vpop.f32.mrf.mxu0
      %v9211 = vadd.f32 0.0, %v9210
      %v9212 = vpop.f32.mrf.mxu0
      %9213 = vmatprep.mubr.f32.mxu0 0.0
      %9214 = vmatmul.mubr.f32.gmra.mxu0 %v9026
      %v9215 = vpop.f32.mrf.mxu0
      %v9216 = vadd.f32 0.0, %v9215
      %v9217 = vpop.f32.mrf.mxu0
      %9218 = vmatprep.mubr.f32.mxu0 0.0
      %9219 = vmatmul.mubr.f32.gmra.mxu0 %v9029
      %v9220 = vpop.f32.mrf.mxu0
      %v9221 = vadd.f32 0.0, %v9220
      %v9222 = vpop.f32.mrf.mxu0
      %9223 = vmatprep.mubr.f32.mxu0 0.0
      %9224 = vmatmul.mubr.f32.gmra.mxu0 %v9032
      %v9225 = vpop.f32.mrf.mxu0
      %v9226 = vadd.f32 0.0, %v9225
      %v9227 = vpop.f32.mrf.mxu0
      %9228 = vmatprep.mubr.f32.mxu0 0.0
      %9229 = vmatmul.mubr.f32.gmra.mxu0 %v9035
      %v9230 = vpop.f32.mrf.mxu0
      %v9231 = vadd.f32 0.0, %v9230
      %v9232 = vpop.f32.mrf.mxu0
      %9233 = vmatprep.mubr.f32.mxu0 0.0
      %9234 = vmatmul.mubr.f32.gmra.mxu0 %v9038
      %v9235 = vpop.f32.mrf.mxu0
      %v9236 = vadd.f32 0.0, %v9235
      %v9237 = vpop.f32.mrf.mxu0
      %9238 = vmatprep.mubr.f32.mxu0 0.0
      %9239 = vmatmul.mubr.f32.gmra.mxu0 %v9041
      %v9240 = vpop.f32.mrf.mxu0
      %v9241 = vadd.f32 0.0, %v9240
      %v9242 = vpop.f32.mrf.mxu0
      %9243 = vmatprep.mubr.f32.mxu0 0.0
      %9244 = vmatmul.mubr.f32.gmra.mxu0 %v9044
      %v9245 = vpop.f32.mrf.mxu0
      %v9246 = vadd.f32 0.0, %v9245
      %v9247 = vpop.f32.mrf.mxu0
      %9248 = vmatprep.mubr.f32.mxu0 0.0
      %9249 = vmatmul.mubr.f32.gmra.mxu0 %v9047
      %v9250 = vpop.f32.mrf.mxu0
      %v9251 = vadd.f32 0.0, %v9250
      %v9252 = vpop.f32.mrf.mxu0
      %9253 = vmatprep.mubr.f32.mxu0 0.0
      %9254 = vmatmul.mubr.f32.gmra.mxu0 %v9050
      %v9255 = vpop.f32.mrf.mxu0
      %v9256 = vadd.f32 0.0, %v9255
      %v9257 = vpop.f32.mrf.mxu0
      %9258 = vmatprep.mubr.f32.mxu0 0.0
      %9259 = vmatmul.mubr.f32.gmra.mxu0 %v9053
      %v9260 = vpop.f32.mrf.mxu0
      %v9261 = vadd.f32 0.0, %v9260
      %v9262 = vpop.f32.mrf.mxu0
      %9263 = vmatprep.mubr.f32.mxu0 0.0
      %9264 = vmatmul.mubr.f32.gmra.mxu0 %v9056
      %v9265 = vpop.f32.mrf.mxu0
      %v9266 = vadd.f32 0.0, %v9265
      %v9267 = vpop.f32.mrf.mxu0
      %9268 = vmatprep.mubr.f32.mxu0 0.0
      %9269 = vmatmul.mubr.f32.gmra.mxu0 %v9059
      %v9270 = vpop.f32.mrf.mxu0
      %v9271 = vadd.f32 0.0, %v9270
      %v9272 = vpop.f32.mrf.mxu0
      %9273 = vmatprep.mubr.f32.mxu0 0.0
      %9274 = vmatmul.mubr.f32.gmra.mxu0 %v9062
      %v9275 = vpop.f32.mrf.mxu0
      %v9276 = vadd.f32 0.0, %v9275
      %v9277 = vpop.f32.mrf.mxu0
      %9278 = vmatprep.mubr.f32.mxu0 0.0
      %9279 = vmatmul.mubr.f32.gmra.mxu0 %v9065
      %v9280 = vpop.f32.mrf.mxu0
      %v9281 = vadd.f32 0.0, %v9280
      %v9282 = vpop.f32.mrf.mxu0
      %9283 = vmatprep.mubr.f32.mxu0 0.0
      %9284 = vmatmul.mubr.f32.gmra.mxu0 %v9068
      %v9285 = vpop.f32.mrf.mxu0
      %v9286 = vadd.f32 0.0, %v9285
      %v9287 = vpop.f32.mrf.mxu0
      %9288 = vmatprep.mubr.f32.mxu0 0.0
      %9289 = vmatmul.mubr.f32.gmra.mxu0 %v9071
      %v9290 = vpop.f32.mrf.mxu0
      %v9291 = vadd.f32 0.0, %v9290
      %v9292 = vpop.f32.mrf.mxu0
      %9293 = vmatprep.mubr.f32.mxu0 0.0
      %9294 = vmatmul.mubr.f32.gmra.mxu0 %v9074
      %v9295 = vpop.f32.mrf.mxu0
      %v9296 = vadd.f32 0.0, %v9295
      %v9297 = vpop.f32.mrf.mxu0
      %9298 = vmatprep.mubr.f32.mxu0 0.0
      %9299 = vmatmul.mubr.f32.gmra.mxu0 %v9077
      %v9300 = vpop.f32.mrf.mxu0
      %v9301 = vadd.f32 0.0, %v9300
      %v9302 = vpop.f32.mrf.mxu0
      %9303 = vdwg.mxu0
      %v9304 = vadd.f32 %v8882, %v9146
      %v9305 = vadd.f32 %v8883, %v9151
      %v9306 = vadd.f32 %v8884, %v9156
      %v9307 = vadd.f32 %v8885, %v9161
      %v9308 = vadd.f32 %v8886, %v9166
      %v9309 = vadd.f32 %v8887, %v9171
      %v9310 = vadd.f32 %v8888, %v9176
      %v9311 = vadd.f32 %v8889, %v9181
      %v9312 = vadd.f32 %v8890, %v9186
      %v9313 = vadd.f32 %v8891, %v9191
      %v9314 = vadd.f32 %v8892, %v9196
      %v9315 = vadd.f32 %v8893, %v9201
      %v9316 = vadd.f32 %v8894, %v9206
      %v9317 = vadd.f32 %v8895, %v9211
      %v9318 = vadd.f32 %v8896, %v9216
      %v9319 = vadd.f32 %v8897, %v9221
      %v9320 = vadd.f32 %v8898, %v9226
      %v9321 = vadd.f32 %v8899, %v9231
      %v9322 = vadd.f32 %v8900, %v9236
      %v9323 = vadd.f32 %v8901, %v9241
      %v9324 = vadd.f32 %v8902, %v9246
      %v9325 = vadd.f32 %v8903, %v9251
      %v9326 = vadd.f32 %v8904, %v9256
      %v9327 = vadd.f32 %v8905, %v9261
      %v9328 = vadd.f32 %v8906, %v9266
      %v9329 = vadd.f32 %v8907, %v9271
      %v9330 = vadd.f32 %v8908, %v9276
      %v9331 = vadd.f32 %v8909, %v9281
      %v9332 = vadd.f32 %v8910, %v9286
      %v9333 = vadd.f32 %v8911, %v9291
      %v9334 = vadd.f32 %v8912, %v9296
      %v9335 = vadd.f32 %v8913, %v9301
      %vm9336 = vcmask 523264
      %9337 = vst.msk [vmem:[%s251] sm:$0xff] %vm9336, %v9304
      %9338 = vst.msk [vmem:[%s251 + $0x8] sm:$0xff] %vm9336, %v9305
      %9339 = vst.msk [vmem:[%s251 + $0x10] sm:$0xff] %vm9336, %v9306
      %9340 = vst.msk [vmem:[%s251 + $0x18] sm:$0xff] %vm9336, %v9307
      %9341 = vst.msk [vmem:[%s251 + $0x20] sm:$0xff] %vm9336, %v9308
      %9342 = vst.msk [vmem:[%s251 + $0x28] sm:$0xff] %vm9336, %v9309
      %9343 = vst.msk [vmem:[%s251 + $0x30] sm:$0xff] %vm9336, %v9310
      %9344 = vst.msk [vmem:[%s251 + $0x38] sm:$0xff] %vm9336, %v9311
      %9345 = vst.msk [vmem:[%s251 + $0x40] sm:$0xff] %vm9336, %v9312
      %9346 = vst.msk [vmem:[%s251 + $0x48] sm:$0xff] %vm9336, %v9313
      %9347 = vst.msk [vmem:[%s251 + $0x50] sm:$0xff] %vm9336, %v9314
      %9348 = vst.msk [vmem:[%s251 + $0x58] sm:$0xff] %vm9336, %v9315
      %9349 = vst.msk [vmem:[%s251 + $0x60] sm:$0xff] %vm9336, %v9316
      %9350 = vst.msk [vmem:[%s251 + $0x68] sm:$0xff] %vm9336, %v9317
      %9351 = vst.msk [vmem:[%s251 + $0x70] sm:$0xff] %vm9336, %v9318
      %9352 = vst.msk [vmem:[%s251 + $0x78] sm:$0xff] %vm9336, %v9319
      %9353 = vst.msk [vmem:[%s251 + $0x80] sm:$0xff] %vm9336, %v9320
      %9354 = vst.msk [vmem:[%s251 + $0x88] sm:$0xff] %vm9336, %v9321
      %9355 = vst.msk [vmem:[%s251 + $0x90] sm:$0xff] %vm9336, %v9322
      %9356 = vst.msk [vmem:[%s251 + $0x98] sm:$0xff] %vm9336, %v9323
      %9357 = vst.msk [vmem:[%s251 + $0xa0] sm:$0xff] %vm9336, %v9324
      %9358 = vst.msk [vmem:[%s251 + $0xa8] sm:$0xff] %vm9336, %v9325
      %9359 = vst.msk [vmem:[%s251 + $0xb0] sm:$0xff] %vm9336, %v9326
      %9360 = vst.msk [vmem:[%s251 + $0xb8] sm:$0xff] %vm9336, %v9327
      %9361 = vst.msk [vmem:[%s251 + $0xc0] sm:$0xff] %vm9336, %v9328
      %9362 = vst.msk [vmem:[%s251 + $0xc8] sm:$0xff] %vm9336, %v9329
      %9363 = vst.msk [vmem:[%s251 + $0xd0] sm:$0xff] %vm9336, %v9330
      %9364 = vst.msk [vmem:[%s251 + $0xd8] sm:$0xff] %vm9336, %v9331
      %9365 = vst.msk [vmem:[%s251 + $0xe0] sm:$0xff] %vm9336, %v9332
      %9366 = vst.msk [vmem:[%s251 + $0xe8] sm:$0xff] %vm9336, %v9333
      %9367 = vst.msk [vmem:[%s251 + $0xf0] sm:$0xff] %vm9336, %v9334
      %9368 = vst.msk [vmem:[%s251 + $0xf8] sm:$0xff] %vm9336, %v9335
      %p9369 = scmp.lt.s32.totalorder %s17, 1
      %s9370 = scalar_select %p9369, %s17, 1
      %s9371 = smul.addr %s9370, 32
      %s9372 = smul.addr %s9371, 8
      %s9373 = scalar_lea.vmem %s6, %s9372
      // Predicated region
      $region45: #{model_forward.1} parent=43 // pred_check
        %p9374 = pneg %p166
      $region46: #{model_forward.1} parent=43 // pred_check_branch
        %9376 = sbr.rel (%p9374) target = $region48
      $region47: #{model_forward.1} parent=43 // pred_region
        _
      $region48: #{model_forward.1} parent=43 // pred_fallthru
        _
    $region44: #{model_forward.1} parent=5 // pred_fallthru
      _
    %p9377 = scmp.le.s32.totalorder 2, %s12
    // Predicated region
    $region49: #{model_forward.1} parent=5 // pred_check
      %p9378 = pneg %p9377
    $region50: #{model_forward.1} parent=5 // pred_check_branch
      %9380 = sbr.rel (%p9378) target = $region52
    $region51: #{model_forward.1} parent=5 // pred_region
      %s9381 = ssub.s32 %s12, 2
      // Predicated region
      $region53: #{model_forward.1} parent=51 // pred_check
        %p9382 = pneg %p172
      $region54: #{model_forward.1} parent=51 // pred_check_branch
        %9384 = sbr.rel (%p9382) target = $region56
      $region55: #{model_forward.1} parent=51 // pred_region
        %p9385 = scmp.lt.s32.totalorder %s18, 1
        %s9386 = scalar_select %p9385, %s18, 1
        %s9387 = smul.addr %s9386, 32
        %s9388 = smul.addr %s9387, 8
        %s9389 = scalar_lea.vmem %s6, %s9388
      $region56: #{model_forward.1} parent=51 // pred_fallthru
        _
    $region52: #{model_forward.1} parent=5 // pred_fallthru
      _
  $region6: #{model_forward.1} parent=0 // loop_footer
    %s16 = sadd.s32 1, %s12
  $region7: #{model_forward.1} parent=0 // loop_footer_branch
    %11 = sbr.rel target = $region3
  $region8: #{model_forward.1} parent=0 // loop_exit
    _

</llo_original>
